<compile_context>
chip_gen: v6e
topology: v6e:2x2x1
jax: 0.10.0
libtpu: 0.0.40
codegen_flags: <defaults>
</compile_context>

<pallas_src>
import functools
import math

import jax
import jax.numpy as jnp
from jax.experimental import pallas as pl
from jax.experimental.pallas import tpu as pltpu


# ----------------------------------------------------------------------------
# Model dimensions (small demo stand-in for the pretrained BERT encoder)
# ----------------------------------------------------------------------------
HIDDEN = 32
N_HEADS = 4
HEAD_DIM = HIDDEN // N_HEADS
INTERMEDIATE = 64
N_LAYERS = 3
VOCAB = 100
MAX_POS = 64
TYPE_VOCAB = 2
N_CLASS = 1
CLS_PAD = 128          # lane-dense padded classifier output width
SMALL_W = 3 * HIDDEN   # width of the packed per-layer small-param tensor


# ----------------------------------------------------------------------------
# In-kernel math helpers (pure jnp, traced inside the Pallas kernel)
# ----------------------------------------------------------------------------
_SQRT1_2 = 0.7071067811865476


def _erf_poly(z):
    # Abramowitz & Stegun 7.1.26, |error| < 1.5e-7 — matches exact-erf GELU to
    # ~f32 precision using only exp / mul / add / select / EUP-reciprocal.
    a1, a2, a3, a4, a5 = (0.254829592, -0.284496736, 1.421413741,
                          -1.453152027, 1.061405429)
    p = 0.3275911
    sgn = jnp.where(z >= 0.0, 1.0, -1.0)
    az = jnp.abs(z)
    # Divide moved to the EUP slot (approx reciprocal, ~2^-12 rel. error).
    t = pl.reciprocal(1.0 + p * az, approx=True)
    poly = ((((a5 * t + a4) * t + a3) * t + a2) * t + a1) * t
    return sgn * (1.0 - poly * jnp.exp(-az * az))


def _gelu_exact(x):
    return 0.5 * x * (1.0 + _erf_poly(x * _SQRT1_2))


def _layernorm(x, g, b, eps=1e-12):
    mu = jnp.mean(x, axis=-1, keepdims=True)
    var = jnp.mean((x - mu) ** 2, axis=-1, keepdims=True)
    return (x - mu) * jax.lax.rsqrt(var + eps) * g + b


# ----------------------------------------------------------------------------
# Fused encoder + pooler + classifier kernel (single pallas_call, no grid)
# ----------------------------------------------------------------------------
def _bert_head_kernel(
    # inputs (all fully VMEM-resident)
    emb_ref,      # (B*S, H)    f32   embedding sum (pre-LN)
    mask_ref,     # (B, S)      f32   attention mask (1 = keep)
    embln_ref,    # (2, H)      f32   [gamma; beta] of embedding LayerNorm
    wqkv_ref,     # (L, H, 3H)  bf16  fused Q|K|V weights
    wo_ref,       # (L, H, H)   bf16  attention output projection
    w1_ref,       # (L, H, I)   bf16  FFN in
    w2_ref,       # (L, I, H)   bf16  FFN out
    small_ref,    # (L, 8, 3H)  f32   packed [bqkv, bo, ln1g, ln1b, b1, b2, ln2g, ln2b]
    wp_ref,       # (H, H)      bf16  pooler dense
    bp_ref,       # (1, H)      f32
    wc_ref,       # (H, CLS_PAD) bf16 classifier (zero-padded past n_class)
    bc_ref,       # (1, CLS_PAD) f32
    # output
    logits_ref,   # (B, CLS_PAD) f32
    *, batch, seq):
    B, S, H, Dh, NH, I = batch, seq, HIDDEN, HEAD_DIM, N_HEADS, INTERMEDIATE

    # --- embedding LayerNorm ---
    x = _layernorm(emb_ref[...], embln_ref[0:1, :], embln_ref[1:2, :])

    # --- layer-invariant additive attention mask, materialized ONCE ---
    add_mask = jnp.broadcast_to(
        ((1.0 - mask_ref[...]) * (-1e9))[:, None, :], (B, S, S))

    scale = 1.0 / math.sqrt(Dh)

    def layer_body(l, x):
        small = small_ref[l]                    # (8, 3H) f32
        bqkv = small[0:1, :]                    # (1, 3H)
        bo   = small[1:2, :H]
        ln1g = small[2:3, :H]
        ln1b = small[3:4, :H]
        b1   = small[4:5, :I]
        b2   = small[5:6, :H]
        ln2g = small[6:7, :H]
        ln2b = small[7:8, :H]

        xb = x.astype(jnp.bfloat16)

        # fused Q/K/V projection: one MXU pass, N = 3H lanes
        qkv = jnp.dot(xb, wqkv_ref[l], preferred_element_type=jnp.float32) + bqkv
        q = qkv[:, 0 * H:1 * H].reshape(B, S, H)
        k = qkv[:, 1 * H:2 * H].reshape(B, S, H)
        v = qkv[:, 2 * H:3 * H].reshape(B, S, H)

        # multi-head self-attention (static head loop, f32; demo Dh=8)
        ctx_heads = []
        for h in range(NH):
            sl = slice(h * Dh, (h + 1) * Dh)
            qh, kh, vh = q[:, :, sl], k[:, :, sl], v[:, :, sl]   # (B, S, Dh)
            s = jnp.einsum("bqd,bkd->bqk", qh, kh,
                           preferred_element_type=jnp.float32) * scale
            s = s + add_mask
            s = s - jnp.max(s, axis=-1, keepdims=True)
            p = jnp.exp(s)
            p = p * pl.reciprocal(jnp.sum(p, axis=-1, keepdims=True), approx=True)
            ctx_heads.append(jnp.einsum("bqk,bkd->bqd", p, vh,
                                        preferred_element_type=jnp.float32))
        # concatenated contexts -> ONE (B*S,H)@(H,H) output-projection matmul
        ctx = jnp.concatenate(ctx_heads, axis=-1).reshape(B * S, H)
        attn = jnp.dot(ctx.astype(jnp.bfloat16), wo_ref[l],
                       preferred_element_type=jnp.float32) + bo

        x = _layernorm(x + attn, ln1g, ln1b)

        # FFN (bf16 MXU, f32 elementwise, exact-erf GELU)
        h1 = jnp.dot(x.astype(jnp.bfloat16), w1_ref[l],
                     preferred_element_type=jnp.float32) + b1
        h1 = _gelu_exact(h1)
        ffn = jnp.dot(h1.astype(jnp.bfloat16), w2_ref[l],
                      preferred_element_type=jnp.float32) + b2

        return _layernorm(x + ffn, ln2g, ln2b)

    x = jax.lax.fori_loop(0, N_LAYERS, layer_body, x, unroll=True)

    # --- BERT pooler (tanh(Linear(CLS))) + classifier head, fully batched ---
    cls = x.reshape(B, S, H)[:, 0, :]                            # (B, H)
    pooled = jnp.tanh(
        jnp.dot(cls.astype(jnp.bfloat16), wp_ref[...],
                preferred_element_type=jnp.float32) + bp_ref[...])
    # Dropout(0.15) is identity in eval/inference mode.
    logits_ref[...] = (
        jnp.dot(pooled.astype(jnp.bfloat16), wc_ref[...],
                preferred_element_type=jnp.float32) + bc_ref[...]
    ).astype(logits_ref.dtype)


# ----------------------------------------------------------------------------
# Parameters (built in-script; per-layer tensors stacked along axis 0)
# ----------------------------------------------------------------------------
def _pack_layer_small(bqkv, bo, ln1g, ln1b, b1, b2, ln2g, ln2b):
    """Pack the 8 tiny per-layer params into one (8, 3H) f32 slab."""
    def pad(v):
        return jnp.zeros((SMALL_W,), jnp.float32).at[:v.shape[0]].set(v)
    return jnp.stack([pad(bqkv), pad(bo), pad(ln1g), pad(ln1b),
                      pad(b1), pad(b2), pad(ln2g), pad(ln2b)])


def init_params(key):
    keys = iter(jax.random.split(key, 24))

    def nrm(shape, std=0.02):
        return std * jax.random.normal(next(keys), shape, dtype=jnp.float32)

    p = {
        "word_emb": nrm((VOCAB, HIDDEN)),
        "pos_emb": nrm((MAX_POS, HIDDEN)),
        "type_emb": nrm((TYPE_VOCAB, HIDDEN)),
        # row 0 = gamma, row 1 = beta
        "emb_ln": jnp.concatenate([jnp.ones((1, HIDDEN), jnp.float32),
                                   jnp.zeros((1, HIDDEN), jnp.float32)], axis=0),
    }

    wqkv, wo, w1, w2, small = [], [], [], [], []
    for _ in range(N_LAYERS):
        wqkv.append(nrm((HIDDEN, 3 * HIDDEN)))
        wo.append(nrm((HIDDEN, HIDDEN)))
        w1.append(nrm((HIDDEN, INTERMEDIATE)))
        w2.append(nrm((INTERMEDIATE, HIDDEN)))
        small.append(_pack_layer_small(
            jnp.zeros((3 * HIDDEN,), jnp.float32),          # bqkv
            jnp.zeros((HIDDEN,), jnp.float32),               # bo
            jnp.ones((HIDDEN,), jnp.float32),                # ln1 gamma
            jnp.zeros((HIDDEN,), jnp.float32),               # ln1 beta
            jnp.zeros((INTERMEDIATE,), jnp.float32),         # b1
            jnp.zeros((HIDDEN,), jnp.float32),               # b2
            jnp.ones((HIDDEN,), jnp.float32),                # ln2 gamma
            jnp.zeros((HIDDEN,), jnp.float32)))              # ln2 beta

    p["wqkv"] = jnp.stack(wqkv).astype(jnp.bfloat16)         # (L, H, 3H)
    p["wo"] = jnp.stack(wo).astype(jnp.bfloat16)             # (L, H, H)  bf16 now
    p["w1"] = jnp.stack(w1).astype(jnp.bfloat16)             # (L, H, I)
    p["w2"] = jnp.stack(w2).astype(jnp.bfloat16)             # (L, I, H)
    p["small"] = jnp.stack(small)                            # (L, 8, 3H) f32

    # BERT pooler: pooled = tanh(W_pool @ CLS + b_pool)
    p["pool_w"] = nrm((HIDDEN, HIDDEN)).astype(jnp.bfloat16)
    p["pool_b"] = jnp.zeros((1, HIDDEN), jnp.float32)

    # Classification head: Linear(hidden, n_class), xavier_uniform W, zero b.
    bound = math.sqrt(6.0 / (HIDDEN + N_CLASS))
    clf_w = jax.random.uniform(next(keys), (HIDDEN, N_CLASS), jnp.float32,
                               minval=-bound, maxval=bound)
    clf_w_pad = jnp.zeros((HIDDEN, CLS_PAD), jnp.float32).at[:, :N_CLASS].set(clf_w)
    p["clf_w_pad"] = clf_w_pad.astype(jnp.bfloat16)
    p["clf_b_pad"] = jnp.zeros((1, CLS_PAD), jnp.float32)
    return p


# ----------------------------------------------------------------------------
# Forward pass (mirrors BertClassificationHeadModel.forward, eval mode)
# ----------------------------------------------------------------------------
def forward(params, input_ids, position_ids=None, token_type_ids=None):
    B, S = input_ids.shape
    # NB: the reference module passes its `position_ids` argument to the
    # transformer as attention_mask — quirk preserved here (None -> all ones,
    # matching HF BertModel's default attention_mask).
    attention_mask = (jnp.ones((B, S), jnp.float32) if position_ids is None
                      else position_ids.astype(jnp.float32))
    if token_type_ids is None:
        token_type_ids = jnp.zeros((B, S), jnp.int32)

    # Embedding gathers are XLA glue; everything downstream (embedding LN,
    # encoder, pooler, classifier) runs inside the single Pallas kernel.
    pos = jnp.arange(S, dtype=jnp.int32)
    emb = (jnp.take(params["word_emb"], input_ids, axis=0)
           + jnp.take(params["pos_emb"], pos, axis=0)[None]
           + jnp.take(params["type_emb"], token_type_ids, axis=0))
    emb = emb.reshape(B * S, HIDDEN).astype(jnp.float32)

    vmem = pl.BlockSpec(memory_space=pltpu.MemorySpace.VMEM)

    logits_padded = pl.pallas_call(
        functools.partial(_bert_head_kernel, batch=B, seq=S),
        out_shape=jax.ShapeDtypeStruct((B, CLS_PAD), jnp.float32),
        in_specs=[vmem] * 12,
        out_specs=vmem,
    )(emb, attention_mask, params["emb_ln"],
      params["wqkv"], params["wo"], params["w1"], params["w2"], params["small"],
      params["pool_w"], params["pool_b"],
      params["clf_w_pad"], params["clf_b_pad"])

    return logits_padded[:, :N_CLASS]       # (B, n_class)


# ----------------------------------------------------------------------------
if __name__ == "__main__":
    key = jax.random.PRNGKey(0)
    pkey, ikey = jax.random.split(key)
    params = init_params(pkey)

    B, S = 2, 8
    input_ids = jax.random.randint(ikey, (B, S), 0, VOCAB, dtype=jnp.int32)

    logits = jax.jit(forward)(params, input_ids)
    logits = jax.block_until_ready(logits)
    assert logits.shape == (B, N_CLASS) and logits.dtype == jnp.float32
    assert bool(jnp.all(jnp.isfinite(logits)))
    print("KERNEL_OK")
</pallas_src>

<mosaic_0001>
module attributes {stable_mosaic.version = 11 : i64} {
  func.func @_bert_head_kernel(%arg0: memref<16x32xf32, #tpu.memory_space<vmem>>, %arg1: memref<2x8xf32, #tpu.memory_space<vmem>>, %arg2: memref<2x32xf32, #tpu.memory_space<vmem>>, %arg3: memref<3x32x96xbf16, #tpu.memory_space<vmem>>, %arg4: memref<3x32x32xbf16, #tpu.memory_space<vmem>>, %arg5: memref<3x32x64xbf16, #tpu.memory_space<vmem>>, %arg6: memref<3x64x32xbf16, #tpu.memory_space<vmem>>, %arg7: memref<3x8x96xf32, #tpu.memory_space<vmem>>, %arg8: memref<32x32xbf16, #tpu.memory_space<vmem>>, %arg9: memref<1x32xf32, #tpu.memory_space<vmem>>, %arg10: memref<32x128xbf16, #tpu.memory_space<vmem>>, %arg11: memref<1x128xf32, #tpu.memory_space<vmem>>, %arg12: memref<2x128xf32, #tpu.memory_space<vmem>>) attributes {dimension_semantics = [], scalar_prefetch = 0 : i64, scratch_operands = 0 : i64, tpu.core_type = #tpu.core_type<tc>} {
    %c0 = arith.constant 0 : index
    %c0_0 = arith.constant 0 : index
    %0 = vector.load %arg0[%c0, %c0_0] : memref<16x32xf32, #tpu.memory_space<vmem>>, vector<16x32xf32>
    %c0_1 = arith.constant 0 : index
    %c0_2 = arith.constant 0 : index
    %1 = vector.load %arg2[%c0_1, %c0_2] : memref<2x32xf32, #tpu.memory_space<vmem>>, vector<1x32xf32>
    %c1 = arith.constant 1 : index
    %c0_3 = arith.constant 0 : index
    %2 = vector.load %arg2[%c1, %c0_3] : memref<2x32xf32, #tpu.memory_space<vmem>>, vector<1x32xf32>
    %cst = arith.constant dense<0.000000e+00> : vector<16xf32>
    %3 = vector.multi_reduction <add>, %0, %cst [1] : vector<16x32xf32> to vector<16xf32>
    %4 = vector.shape_cast %3 : vector<16xf32> to vector<16x1xf32>
    %cst_4 = arith.constant 3.200000e+01 : f32
    %5 = vector.broadcast %cst_4 : f32 to vector<16x1xf32>
    %6 = arith.divf %4, %5 : vector<16x1xf32>
    %7 = vector.broadcast %6 : vector<16x1xf32> to vector<16x32xf32>
    %8 = arith.subf %0, %7 : vector<16x32xf32>
    %9 = arith.mulf %8, %8 : vector<16x32xf32>
    %cst_5 = arith.constant dense<0.000000e+00> : vector<16xf32>
    %10 = vector.multi_reduction <add>, %9, %cst_5 [1] : vector<16x32xf32> to vector<16xf32>
    %11 = vector.shape_cast %10 : vector<16xf32> to vector<16x1xf32>
    %cst_6 = arith.constant 3.200000e+01 : f32
    %12 = vector.broadcast %cst_6 : f32 to vector<16x1xf32>
    %13 = arith.divf %11, %12 : vector<16x1xf32>
    %14 = vector.broadcast %6 : vector<16x1xf32> to vector<16x32xf32>
    %15 = arith.subf %0, %14 : vector<16x32xf32>
    %cst_7 = arith.constant 9.99999996E-13 : f32
    %16 = vector.broadcast %cst_7 : f32 to vector<16x1xf32>
    %17 = arith.addf %13, %16 : vector<16x1xf32>
    %18 = math.rsqrt %17 : vector<16x1xf32>
    %19 = vector.broadcast %18 : vector<16x1xf32> to vector<16x32xf32>
    %20 = arith.mulf %15, %19 : vector<16x32xf32>
    %21 = vector.broadcast %1 : vector<1x32xf32> to vector<16x32xf32>
    %22 = arith.mulf %20, %21 : vector<16x32xf32>
    %23 = vector.broadcast %2 : vector<1x32xf32> to vector<16x32xf32>
    %24 = arith.addf %22, %23 : vector<16x32xf32>
    %c0_8 = arith.constant 0 : index
    %c0_9 = arith.constant 0 : index
    %25 = vector.load %arg1[%c0_8, %c0_9] : memref<2x8xf32, #tpu.memory_space<vmem>>, vector<2x8xf32>
    %cst_10 = arith.constant 1.000000e+00 : f32
    %26 = vector.broadcast %cst_10 : f32 to vector<2x8xf32>
    %27 = arith.subf %26, %25 : vector<2x8xf32>
    %cst_11 = arith.constant -1.000000e+09 : f32
    %28 = vector.broadcast %cst_11 : f32 to vector<2x8xf32>
    %29 = arith.mulf %27, %28 : vector<2x8xf32>
    %30 = vector.shape_cast %29 : vector<2x8xf32> to vector<2x1x8xf32>
    %31 = vector.shape_cast %30 : vector<2x1x8xf32> to vector<2x1x8xf32>
    %32 = vector.broadcast %31 : vector<2x1x8xf32> to vector<2x8x8xf32>
    %c0_i32 = arith.constant 0 : i32
    %33 = arith.index_cast %c0_i32 : i32 to index
    %c0_12 = arith.constant 0 : index
    %c0_13 = arith.constant 0 : index
    %34 = vector.load %arg7[%33, %c0_12, %c0_13] : memref<3x8x96xf32, #tpu.memory_space<vmem>>, vector<1x8x96xf32>
    %35 = vector.shape_cast %34 : vector<1x8x96xf32> to vector<8x96xf32>
    %36 = vector.extract_strided_slice %35 {offsets = [0, 0], sizes = [1, 96], strides = [1, 1]} : vector<8x96xf32> to vector<1x96xf32>
    %37 = vector.extract_strided_slice %35 {offsets = [1, 0], sizes = [1, 32], strides = [1, 1]} : vector<8x96xf32> to vector<1x32xf32>
    %38 = vector.extract_strided_slice %35 {offsets = [2, 0], sizes = [1, 32], strides = [1, 1]} : vector<8x96xf32> to vector<1x32xf32>
    %39 = vector.extract_strided_slice %35 {offsets = [3, 0], sizes = [1, 32], strides = [1, 1]} : vector<8x96xf32> to vector<1x32xf32>
    %40 = vector.extract_strided_slice %35 {offsets = [4, 0], sizes = [1, 64], strides = [1, 1]} : vector<8x96xf32> to vector<1x64xf32>
    %41 = vector.extract_strided_slice %35 {offsets = [5, 0], sizes = [1, 32], strides = [1, 1]} : vector<8x96xf32> to vector<1x32xf32>
    %42 = vector.extract_strided_slice %35 {offsets = [6, 0], sizes = [1, 32], strides = [1, 1]} : vector<8x96xf32> to vector<1x32xf32>
    %43 = vector.extract_strided_slice %35 {offsets = [7, 0], sizes = [1, 32], strides = [1, 1]} : vector<8x96xf32> to vector<1x32xf32>
    %44 = arith.truncf %24 : vector<16x32xf32> to vector<16x32xbf16>
    %45 = arith.index_cast %c0_i32 : i32 to index
    %c0_14 = arith.constant 0 : index
    %c0_15 = arith.constant 0 : index
    %46 = vector.load %arg3[%45, %c0_14, %c0_15] : memref<3x32x96xbf16, #tpu.memory_space<vmem>>, vector<1x32x96xbf16>
    %47 = vector.shape_cast %46 : vector<1x32x96xbf16> to vector<32x96xbf16>
    %cst_16 = arith.constant dense<0.000000e+00> : vector<16x96xf32>
    %48 = tpu.matmul %44, %47, %cst_16 {dimension_numbers = #tpu.dot_dimension_numbers<[1], [0], [0], [1], [0, 0, 1, 1], [], []>} : vector<16x32xbf16>, vector<32x96xbf16>, vector<16x96xf32> -> vector<16x96xf32>
    %49 = vector.broadcast %36 : vector<1x96xf32> to vector<16x96xf32>
    %50 = arith.addf %48, %49 : vector<16x96xf32>
    %51 = vector.extract_strided_slice %50 {offsets = [0, 0], sizes = [16, 32], strides = [1, 1]} : vector<16x96xf32> to vector<16x32xf32>
    %52 = vector.shape_cast %51 : vector<16x32xf32> to vector<2x8x32xf32>
    %53 = vector.extract_strided_slice %50 {offsets = [0, 32], sizes = [16, 32], strides = [1, 1]} : vector<16x96xf32> to vector<16x32xf32>
    %54 = vector.shape_cast %53 : vector<16x32xf32> to vector<2x8x32xf32>
    %55 = vector.extract_strided_slice %50 {offsets = [0, 64], sizes = [16, 32], strides = [1, 1]} : vector<16x96xf32> to vector<16x32xf32>
    %56 = vector.shape_cast %55 : vector<16x32xf32> to vector<2x8x32xf32>
    %57 = vector.extract_strided_slice %52 {offsets = [0, 0, 0], sizes = [2, 8, 8], strides = [1, 1, 1]} : vector<2x8x32xf32> to vector<2x8x8xf32>
    %58 = vector.extract_strided_slice %54 {offsets = [0, 0, 0], sizes = [2, 8, 8], strides = [1, 1, 1]} : vector<2x8x32xf32> to vector<2x8x8xf32>
    %59 = vector.extract_strided_slice %56 {offsets = [0, 0, 0], sizes = [2, 8, 8], strides = [1, 1, 1]} : vector<2x8x32xf32> to vector<2x8x8xf32>
    "tpu.trace_start"() <{level = 10 : i32, message = "bqd,bkd->bqk"}> : () -> ()
    %cst_17 = arith.constant dense<0.000000e+00> : vector<2x8x8xf32>
    %60 = tpu.matmul %57, %58, %cst_17 {dimension_numbers = #tpu.dot_dimension_numbers<[2], [2], [1], [1], [0, 0, 0, 1, 1, 1], [0], [0]>} : vector<2x8x8xf32>, vector<2x8x8xf32>, vector<2x8x8xf32> -> vector<2x8x8xf32>
    "tpu.trace_stop"() : () -> ()
    %cst_18 = arith.constant 0.353553385 : f32
    %61 = vector.broadcast %cst_18 : f32 to vector<2x8x8xf32>
    %62 = arith.mulf %60, %61 : vector<2x8x8xf32>
    %63 = arith.addf %62, %32 : vector<2x8x8xf32>
    %cst_19 = arith.constant dense<0xFF800000> : vector<2x8xf32>
    %64 = vector.multi_reduction <maximumf>, %63, %cst_19 [2] : vector<2x8x8xf32> to vector<2x8xf32>
    %65 = vector.shape_cast %64 : vector<2x8xf32> to vector<2x8x1xf32>
    %66 = vector.broadcast %65 : vector<2x8x1xf32> to vector<2x8x8xf32>
    %67 = arith.subf %63, %66 : vector<2x8x8xf32>
    %68 = math.exp %67 : vector<2x8x8xf32>
    %cst_20 = arith.constant dense<0.000000e+00> : vector<2x8xf32>
    %69 = vector.multi_reduction <add>, %68, %cst_20 [2] : vector<2x8x8xf32> to vector<2x8xf32>
    %70 = vector.shape_cast %69 : vector<2x8xf32> to vector<2x8x1xf32>
    %71 = tpu.reciprocal %70 {approx = true} : vector<2x8x1xf32> -> vector<2x8x1xf32>
    %72 = vector.broadcast %71 : vector<2x8x1xf32> to vector<2x8x8xf32>
    %73 = arith.mulf %68, %72 : vector<2x8x8xf32>
    "tpu.trace_start"() <{level = 10 : i32, message = "bqk,bkd->bqd"}> : () -> ()
    %cst_21 = arith.constant dense<0.000000e+00> : vector<2x8x8xf32>
    %74 = tpu.matmul %73, %59, %cst_21 {dimension_numbers = #tpu.dot_dimension_numbers<[2], [1], [1], [2], [0, 0, 0, 1, 1, 2], [0], [0]>} : vector<2x8x8xf32>, vector<2x8x8xf32>, vector<2x8x8xf32> -> vector<2x8x8xf32>
    "tpu.trace_stop"() : () -> ()
    %75 = vector.extract_strided_slice %52 {offsets = [0, 0, 8], sizes = [2, 8, 8], strides = [1, 1, 1]} : vector<2x8x32xf32> to vector<2x8x8xf32>
    %76 = vector.extract_strided_slice %54 {offsets = [0, 0, 8], sizes = [2, 8, 8], strides = [1, 1, 1]} : vector<2x8x32xf32> to vector<2x8x8xf32>
    %77 = vector.extract_strided_slice %56 {offsets = [0, 0, 8], sizes = [2, 8, 8], strides = [1, 1, 1]} : vector<2x8x32xf32> to vector<2x8x8xf32>
    "tpu.trace_start"() <{level = 10 : i32, message = "bqd,bkd->bqk"}> : () -> ()
    %cst_22 = arith.constant dense<0.000000e+00> : vector<2x8x8xf32>
    %78 = tpu.matmul %75, %76, %cst_22 {dimension_numbers = #tpu.dot_dimension_numbers<[2], [2], [1], [1], [0, 0, 0, 1, 1, 1], [0], [0]>} : vector<2x8x8xf32>, vector<2x8x8xf32>, vector<2x8x8xf32> -> vector<2x8x8xf32>
    "tpu.trace_stop"() : () -> ()
    %cst_23 = arith.constant 0.353553385 : f32
    %79 = vector.broadcast %cst_23 : f32 to vector<2x8x8xf32>
    %80 = arith.mulf %78, %79 : vector<2x8x8xf32>
    %81 = arith.addf %80, %32 : vector<2x8x8xf32>
    %cst_24 = arith.constant dense<0xFF800000> : vector<2x8xf32>
    %82 = vector.multi_reduction <maximumf>, %81, %cst_24 [2] : vector<2x8x8xf32> to vector<2x8xf32>
    %83 = vector.shape_cast %82 : vector<2x8xf32> to vector<2x8x1xf32>
    %84 = vector.broadcast %83 : vector<2x8x1xf32> to vector<2x8x8xf32>
    %85 = arith.subf %81, %84 : vector<2x8x8xf32>
    %86 = math.exp %85 : vector<2x8x8xf32>
    %cst_25 = arith.constant dense<0.000000e+00> : vector<2x8xf32>
    %87 = vector.multi_reduction <add>, %86, %cst_25 [2] : vector<2x8x8xf32> to vector<2x8xf32>
    %88 = vector.shape_cast %87 : vector<2x8xf32> to vector<2x8x1xf32>
    %89 = tpu.reciprocal %88 {approx = true} : vector<2x8x1xf32> -> vector<2x8x1xf32>
    %90 = vector.broadcast %89 : vector<2x8x1xf32> to vector<2x8x8xf32>
    %91 = arith.mulf %86, %90 : vector<2x8x8xf32>
    "tpu.trace_start"() <{level = 10 : i32, message = "bqk,bkd->bqd"}> : () -> ()
    %cst_26 = arith.constant dense<0.000000e+00> : vector<2x8x8xf32>
    %92 = tpu.matmul %91, %77, %cst_26 {dimension_numbers = #tpu.dot_dimension_numbers<[2], [1], [1], [2], [0, 0, 0, 1, 1, 2], [0], [0]>} : vector<2x8x8xf32>, vector<2x8x8xf32>, vector<2x8x8xf32> -> vector<2x8x8xf32>
    "tpu.trace_stop"() : () -> ()
    %93 = vector.extract_strided_slice %52 {offsets = [0, 0, 16], sizes = [2, 8, 8], strides = [1, 1, 1]} : vector<2x8x32xf32> to vector<2x8x8xf32>
    %94 = vector.extract_strided_slice %54 {offsets = [0, 0, 16], sizes = [2, 8, 8], strides = [1, 1, 1]} : vector<2x8x32xf32> to vector<2x8x8xf32>
    %95 = vector.extract_strided_slice %56 {offsets = [0, 0, 16], sizes = [2, 8, 8], strides = [1, 1, 1]} : vector<2x8x32xf32> to vector<2x8x8xf32>
    "tpu.trace_start"() <{level = 10 : i32, message = "bqd,bkd->bqk"}> : () -> ()
    %cst_27 = arith.constant dense<0.000000e+00> : vector<2x8x8xf32>
    %96 = tpu.matmul %93, %94, %cst_27 {dimension_numbers = #tpu.dot_dimension_numbers<[2], [2], [1], [1], [0, 0, 0, 1, 1, 1], [0], [0]>} : vector<2x8x8xf32>, vector<2x8x8xf32>, vector<2x8x8xf32> -> vector<2x8x8xf32>
    "tpu.trace_stop"() : () -> ()
    %cst_28 = arith.constant 0.353553385 : f32
    %97 = vector.broadcast %cst_28 : f32 to vector<2x8x8xf32>
    %98 = arith.mulf %96, %97 : vector<2x8x8xf32>
    %99 = arith.addf %98, %32 : vector<2x8x8xf32>
    %cst_29 = arith.constant dense<0xFF800000> : vector<2x8xf32>
    %100 = vector.multi_reduction <maximumf>, %99, %cst_29 [2] : vector<2x8x8xf32> to vector<2x8xf32>
    %101 = vector.shape_cast %100 : vector<2x8xf32> to vector<2x8x1xf32>
    %102 = vector.broadcast %101 : vector<2x8x1xf32> to vector<2x8x8xf32>
    %103 = arith.subf %99, %102 : vector<2x8x8xf32>
    %104 = math.exp %103 : vector<2x8x8xf32>
    %cst_30 = arith.constant dense<0.000000e+00> : vector<2x8xf32>
    %105 = vector.multi_reduction <add>, %104, %cst_30 [2] : vector<2x8x8xf32> to vector<2x8xf32>
    %106 = vector.shape_cast %105 : vector<2x8xf32> to vector<2x8x1xf32>
    %107 = tpu.reciprocal %106 {approx = true} : vector<2x8x1xf32> -> vector<2x8x1xf32>
    %108 = vector.broadcast %107 : vector<2x8x1xf32> to vector<2x8x8xf32>
    %109 = arith.mulf %104, %108 : vector<2x8x8xf32>
    "tpu.trace_start"() <{level = 10 : i32, message = "bqk,bkd->bqd"}> : () -> ()
    %cst_31 = arith.constant dense<0.000000e+00> : vector<2x8x8xf32>
    %110 = tpu.matmul %109, %95, %cst_31 {dimension_numbers = #tpu.dot_dimension_numbers<[2], [1], [1], [2], [0, 0, 0, 1, 1, 2], [0], [0]>} : vector<2x8x8xf32>, vector<2x8x8xf32>, vector<2x8x8xf32> -> vector<2x8x8xf32>
    "tpu.trace_stop"() : () -> ()
    %111 = vector.extract_strided_slice %52 {offsets = [0, 0, 24], sizes = [2, 8, 8], strides = [1, 1, 1]} : vector<2x8x32xf32> to vector<2x8x8xf32>
    %112 = vector.extract_strided_slice %54 {offsets = [0, 0, 24], sizes = [2, 8, 8], strides = [1, 1, 1]} : vector<2x8x32xf32> to vector<2x8x8xf32>
    %113 = vector.extract_strided_slice %56 {offsets = [0, 0, 24], sizes = [2, 8, 8], strides = [1, 1, 1]} : vector<2x8x32xf32> to vector<2x8x8xf32>
    "tpu.trace_start"() <{level = 10 : i32, message = "bqd,bkd->bqk"}> : () -> ()
    %cst_32 = arith.constant dense<0.000000e+00> : vector<2x8x8xf32>
    %114 = tpu.matmul %111, %112, %cst_32 {dimension_numbers = #tpu.dot_dimension_numbers<[2], [2], [1], [1], [0, 0, 0, 1, 1, 1], [0], [0]>} : vector<2x8x8xf32>, vector<2x8x8xf32>, vector<2x8x8xf32> -> vector<2x8x8xf32>
    "tpu.trace_stop"() : () -> ()
    %cst_33 = arith.constant 0.353553385 : f32
    %115 = vector.broadcast %cst_33 : f32 to vector<2x8x8xf32>
    %116 = arith.mulf %114, %115 : vector<2x8x8xf32>
    %117 = arith.addf %116, %32 : vector<2x8x8xf32>
    %cst_34 = arith.constant dense<0xFF800000> : vector<2x8xf32>
    %118 = vector.multi_reduction <maximumf>, %117, %cst_34 [2] : vector<2x8x8xf32> to vector<2x8xf32>
    %119 = vector.shape_cast %118 : vector<2x8xf32> to vector<2x8x1xf32>
    %120 = vector.broadcast %119 : vector<2x8x1xf32> to vector<2x8x8xf32>
    %121 = arith.subf %117, %120 : vector<2x8x8xf32>
    %122 = math.exp %121 : vector<2x8x8xf32>
    %cst_35 = arith.constant dense<0.000000e+00> : vector<2x8xf32>
    %123 = vector.multi_reduction <add>, %122, %cst_35 [2] : vector<2x8x8xf32> to vector<2x8xf32>
    %124 = vector.shape_cast %123 : vector<2x8xf32> to vector<2x8x1xf32>
    %125 = tpu.reciprocal %124 {approx = true} : vector<2x8x1xf32> -> vector<2x8x1xf32>
    %126 = vector.broadcast %125 : vector<2x8x1xf32> to vector<2x8x8xf32>
    %127 = arith.mulf %122, %126 : vector<2x8x8xf32>
    "tpu.trace_start"() <{level = 10 : i32, message = "bqk,bkd->bqd"}> : () -> ()
    %cst_36 = arith.constant dense<0.000000e+00> : vector<2x8x8xf32>
    %128 = tpu.matmul %127, %113, %cst_36 {dimension_numbers = #tpu.dot_dimension_numbers<[2], [1], [1], [2], [0, 0, 0, 1, 1, 2], [0], [0]>} : vector<2x8x8xf32>, vector<2x8x8xf32>, vector<2x8x8xf32> -> vector<2x8x8xf32>
    "tpu.trace_stop"() : () -> ()
    %129 = tpu.concatenate %74, %92, %110, %128 in 2 : vector<2x8x8xf32>, vector<2x8x8xf32>, vector<2x8x8xf32>, vector<2x8x8xf32> -> vector<2x8x32xf32>
    %130 = vector.shape_cast %129 : vector<2x8x32xf32> to vector<16x32xf32>
    %131 = arith.truncf %130 : vector<16x32xf32> to vector<16x32xbf16>
    %132 = arith.index_cast %c0_i32 : i32 to index
    %c0_37 = arith.constant 0 : index
    %c0_38 = arith.constant 0 : index
    %133 = vector.load %arg4[%132, %c0_37, %c0_38] : memref<3x32x32xbf16, #tpu.memory_space<vmem>>, vector<1x32x32xbf16>
    %134 = vector.shape_cast %133 : vector<1x32x32xbf16> to vector<32x32xbf16>
    %cst_39 = arith.constant dense<0.000000e+00> : vector<16x32xf32>
    %135 = tpu.matmul %131, %134, %cst_39 {dimension_numbers = #tpu.dot_dimension_numbers<[1], [0], [0], [1], [0, 0, 1, 1], [], []>} : vector<16x32xbf16>, vector<32x32xbf16>, vector<16x32xf32> -> vector<16x32xf32>
    %136 = vector.broadcast %37 : vector<1x32xf32> to vector<16x32xf32>
    %137 = arith.addf %135, %136 : vector<16x32xf32>
    %138 = arith.addf %24, %137 : vector<16x32xf32>
    %cst_40 = arith.constant dense<0.000000e+00> : vector<16xf32>
    %139 = vector.multi_reduction <add>, %138, %cst_40 [1] : vector<16x32xf32> to vector<16xf32>
    %140 = vector.shape_cast %139 : vector<16xf32> to vector<16x1xf32>
    %cst_41 = arith.constant 3.200000e+01 : f32
    %141 = vector.broadcast %cst_41 : f32 to vector<16x1xf32>
    %142 = arith.divf %140, %141 : vector<16x1xf32>
    %143 = vector.broadcast %142 : vector<16x1xf32> to vector<16x32xf32>
    %144 = arith.subf %138, %143 : vector<16x32xf32>
    %145 = arith.mulf %144, %144 : vector<16x32xf32>
    %cst_42 = arith.constant dense<0.000000e+00> : vector<16xf32>
    %146 = vector.multi_reduction <add>, %145, %cst_42 [1] : vector<16x32xf32> to vector<16xf32>
    %147 = vector.shape_cast %146 : vector<16xf32> to vector<16x1xf32>
    %cst_43 = arith.constant 3.200000e+01 : f32
    %148 = vector.broadcast %cst_43 : f32 to vector<16x1xf32>
    %149 = arith.divf %147, %148 : vector<16x1xf32>
    %150 = vector.broadcast %142 : vector<16x1xf32> to vector<16x32xf32>
    %151 = arith.subf %138, %150 : vector<16x32xf32>
    %cst_44 = arith.constant 9.99999996E-13 : f32
    %152 = vector.broadcast %cst_44 : f32 to vector<16x1xf32>
    %153 = arith.addf %149, %152 : vector<16x1xf32>
    %154 = math.rsqrt %153 : vector<16x1xf32>
    %155 = vector.broadcast %154 : vector<16x1xf32> to vector<16x32xf32>
    %156 = arith.mulf %151, %155 : vector<16x32xf32>
    %157 = vector.broadcast %38 : vector<1x32xf32> to vector<16x32xf32>
    %158 = arith.mulf %156, %157 : vector<16x32xf32>
    %159 = vector.broadcast %39 : vector<1x32xf32> to vector<16x32xf32>
    %160 = arith.addf %158, %159 : vector<16x32xf32>
    %161 = arith.truncf %160 : vector<16x32xf32> to vector<16x32xbf16>
    %162 = arith.index_cast %c0_i32 : i32 to index
    %c0_45 = arith.constant 0 : index
    %c0_46 = arith.constant 0 : index
    %163 = vector.load %arg5[%162, %c0_45, %c0_46] : memref<3x32x64xbf16, #tpu.memory_space<vmem>>, vector<1x32x64xbf16>
    %164 = vector.shape_cast %163 : vector<1x32x64xbf16> to vector<32x64xbf16>
    %cst_47 = arith.constant dense<0.000000e+00> : vector<16x64xf32>
    %165 = tpu.matmul %161, %164, %cst_47 {dimension_numbers = #tpu.dot_dimension_numbers<[1], [0], [0], [1], [0, 0, 1, 1], [], []>} : vector<16x32xbf16>, vector<32x64xbf16>, vector<16x64xf32> -> vector<16x64xf32>
    %166 = vector.broadcast %40 : vector<1x64xf32> to vector<16x64xf32>
    %167 = arith.addf %165, %166 : vector<16x64xf32>
    %cst_48 = arith.constant 5.000000e-01 : f32
    %168 = vector.broadcast %cst_48 : f32 to vector<16x64xf32>
    %169 = arith.mulf %168, %167 : vector<16x64xf32>
    %cst_49 = arith.constant 0.707106769 : f32
    %170 = vector.broadcast %cst_49 : f32 to vector<16x64xf32>
    %171 = arith.mulf %167, %170 : vector<16x64xf32>
    %cst_50 = arith.constant 0.000000e+00 : f32
    %172 = vector.broadcast %cst_50 : f32 to vector<16x64xf32>
    %173 = arith.cmpf oge, %171, %172 : vector<16x64xf32>
    %cst_51 = arith.constant 1.000000e+00 : f32
    %cst_52 = arith.constant -1.000000e+00 : f32
    %174 = vector.broadcast %cst_51 : f32 to vector<16x64xf32>
    %175 = vector.broadcast %cst_52 : f32 to vector<16x64xf32>
    %176 = arith.select %173, %174, %175 : vector<16x64xi1>, vector<16x64xf32>
    %177 = math.absf %171 : vector<16x64xf32>
    %cst_53 = arith.constant 0.327591091 : f32
    %178 = vector.broadcast %cst_53 : f32 to vector<16x64xf32>
    %179 = arith.mulf %178, %177 : vector<16x64xf32>
    %cst_54 = arith.constant 1.000000e+00 : f32
    %180 = vector.broadcast %cst_54 : f32 to vector<16x64xf32>
    %181 = arith.addf %180, %179 : vector<16x64xf32>
    %182 = tpu.reciprocal %181 {approx = true} : vector<16x64xf32> -> vector<16x64xf32>
    %cst_55 = arith.constant 1.06140542 : f32
    %183 = vector.broadcast %cst_55 : f32 to vector<16x64xf32>
    %184 = arith.mulf %183, %182 : vector<16x64xf32>
    %cst_56 = arith.constant -1.45315206 : f32
    %185 = vector.broadcast %cst_56 : f32 to vector<16x64xf32>
    %186 = arith.addf %184, %185 : vector<16x64xf32>
    %187 = arith.mulf %186, %182 : vector<16x64xf32>
    %cst_57 = arith.constant 1.42141378 : f32
    %188 = vector.broadcast %cst_57 : f32 to vector<16x64xf32>
    %189 = arith.addf %187, %188 : vector<16x64xf32>
    %190 = arith.mulf %189, %182 : vector<16x64xf32>
    %cst_58 = arith.constant -0.284496725 : f32
    %191 = vector.broadcast %cst_58 : f32 to vector<16x64xf32>
    %192 = arith.addf %190, %191 : vector<16x64xf32>
    %193 = arith.mulf %192, %182 : vector<16x64xf32>
    %cst_59 = arith.constant 0.254829586 : f32
    %194 = vector.broadcast %cst_59 : f32 to vector<16x64xf32>
    %195 = arith.addf %193, %194 : vector<16x64xf32>
    %196 = arith.mulf %195, %182 : vector<16x64xf32>
    %cst_60 = arith.constant 0.000000e+00 : f32
    %197 = vector.broadcast %cst_60 : f32 to vector<16x64xf32>
    %198 = arith.subf %197, %177 : vector<16x64xf32>
    %199 = arith.mulf %198, %177 : vector<16x64xf32>
    %200 = math.exp %199 : vector<16x64xf32>
    %201 = arith.mulf %196, %200 : vector<16x64xf32>
    %cst_61 = arith.constant 1.000000e+00 : f32
    %202 = vector.broadcast %cst_61 : f32 to vector<16x64xf32>
    %203 = arith.subf %202, %201 : vector<16x64xf32>
    %204 = arith.mulf %176, %203 : vector<16x64xf32>
    %cst_62 = arith.constant 1.000000e+00 : f32
    %205 = vector.broadcast %cst_62 : f32 to vector<16x64xf32>
    %206 = arith.addf %205, %204 : vector<16x64xf32>
    %207 = arith.mulf %169, %206 : vector<16x64xf32>
    %208 = arith.truncf %207 : vector<16x64xf32> to vector<16x64xbf16>
    %209 = arith.index_cast %c0_i32 : i32 to index
    %c0_63 = arith.constant 0 : index
    %c0_64 = arith.constant 0 : index
    %210 = vector.load %arg6[%209, %c0_63, %c0_64] : memref<3x64x32xbf16, #tpu.memory_space<vmem>>, vector<1x64x32xbf16>
    %211 = vector.shape_cast %210 : vector<1x64x32xbf16> to vector<64x32xbf16>
    %cst_65 = arith.constant dense<0.000000e+00> : vector<16x32xf32>
    %212 = tpu.matmul %208, %211, %cst_65 {dimension_numbers = #tpu.dot_dimension_numbers<[1], [0], [0], [1], [0, 0, 1, 1], [], []>} : vector<16x64xbf16>, vector<64x32xbf16>, vector<16x32xf32> -> vector<16x32xf32>
    %213 = vector.broadcast %41 : vector<1x32xf32> to vector<16x32xf32>
    %214 = arith.addf %212, %213 : vector<16x32xf32>
    %215 = arith.addf %160, %214 : vector<16x32xf32>
    %cst_66 = arith.constant dense<0.000000e+00> : vector<16xf32>
    %216 = vector.multi_reduction <add>, %215, %cst_66 [1] : vector<16x32xf32> to vector<16xf32>
    %217 = vector.shape_cast %216 : vector<16xf32> to vector<16x1xf32>
    %cst_67 = arith.constant 3.200000e+01 : f32
    %218 = vector.broadcast %cst_67 : f32 to vector<16x1xf32>
    %219 = arith.divf %217, %218 : vector<16x1xf32>
    %220 = vector.broadcast %219 : vector<16x1xf32> to vector<16x32xf32>
    %221 = arith.subf %215, %220 : vector<16x32xf32>
    %222 = arith.mulf %221, %221 : vector<16x32xf32>
    %cst_68 = arith.constant dense<0.000000e+00> : vector<16xf32>
    %223 = vector.multi_reduction <add>, %222, %cst_68 [1] : vector<16x32xf32> to vector<16xf32>
    %224 = vector.shape_cast %223 : vector<16xf32> to vector<16x1xf32>
    %cst_69 = arith.constant 3.200000e+01 : f32
    %225 = vector.broadcast %cst_69 : f32 to vector<16x1xf32>
    %226 = arith.divf %224, %225 : vector<16x1xf32>
    %227 = vector.broadcast %219 : vector<16x1xf32> to vector<16x32xf32>
    %228 = arith.subf %215, %227 : vector<16x32xf32>
    %cst_70 = arith.constant 9.99999996E-13 : f32
    %229 = vector.broadcast %cst_70 : f32 to vector<16x1xf32>
    %230 = arith.addf %226, %229 : vector<16x1xf32>
    %231 = math.rsqrt %230 : vector<16x1xf32>
    %232 = vector.broadcast %231 : vector<16x1xf32> to vector<16x32xf32>
    %233 = arith.mulf %228, %232 : vector<16x32xf32>
    %234 = vector.broadcast %42 : vector<1x32xf32> to vector<16x32xf32>
    %235 = arith.mulf %233, %234 : vector<16x32xf32>
    %236 = vector.broadcast %43 : vector<1x32xf32> to vector<16x32xf32>
    %237 = arith.addf %235, %236 : vector<16x32xf32>
    %c1_i32 = arith.constant 1 : i32
    %238 = arith.index_cast %c1_i32 : i32 to index
    %c0_71 = arith.constant 0 : index
    %c0_72 = arith.constant 0 : index
    %239 = vector.load %arg7[%238, %c0_71, %c0_72] : memref<3x8x96xf32, #tpu.memory_space<vmem>>, vector<1x8x96xf32>
    %240 = vector.shape_cast %239 : vector<1x8x96xf32> to vector<8x96xf32>
    %241 = vector.extract_strided_slice %240 {offsets = [0, 0], sizes = [1, 96], strides = [1, 1]} : vector<8x96xf32> to vector<1x96xf32>
    %242 = vector.extract_strided_slice %240 {offsets = [1, 0], sizes = [1, 32], strides = [1, 1]} : vector<8x96xf32> to vector<1x32xf32>
    %243 = vector.extract_strided_slice %240 {offsets = [2, 0], sizes = [1, 32], strides = [1, 1]} : vector<8x96xf32> to vector<1x32xf32>
    %244 = vector.extract_strided_slice %240 {offsets = [3, 0], sizes = [1, 32], strides = [1, 1]} : vector<8x96xf32> to vector<1x32xf32>
    %245 = vector.extract_strided_slice %240 {offsets = [4, 0], sizes = [1, 64], strides = [1, 1]} : vector<8x96xf32> to vector<1x64xf32>
    %246 = vector.extract_strided_slice %240 {offsets = [5, 0], sizes = [1, 32], strides = [1, 1]} : vector<8x96xf32> to vector<1x32xf32>
    %247 = vector.extract_strided_slice %240 {offsets = [6, 0], sizes = [1, 32], strides = [1, 1]} : vector<8x96xf32> to vector<1x32xf32>
    %248 = vector.extract_strided_slice %240 {offsets = [7, 0], sizes = [1, 32], strides = [1, 1]} : vector<8x96xf32> to vector<1x32xf32>
    %249 = arith.truncf %237 : vector<16x32xf32> to vector<16x32xbf16>
    %250 = arith.index_cast %c1_i32 : i32 to index
    %c0_73 = arith.constant 0 : index
    %c0_74 = arith.constant 0 : index
    %251 = vector.load %arg3[%250, %c0_73, %c0_74] : memref<3x32x96xbf16, #tpu.memory_space<vmem>>, vector<1x32x96xbf16>
    %252 = vector.shape_cast %251 : vector<1x32x96xbf16> to vector<32x96xbf16>
    %cst_75 = arith.constant dense<0.000000e+00> : vector<16x96xf32>
    %253 = tpu.matmul %249, %252, %cst_75 {dimension_numbers = #tpu.dot_dimension_numbers<[1], [0], [0], [1], [0, 0, 1, 1], [], []>} : vector<16x32xbf16>, vector<32x96xbf16>, vector<16x96xf32> -> vector<16x96xf32>
    %254 = vector.broadcast %241 : vector<1x96xf32> to vector<16x96xf32>
    %255 = arith.addf %253, %254 : vector<16x96xf32>
    %256 = vector.extract_strided_slice %255 {offsets = [0, 0], sizes = [16, 32], strides = [1, 1]} : vector<16x96xf32> to vector<16x32xf32>
    %257 = vector.shape_cast %256 : vector<16x32xf32> to vector<2x8x32xf32>
    %258 = vector.extract_strided_slice %255 {offsets = [0, 32], sizes = [16, 32], strides = [1, 1]} : vector<16x96xf32> to vector<16x32xf32>
    %259 = vector.shape_cast %258 : vector<16x32xf32> to vector<2x8x32xf32>
    %260 = vector.extract_strided_slice %255 {offsets = [0, 64], sizes = [16, 32], strides = [1, 1]} : vector<16x96xf32> to vector<16x32xf32>
    %261 = vector.shape_cast %260 : vector<16x32xf32> to vector<2x8x32xf32>
    %262 = vector.extract_strided_slice %257 {offsets = [0, 0, 0], sizes = [2, 8, 8], strides = [1, 1, 1]} : vector<2x8x32xf32> to vector<2x8x8xf32>
    %263 = vector.extract_strided_slice %259 {offsets = [0, 0, 0], sizes = [2, 8, 8], strides = [1, 1, 1]} : vector<2x8x32xf32> to vector<2x8x8xf32>
    %264 = vector.extract_strided_slice %261 {offsets = [0, 0, 0], sizes = [2, 8, 8], strides = [1, 1, 1]} : vector<2x8x32xf32> to vector<2x8x8xf32>
    "tpu.trace_start"() <{level = 10 : i32, message = "bqd,bkd->bqk"}> : () -> ()
    %cst_76 = arith.constant dense<0.000000e+00> : vector<2x8x8xf32>
    %265 = tpu.matmul %262, %263, %cst_76 {dimension_numbers = #tpu.dot_dimension_numbers<[2], [2], [1], [1], [0, 0, 0, 1, 1, 1], [0], [0]>} : vector<2x8x8xf32>, vector<2x8x8xf32>, vector<2x8x8xf32> -> vector<2x8x8xf32>
    "tpu.trace_stop"() : () -> ()
    %cst_77 = arith.constant 0.353553385 : f32
    %266 = vector.broadcast %cst_77 : f32 to vector<2x8x8xf32>
    %267 = arith.mulf %265, %266 : vector<2x8x8xf32>
    %268 = arith.addf %267, %32 : vector<2x8x8xf32>
    %cst_78 = arith.constant dense<0xFF800000> : vector<2x8xf32>
    %269 = vector.multi_reduction <maximumf>, %268, %cst_78 [2] : vector<2x8x8xf32> to vector<2x8xf32>
    %270 = vector.shape_cast %269 : vector<2x8xf32> to vector<2x8x1xf32>
    %271 = vector.broadcast %270 : vector<2x8x1xf32> to vector<2x8x8xf32>
    %272 = arith.subf %268, %271 : vector<2x8x8xf32>
    %273 = math.exp %272 : vector<2x8x8xf32>
    %cst_79 = arith.constant dense<0.000000e+00> : vector<2x8xf32>
    %274 = vector.multi_reduction <add>, %273, %cst_79 [2] : vector<2x8x8xf32> to vector<2x8xf32>
    %275 = vector.shape_cast %274 : vector<2x8xf32> to vector<2x8x1xf32>
    %276 = tpu.reciprocal %275 {approx = true} : vector<2x8x1xf32> -> vector<2x8x1xf32>
    %277 = vector.broadcast %276 : vector<2x8x1xf32> to vector<2x8x8xf32>
    %278 = arith.mulf %273, %277 : vector<2x8x8xf32>
    "tpu.trace_start"() <{level = 10 : i32, message = "bqk,bkd->bqd"}> : () -> ()
    %cst_80 = arith.constant dense<0.000000e+00> : vector<2x8x8xf32>
    %279 = tpu.matmul %278, %264, %cst_80 {dimension_numbers = #tpu.dot_dimension_numbers<[2], [1], [1], [2], [0, 0, 0, 1, 1, 2], [0], [0]>} : vector<2x8x8xf32>, vector<2x8x8xf32>, vector<2x8x8xf32> -> vector<2x8x8xf32>
    "tpu.trace_stop"() : () -> ()
    %280 = vector.extract_strided_slice %257 {offsets = [0, 0, 8], sizes = [2, 8, 8], strides = [1, 1, 1]} : vector<2x8x32xf32> to vector<2x8x8xf32>
    %281 = vector.extract_strided_slice %259 {offsets = [0, 0, 8], sizes = [2, 8, 8], strides = [1, 1, 1]} : vector<2x8x32xf32> to vector<2x8x8xf32>
    %282 = vector.extract_strided_slice %261 {offsets = [0, 0, 8], sizes = [2, 8, 8], strides = [1, 1, 1]} : vector<2x8x32xf32> to vector<2x8x8xf32>
    "tpu.trace_start"() <{level = 10 : i32, message = "bqd,bkd->bqk"}> : () -> ()
    %cst_81 = arith.constant dense<0.000000e+00> : vector<2x8x8xf32>
    %283 = tpu.matmul %280, %281, %cst_81 {dimension_numbers = #tpu.dot_dimension_numbers<[2], [2], [1], [1], [0, 0, 0, 1, 1, 1], [0], [0]>} : vector<2x8x8xf32>, vector<2x8x8xf32>, vector<2x8x8xf32> -> vector<2x8x8xf32>
    "tpu.trace_stop"() : () -> ()
    %cst_82 = arith.constant 0.353553385 : f32
    %284 = vector.broadcast %cst_82 : f32 to vector<2x8x8xf32>
    %285 = arith.mulf %283, %284 : vector<2x8x8xf32>
    %286 = arith.addf %285, %32 : vector<2x8x8xf32>
    %cst_83 = arith.constant dense<0xFF800000> : vector<2x8xf32>
    %287 = vector.multi_reduction <maximumf>, %286, %cst_83 [2] : vector<2x8x8xf32> to vector<2x8xf32>
    %288 = vector.shape_cast %287 : vector<2x8xf32> to vector<2x8x1xf32>
    %289 = vector.broadcast %288 : vector<2x8x1xf32> to vector<2x8x8xf32>
    %290 = arith.subf %286, %289 : vector<2x8x8xf32>
    %291 = math.exp %290 : vector<2x8x8xf32>
    %cst_84 = arith.constant dense<0.000000e+00> : vector<2x8xf32>
    %292 = vector.multi_reduction <add>, %291, %cst_84 [2] : vector<2x8x8xf32> to vector<2x8xf32>
    %293 = vector.shape_cast %292 : vector<2x8xf32> to vector<2x8x1xf32>
    %294 = tpu.reciprocal %293 {approx = true} : vector<2x8x1xf32> -> vector<2x8x1xf32>
    %295 = vector.broadcast %294 : vector<2x8x1xf32> to vector<2x8x8xf32>
    %296 = arith.mulf %291, %295 : vector<2x8x8xf32>
    "tpu.trace_start"() <{level = 10 : i32, message = "bqk,bkd->bqd"}> : () -> ()
    %cst_85 = arith.constant dense<0.000000e+00> : vector<2x8x8xf32>
    %297 = tpu.matmul %296, %282, %cst_85 {dimension_numbers = #tpu.dot_dimension_numbers<[2], [1], [1], [2], [0, 0, 0, 1, 1, 2], [0], [0]>} : vector<2x8x8xf32>, vector<2x8x8xf32>, vector<2x8x8xf32> -> vector<2x8x8xf32>
    "tpu.trace_stop"() : () -> ()
    %298 = vector.extract_strided_slice %257 {offsets = [0, 0, 16], sizes = [2, 8, 8], strides = [1, 1, 1]} : vector<2x8x32xf32> to vector<2x8x8xf32>
    %299 = vector.extract_strided_slice %259 {offsets = [0, 0, 16], sizes = [2, 8, 8], strides = [1, 1, 1]} : vector<2x8x32xf32> to vector<2x8x8xf32>
    %300 = vector.extract_strided_slice %261 {offsets = [0, 0, 16], sizes = [2, 8, 8], strides = [1, 1, 1]} : vector<2x8x32xf32> to vector<2x8x8xf32>
    "tpu.trace_start"() <{level = 10 : i32, message = "bqd,bkd->bqk"}> : () -> ()
    %cst_86 = arith.constant dense<0.000000e+00> : vector<2x8x8xf32>
    %301 = tpu.matmul %298, %299, %cst_86 {dimension_numbers = #tpu.dot_dimension_numbers<[2], [2], [1], [1], [0, 0, 0, 1, 1, 1], [0], [0]>} : vector<2x8x8xf32>, vector<2x8x8xf32>, vector<2x8x8xf32> -> vector<2x8x8xf32>
    "tpu.trace_stop"() : () -> ()
    %cst_87 = arith.constant 0.353553385 : f32
    %302 = vector.broadcast %cst_87 : f32 to vector<2x8x8xf32>
    %303 = arith.mulf %301, %302 : vector<2x8x8xf32>
    %304 = arith.addf %303, %32 : vector<2x8x8xf32>
    %cst_88 = arith.constant dense<0xFF800000> : vector<2x8xf32>
    %305 = vector.multi_reduction <maximumf>, %304, %cst_88 [2] : vector<2x8x8xf32> to vector<2x8xf32>
    %306 = vector.shape_cast %305 : vector<2x8xf32> to vector<2x8x1xf32>
    %307 = vector.broadcast %306 : vector<2x8x1xf32> to vector<2x8x8xf32>
    %308 = arith.subf %304, %307 : vector<2x8x8xf32>
    %309 = math.exp %308 : vector<2x8x8xf32>
    %cst_89 = arith.constant dense<0.000000e+00> : vector<2x8xf32>
    %310 = vector.multi_reduction <add>, %309, %cst_89 [2] : vector<2x8x8xf32> to vector<2x8xf32>
    %311 = vector.shape_cast %310 : vector<2x8xf32> to vector<2x8x1xf32>
    %312 = tpu.reciprocal %311 {approx = true} : vector<2x8x1xf32> -> vector<2x8x1xf32>
    %313 = vector.broadcast %312 : vector<2x8x1xf32> to vector<2x8x8xf32>
    %314 = arith.mulf %309, %313 : vector<2x8x8xf32>
    "tpu.trace_start"() <{level = 10 : i32, message = "bqk,bkd->bqd"}> : () -> ()
    %cst_90 = arith.constant dense<0.000000e+00> : vector<2x8x8xf32>
    %315 = tpu.matmul %314, %300, %cst_90 {dimension_numbers = #tpu.dot_dimension_numbers<[2], [1], [1], [2], [0, 0, 0, 1, 1, 2], [0], [0]>} : vector<2x8x8xf32>, vector<2x8x8xf32>, vector<2x8x8xf32> -> vector<2x8x8xf32>
    "tpu.trace_stop"() : () -> ()
    %316 = vector.extract_strided_slice %257 {offsets = [0, 0, 24], sizes = [2, 8, 8], strides = [1, 1, 1]} : vector<2x8x32xf32> to vector<2x8x8xf32>
    %317 = vector.extract_strided_slice %259 {offsets = [0, 0, 24], sizes = [2, 8, 8], strides = [1, 1, 1]} : vector<2x8x32xf32> to vector<2x8x8xf32>
    %318 = vector.extract_strided_slice %261 {offsets = [0, 0, 24], sizes = [2, 8, 8], strides = [1, 1, 1]} : vector<2x8x32xf32> to vector<2x8x8xf32>
    "tpu.trace_start"() <{level = 10 : i32, message = "bqd,bkd->bqk"}> : () -> ()
    %cst_91 = arith.constant dense<0.000000e+00> : vector<2x8x8xf32>
    %319 = tpu.matmul %316, %317, %cst_91 {dimension_numbers = #tpu.dot_dimension_numbers<[2], [2], [1], [1], [0, 0, 0, 1, 1, 1], [0], [0]>} : vector<2x8x8xf32>, vector<2x8x8xf32>, vector<2x8x8xf32> -> vector<2x8x8xf32>
    "tpu.trace_stop"() : () -> ()
    %cst_92 = arith.constant 0.353553385 : f32
    %320 = vector.broadcast %cst_92 : f32 to vector<2x8x8xf32>
    %321 = arith.mulf %319, %320 : vector<2x8x8xf32>
    %322 = arith.addf %321, %32 : vector<2x8x8xf32>
    %cst_93 = arith.constant dense<0xFF800000> : vector<2x8xf32>
    %323 = vector.multi_reduction <maximumf>, %322, %cst_93 [2] : vector<2x8x8xf32> to vector<2x8xf32>
    %324 = vector.shape_cast %323 : vector<2x8xf32> to vector<2x8x1xf32>
    %325 = vector.broadcast %324 : vector<2x8x1xf32> to vector<2x8x8xf32>
    %326 = arith.subf %322, %325 : vector<2x8x8xf32>
    %327 = math.exp %326 : vector<2x8x8xf32>
    %cst_94 = arith.constant dense<0.000000e+00> : vector<2x8xf32>
    %328 = vector.multi_reduction <add>, %327, %cst_94 [2] : vector<2x8x8xf32> to vector<2x8xf32>
    %329 = vector.shape_cast %328 : vector<2x8xf32> to vector<2x8x1xf32>
    %330 = tpu.reciprocal %329 {approx = true} : vector<2x8x1xf32> -> vector<2x8x1xf32>
    %331 = vector.broadcast %330 : vector<2x8x1xf32> to vector<2x8x8xf32>
    %332 = arith.mulf %327, %331 : vector<2x8x8xf32>
    "tpu.trace_start"() <{level = 10 : i32, message = "bqk,bkd->bqd"}> : () -> ()
    %cst_95 = arith.constant dense<0.000000e+00> : vector<2x8x8xf32>
    %333 = tpu.matmul %332, %318, %cst_95 {dimension_numbers = #tpu.dot_dimension_numbers<[2], [1], [1], [2], [0, 0, 0, 1, 1, 2], [0], [0]>} : vector<2x8x8xf32>, vector<2x8x8xf32>, vector<2x8x8xf32> -> vector<2x8x8xf32>
    "tpu.trace_stop"() : () -> ()
    %334 = tpu.concatenate %279, %297, %315, %333 in 2 : vector<2x8x8xf32>, vector<2x8x8xf32>, vector<2x8x8xf32>, vector<2x8x8xf32> -> vector<2x8x32xf32>
    %335 = vector.shape_cast %334 : vector<2x8x32xf32> to vector<16x32xf32>
    %336 = arith.truncf %335 : vector<16x32xf32> to vector<16x32xbf16>
    %337 = arith.index_cast %c1_i32 : i32 to index
    %c0_96 = arith.constant 0 : index
    %c0_97 = arith.constant 0 : index
    %338 = vector.load %arg4[%337, %c0_96, %c0_97] : memref<3x32x32xbf16, #tpu.memory_space<vmem>>, vector<1x32x32xbf16>
    %339 = vector.shape_cast %338 : vector<1x32x32xbf16> to vector<32x32xbf16>
    %cst_98 = arith.constant dense<0.000000e+00> : vector<16x32xf32>
    %340 = tpu.matmul %336, %339, %cst_98 {dimension_numbers = #tpu.dot_dimension_numbers<[1], [0], [0], [1], [0, 0, 1, 1], [], []>} : vector<16x32xbf16>, vector<32x32xbf16>, vector<16x32xf32> -> vector<16x32xf32>
    %341 = vector.broadcast %242 : vector<1x32xf32> to vector<16x32xf32>
    %342 = arith.addf %340, %341 : vector<16x32xf32>
    %343 = arith.addf %237, %342 : vector<16x32xf32>
    %cst_99 = arith.constant dense<0.000000e+00> : vector<16xf32>
    %344 = vector.multi_reduction <add>, %343, %cst_99 [1] : vector<16x32xf32> to vector<16xf32>
    %345 = vector.shape_cast %344 : vector<16xf32> to vector<16x1xf32>
    %cst_100 = arith.constant 3.200000e+01 : f32
    %346 = vector.broadcast %cst_100 : f32 to vector<16x1xf32>
    %347 = arith.divf %345, %346 : vector<16x1xf32>
    %348 = vector.broadcast %347 : vector<16x1xf32> to vector<16x32xf32>
    %349 = arith.subf %343, %348 : vector<16x32xf32>
    %350 = arith.mulf %349, %349 : vector<16x32xf32>
    %cst_101 = arith.constant dense<0.000000e+00> : vector<16xf32>
    %351 = vector.multi_reduction <add>, %350, %cst_101 [1] : vector<16x32xf32> to vector<16xf32>
    %352 = vector.shape_cast %351 : vector<16xf32> to vector<16x1xf32>
    %cst_102 = arith.constant 3.200000e+01 : f32
    %353 = vector.broadcast %cst_102 : f32 to vector<16x1xf32>
    %354 = arith.divf %352, %353 : vector<16x1xf32>
    %355 = vector.broadcast %347 : vector<16x1xf32> to vector<16x32xf32>
    %356 = arith.subf %343, %355 : vector<16x32xf32>
    %cst_103 = arith.constant 9.99999996E-13 : f32
    %357 = vector.broadcast %cst_103 : f32 to vector<16x1xf32>
    %358 = arith.addf %354, %357 : vector<16x1xf32>
    %359 = math.rsqrt %358 : vector<16x1xf32>
    %360 = vector.broadcast %359 : vector<16x1xf32> to vector<16x32xf32>
    %361 = arith.mulf %356, %360 : vector<16x32xf32>
    %362 = vector.broadcast %243 : vector<1x32xf32> to vector<16x32xf32>
    %363 = arith.mulf %361, %362 : vector<16x32xf32>
    %364 = vector.broadcast %244 : vector<1x32xf32> to vector<16x32xf32>
    %365 = arith.addf %363, %364 : vector<16x32xf32>
    %366 = arith.truncf %365 : vector<16x32xf32> to vector<16x32xbf16>
    %367 = arith.index_cast %c1_i32 : i32 to index
    %c0_104 = arith.constant 0 : index
    %c0_105 = arith.constant 0 : index
    %368 = vector.load %arg5[%367, %c0_104, %c0_105] : memref<3x32x64xbf16, #tpu.memory_space<vmem>>, vector<1x32x64xbf16>
    %369 = vector.shape_cast %368 : vector<1x32x64xbf16> to vector<32x64xbf16>
    %cst_106 = arith.constant dense<0.000000e+00> : vector<16x64xf32>
    %370 = tpu.matmul %366, %369, %cst_106 {dimension_numbers = #tpu.dot_dimension_numbers<[1], [0], [0], [1], [0, 0, 1, 1], [], []>} : vector<16x32xbf16>, vector<32x64xbf16>, vector<16x64xf32> -> vector<16x64xf32>
    %371 = vector.broadcast %245 : vector<1x64xf32> to vector<16x64xf32>
    %372 = arith.addf %370, %371 : vector<16x64xf32>
    %cst_107 = arith.constant 5.000000e-01 : f32
    %373 = vector.broadcast %cst_107 : f32 to vector<16x64xf32>
    %374 = arith.mulf %373, %372 : vector<16x64xf32>
    %cst_108 = arith.constant 0.707106769 : f32
    %375 = vector.broadcast %cst_108 : f32 to vector<16x64xf32>
    %376 = arith.mulf %372, %375 : vector<16x64xf32>
    %cst_109 = arith.constant 0.000000e+00 : f32
    %377 = vector.broadcast %cst_109 : f32 to vector<16x64xf32>
    %378 = arith.cmpf oge, %376, %377 : vector<16x64xf32>
    %cst_110 = arith.constant 1.000000e+00 : f32
    %cst_111 = arith.constant -1.000000e+00 : f32
    %379 = vector.broadcast %cst_110 : f32 to vector<16x64xf32>
    %380 = vector.broadcast %cst_111 : f32 to vector<16x64xf32>
    %381 = arith.select %378, %379, %380 : vector<16x64xi1>, vector<16x64xf32>
    %382 = math.absf %376 : vector<16x64xf32>
    %cst_112 = arith.constant 0.327591091 : f32
    %383 = vector.broadcast %cst_112 : f32 to vector<16x64xf32>
    %384 = arith.mulf %383, %382 : vector<16x64xf32>
    %cst_113 = arith.constant 1.000000e+00 : f32
    %385 = vector.broadcast %cst_113 : f32 to vector<16x64xf32>
    %386 = arith.addf %385, %384 : vector<16x64xf32>
    %387 = tpu.reciprocal %386 {approx = true} : vector<16x64xf32> -> vector<16x64xf32>
    %cst_114 = arith.constant 1.06140542 : f32
    %388 = vector.broadcast %cst_114 : f32 to vector<16x64xf32>
    %389 = arith.mulf %388, %387 : vector<16x64xf32>
    %cst_115 = arith.constant -1.45315206 : f32
    %390 = vector.broadcast %cst_115 : f32 to vector<16x64xf32>
    %391 = arith.addf %389, %390 : vector<16x64xf32>
    %392 = arith.mulf %391, %387 : vector<16x64xf32>
    %cst_116 = arith.constant 1.42141378 : f32
    %393 = vector.broadcast %cst_116 : f32 to vector<16x64xf32>
    %394 = arith.addf %392, %393 : vector<16x64xf32>
    %395 = arith.mulf %394, %387 : vector<16x64xf32>
    %cst_117 = arith.constant -0.284496725 : f32
    %396 = vector.broadcast %cst_117 : f32 to vector<16x64xf32>
    %397 = arith.addf %395, %396 : vector<16x64xf32>
    %398 = arith.mulf %397, %387 : vector<16x64xf32>
    %cst_118 = arith.constant 0.254829586 : f32
    %399 = vector.broadcast %cst_118 : f32 to vector<16x64xf32>
    %400 = arith.addf %398, %399 : vector<16x64xf32>
    %401 = arith.mulf %400, %387 : vector<16x64xf32>
    %cst_119 = arith.constant 0.000000e+00 : f32
    %402 = vector.broadcast %cst_119 : f32 to vector<16x64xf32>
    %403 = arith.subf %402, %382 : vector<16x64xf32>
    %404 = arith.mulf %403, %382 : vector<16x64xf32>
    %405 = math.exp %404 : vector<16x64xf32>
    %406 = arith.mulf %401, %405 : vector<16x64xf32>
    %cst_120 = arith.constant 1.000000e+00 : f32
    %407 = vector.broadcast %cst_120 : f32 to vector<16x64xf32>
    %408 = arith.subf %407, %406 : vector<16x64xf32>
    %409 = arith.mulf %381, %408 : vector<16x64xf32>
    %cst_121 = arith.constant 1.000000e+00 : f32
    %410 = vector.broadcast %cst_121 : f32 to vector<16x64xf32>
    %411 = arith.addf %410, %409 : vector<16x64xf32>
    %412 = arith.mulf %374, %411 : vector<16x64xf32>
    %413 = arith.truncf %412 : vector<16x64xf32> to vector<16x64xbf16>
    %414 = arith.index_cast %c1_i32 : i32 to index
    %c0_122 = arith.constant 0 : index
    %c0_123 = arith.constant 0 : index
    %415 = vector.load %arg6[%414, %c0_122, %c0_123] : memref<3x64x32xbf16, #tpu.memory_space<vmem>>, vector<1x64x32xbf16>
    %416 = vector.shape_cast %415 : vector<1x64x32xbf16> to vector<64x32xbf16>
    %cst_124 = arith.constant dense<0.000000e+00> : vector<16x32xf32>
    %417 = tpu.matmul %413, %416, %cst_124 {dimension_numbers = #tpu.dot_dimension_numbers<[1], [0], [0], [1], [0, 0, 1, 1], [], []>} : vector<16x64xbf16>, vector<64x32xbf16>, vector<16x32xf32> -> vector<16x32xf32>
    %418 = vector.broadcast %246 : vector<1x32xf32> to vector<16x32xf32>
    %419 = arith.addf %417, %418 : vector<16x32xf32>
    %420 = arith.addf %365, %419 : vector<16x32xf32>
    %cst_125 = arith.constant dense<0.000000e+00> : vector<16xf32>
    %421 = vector.multi_reduction <add>, %420, %cst_125 [1] : vector<16x32xf32> to vector<16xf32>
    %422 = vector.shape_cast %421 : vector<16xf32> to vector<16x1xf32>
    %cst_126 = arith.constant 3.200000e+01 : f32
    %423 = vector.broadcast %cst_126 : f32 to vector<16x1xf32>
    %424 = arith.divf %422, %423 : vector<16x1xf32>
    %425 = vector.broadcast %424 : vector<16x1xf32> to vector<16x32xf32>
    %426 = arith.subf %420, %425 : vector<16x32xf32>
    %427 = arith.mulf %426, %426 : vector<16x32xf32>
    %cst_127 = arith.constant dense<0.000000e+00> : vector<16xf32>
    %428 = vector.multi_reduction <add>, %427, %cst_127 [1] : vector<16x32xf32> to vector<16xf32>
    %429 = vector.shape_cast %428 : vector<16xf32> to vector<16x1xf32>
    %cst_128 = arith.constant 3.200000e+01 : f32
    %430 = vector.broadcast %cst_128 : f32 to vector<16x1xf32>
    %431 = arith.divf %429, %430 : vector<16x1xf32>
    %432 = vector.broadcast %424 : vector<16x1xf32> to vector<16x32xf32>
    %433 = arith.subf %420, %432 : vector<16x32xf32>
    %cst_129 = arith.constant 9.99999996E-13 : f32
    %434 = vector.broadcast %cst_129 : f32 to vector<16x1xf32>
    %435 = arith.addf %431, %434 : vector<16x1xf32>
    %436 = math.rsqrt %435 : vector<16x1xf32>
    %437 = vector.broadcast %436 : vector<16x1xf32> to vector<16x32xf32>
    %438 = arith.mulf %433, %437 : vector<16x32xf32>
    %439 = vector.broadcast %247 : vector<1x32xf32> to vector<16x32xf32>
    %440 = arith.mulf %438, %439 : vector<16x32xf32>
    %441 = vector.broadcast %248 : vector<1x32xf32> to vector<16x32xf32>
    %442 = arith.addf %440, %441 : vector<16x32xf32>
    %c2_i32 = arith.constant 2 : i32
    %443 = arith.index_cast %c2_i32 : i32 to index
    %c0_130 = arith.constant 0 : index
    %c0_131 = arith.constant 0 : index
    %444 = vector.load %arg7[%443, %c0_130, %c0_131] : memref<3x8x96xf32, #tpu.memory_space<vmem>>, vector<1x8x96xf32>
    %445 = vector.shape_cast %444 : vector<1x8x96xf32> to vector<8x96xf32>
    %446 = vector.extract_strided_slice %445 {offsets = [0, 0], sizes = [1, 96], strides = [1, 1]} : vector<8x96xf32> to vector<1x96xf32>
    %447 = vector.extract_strided_slice %445 {offsets = [1, 0], sizes = [1, 32], strides = [1, 1]} : vector<8x96xf32> to vector<1x32xf32>
    %448 = vector.extract_strided_slice %445 {offsets = [2, 0], sizes = [1, 32], strides = [1, 1]} : vector<8x96xf32> to vector<1x32xf32>
    %449 = vector.extract_strided_slice %445 {offsets = [3, 0], sizes = [1, 32], strides = [1, 1]} : vector<8x96xf32> to vector<1x32xf32>
    %450 = vector.extract_strided_slice %445 {offsets = [4, 0], sizes = [1, 64], strides = [1, 1]} : vector<8x96xf32> to vector<1x64xf32>
    %451 = vector.extract_strided_slice %445 {offsets = [5, 0], sizes = [1, 32], strides = [1, 1]} : vector<8x96xf32> to vector<1x32xf32>
    %452 = vector.extract_strided_slice %445 {offsets = [6, 0], sizes = [1, 32], strides = [1, 1]} : vector<8x96xf32> to vector<1x32xf32>
    %453 = vector.extract_strided_slice %445 {offsets = [7, 0], sizes = [1, 32], strides = [1, 1]} : vector<8x96xf32> to vector<1x32xf32>
    %454 = arith.truncf %442 : vector<16x32xf32> to vector<16x32xbf16>
    %455 = arith.index_cast %c2_i32 : i32 to index
    %c0_132 = arith.constant 0 : index
    %c0_133 = arith.constant 0 : index
    %456 = vector.load %arg3[%455, %c0_132, %c0_133] : memref<3x32x96xbf16, #tpu.memory_space<vmem>>, vector<1x32x96xbf16>
    %457 = vector.shape_cast %456 : vector<1x32x96xbf16> to vector<32x96xbf16>
    %cst_134 = arith.constant dense<0.000000e+00> : vector<16x96xf32>
    %458 = tpu.matmul %454, %457, %cst_134 {dimension_numbers = #tpu.dot_dimension_numbers<[1], [0], [0], [1], [0, 0, 1, 1], [], []>} : vector<16x32xbf16>, vector<32x96xbf16>, vector<16x96xf32> -> vector<16x96xf32>
    %459 = vector.broadcast %446 : vector<1x96xf32> to vector<16x96xf32>
    %460 = arith.addf %458, %459 : vector<16x96xf32>
    %461 = vector.extract_strided_slice %460 {offsets = [0, 0], sizes = [16, 32], strides = [1, 1]} : vector<16x96xf32> to vector<16x32xf32>
    %462 = vector.shape_cast %461 : vector<16x32xf32> to vector<2x8x32xf32>
    %463 = vector.extract_strided_slice %460 {offsets = [0, 32], sizes = [16, 32], strides = [1, 1]} : vector<16x96xf32> to vector<16x32xf32>
    %464 = vector.shape_cast %463 : vector<16x32xf32> to vector<2x8x32xf32>
    %465 = vector.extract_strided_slice %460 {offsets = [0, 64], sizes = [16, 32], strides = [1, 1]} : vector<16x96xf32> to vector<16x32xf32>
    %466 = vector.shape_cast %465 : vector<16x32xf32> to vector<2x8x32xf32>
    %467 = vector.extract_strided_slice %462 {offsets = [0, 0, 0], sizes = [2, 8, 8], strides = [1, 1, 1]} : vector<2x8x32xf32> to vector<2x8x8xf32>
    %468 = vector.extract_strided_slice %464 {offsets = [0, 0, 0], sizes = [2, 8, 8], strides = [1, 1, 1]} : vector<2x8x32xf32> to vector<2x8x8xf32>
    %469 = vector.extract_strided_slice %466 {offsets = [0, 0, 0], sizes = [2, 8, 8], strides = [1, 1, 1]} : vector<2x8x32xf32> to vector<2x8x8xf32>
    "tpu.trace_start"() <{level = 10 : i32, message = "bqd,bkd->bqk"}> : () -> ()
    %cst_135 = arith.constant dense<0.000000e+00> : vector<2x8x8xf32>
    %470 = tpu.matmul %467, %468, %cst_135 {dimension_numbers = #tpu.dot_dimension_numbers<[2], [2], [1], [1], [0, 0, 0, 1, 1, 1], [0], [0]>} : vector<2x8x8xf32>, vector<2x8x8xf32>, vector<2x8x8xf32> -> vector<2x8x8xf32>
    "tpu.trace_stop"() : () -> ()
    %cst_136 = arith.constant 0.353553385 : f32
    %471 = vector.broadcast %cst_136 : f32 to vector<2x8x8xf32>
    %472 = arith.mulf %470, %471 : vector<2x8x8xf32>
    %473 = arith.addf %472, %32 : vector<2x8x8xf32>
    %cst_137 = arith.constant dense<0xFF800000> : vector<2x8xf32>
    %474 = vector.multi_reduction <maximumf>, %473, %cst_137 [2] : vector<2x8x8xf32> to vector<2x8xf32>
    %475 = vector.shape_cast %474 : vector<2x8xf32> to vector<2x8x1xf32>
    %476 = vector.broadcast %475 : vector<2x8x1xf32> to vector<2x8x8xf32>
    %477 = arith.subf %473, %476 : vector<2x8x8xf32>
    %478 = math.exp %477 : vector<2x8x8xf32>
    %cst_138 = arith.constant dense<0.000000e+00> : vector<2x8xf32>
    %479 = vector.multi_reduction <add>, %478, %cst_138 [2] : vector<2x8x8xf32> to vector<2x8xf32>
    %480 = vector.shape_cast %479 : vector<2x8xf32> to vector<2x8x1xf32>
    %481 = tpu.reciprocal %480 {approx = true} : vector<2x8x1xf32> -> vector<2x8x1xf32>
    %482 = vector.broadcast %481 : vector<2x8x1xf32> to vector<2x8x8xf32>
    %483 = arith.mulf %478, %482 : vector<2x8x8xf32>
    "tpu.trace_start"() <{level = 10 : i32, message = "bqk,bkd->bqd"}> : () -> ()
    %cst_139 = arith.constant dense<0.000000e+00> : vector<2x8x8xf32>
    %484 = tpu.matmul %483, %469, %cst_139 {dimension_numbers = #tpu.dot_dimension_numbers<[2], [1], [1], [2], [0, 0, 0, 1, 1, 2], [0], [0]>} : vector<2x8x8xf32>, vector<2x8x8xf32>, vector<2x8x8xf32> -> vector<2x8x8xf32>
    "tpu.trace_stop"() : () -> ()
    %485 = vector.extract_strided_slice %462 {offsets = [0, 0, 8], sizes = [2, 8, 8], strides = [1, 1, 1]} : vector<2x8x32xf32> to vector<2x8x8xf32>
    %486 = vector.extract_strided_slice %464 {offsets = [0, 0, 8], sizes = [2, 8, 8], strides = [1, 1, 1]} : vector<2x8x32xf32> to vector<2x8x8xf32>
    %487 = vector.extract_strided_slice %466 {offsets = [0, 0, 8], sizes = [2, 8, 8], strides = [1, 1, 1]} : vector<2x8x32xf32> to vector<2x8x8xf32>
    "tpu.trace_start"() <{level = 10 : i32, message = "bqd,bkd->bqk"}> : () -> ()
    %cst_140 = arith.constant dense<0.000000e+00> : vector<2x8x8xf32>
    %488 = tpu.matmul %485, %486, %cst_140 {dimension_numbers = #tpu.dot_dimension_numbers<[2], [2], [1], [1], [0, 0, 0, 1, 1, 1], [0], [0]>} : vector<2x8x8xf32>, vector<2x8x8xf32>, vector<2x8x8xf32> -> vector<2x8x8xf32>
    "tpu.trace_stop"() : () -> ()
    %cst_141 = arith.constant 0.353553385 : f32
    %489 = vector.broadcast %cst_141 : f32 to vector<2x8x8xf32>
    %490 = arith.mulf %488, %489 : vector<2x8x8xf32>
    %491 = arith.addf %490, %32 : vector<2x8x8xf32>
    %cst_142 = arith.constant dense<0xFF800000> : vector<2x8xf32>
    %492 = vector.multi_reduction <maximumf>, %491, %cst_142 [2] : vector<2x8x8xf32> to vector<2x8xf32>
    %493 = vector.shape_cast %492 : vector<2x8xf32> to vector<2x8x1xf32>
    %494 = vector.broadcast %493 : vector<2x8x1xf32> to vector<2x8x8xf32>
    %495 = arith.subf %491, %494 : vector<2x8x8xf32>
    %496 = math.exp %495 : vector<2x8x8xf32>
    %cst_143 = arith.constant dense<0.000000e+00> : vector<2x8xf32>
    %497 = vector.multi_reduction <add>, %496, %cst_143 [2] : vector<2x8x8xf32> to vector<2x8xf32>
    %498 = vector.shape_cast %497 : vector<2x8xf32> to vector<2x8x1xf32>
    %499 = tpu.reciprocal %498 {approx = true} : vector<2x8x1xf32> -> vector<2x8x1xf32>
    %500 = vector.broadcast %499 : vector<2x8x1xf32> to vector<2x8x8xf32>
    %501 = arith.mulf %496, %500 : vector<2x8x8xf32>
    "tpu.trace_start"() <{level = 10 : i32, message = "bqk,bkd->bqd"}> : () -> ()
    %cst_144 = arith.constant dense<0.000000e+00> : vector<2x8x8xf32>
    %502 = tpu.matmul %501, %487, %cst_144 {dimension_numbers = #tpu.dot_dimension_numbers<[2], [1], [1], [2], [0, 0, 0, 1, 1, 2], [0], [0]>} : vector<2x8x8xf32>, vector<2x8x8xf32>, vector<2x8x8xf32> -> vector<2x8x8xf32>
    "tpu.trace_stop"() : () -> ()
    %503 = vector.extract_strided_slice %462 {offsets = [0, 0, 16], sizes = [2, 8, 8], strides = [1, 1, 1]} : vector<2x8x32xf32> to vector<2x8x8xf32>
    %504 = vector.extract_strided_slice %464 {offsets = [0, 0, 16], sizes = [2, 8, 8], strides = [1, 1, 1]} : vector<2x8x32xf32> to vector<2x8x8xf32>
    %505 = vector.extract_strided_slice %466 {offsets = [0, 0, 16], sizes = [2, 8, 8], strides = [1, 1, 1]} : vector<2x8x32xf32> to vector<2x8x8xf32>
    "tpu.trace_start"() <{level = 10 : i32, message = "bqd,bkd->bqk"}> : () -> ()
    %cst_145 = arith.constant dense<0.000000e+00> : vector<2x8x8xf32>
    %506 = tpu.matmul %503, %504, %cst_145 {dimension_numbers = #tpu.dot_dimension_numbers<[2], [2], [1], [1], [0, 0, 0, 1, 1, 1], [0], [0]>} : vector<2x8x8xf32>, vector<2x8x8xf32>, vector<2x8x8xf32> -> vector<2x8x8xf32>
    "tpu.trace_stop"() : () -> ()
    %cst_146 = arith.constant 0.353553385 : f32
    %507 = vector.broadcast %cst_146 : f32 to vector<2x8x8xf32>
    %508 = arith.mulf %506, %507 : vector<2x8x8xf32>
    %509 = arith.addf %508, %32 : vector<2x8x8xf32>
    %cst_147 = arith.constant dense<0xFF800000> : vector<2x8xf32>
    %510 = vector.multi_reduction <maximumf>, %509, %cst_147 [2] : vector<2x8x8xf32> to vector<2x8xf32>
    %511 = vector.shape_cast %510 : vector<2x8xf32> to vector<2x8x1xf32>
    %512 = vector.broadcast %511 : vector<2x8x1xf32> to vector<2x8x8xf32>
    %513 = arith.subf %509, %512 : vector<2x8x8xf32>
    %514 = math.exp %513 : vector<2x8x8xf32>
    %cst_148 = arith.constant dense<0.000000e+00> : vector<2x8xf32>
    %515 = vector.multi_reduction <add>, %514, %cst_148 [2] : vector<2x8x8xf32> to vector<2x8xf32>
    %516 = vector.shape_cast %515 : vector<2x8xf32> to vector<2x8x1xf32>
    %517 = tpu.reciprocal %516 {approx = true} : vector<2x8x1xf32> -> vector<2x8x1xf32>
    %518 = vector.broadcast %517 : vector<2x8x1xf32> to vector<2x8x8xf32>
    %519 = arith.mulf %514, %518 : vector<2x8x8xf32>
    "tpu.trace_start"() <{level = 10 : i32, message = "bqk,bkd->bqd"}> : () -> ()
    %cst_149 = arith.constant dense<0.000000e+00> : vector<2x8x8xf32>
    %520 = tpu.matmul %519, %505, %cst_149 {dimension_numbers = #tpu.dot_dimension_numbers<[2], [1], [1], [2], [0, 0, 0, 1, 1, 2], [0], [0]>} : vector<2x8x8xf32>, vector<2x8x8xf32>, vector<2x8x8xf32> -> vector<2x8x8xf32>
    "tpu.trace_stop"() : () -> ()
    %521 = vector.extract_strided_slice %462 {offsets = [0, 0, 24], sizes = [2, 8, 8], strides = [1, 1, 1]} : vector<2x8x32xf32> to vector<2x8x8xf32>
    %522 = vector.extract_strided_slice %464 {offsets = [0, 0, 24], sizes = [2, 8, 8], strides = [1, 1, 1]} : vector<2x8x32xf32> to vector<2x8x8xf32>
    %523 = vector.extract_strided_slice %466 {offsets = [0, 0, 24], sizes = [2, 8, 8], strides = [1, 1, 1]} : vector<2x8x32xf32> to vector<2x8x8xf32>
    "tpu.trace_start"() <{level = 10 : i32, message = "bqd,bkd->bqk"}> : () -> ()
    %cst_150 = arith.constant dense<0.000000e+00> : vector<2x8x8xf32>
    %524 = tpu.matmul %521, %522, %cst_150 {dimension_numbers = #tpu.dot_dimension_numbers<[2], [2], [1], [1], [0, 0, 0, 1, 1, 1], [0], [0]>} : vector<2x8x8xf32>, vector<2x8x8xf32>, vector<2x8x8xf32> -> vector<2x8x8xf32>
    "tpu.trace_stop"() : () -> ()
    %cst_151 = arith.constant 0.353553385 : f32
    %525 = vector.broadcast %cst_151 : f32 to vector<2x8x8xf32>
    %526 = arith.mulf %524, %525 : vector<2x8x8xf32>
    %527 = arith.addf %526, %32 : vector<2x8x8xf32>
    %cst_152 = arith.constant dense<0xFF800000> : vector<2x8xf32>
    %528 = vector.multi_reduction <maximumf>, %527, %cst_152 [2] : vector<2x8x8xf32> to vector<2x8xf32>
    %529 = vector.shape_cast %528 : vector<2x8xf32> to vector<2x8x1xf32>
    %530 = vector.broadcast %529 : vector<2x8x1xf32> to vector<2x8x8xf32>
    %531 = arith.subf %527, %530 : vector<2x8x8xf32>
    %532 = math.exp %531 : vector<2x8x8xf32>
    %cst_153 = arith.constant dense<0.000000e+00> : vector<2x8xf32>
    %533 = vector.multi_reduction <add>, %532, %cst_153 [2] : vector<2x8x8xf32> to vector<2x8xf32>
    %534 = vector.shape_cast %533 : vector<2x8xf32> to vector<2x8x1xf32>
    %535 = tpu.reciprocal %534 {approx = true} : vector<2x8x1xf32> -> vector<2x8x1xf32>
    %536 = vector.broadcast %535 : vector<2x8x1xf32> to vector<2x8x8xf32>
    %537 = arith.mulf %532, %536 : vector<2x8x8xf32>
    "tpu.trace_start"() <{level = 10 : i32, message = "bqk,bkd->bqd"}> : () -> ()
    %cst_154 = arith.constant dense<0.000000e+00> : vector<2x8x8xf32>
    %538 = tpu.matmul %537, %523, %cst_154 {dimension_numbers = #tpu.dot_dimension_numbers<[2], [1], [1], [2], [0, 0, 0, 1, 1, 2], [0], [0]>} : vector<2x8x8xf32>, vector<2x8x8xf32>, vector<2x8x8xf32> -> vector<2x8x8xf32>
    "tpu.trace_stop"() : () -> ()
    %539 = tpu.concatenate %484, %502, %520, %538 in 2 : vector<2x8x8xf32>, vector<2x8x8xf32>, vector<2x8x8xf32>, vector<2x8x8xf32> -> vector<2x8x32xf32>
    %540 = vector.shape_cast %539 : vector<2x8x32xf32> to vector<16x32xf32>
    %541 = arith.truncf %540 : vector<16x32xf32> to vector<16x32xbf16>
    %542 = arith.index_cast %c2_i32 : i32 to index
    %c0_155 = arith.constant 0 : index
    %c0_156 = arith.constant 0 : index
    %543 = vector.load %arg4[%542, %c0_155, %c0_156] : memref<3x32x32xbf16, #tpu.memory_space<vmem>>, vector<1x32x32xbf16>
    %544 = vector.shape_cast %543 : vector<1x32x32xbf16> to vector<32x32xbf16>
    %cst_157 = arith.constant dense<0.000000e+00> : vector<16x32xf32>
    %545 = tpu.matmul %541, %544, %cst_157 {dimension_numbers = #tpu.dot_dimension_numbers<[1], [0], [0], [1], [0, 0, 1, 1], [], []>} : vector<16x32xbf16>, vector<32x32xbf16>, vector<16x32xf32> -> vector<16x32xf32>
    %546 = vector.broadcast %447 : vector<1x32xf32> to vector<16x32xf32>
    %547 = arith.addf %545, %546 : vector<16x32xf32>
    %548 = arith.addf %442, %547 : vector<16x32xf32>
    %cst_158 = arith.constant dense<0.000000e+00> : vector<16xf32>
    %549 = vector.multi_reduction <add>, %548, %cst_158 [1] : vector<16x32xf32> to vector<16xf32>
    %550 = vector.shape_cast %549 : vector<16xf32> to vector<16x1xf32>
    %cst_159 = arith.constant 3.200000e+01 : f32
    %551 = vector.broadcast %cst_159 : f32 to vector<16x1xf32>
    %552 = arith.divf %550, %551 : vector<16x1xf32>
    %553 = vector.broadcast %552 : vector<16x1xf32> to vector<16x32xf32>
    %554 = arith.subf %548, %553 : vector<16x32xf32>
    %555 = arith.mulf %554, %554 : vector<16x32xf32>
    %cst_160 = arith.constant dense<0.000000e+00> : vector<16xf32>
    %556 = vector.multi_reduction <add>, %555, %cst_160 [1] : vector<16x32xf32> to vector<16xf32>
    %557 = vector.shape_cast %556 : vector<16xf32> to vector<16x1xf32>
    %cst_161 = arith.constant 3.200000e+01 : f32
    %558 = vector.broadcast %cst_161 : f32 to vector<16x1xf32>
    %559 = arith.divf %557, %558 : vector<16x1xf32>
    %560 = vector.broadcast %552 : vector<16x1xf32> to vector<16x32xf32>
    %561 = arith.subf %548, %560 : vector<16x32xf32>
    %cst_162 = arith.constant 9.99999996E-13 : f32
    %562 = vector.broadcast %cst_162 : f32 to vector<16x1xf32>
    %563 = arith.addf %559, %562 : vector<16x1xf32>
    %564 = math.rsqrt %563 : vector<16x1xf32>
    %565 = vector.broadcast %564 : vector<16x1xf32> to vector<16x32xf32>
    %566 = arith.mulf %561, %565 : vector<16x32xf32>
    %567 = vector.broadcast %448 : vector<1x32xf32> to vector<16x32xf32>
    %568 = arith.mulf %566, %567 : vector<16x32xf32>
    %569 = vector.broadcast %449 : vector<1x32xf32> to vector<16x32xf32>
    %570 = arith.addf %568, %569 : vector<16x32xf32>
    %571 = arith.truncf %570 : vector<16x32xf32> to vector<16x32xbf16>
    %572 = arith.index_cast %c2_i32 : i32 to index
    %c0_163 = arith.constant 0 : index
    %c0_164 = arith.constant 0 : index
    %573 = vector.load %arg5[%572, %c0_163, %c0_164] : memref<3x32x64xbf16, #tpu.memory_space<vmem>>, vector<1x32x64xbf16>
    %574 = vector.shape_cast %573 : vector<1x32x64xbf16> to vector<32x64xbf16>
    %cst_165 = arith.constant dense<0.000000e+00> : vector<16x64xf32>
    %575 = tpu.matmul %571, %574, %cst_165 {dimension_numbers = #tpu.dot_dimension_numbers<[1], [0], [0], [1], [0, 0, 1, 1], [], []>} : vector<16x32xbf16>, vector<32x64xbf16>, vector<16x64xf32> -> vector<16x64xf32>
    %576 = vector.broadcast %450 : vector<1x64xf32> to vector<16x64xf32>
    %577 = arith.addf %575, %576 : vector<16x64xf32>
    %cst_166 = arith.constant 5.000000e-01 : f32
    %578 = vector.broadcast %cst_166 : f32 to vector<16x64xf32>
    %579 = arith.mulf %578, %577 : vector<16x64xf32>
    %cst_167 = arith.constant 0.707106769 : f32
    %580 = vector.broadcast %cst_167 : f32 to vector<16x64xf32>
    %581 = arith.mulf %577, %580 : vector<16x64xf32>
    %cst_168 = arith.constant 0.000000e+00 : f32
    %582 = vector.broadcast %cst_168 : f32 to vector<16x64xf32>
    %583 = arith.cmpf oge, %581, %582 : vector<16x64xf32>
    %cst_169 = arith.constant 1.000000e+00 : f32
    %cst_170 = arith.constant -1.000000e+00 : f32
    %584 = vector.broadcast %cst_169 : f32 to vector<16x64xf32>
    %585 = vector.broadcast %cst_170 : f32 to vector<16x64xf32>
    %586 = arith.select %583, %584, %585 : vector<16x64xi1>, vector<16x64xf32>
    %587 = math.absf %581 : vector<16x64xf32>
    %cst_171 = arith.constant 0.327591091 : f32
    %588 = vector.broadcast %cst_171 : f32 to vector<16x64xf32>
    %589 = arith.mulf %588, %587 : vector<16x64xf32>
    %cst_172 = arith.constant 1.000000e+00 : f32
    %590 = vector.broadcast %cst_172 : f32 to vector<16x64xf32>
    %591 = arith.addf %590, %589 : vector<16x64xf32>
    %592 = tpu.reciprocal %591 {approx = true} : vector<16x64xf32> -> vector<16x64xf32>
    %cst_173 = arith.constant 1.06140542 : f32
    %593 = vector.broadcast %cst_173 : f32 to vector<16x64xf32>
    %594 = arith.mulf %593, %592 : vector<16x64xf32>
    %cst_174 = arith.constant -1.45315206 : f32
    %595 = vector.broadcast %cst_174 : f32 to vector<16x64xf32>
    %596 = arith.addf %594, %595 : vector<16x64xf32>
    %597 = arith.mulf %596, %592 : vector<16x64xf32>
    %cst_175 = arith.constant 1.42141378 : f32
    %598 = vector.broadcast %cst_175 : f32 to vector<16x64xf32>
    %599 = arith.addf %597, %598 : vector<16x64xf32>
    %600 = arith.mulf %599, %592 : vector<16x64xf32>
    %cst_176 = arith.constant -0.284496725 : f32
    %601 = vector.broadcast %cst_176 : f32 to vector<16x64xf32>
    %602 = arith.addf %600, %601 : vector<16x64xf32>
    %603 = arith.mulf %602, %592 : vector<16x64xf32>
    %cst_177 = arith.constant 0.254829586 : f32
    %604 = vector.broadcast %cst_177 : f32 to vector<16x64xf32>
    %605 = arith.addf %603, %604 : vector<16x64xf32>
    %606 = arith.mulf %605, %592 : vector<16x64xf32>
    %cst_178 = arith.constant 0.000000e+00 : f32
    %607 = vector.broadcast %cst_178 : f32 to vector<16x64xf32>
    %608 = arith.subf %607, %587 : vector<16x64xf32>
    %609 = arith.mulf %608, %587 : vector<16x64xf32>
    %610 = math.exp %609 : vector<16x64xf32>
    %611 = arith.mulf %606, %610 : vector<16x64xf32>
    %cst_179 = arith.constant 1.000000e+00 : f32
    %612 = vector.broadcast %cst_179 : f32 to vector<16x64xf32>
    %613 = arith.subf %612, %611 : vector<16x64xf32>
    %614 = arith.mulf %586, %613 : vector<16x64xf32>
    %cst_180 = arith.constant 1.000000e+00 : f32
    %615 = vector.broadcast %cst_180 : f32 to vector<16x64xf32>
    %616 = arith.addf %615, %614 : vector<16x64xf32>
    %617 = arith.mulf %579, %616 : vector<16x64xf32>
    %618 = arith.truncf %617 : vector<16x64xf32> to vector<16x64xbf16>
    %619 = arith.index_cast %c2_i32 : i32 to index
    %c0_181 = arith.constant 0 : index
    %c0_182 = arith.constant 0 : index
    %620 = vector.load %arg6[%619, %c0_181, %c0_182] : memref<3x64x32xbf16, #tpu.memory_space<vmem>>, vector<1x64x32xbf16>
    %621 = vector.shape_cast %620 : vector<1x64x32xbf16> to vector<64x32xbf16>
    %cst_183 = arith.constant dense<0.000000e+00> : vector<16x32xf32>
    %622 = tpu.matmul %618, %621, %cst_183 {dimension_numbers = #tpu.dot_dimension_numbers<[1], [0], [0], [1], [0, 0, 1, 1], [], []>} : vector<16x64xbf16>, vector<64x32xbf16>, vector<16x32xf32> -> vector<16x32xf32>
    %623 = vector.broadcast %451 : vector<1x32xf32> to vector<16x32xf32>
    %624 = arith.addf %622, %623 : vector<16x32xf32>
    %625 = arith.addf %570, %624 : vector<16x32xf32>
    %cst_184 = arith.constant dense<0.000000e+00> : vector<16xf32>
    %626 = vector.multi_reduction <add>, %625, %cst_184 [1] : vector<16x32xf32> to vector<16xf32>
    %627 = vector.shape_cast %626 : vector<16xf32> to vector<16x1xf32>
    %cst_185 = arith.constant 3.200000e+01 : f32
    %628 = vector.broadcast %cst_185 : f32 to vector<16x1xf32>
    %629 = arith.divf %627, %628 : vector<16x1xf32>
    %630 = vector.broadcast %629 : vector<16x1xf32> to vector<16x32xf32>
    %631 = arith.subf %625, %630 : vector<16x32xf32>
    %632 = arith.mulf %631, %631 : vector<16x32xf32>
    %cst_186 = arith.constant dense<0.000000e+00> : vector<16xf32>
    %633 = vector.multi_reduction <add>, %632, %cst_186 [1] : vector<16x32xf32> to vector<16xf32>
    %634 = vector.shape_cast %633 : vector<16xf32> to vector<16x1xf32>
    %cst_187 = arith.constant 3.200000e+01 : f32
    %635 = vector.broadcast %cst_187 : f32 to vector<16x1xf32>
    %636 = arith.divf %634, %635 : vector<16x1xf32>
    %637 = vector.broadcast %629 : vector<16x1xf32> to vector<16x32xf32>
    %638 = arith.subf %625, %637 : vector<16x32xf32>
    %cst_188 = arith.constant 9.99999996E-13 : f32
    %639 = vector.broadcast %cst_188 : f32 to vector<16x1xf32>
    %640 = arith.addf %636, %639 : vector<16x1xf32>
    %641 = math.rsqrt %640 : vector<16x1xf32>
    %642 = vector.broadcast %641 : vector<16x1xf32> to vector<16x32xf32>
    %643 = arith.mulf %638, %642 : vector<16x32xf32>
    %644 = vector.broadcast %452 : vector<1x32xf32> to vector<16x32xf32>
    %645 = arith.mulf %643, %644 : vector<16x32xf32>
    %646 = vector.broadcast %453 : vector<1x32xf32> to vector<16x32xf32>
    %647 = arith.addf %645, %646 : vector<16x32xf32>
    %c3_i32 = arith.constant 3 : i32
    %648 = vector.shape_cast %647 : vector<16x32xf32> to vector<2x8x32xf32>
    %649 = vector.extract_strided_slice %648 {offsets = [0, 0, 0], sizes = [2, 1, 32], strides = [1, 1, 1]} : vector<2x8x32xf32> to vector<2x1x32xf32>
    %650 = vector.shape_cast %649 : vector<2x1x32xf32> to vector<2x32xf32>
    %651 = arith.truncf %650 : vector<2x32xf32> to vector<2x32xbf16>
    %c0_189 = arith.constant 0 : index
    %c0_190 = arith.constant 0 : index
    %652 = vector.load %arg8[%c0_189, %c0_190] : memref<32x32xbf16, #tpu.memory_space<vmem>>, vector<32x32xbf16>
    %cst_191 = arith.constant dense<0.000000e+00> : vector<2x32xf32>
    %653 = tpu.matmul %651, %652, %cst_191 {dimension_numbers = #tpu.dot_dimension_numbers<[1], [0], [0], [1], [0, 0, 1, 1], [], []>} : vector<2x32xbf16>, vector<32x32xbf16>, vector<2x32xf32> -> vector<2x32xf32>
    %c0_192 = arith.constant 0 : index
    %c0_193 = arith.constant 0 : index
    %654 = vector.load %arg9[%c0_192, %c0_193] : memref<1x32xf32, #tpu.memory_space<vmem>>, vector<1x32xf32>
    %655 = vector.broadcast %654 : vector<1x32xf32> to vector<2x32xf32>
    %656 = arith.addf %653, %655 : vector<2x32xf32>
    %657 = math.tanh %656 : vector<2x32xf32>
    %658 = arith.truncf %657 : vector<2x32xf32> to vector<2x32xbf16>
    %c0_194 = arith.constant 0 : index
    %c0_195 = arith.constant 0 : index
    %659 = vector.load %arg10[%c0_194, %c0_195] : memref<32x128xbf16, #tpu.memory_space<vmem>>, vector<32x128xbf16>
    %cst_196 = arith.constant dense<0.000000e+00> : vector<2x128xf32>
    %660 = tpu.matmul %658, %659, %cst_196 {dimension_numbers = #tpu.dot_dimension_numbers<[1], [0], [0], [1], [0, 0, 1, 1], [], []>} : vector<2x32xbf16>, vector<32x128xbf16>, vector<2x128xf32> -> vector<2x128xf32>
    %c0_197 = arith.constant 0 : index
    %c0_198 = arith.constant 0 : index
    %661 = vector.load %arg11[%c0_197, %c0_198] : memref<1x128xf32, #tpu.memory_space<vmem>>, vector<1x128xf32>
    %662 = vector.broadcast %661 : vector<1x128xf32> to vector<2x128xf32>
    %663 = arith.addf %660, %662 : vector<2x128xf32>
    %c0_199 = arith.constant 0 : index
    %c0_200 = arith.constant 0 : index
    %664 = vector.load %arg12[%c0_199, %c0_200] : memref<2x128xf32, #tpu.memory_space<vmem>>, vector<2x128xf32>
    tpu.vector_store %arg12[%c0_199, %c0_200], %663 {strides = array<i32>} : memref<2x128xf32, #tpu.memory_space<vmem>>, vector<2x128xf32>,
    return
  }
}

</mosaic_0001>

<llo_original>
// kernel: forward.1
$region0: #{forward.1}
  #allocation0 [shape = 'u32[]', space=smem, size = 0x4, offset = 0x4, fixed_abs, tag = 'smem constant byte address 0x4 - core index']
  #allocation1 [shape = 'u32[144,128]{1,0:T(1,128)}', space=vmem, size = 0x12000, scoped, tag = 'internal scratch']
  %s0 = inlined_call_operand.vmem [shape: f32[16,32], index: 0, kind: input, shape index: {}]
  %s1 = inlined_call_operand.vmem [shape: f32[2,8], index: 1, kind: input, shape index: {}]
  %s2 = inlined_call_operand.vmem [shape: f32[2,32], index: 2, kind: input, shape index: {}]
  %s3 = inlined_call_operand.vmem [shape: bf16[3,32,96], index: 3, kind: input, shape index: {}]
  %s4 = inlined_call_operand.vmem [shape: bf16[3,32,32], index: 4, kind: input, shape index: {}]
  %s5 = inlined_call_operand.vmem [shape: bf16[3,32,64], index: 5, kind: input, shape index: {}]
  %s6 = inlined_call_operand.vmem [shape: bf16[3,64,32], index: 6, kind: input, shape index: {}]
  %s7 = inlined_call_operand.vmem [shape: f32[3,8,96], index: 7, kind: input, shape index: {}]
  %s8 = inlined_call_operand.vmem [shape: bf16[32,32], index: 8, kind: input, shape index: {}]
  %s9 = inlined_call_operand.vmem [shape: f32[1,32], index: 9, kind: input, shape index: {}]
  %s10 = inlined_call_operand.vmem [shape: bf16[32,128], index: 10, kind: input, shape index: {}]
  %s11 = inlined_call_operand.vmem [shape: f32[1,128], index: 11, kind: input, shape index: {}]
  %s12 = inlined_call_operand.vmem [shape: f32[2,128], index: 12, kind: output, shape index: {}]
  %s13 = sld [smem:[#allocation0]]
  $region58: #{forward.1} parent=0
    _
  %s15 = ssub.s32 1, %s13
  %s16 = scalar_select 0, %s15, %s13
  // Predicated region
  $region2: #{forward.1} parent=0 // pred_check
    _
  $region3: #{forward.1} parent=0 // pred_check_branch
    %18 = sbr.rel (0) target = $region5
  $region4: #{forward.1} parent=0 // pred_region
    _
  $region5: #{forward.1} parent=0 // pred_fallthru
    _
  // Predicated region
  $region6: #{forward.1} parent=0 // pred_check
    _
  $region7: #{forward.1} parent=0 // pred_check_branch
    %20 = sbr.rel (0) target = $region9
  $region8: #{forward.1} parent=0 // pred_region
    _
  $region9: #{forward.1} parent=0 // pred_fallthru
    _
  // Predicated region
  $region10: #{forward.1} parent=0 // pred_check
    _
  $region11: #{forward.1} parent=0 // pred_check_branch
    %22 = sbr.rel (0) target = $region13
  $region12: #{forward.1} parent=0 // pred_region
    _
  $region13: #{forward.1} parent=0 // pred_fallthru
    _
  // Predicated region
  $region14: #{forward.1} parent=0 // pred_check
    _
  $region15: #{forward.1} parent=0 // pred_check_branch
    %24 = sbr.rel (0) target = $region17
  $region16: #{forward.1} parent=0 // pred_region
    _
  $region17: #{forward.1} parent=0 // pred_fallthru
    _
  // Predicated region
  $region18: #{forward.1} parent=0 // pred_check
    _
  $region19: #{forward.1} parent=0 // pred_check_branch
    %26 = sbr.rel (0) target = $region21
  $region20: #{forward.1} parent=0 // pred_region
    _
  $region21: #{forward.1} parent=0 // pred_fallthru
    _
  // Predicated region
  $region22: #{forward.1} parent=0 // pred_check
    _
  $region23: #{forward.1} parent=0 // pred_check_branch
    %28 = sbr.rel (0) target = $region25
  $region24: #{forward.1} parent=0 // pred_region
    _
  $region25: #{forward.1} parent=0 // pred_fallthru
    _
  // Predicated region
  $region26: #{forward.1} parent=0 // pred_check
    _
  $region27: #{forward.1} parent=0 // pred_check_branch
    %30 = sbr.rel (0) target = $region29
  $region28: #{forward.1} parent=0 // pred_region
    _
  $region29: #{forward.1} parent=0 // pred_fallthru
    _
  // Predicated region
  $region30: #{forward.1} parent=0 // pred_check
    _
  $region31: #{forward.1} parent=0 // pred_check_branch
    %32 = sbr.rel (0) target = $region33
  $region32: #{forward.1} parent=0 // pred_region
    _
  $region33: #{forward.1} parent=0 // pred_fallthru
    _
  // Predicated region
  $region34: #{forward.1} parent=0 // pred_check
    _
  $region35: #{forward.1} parent=0 // pred_check_branch
    %34 = sbr.rel (0) target = $region37
  $region36: #{forward.1} parent=0 // pred_region
    _
  $region37: #{forward.1} parent=0 // pred_fallthru
    _
  // Predicated region
  $region38: #{forward.1} parent=0 // pred_check
    _
  $region39: #{forward.1} parent=0 // pred_check_branch
    %36 = sbr.rel (0) target = $region41
  $region40: #{forward.1} parent=0 // pred_region
    _
  $region41: #{forward.1} parent=0 // pred_fallthru
    _
  // Predicated region
  $region42: #{forward.1} parent=0 // pred_check
    _
  $region43: #{forward.1} parent=0 // pred_check_branch
    %38 = sbr.rel (0) target = $region45
  $region44: #{forward.1} parent=0 // pred_region
    _
  $region45: #{forward.1} parent=0 // pred_fallthru
    _
  // Predicated region
  $region46: #{forward.1} parent=0 // pred_check
    _
  $region47: #{forward.1} parent=0 // pred_check_branch
    %40 = sbr.rel (0) target = $region49
  $region48: #{forward.1} parent=0 // pred_region
    _
  $region49: #{forward.1} parent=0 // pred_fallthru
    _
  %v42 = vld [vmem:[%s0] sm:$0xff]
  %v43 = vld [vmem:[%s0 + $0x8] sm:$0xff]
  %v44 = vld [vmem:[%s2] sm:$0x1]
  %v45 = vld [vmem:[%s2 + $0x1] sm:$0x1]
  %vm46 = vcmask 261120
  %v47 = vsel %vm46, %v42, 0.0
  %48 = vadd.xlane.f32.xlu0 %v47
  %v49 = vpop.xlane.xlu0 %48
  %v50 = vsel %vm46, %v43, 0.0
  %51 = vadd.xlane.f32.xlu0 %v50
  %v52 = vpop.xlane.xlu0 %51
  %v53 = vrcp.pop 32.0
  %v54 = vmul.f32 %v49, %v53
  %v55 = vmul.f32 %v52, %v53
  %v56 = vsub.f32 %v42, %v54
  %v57 = vsub.f32 %v43, %v55
  %v58 = vmul.f32 %v56, %v56
  %v59 = vmul.f32 %v57, %v57
  %v60 = vsel %vm46, %v58, 0.0
  %61 = vadd.xlane.f32.xlu0 %v60
  %v62 = vpop.xlane.xlu0 %61
  %v63 = vsel %vm46, %v59, 0.0
  %64 = vadd.xlane.f32.xlu0 %v63
  %v65 = vpop.xlane.xlu0 %64
  %v66 = vmul.f32 %v62, %v53
  %v67 = vmul.f32 %v65, %v53
  %v68 = vadd.f32 %v66, 1e-12
  %v69 = vadd.f32 %v67, 1e-12
  %v70 = vrsqrt.pop %v68
  %v71 = vrsqrt.pop %v69
  %v72 = vmul.f32 %v56, %v70
  %v73 = vmul.f32 %v57, %v71
  %v74 = vlaneseq
  %v75 = vshrl.u32 %v74, 7
  %v76 = vsub.s32 0, %v75
  %v77 = vrot.slane %v44, %v76
  %v78 = vmul.f32 %v72, %v77
  %v79 = vmul.f32 %v73, %v77
  %v80 = vlaneseq
  %v81 = vshrl.u32 %v80, 7
  %v82 = vsub.s32 0, %v81
  %v83 = vrot.slane %v45, %v82
  %v84 = vadd.f32 %v78, %v83
  %v85 = vadd.f32 %v79, %v83
  %v86 = vld [vmem:[%s1] sm:$0x3]
  %v87 = vsub.f32 1.0, %v86
  %v88 = vmul.f32 %v87, -1e+09
  %v91 = vunpack.c.l.s4 1966171168
  %v92 = vunpack.c.0.s8 %v91
  %v93 = vlaneseq
  %v94 = vshrl.u32 %v93, 7
  %v95 = vsub.s32 %v92, %v94
  %v96 = vrot.slane %v88, %v95
  %v97 = vcombine.high %v96, %v96
  %v99 = vunpack.c.l.s4 1966171168
  %v100 = vunpack.c.0.s8 %v99
  %v101 = vlaneseq
  %v102 = vshrl.u32 %v101, 7
  %v103 = vsub.s32 %v100, %v102
  %v104 = vrot.slane %v96, %v103
  %v106 = vunpack.c.l.s4 1966171168
  %v107 = vunpack.c.0.s8 %v106
  %v108 = vlaneseq
  %v109 = vshrl.u32 %v108, 7
  %v110 = vsub.s32 %v107, %v109
  %v111 = vrot.slane %v97, %v110
  %v112 = vlaneseq
  %v113 = vshrl.u32 %v112, 7
  %v114 = vsub.s32 0, %v113
  %v115 = vrot.slane %v104, %v114
  %v116 = vlaneseq
  %v117 = vshrl.u32 %v116, 7
  %v118 = vsub.s32 0, %v117
  %v119 = vrot.slane %v111, %v118
  %v122 = vld [vmem:[%s7] sm:$0xff]
  %v123 = vpack.c.bf16 %v85, %v84
  %v124 = vld [vmem:[%s3] sm:$0xf]
  %v125 = vld [vmem:[%s3 + $0x4] sm:$0xf]
  %v126 = vld [vmem:[%s3 + $0x8] sm:$0xf]
  %v127 = vld [vmem:[%s3 + $0xc] sm:$0xf]
  %v128 = vlaneseq
  %v129 = vshrl.u32 %v128, 7
  %v130 = vsub.s32 0, %v129
  %v131 = vrot.slane %v122, %v130
  %v136 = vunpack.c.l.b16 %v124
  %v137 = vunpack.c.l.b16 %v125
  %v138 = vunpack.c.l.b16 %v126
  %v139 = vunpack.c.l.b16 %v127
  %v140 = vpack.c.b16 %v137, %v136
  %v141 = vpack.c.b16 %v139, %v138
  %v145 = vsel %vm46, %v123, 0
  %147 = vmatprep.subr.bf16.mxu0 0
  %148 = vmatpush1.bf16.msra.mxu0 0
  %149 = vmatprep.subr.bf16.mxu0 0
  %150 = vmatpush1.bf16.msra.mxu0 0
  %151 = vmatprep.subr.bf16.mxu0 0
  %152 = vmatpush1.bf16.msra.mxu0 0
  %153 = vmatprep.subr.bf16.mxu0 0
  %154 = vmatpush1.bf16.msra.mxu0 0
  %155 = vmatprep.subr.bf16.mxu0 0
  %156 = vmatpush1.bf16.msra.mxu0 0
  %157 = vmatprep.subr.bf16.mxu0 0
  %158 = vmatpush1.bf16.msra.mxu0 0
  %159 = vmatprep.subr.bf16.mxu0 0
  %160 = vmatpush1.bf16.msra.mxu0 %v141
  %161 = vmatprep.subr.bf16.mxu0 0
  %162 = vmatpush1.bf16.msra.mxu0 %v140
  %163 = vmatprep.subr.bf16.mxu0 0
  %164 = vmatpush2.bf16.msra.mxu0 0
  %165 = vmatprep.subr.bf16.mxu0 0
  %166 = vmatpush2.bf16.msra.mxu0 0
  %167 = vmatprep.subr.bf16.mxu0 0
  %168 = vmatpush2.bf16.msra.mxu0 0
  %169 = vmatprep.subr.bf16.mxu0 0
  %170 = vmatpush2.bf16.msra.mxu0 0
  %171 = vmatprep.subr.bf16.mxu0 0
  %172 = vmatpush2.bf16.msra.mxu0 0
  %173 = vmatprep.subr.bf16.mxu0 0
  %174 = vmatpush2.bf16.msra.mxu0 0
  %175 = vmatprep.subr.bf16.mxu0 0
  %176 = vmatpush2.bf16.msra.mxu0 0
  %177 = vmatprep.subr.bf16.mxu0 0
  %178 = vmatpush2.bf16.msra.mxu0 0
  %179 = vmatprep.mubr.bf16.mxu0 0
  %180 = vmatmul.mubr.bf16.gmra.mxu0 %v145
  %v181 = vpop.f32.mrf.mxu0
  %v182 = vadd.f32 %v131, %v181
  %v183 = vpop.f32.mrf.mxu0
  %v184 = vpop.f32.mrf.mxu0
  %v185 = vadd.f32 %v131, %v184
  %v186 = vpop.f32.mrf.mxu0
  %187 = vdwg.mxu0
  %189 = vrot.lane.b32.xlu0 %v182, 96
  %v190 = vpop.permute.xlu0 %189
  %vm191 = vcmask 64512
  %v192 = vsel %vm191, %v182, 0
  %v194 = vsel %vm191, %v190, 0
  %196 = vmatprep.subr.mxu0 0.0
  %197 = vmatpush1.xpose.msra.mxu0 0.0
  %198 = vmatprep.subr.mxu0 0.0
  %199 = vmatpush1.xpose.msra.mxu0 0.0
  %200 = vmatprep.subr.mxu0 0.0
  %201 = vmatpush1.xpose.msra.mxu0 0.0
  %202 = vmatprep.subr.mxu0 0.0
  %203 = vmatpush1.xpose.msra.mxu0 0.0
  %204 = vmatprep.subr.mxu0 0.0
  %205 = vmatpush1.xpose.msra.mxu0 0.0
  %206 = vmatprep.subr.mxu0 0.0
  %207 = vmatpush1.xpose.msra.mxu0 0.0
  %208 = vmatprep.subr.mxu0 0.0
  %209 = vmatpush1.xpose.msra.mxu0 0.0
  %210 = vmatprep.subr.mxu0 0.0
  %211 = vmatpush1.xpose.msra.mxu0 0.0
  %212 = vmatprep.subr.mxu0 0.0
  %213 = vmatpush1.xpose.msra.mxu0 0.0
  %214 = vmatprep.subr.mxu0 0.0
  %215 = vmatpush1.xpose.msra.mxu0 0.0
  %216 = vmatprep.subr.mxu0 0.0
  %217 = vmatpush1.xpose.msra.mxu0 0.0
  %218 = vmatprep.subr.mxu0 0.0
  %219 = vmatpush1.xpose.msra.mxu0 0.0
  %220 = vmatprep.subr.mxu0 0.0
  %221 = vmatpush1.xpose.msra.mxu0 0.0
  %222 = vmatprep.subr.mxu0 0.0
  %223 = vmatpush1.xpose.msra.mxu0 0.0
  %224 = vmatprep.subr.mxu0 0.0
  %225 = vmatpush1.xpose.msra.mxu0 0.0
  %226 = vmatprep.subr.mxu0 0.0
  %227 = vmatpush1.xpose.msra.mxu0 %v194
  %228 = vmatprep.subr.mxu0 0.0
  %229 = vmatpush2.xpose.msra.mxu0 0.0
  %230 = vmatprep.subr.mxu0 0.0
  %231 = vmatpush2.xpose.msra.mxu0 0.0
  %232 = vmatprep.subr.mxu0 0.0
  %233 = vmatpush2.xpose.msra.mxu0 0.0
  %234 = vmatprep.subr.mxu0 0.0
  %235 = vmatpush2.xpose.msra.mxu0 0.0
  %236 = vmatprep.subr.mxu0 0.0
  %237 = vmatpush2.xpose.msra.mxu0 0.0
  %238 = vmatprep.subr.mxu0 0.0
  %239 = vmatpush2.xpose.msra.mxu0 0.0
  %240 = vmatprep.subr.mxu0 0.0
  %241 = vmatpush2.xpose.msra.mxu0 0.0
  %242 = vmatprep.subr.mxu0 0.0
  %243 = vmatpush2.xpose.msra.mxu0 0.0
  %244 = vmatprep.subr.mxu0 0.0
  %245 = vmatpush2.xpose.msra.mxu0 0.0
  %246 = vmatprep.subr.mxu0 0.0
  %247 = vmatpush2.xpose.msra.mxu0 0.0
  %248 = vmatprep.subr.mxu0 0.0
  %249 = vmatpush2.xpose.msra.mxu0 0.0
  %250 = vmatprep.subr.mxu0 0.0
  %251 = vmatpush2.xpose.msra.mxu0 0.0
  %252 = vmatprep.subr.mxu0 0.0
  %253 = vmatpush2.xpose.msra.mxu0 0.0
  %254 = vmatprep.subr.mxu0 0.0
  %255 = vmatpush2.xpose.msra.mxu0 0.0
  %256 = vmatprep.subr.mxu0 0.0
  %257 = vmatpush2.xpose.msra.mxu0 0.0
  %258 = vmatprep.subr.mxu0 0.0
  %259 = vmatpush2.xpose.msra.mxu0 0.0
  %260 = vmatprep.mubr.f32.mxu0 0.0
  %261 = vmatmul.mubr.f32.gmra.mxu0 %v192
  %v262 = vpop.f32.mrf.mxu0
  %v263 = vadd.f32 0.0, %v262
  %v264 = vpop.f32.mrf.mxu0
  %265 = vdwg.mxu0
  %267 = vrot.lane.b32.xlu0 %v185, 96
  %v268 = vpop.permute.xlu0 %267
  %v269 = vsel %vm191, %v185, 0
  %v271 = vsel %vm191, %v268, 0
  %273 = vmatprep.subr.mxu0 0.0
  %274 = vmatpush1.xpose.msra.mxu0 0.0
  %275 = vmatprep.subr.mxu0 0.0
  %276 = vmatpush1.xpose.msra.mxu0 0.0
  %277 = vmatprep.subr.mxu0 0.0
  %278 = vmatpush1.xpose.msra.mxu0 0.0
  %279 = vmatprep.subr.mxu0 0.0
  %280 = vmatpush1.xpose.msra.mxu0 0.0
  %281 = vmatprep.subr.mxu0 0.0
  %282 = vmatpush1.xpose.msra.mxu0 0.0
  %283 = vmatprep.subr.mxu0 0.0
  %284 = vmatpush1.xpose.msra.mxu0 0.0
  %285 = vmatprep.subr.mxu0 0.0
  %286 = vmatpush1.xpose.msra.mxu0 0.0
  %287 = vmatprep.subr.mxu0 0.0
  %288 = vmatpush1.xpose.msra.mxu0 0.0
  %289 = vmatprep.subr.mxu0 0.0
  %290 = vmatpush1.xpose.msra.mxu0 0.0
  %291 = vmatprep.subr.mxu0 0.0
  %292 = vmatpush1.xpose.msra.mxu0 0.0
  %293 = vmatprep.subr.mxu0 0.0
  %294 = vmatpush1.xpose.msra.mxu0 0.0
  %295 = vmatprep.subr.mxu0 0.0
  %296 = vmatpush1.xpose.msra.mxu0 0.0
  %297 = vmatprep.subr.mxu0 0.0
  %298 = vmatpush1.xpose.msra.mxu0 0.0
  %299 = vmatprep.subr.mxu0 0.0
  %300 = vmatpush1.xpose.msra.mxu0 0.0
  %301 = vmatprep.subr.mxu0 0.0
  %302 = vmatpush1.xpose.msra.mxu0 0.0
  %303 = vmatprep.subr.mxu0 0.0
  %304 = vmatpush1.xpose.msra.mxu0 %v271
  %305 = vmatprep.subr.mxu0 0.0
  %306 = vmatpush2.xpose.msra.mxu0 0.0
  %307 = vmatprep.subr.mxu0 0.0
  %308 = vmatpush2.xpose.msra.mxu0 0.0
  %309 = vmatprep.subr.mxu0 0.0
  %310 = vmatpush2.xpose.msra.mxu0 0.0
  %311 = vmatprep.subr.mxu0 0.0
  %312 = vmatpush2.xpose.msra.mxu0 0.0
  %313 = vmatprep.subr.mxu0 0.0
  %314 = vmatpush2.xpose.msra.mxu0 0.0
  %315 = vmatprep.subr.mxu0 0.0
  %316 = vmatpush2.xpose.msra.mxu0 0.0
  %317 = vmatprep.subr.mxu0 0.0
  %318 = vmatpush2.xpose.msra.mxu0 0.0
  %319 = vmatprep.subr.mxu0 0.0
  %320 = vmatpush2.xpose.msra.mxu0 0.0
  %321 = vmatprep.subr.mxu0 0.0
  %322 = vmatpush2.xpose.msra.mxu0 0.0
  %323 = vmatprep.subr.mxu0 0.0
  %324 = vmatpush2.xpose.msra.mxu0 0.0
  %325 = vmatprep.subr.mxu0 0.0
  %326 = vmatpush2.xpose.msra.mxu0 0.0
  %327 = vmatprep.subr.mxu0 0.0
  %328 = vmatpush2.xpose.msra.mxu0 0.0
  %329 = vmatprep.subr.mxu0 0.0
  %330 = vmatpush2.xpose.msra.mxu0 0.0
  %331 = vmatprep.subr.mxu0 0.0
  %332 = vmatpush2.xpose.msra.mxu0 0.0
  %333 = vmatprep.subr.mxu0 0.0
  %334 = vmatpush2.xpose.msra.mxu0 0.0
  %335 = vmatprep.subr.mxu0 0.0
  %336 = vmatpush2.xpose.msra.mxu0 0.0
  %337 = vmatprep.mubr.f32.mxu0 0.0
  %338 = vmatmul.mubr.f32.gmra.mxu0 %v269
  %v339 = vpop.f32.mrf.mxu0
  %v340 = vadd.f32 0.0, %v339
  %v341 = vpop.f32.mrf.mxu0
  %342 = vdwg.mxu0
  %v343 = vmul.f32 %v263, 0.35355338
  %v344 = vmul.f32 %v340, 0.35355338
  %v345 = vadd.f32 %v343, %v115
  %v346 = vadd.f32 %v344, %v119
  %v347 = vsel %vm191, %v345, -inf
  %348 = vmax.xlane.f32.xlu0 %v347
  %v349 = vpop.xlane.xlu0 %348
  %v350 = vsel %vm191, %v346, -inf
  %351 = vmax.xlane.f32.xlu0 %v350
  %v352 = vpop.xlane.xlu0 %351
  %v353 = vsub.f32 %v345, %v349
  %v354 = vsub.f32 %v346, %v352
  %v355 = vmul.f32 %v353, 1.442695
  %v356 = vpow.pop %v355
  %v357 = vmul.f32 %v354, 1.442695
  %v358 = vpow.pop %v357
  %v359 = vsel %vm191, %v356, 0.0
  %360 = vadd.xlane.f32.xlu0 %v359
  %v361 = vpop.xlane.xlu0 %360
  %v362 = vsel %vm191, %v358, 0.0
  %363 = vadd.xlane.f32.xlu0 %v362
  %v364 = vpop.xlane.xlu0 %363
  %v365 = vrcp.pop %v361
  %v366 = vrcp.pop %v364
  %v367 = vmul.f32 %v356, %v365
  %v368 = vmul.f32 %v358, %v366
  %369 = vrot.lane.b32.xlu0 %v182, 64
  %v370 = vpop.permute.xlu0 %369
  %v373 = vsel %vm191, %v367, 0
  %375 = vmatprep.subr.mxu0 0.0
  %376 = vmatpush1.msra.mxu0 0.0
  %377 = vmatprep.subr.mxu0 0.0
  %378 = vmatpush1.msra.mxu0 0.0
  %379 = vmatprep.subr.mxu0 0.0
  %380 = vmatpush1.msra.mxu0 0.0
  %381 = vmatprep.subr.mxu0 0.0
  %382 = vmatpush1.msra.mxu0 0.0
  %383 = vmatprep.subr.mxu0 0.0
  %384 = vmatpush1.msra.mxu0 0.0
  %385 = vmatprep.subr.mxu0 0.0
  %386 = vmatpush1.msra.mxu0 0.0
  %387 = vmatprep.subr.mxu0 0.0
  %388 = vmatpush1.msra.mxu0 0.0
  %389 = vmatprep.subr.mxu0 0.0
  %390 = vmatpush1.msra.mxu0 0.0
  %391 = vmatprep.subr.mxu0 0.0
  %392 = vmatpush1.msra.mxu0 0.0
  %393 = vmatprep.subr.mxu0 0.0
  %394 = vmatpush1.msra.mxu0 0.0
  %395 = vmatprep.subr.mxu0 0.0
  %396 = vmatpush1.msra.mxu0 0.0
  %397 = vmatprep.subr.mxu0 0.0
  %398 = vmatpush1.msra.mxu0 0.0
  %399 = vmatprep.subr.mxu0 0.0
  %400 = vmatpush1.msra.mxu0 0.0
  %401 = vmatprep.subr.mxu0 0.0
  %402 = vmatpush1.msra.mxu0 0.0
  %403 = vmatprep.subr.mxu0 0.0
  %404 = vmatpush1.msra.mxu0 0.0
  %405 = vmatprep.subr.mxu0 0.0
  %406 = vmatpush1.msra.mxu0 %v370
  %407 = vmatprep.subr.mxu0 0.0
  %408 = vmatpush2.msra.mxu0 0.0
  %409 = vmatprep.subr.mxu0 0.0
  %410 = vmatpush2.msra.mxu0 0.0
  %411 = vmatprep.subr.mxu0 0.0
  %412 = vmatpush2.msra.mxu0 0.0
  %413 = vmatprep.subr.mxu0 0.0
  %414 = vmatpush2.msra.mxu0 0.0
  %415 = vmatprep.subr.mxu0 0.0
  %416 = vmatpush2.msra.mxu0 0.0
  %417 = vmatprep.subr.mxu0 0.0
  %418 = vmatpush2.msra.mxu0 0.0
  %419 = vmatprep.subr.mxu0 0.0
  %420 = vmatpush2.msra.mxu0 0.0
  %421 = vmatprep.subr.mxu0 0.0
  %422 = vmatpush2.msra.mxu0 0.0
  %423 = vmatprep.subr.mxu0 0.0
  %424 = vmatpush2.msra.mxu0 0.0
  %425 = vmatprep.subr.mxu0 0.0
  %426 = vmatpush2.msra.mxu0 0.0
  %427 = vmatprep.subr.mxu0 0.0
  %428 = vmatpush2.msra.mxu0 0.0
  %429 = vmatprep.subr.mxu0 0.0
  %430 = vmatpush2.msra.mxu0 0.0
  %431 = vmatprep.subr.mxu0 0.0
  %432 = vmatpush2.msra.mxu0 0.0
  %433 = vmatprep.subr.mxu0 0.0
  %434 = vmatpush2.msra.mxu0 0.0
  %435 = vmatprep.subr.mxu0 0.0
  %436 = vmatpush2.msra.mxu0 0.0
  %437 = vmatprep.subr.mxu0 0.0
  %438 = vmatpush2.msra.mxu0 0.0
  %439 = vmatprep.mubr.f32.mxu0 0.0
  %440 = vmatmul.mubr.f32.gmra.mxu0 %v373
  %v441 = vpop.f32.mrf.mxu0
  %v442 = vadd.f32 0.0, %v441
  %v443 = vpop.f32.mrf.mxu0
  %444 = vdwg.mxu0
  %445 = vrot.lane.b32.xlu0 %v185, 64
  %v446 = vpop.permute.xlu0 %445
  %v449 = vsel %vm191, %v368, 0
  %451 = vmatprep.subr.mxu0 0.0
  %452 = vmatpush1.msra.mxu0 0.0
  %453 = vmatprep.subr.mxu0 0.0
  %454 = vmatpush1.msra.mxu0 0.0
  %455 = vmatprep.subr.mxu0 0.0
  %456 = vmatpush1.msra.mxu0 0.0
  %457 = vmatprep.subr.mxu0 0.0
  %458 = vmatpush1.msra.mxu0 0.0
  %459 = vmatprep.subr.mxu0 0.0
  %460 = vmatpush1.msra.mxu0 0.0
  %461 = vmatprep.subr.mxu0 0.0
  %462 = vmatpush1.msra.mxu0 0.0
  %463 = vmatprep.subr.mxu0 0.0
  %464 = vmatpush1.msra.mxu0 0.0
  %465 = vmatprep.subr.mxu0 0.0
  %466 = vmatpush1.msra.mxu0 0.0
  %467 = vmatprep.subr.mxu0 0.0
  %468 = vmatpush1.msra.mxu0 0.0
  %469 = vmatprep.subr.mxu0 0.0
  %470 = vmatpush1.msra.mxu0 0.0
  %471 = vmatprep.subr.mxu0 0.0
  %472 = vmatpush1.msra.mxu0 0.0
  %473 = vmatprep.subr.mxu0 0.0
  %474 = vmatpush1.msra.mxu0 0.0
  %475 = vmatprep.subr.mxu0 0.0
  %476 = vmatpush1.msra.mxu0 0.0
  %477 = vmatprep.subr.mxu0 0.0
  %478 = vmatpush1.msra.mxu0 0.0
  %479 = vmatprep.subr.mxu0 0.0
  %480 = vmatpush1.msra.mxu0 0.0
  %481 = vmatprep.subr.mxu0 0.0
  %482 = vmatpush1.msra.mxu0 %v446
  %483 = vmatprep.subr.mxu0 0.0
  %484 = vmatpush2.msra.mxu0 0.0
  %485 = vmatprep.subr.mxu0 0.0
  %486 = vmatpush2.msra.mxu0 0.0
  %487 = vmatprep.subr.mxu0 0.0
  %488 = vmatpush2.msra.mxu0 0.0
  %489 = vmatprep.subr.mxu0 0.0
  %490 = vmatpush2.msra.mxu0 0.0
  %491 = vmatprep.subr.mxu0 0.0
  %492 = vmatpush2.msra.mxu0 0.0
  %493 = vmatprep.subr.mxu0 0.0
  %494 = vmatpush2.msra.mxu0 0.0
  %495 = vmatprep.subr.mxu0 0.0
  %496 = vmatpush2.msra.mxu0 0.0
  %497 = vmatprep.subr.mxu0 0.0
  %498 = vmatpush2.msra.mxu0 0.0
  %499 = vmatprep.subr.mxu0 0.0
  %500 = vmatpush2.msra.mxu0 0.0
  %501 = vmatprep.subr.mxu0 0.0
  %502 = vmatpush2.msra.mxu0 0.0
  %503 = vmatprep.subr.mxu0 0.0
  %504 = vmatpush2.msra.mxu0 0.0
  %505 = vmatprep.subr.mxu0 0.0
  %506 = vmatpush2.msra.mxu0 0.0
  %507 = vmatprep.subr.mxu0 0.0
  %508 = vmatpush2.msra.mxu0 0.0
  %509 = vmatprep.subr.mxu0 0.0
  %510 = vmatpush2.msra.mxu0 0.0
  %511 = vmatprep.subr.mxu0 0.0
  %512 = vmatpush2.msra.mxu0 0.0
  %513 = vmatprep.subr.mxu0 0.0
  %514 = vmatpush2.msra.mxu0 0.0
  %515 = vmatprep.mubr.f32.mxu0 0.0
  %516 = vmatmul.mubr.f32.gmra.mxu0 %v449
  %v517 = vpop.f32.mrf.mxu0
  %v518 = vadd.f32 0.0, %v517
  %v519 = vpop.f32.mrf.mxu0
  %520 = vdwg.mxu0
  %521 = vrot.lane.b32.xlu0 %v182, 120
  %v522 = vpop.permute.xlu0 %521
  %523 = vrot.lane.b32.xlu0 %v182, 88
  %v524 = vpop.permute.xlu0 %523
  %v525 = vsel %vm191, %v522, 0
  %v527 = vsel %vm191, %v524, 0
  %529 = vmatprep.subr.mxu0 0.0
  %530 = vmatpush1.xpose.msra.mxu0 0.0
  %531 = vmatprep.subr.mxu0 0.0
  %532 = vmatpush1.xpose.msra.mxu0 0.0
  %533 = vmatprep.subr.mxu0 0.0
  %534 = vmatpush1.xpose.msra.mxu0 0.0
  %535 = vmatprep.subr.mxu0 0.0
  %536 = vmatpush1.xpose.msra.mxu0 0.0
  %537 = vmatprep.subr.mxu0 0.0
  %538 = vmatpush1.xpose.msra.mxu0 0.0
  %539 = vmatprep.subr.mxu0 0.0
  %540 = vmatpush1.xpose.msra.mxu0 0.0
  %541 = vmatprep.subr.mxu0 0.0
  %542 = vmatpush1.xpose.msra.mxu0 0.0
  %543 = vmatprep.subr.mxu0 0.0
  %544 = vmatpush1.xpose.msra.mxu0 0.0
  %545 = vmatprep.subr.mxu0 0.0
  %546 = vmatpush1.xpose.msra.mxu0 0.0
  %547 = vmatprep.subr.mxu0 0.0
  %548 = vmatpush1.xpose.msra.mxu0 0.0
  %549 = vmatprep.subr.mxu0 0.0
  %550 = vmatpush1.xpose.msra.mxu0 0.0
  %551 = vmatprep.subr.mxu0 0.0
  %552 = vmatpush1.xpose.msra.mxu0 0.0
  %553 = vmatprep.subr.mxu0 0.0
  %554 = vmatpush1.xpose.msra.mxu0 0.0
  %555 = vmatprep.subr.mxu0 0.0
  %556 = vmatpush1.xpose.msra.mxu0 0.0
  %557 = vmatprep.subr.mxu0 0.0
  %558 = vmatpush1.xpose.msra.mxu0 0.0
  %559 = vmatprep.subr.mxu0 0.0
  %560 = vmatpush1.xpose.msra.mxu0 %v527
  %561 = vmatprep.subr.mxu0 0.0
  %562 = vmatpush2.xpose.msra.mxu0 0.0
  %563 = vmatprep.subr.mxu0 0.0
  %564 = vmatpush2.xpose.msra.mxu0 0.0
  %565 = vmatprep.subr.mxu0 0.0
  %566 = vmatpush2.xpose.msra.mxu0 0.0
  %567 = vmatprep.subr.mxu0 0.0
  %568 = vmatpush2.xpose.msra.mxu0 0.0
  %569 = vmatprep.subr.mxu0 0.0
  %570 = vmatpush2.xpose.msra.mxu0 0.0
  %571 = vmatprep.subr.mxu0 0.0
  %572 = vmatpush2.xpose.msra.mxu0 0.0
  %573 = vmatprep.subr.mxu0 0.0
  %574 = vmatpush2.xpose.msra.mxu0 0.0
  %575 = vmatprep.subr.mxu0 0.0
  %576 = vmatpush2.xpose.msra.mxu0 0.0
  %577 = vmatprep.subr.mxu0 0.0
  %578 = vmatpush2.xpose.msra.mxu0 0.0
  %579 = vmatprep.subr.mxu0 0.0
  %580 = vmatpush2.xpose.msra.mxu0 0.0
  %581 = vmatprep.subr.mxu0 0.0
  %582 = vmatpush2.xpose.msra.mxu0 0.0
  %583 = vmatprep.subr.mxu0 0.0
  %584 = vmatpush2.xpose.msra.mxu0 0.0
  %585 = vmatprep.subr.mxu0 0.0
  %586 = vmatpush2.xpose.msra.mxu0 0.0
  %587 = vmatprep.subr.mxu0 0.0
  %588 = vmatpush2.xpose.msra.mxu0 0.0
  %589 = vmatprep.subr.mxu0 0.0
  %590 = vmatpush2.xpose.msra.mxu0 0.0
  %591 = vmatprep.subr.mxu0 0.0
  %592 = vmatpush2.xpose.msra.mxu0 0.0
  %593 = vmatprep.mubr.f32.mxu0 0.0
  %594 = vmatmul.mubr.f32.gmra.mxu0 %v525
  %v595 = vpop.f32.mrf.mxu0
  %v596 = vadd.f32 0.0, %v595
  %v597 = vpop.f32.mrf.mxu0
  %598 = vdwg.mxu0
  %599 = vrot.lane.b32.xlu0 %v185, 120
  %v600 = vpop.permute.xlu0 %599
  %601 = vrot.lane.b32.xlu0 %v185, 88
  %v602 = vpop.permute.xlu0 %601
  %v603 = vsel %vm191, %v600, 0
  %v605 = vsel %vm191, %v602, 0
  %607 = vmatprep.subr.mxu0 0.0
  %608 = vmatpush1.xpose.msra.mxu0 0.0
  %609 = vmatprep.subr.mxu0 0.0
  %610 = vmatpush1.xpose.msra.mxu0 0.0
  %611 = vmatprep.subr.mxu0 0.0
  %612 = vmatpush1.xpose.msra.mxu0 0.0
  %613 = vmatprep.subr.mxu0 0.0
  %614 = vmatpush1.xpose.msra.mxu0 0.0
  %615 = vmatprep.subr.mxu0 0.0
  %616 = vmatpush1.xpose.msra.mxu0 0.0
  %617 = vmatprep.subr.mxu0 0.0
  %618 = vmatpush1.xpose.msra.mxu0 0.0
  %619 = vmatprep.subr.mxu0 0.0
  %620 = vmatpush1.xpose.msra.mxu0 0.0
  %621 = vmatprep.subr.mxu0 0.0
  %622 = vmatpush1.xpose.msra.mxu0 0.0
  %623 = vmatprep.subr.mxu0 0.0
  %624 = vmatpush1.xpose.msra.mxu0 0.0
  %625 = vmatprep.subr.mxu0 0.0
  %626 = vmatpush1.xpose.msra.mxu0 0.0
  %627 = vmatprep.subr.mxu0 0.0
  %628 = vmatpush1.xpose.msra.mxu0 0.0
  %629 = vmatprep.subr.mxu0 0.0
  %630 = vmatpush1.xpose.msra.mxu0 0.0
  %631 = vmatprep.subr.mxu0 0.0
  %632 = vmatpush1.xpose.msra.mxu0 0.0
  %633 = vmatprep.subr.mxu0 0.0
  %634 = vmatpush1.xpose.msra.mxu0 0.0
  %635 = vmatprep.subr.mxu0 0.0
  %636 = vmatpush1.xpose.msra.mxu0 0.0
  %637 = vmatprep.subr.mxu0 0.0
  %638 = vmatpush1.xpose.msra.mxu0 %v605
  %639 = vmatprep.subr.mxu0 0.0
  %640 = vmatpush2.xpose.msra.mxu0 0.0
  %641 = vmatprep.subr.mxu0 0.0
  %642 = vmatpush2.xpose.msra.mxu0 0.0
  %643 = vmatprep.subr.mxu0 0.0
  %644 = vmatpush2.xpose.msra.mxu0 0.0
  %645 = vmatprep.subr.mxu0 0.0
  %646 = vmatpush2.xpose.msra.mxu0 0.0
  %647 = vmatprep.subr.mxu0 0.0
  %648 = vmatpush2.xpose.msra.mxu0 0.0
  %649 = vmatprep.subr.mxu0 0.0
  %650 = vmatpush2.xpose.msra.mxu0 0.0
  %651 = vmatprep.subr.mxu0 0.0
  %652 = vmatpush2.xpose.msra.mxu0 0.0
  %653 = vmatprep.subr.mxu0 0.0
  %654 = vmatpush2.xpose.msra.mxu0 0.0
  %655 = vmatprep.subr.mxu0 0.0
  %656 = vmatpush2.xpose.msra.mxu0 0.0
  %657 = vmatprep.subr.mxu0 0.0
  %658 = vmatpush2.xpose.msra.mxu0 0.0
  %659 = vmatprep.subr.mxu0 0.0
  %660 = vmatpush2.xpose.msra.mxu0 0.0
  %661 = vmatprep.subr.mxu0 0.0
  %662 = vmatpush2.xpose.msra.mxu0 0.0
  %663 = vmatprep.subr.mxu0 0.0
  %664 = vmatpush2.xpose.msra.mxu0 0.0
  %665 = vmatprep.subr.mxu0 0.0
  %666 = vmatpush2.xpose.msra.mxu0 0.0
  %667 = vmatprep.subr.mxu0 0.0
  %668 = vmatpush2.xpose.msra.mxu0 0.0
  %669 = vmatprep.subr.mxu0 0.0
  %670 = vmatpush2.xpose.msra.mxu0 0.0
  %671 = vmatprep.mubr.f32.mxu0 0.0
  %672 = vmatmul.mubr.f32.gmra.mxu0 %v603
  %v673 = vpop.f32.mrf.mxu0
  %v674 = vadd.f32 0.0, %v673
  %v675 = vpop.f32.mrf.mxu0
  %676 = vdwg.mxu0
  %v677 = vmul.f32 %v596, 0.35355338
  %v678 = vmul.f32 %v674, 0.35355338
  %v679 = vadd.f32 %v677, %v115
  %v680 = vadd.f32 %v678, %v119
  %v681 = vsel %vm191, %v679, -inf
  %682 = vmax.xlane.f32.xlu0 %v681
  %v683 = vpop.xlane.xlu0 %682
  %v684 = vsel %vm191, %v680, -inf
  %685 = vmax.xlane.f32.xlu0 %v684
  %v686 = vpop.xlane.xlu0 %685
  %v687 = vsub.f32 %v679, %v683
  %v688 = vsub.f32 %v680, %v686
  %v689 = vmul.f32 %v687, 1.442695
  %v690 = vpow.pop %v689
  %v691 = vmul.f32 %v688, 1.442695
  %v692 = vpow.pop %v691
  %v693 = vsel %vm191, %v690, 0.0
  %694 = vadd.xlane.f32.xlu0 %v693
  %v695 = vpop.xlane.xlu0 %694
  %v696 = vsel %vm191, %v692, 0.0
  %697 = vadd.xlane.f32.xlu0 %v696
  %v698 = vpop.xlane.xlu0 %697
  %v699 = vrcp.pop %v695
  %v700 = vrcp.pop %v698
  %v701 = vmul.f32 %v690, %v699
  %v702 = vmul.f32 %v692, %v700
  %703 = vrot.lane.b32.xlu0 %v182, 56
  %v704 = vpop.permute.xlu0 %703
  %v707 = vsel %vm191, %v701, 0
  %709 = vmatprep.subr.mxu0 0.0
  %710 = vmatpush1.msra.mxu0 0.0
  %711 = vmatprep.subr.mxu0 0.0
  %712 = vmatpush1.msra.mxu0 0.0
  %713 = vmatprep.subr.mxu0 0.0
  %714 = vmatpush1.msra.mxu0 0.0
  %715 = vmatprep.subr.mxu0 0.0
  %716 = vmatpush1.msra.mxu0 0.0
  %717 = vmatprep.subr.mxu0 0.0
  %718 = vmatpush1.msra.mxu0 0.0
  %719 = vmatprep.subr.mxu0 0.0
  %720 = vmatpush1.msra.mxu0 0.0
  %721 = vmatprep.subr.mxu0 0.0
  %722 = vmatpush1.msra.mxu0 0.0
  %723 = vmatprep.subr.mxu0 0.0
  %724 = vmatpush1.msra.mxu0 0.0
  %725 = vmatprep.subr.mxu0 0.0
  %726 = vmatpush1.msra.mxu0 0.0
  %727 = vmatprep.subr.mxu0 0.0
  %728 = vmatpush1.msra.mxu0 0.0
  %729 = vmatprep.subr.mxu0 0.0
  %730 = vmatpush1.msra.mxu0 0.0
  %731 = vmatprep.subr.mxu0 0.0
  %732 = vmatpush1.msra.mxu0 0.0
  %733 = vmatprep.subr.mxu0 0.0
  %734 = vmatpush1.msra.mxu0 0.0
  %735 = vmatprep.subr.mxu0 0.0
  %736 = vmatpush1.msra.mxu0 0.0
  %737 = vmatprep.subr.mxu0 0.0
  %738 = vmatpush1.msra.mxu0 0.0
  %739 = vmatprep.subr.mxu0 0.0
  %740 = vmatpush1.msra.mxu0 %v704
  %741 = vmatprep.subr.mxu0 0.0
  %742 = vmatpush2.msra.mxu0 0.0
  %743 = vmatprep.subr.mxu0 0.0
  %744 = vmatpush2.msra.mxu0 0.0
  %745 = vmatprep.subr.mxu0 0.0
  %746 = vmatpush2.msra.mxu0 0.0
  %747 = vmatprep.subr.mxu0 0.0
  %748 = vmatpush2.msra.mxu0 0.0
  %749 = vmatprep.subr.mxu0 0.0
  %750 = vmatpush2.msra.mxu0 0.0
  %751 = vmatprep.subr.mxu0 0.0
  %752 = vmatpush2.msra.mxu0 0.0
  %753 = vmatprep.subr.mxu0 0.0
  %754 = vmatpush2.msra.mxu0 0.0
  %755 = vmatprep.subr.mxu0 0.0
  %756 = vmatpush2.msra.mxu0 0.0
  %757 = vmatprep.subr.mxu0 0.0
  %758 = vmatpush2.msra.mxu0 0.0
  %759 = vmatprep.subr.mxu0 0.0
  %760 = vmatpush2.msra.mxu0 0.0
  %761 = vmatprep.subr.mxu0 0.0
  %762 = vmatpush2.msra.mxu0 0.0
  %763 = vmatprep.subr.mxu0 0.0
  %764 = vmatpush2.msra.mxu0 0.0
  %765 = vmatprep.subr.mxu0 0.0
  %766 = vmatpush2.msra.mxu0 0.0
  %767 = vmatprep.subr.mxu0 0.0
  %768 = vmatpush2.msra.mxu0 0.0
  %769 = vmatprep.subr.mxu0 0.0
  %770 = vmatpush2.msra.mxu0 0.0
  %771 = vmatprep.subr.mxu0 0.0
  %772 = vmatpush2.msra.mxu0 0.0
  %773 = vmatprep.mubr.f32.mxu0 0.0
  %774 = vmatmul.mubr.f32.gmra.mxu0 %v707
  %v775 = vpop.f32.mrf.mxu0
  %v776 = vadd.f32 0.0, %v775
  %v777 = vpop.f32.mrf.mxu0
  %778 = vdwg.mxu0
  %779 = vrot.lane.b32.xlu0 %v185, 56
  %v780 = vpop.permute.xlu0 %779
  %v783 = vsel %vm191, %v702, 0
  %785 = vmatprep.subr.mxu0 0.0
  %786 = vmatpush1.msra.mxu0 0.0
  %787 = vmatprep.subr.mxu0 0.0
  %788 = vmatpush1.msra.mxu0 0.0
  %789 = vmatprep.subr.mxu0 0.0
  %790 = vmatpush1.msra.mxu0 0.0
  %791 = vmatprep.subr.mxu0 0.0
  %792 = vmatpush1.msra.mxu0 0.0
  %793 = vmatprep.subr.mxu0 0.0
  %794 = vmatpush1.msra.mxu0 0.0
  %795 = vmatprep.subr.mxu0 0.0
  %796 = vmatpush1.msra.mxu0 0.0
  %797 = vmatprep.subr.mxu0 0.0
  %798 = vmatpush1.msra.mxu0 0.0
  %799 = vmatprep.subr.mxu0 0.0
  %800 = vmatpush1.msra.mxu0 0.0
  %801 = vmatprep.subr.mxu0 0.0
  %802 = vmatpush1.msra.mxu0 0.0
  %803 = vmatprep.subr.mxu0 0.0
  %804 = vmatpush1.msra.mxu0 0.0
  %805 = vmatprep.subr.mxu0 0.0
  %806 = vmatpush1.msra.mxu0 0.0
  %807 = vmatprep.subr.mxu0 0.0
  %808 = vmatpush1.msra.mxu0 0.0
  %809 = vmatprep.subr.mxu0 0.0
  %810 = vmatpush1.msra.mxu0 0.0
  %811 = vmatprep.subr.mxu0 0.0
  %812 = vmatpush1.msra.mxu0 0.0
  %813 = vmatprep.subr.mxu0 0.0
  %814 = vmatpush1.msra.mxu0 0.0
  %815 = vmatprep.subr.mxu0 0.0
  %816 = vmatpush1.msra.mxu0 %v780
  %817 = vmatprep.subr.mxu0 0.0
  %818 = vmatpush2.msra.mxu0 0.0
  %819 = vmatprep.subr.mxu0 0.0
  %820 = vmatpush2.msra.mxu0 0.0
  %821 = vmatprep.subr.mxu0 0.0
  %822 = vmatpush2.msra.mxu0 0.0
  %823 = vmatprep.subr.mxu0 0.0
  %824 = vmatpush2.msra.mxu0 0.0
  %825 = vmatprep.subr.mxu0 0.0
  %826 = vmatpush2.msra.mxu0 0.0
  %827 = vmatprep.subr.mxu0 0.0
  %828 = vmatpush2.msra.mxu0 0.0
  %829 = vmatprep.subr.mxu0 0.0
  %830 = vmatpush2.msra.mxu0 0.0
  %831 = vmatprep.subr.mxu0 0.0
  %832 = vmatpush2.msra.mxu0 0.0
  %833 = vmatprep.subr.mxu0 0.0
  %834 = vmatpush2.msra.mxu0 0.0
  %835 = vmatprep.subr.mxu0 0.0
  %836 = vmatpush2.msra.mxu0 0.0
  %837 = vmatprep.subr.mxu0 0.0
  %838 = vmatpush2.msra.mxu0 0.0
  %839 = vmatprep.subr.mxu0 0.0
  %840 = vmatpush2.msra.mxu0 0.0
  %841 = vmatprep.subr.mxu0 0.0
  %842 = vmatpush2.msra.mxu0 0.0
  %843 = vmatprep.subr.mxu0 0.0
  %844 = vmatpush2.msra.mxu0 0.0
  %845 = vmatprep.subr.mxu0 0.0
  %846 = vmatpush2.msra.mxu0 0.0
  %847 = vmatprep.subr.mxu0 0.0
  %848 = vmatpush2.msra.mxu0 0.0
  %849 = vmatprep.mubr.f32.mxu0 0.0
  %850 = vmatmul.mubr.f32.gmra.mxu0 %v783
  %v851 = vpop.f32.mrf.mxu0
  %v852 = vadd.f32 0.0, %v851
  %v853 = vpop.f32.mrf.mxu0
  %854 = vdwg.mxu0
  %855 = vrot.lane.b32.xlu0 %v182, 112
  %v856 = vpop.permute.xlu0 %855
  %857 = vrot.lane.b32.xlu0 %v182, 80
  %v858 = vpop.permute.xlu0 %857
  %v859 = vsel %vm191, %v856, 0
  %v861 = vsel %vm191, %v858, 0
  %863 = vmatprep.subr.mxu0 0.0
  %864 = vmatpush1.xpose.msra.mxu0 0.0
  %865 = vmatprep.subr.mxu0 0.0
  %866 = vmatpush1.xpose.msra.mxu0 0.0
  %867 = vmatprep.subr.mxu0 0.0
  %868 = vmatpush1.xpose.msra.mxu0 0.0
  %869 = vmatprep.subr.mxu0 0.0
  %870 = vmatpush1.xpose.msra.mxu0 0.0
  %871 = vmatprep.subr.mxu0 0.0
  %872 = vmatpush1.xpose.msra.mxu0 0.0
  %873 = vmatprep.subr.mxu0 0.0
  %874 = vmatpush1.xpose.msra.mxu0 0.0
  %875 = vmatprep.subr.mxu0 0.0
  %876 = vmatpush1.xpose.msra.mxu0 0.0
  %877 = vmatprep.subr.mxu0 0.0
  %878 = vmatpush1.xpose.msra.mxu0 0.0
  %879 = vmatprep.subr.mxu0 0.0
  %880 = vmatpush1.xpose.msra.mxu0 0.0
  %881 = vmatprep.subr.mxu0 0.0
  %882 = vmatpush1.xpose.msra.mxu0 0.0
  %883 = vmatprep.subr.mxu0 0.0
  %884 = vmatpush1.xpose.msra.mxu0 0.0
  %885 = vmatprep.subr.mxu0 0.0
  %886 = vmatpush1.xpose.msra.mxu0 0.0
  %887 = vmatprep.subr.mxu0 0.0
  %888 = vmatpush1.xpose.msra.mxu0 0.0
  %889 = vmatprep.subr.mxu0 0.0
  %890 = vmatpush1.xpose.msra.mxu0 0.0
  %891 = vmatprep.subr.mxu0 0.0
  %892 = vmatpush1.xpose.msra.mxu0 0.0
  %893 = vmatprep.subr.mxu0 0.0
  %894 = vmatpush1.xpose.msra.mxu0 %v861
  %895 = vmatprep.subr.mxu0 0.0
  %896 = vmatpush2.xpose.msra.mxu0 0.0
  %897 = vmatprep.subr.mxu0 0.0
  %898 = vmatpush2.xpose.msra.mxu0 0.0
  %899 = vmatprep.subr.mxu0 0.0
  %900 = vmatpush2.xpose.msra.mxu0 0.0
  %901 = vmatprep.subr.mxu0 0.0
  %902 = vmatpush2.xpose.msra.mxu0 0.0
  %903 = vmatprep.subr.mxu0 0.0
  %904 = vmatpush2.xpose.msra.mxu0 0.0
  %905 = vmatprep.subr.mxu0 0.0
  %906 = vmatpush2.xpose.msra.mxu0 0.0
  %907 = vmatprep.subr.mxu0 0.0
  %908 = vmatpush2.xpose.msra.mxu0 0.0
  %909 = vmatprep.subr.mxu0 0.0
  %910 = vmatpush2.xpose.msra.mxu0 0.0
  %911 = vmatprep.subr.mxu0 0.0
  %912 = vmatpush2.xpose.msra.mxu0 0.0
  %913 = vmatprep.subr.mxu0 0.0
  %914 = vmatpush2.xpose.msra.mxu0 0.0
  %915 = vmatprep.subr.mxu0 0.0
  %916 = vmatpush2.xpose.msra.mxu0 0.0
  %917 = vmatprep.subr.mxu0 0.0
  %918 = vmatpush2.xpose.msra.mxu0 0.0
  %919 = vmatprep.subr.mxu0 0.0
  %920 = vmatpush2.xpose.msra.mxu0 0.0
  %921 = vmatprep.subr.mxu0 0.0
  %922 = vmatpush2.xpose.msra.mxu0 0.0
  %923 = vmatprep.subr.mxu0 0.0
  %924 = vmatpush2.xpose.msra.mxu0 0.0
  %925 = vmatprep.subr.mxu0 0.0
  %926 = vmatpush2.xpose.msra.mxu0 0.0
  %927 = vmatprep.mubr.f32.mxu0 0.0
  %928 = vmatmul.mubr.f32.gmra.mxu0 %v859
  %v929 = vpop.f32.mrf.mxu0
  %v930 = vadd.f32 0.0, %v929
  %v931 = vpop.f32.mrf.mxu0
  %932 = vdwg.mxu0
  %933 = vrot.lane.b32.xlu0 %v185, 112
  %v934 = vpop.permute.xlu0 %933
  %935 = vrot.lane.b32.xlu0 %v185, 80
  %v936 = vpop.permute.xlu0 %935
  %v937 = vsel %vm191, %v934, 0
  %v939 = vsel %vm191, %v936, 0
  %941 = vmatprep.subr.mxu0 0.0
  %942 = vmatpush1.xpose.msra.mxu0 0.0
  %943 = vmatprep.subr.mxu0 0.0
  %944 = vmatpush1.xpose.msra.mxu0 0.0
  %945 = vmatprep.subr.mxu0 0.0
  %946 = vmatpush1.xpose.msra.mxu0 0.0
  %947 = vmatprep.subr.mxu0 0.0
  %948 = vmatpush1.xpose.msra.mxu0 0.0
  %949 = vmatprep.subr.mxu0 0.0
  %950 = vmatpush1.xpose.msra.mxu0 0.0
  %951 = vmatprep.subr.mxu0 0.0
  %952 = vmatpush1.xpose.msra.mxu0 0.0
  %953 = vmatprep.subr.mxu0 0.0
  %954 = vmatpush1.xpose.msra.mxu0 0.0
  %955 = vmatprep.subr.mxu0 0.0
  %956 = vmatpush1.xpose.msra.mxu0 0.0
  %957 = vmatprep.subr.mxu0 0.0
  %958 = vmatpush1.xpose.msra.mxu0 0.0
  %959 = vmatprep.subr.mxu0 0.0
  %960 = vmatpush1.xpose.msra.mxu0 0.0
  %961 = vmatprep.subr.mxu0 0.0
  %962 = vmatpush1.xpose.msra.mxu0 0.0
  %963 = vmatprep.subr.mxu0 0.0
  %964 = vmatpush1.xpose.msra.mxu0 0.0
  %965 = vmatprep.subr.mxu0 0.0
  %966 = vmatpush1.xpose.msra.mxu0 0.0
  %967 = vmatprep.subr.mxu0 0.0
  %968 = vmatpush1.xpose.msra.mxu0 0.0
  %969 = vmatprep.subr.mxu0 0.0
  %970 = vmatpush1.xpose.msra.mxu0 0.0
  %971 = vmatprep.subr.mxu0 0.0
  %972 = vmatpush1.xpose.msra.mxu0 %v939
  %973 = vmatprep.subr.mxu0 0.0
  %974 = vmatpush2.xpose.msra.mxu0 0.0
  %975 = vmatprep.subr.mxu0 0.0
  %976 = vmatpush2.xpose.msra.mxu0 0.0
  %977 = vmatprep.subr.mxu0 0.0
  %978 = vmatpush2.xpose.msra.mxu0 0.0
  %979 = vmatprep.subr.mxu0 0.0
  %980 = vmatpush2.xpose.msra.mxu0 0.0
  %981 = vmatprep.subr.mxu0 0.0
  %982 = vmatpush2.xpose.msra.mxu0 0.0
  %983 = vmatprep.subr.mxu0 0.0
  %984 = vmatpush2.xpose.msra.mxu0 0.0
  %985 = vmatprep.subr.mxu0 0.0
  %986 = vmatpush2.xpose.msra.mxu0 0.0
  %987 = vmatprep.subr.mxu0 0.0
  %988 = vmatpush2.xpose.msra.mxu0 0.0
  %989 = vmatprep.subr.mxu0 0.0
  %990 = vmatpush2.xpose.msra.mxu0 0.0
  %991 = vmatprep.subr.mxu0 0.0
  %992 = vmatpush2.xpose.msra.mxu0 0.0
  %993 = vmatprep.subr.mxu0 0.0
  %994 = vmatpush2.xpose.msra.mxu0 0.0
  %995 = vmatprep.subr.mxu0 0.0
  %996 = vmatpush2.xpose.msra.mxu0 0.0
  %997 = vmatprep.subr.mxu0 0.0
  %998 = vmatpush2.xpose.msra.mxu0 0.0
  %999 = vmatprep.subr.mxu0 0.0
  %1000 = vmatpush2.xpose.msra.mxu0 0.0
  %1001 = vmatprep.subr.mxu0 0.0
  %1002 = vmatpush2.xpose.msra.mxu0 0.0
  %1003 = vmatprep.subr.mxu0 0.0
  %1004 = vmatpush2.xpose.msra.mxu0 0.0
  %1005 = vmatprep.mubr.f32.mxu0 0.0
  %1006 = vmatmul.mubr.f32.gmra.mxu0 %v937
  %v1007 = vpop.f32.mrf.mxu0
  %v1008 = vadd.f32 0.0, %v1007
  %v1009 = vpop.f32.mrf.mxu0
  %1010 = vdwg.mxu0
  %v1011 = vmul.f32 %v930, 0.35355338
  %v1012 = vmul.f32 %v1008, 0.35355338
  %v1013 = vadd.f32 %v1011, %v115
  %v1014 = vadd.f32 %v1012, %v119
  %v1015 = vsel %vm191, %v1013, -inf
  %1016 = vmax.xlane.f32.xlu0 %v1015
  %v1017 = vpop.xlane.xlu0 %1016
  %v1018 = vsel %vm191, %v1014, -inf
  %1019 = vmax.xlane.f32.xlu0 %v1018
  %v1020 = vpop.xlane.xlu0 %1019
  %v1021 = vsub.f32 %v1013, %v1017
  %v1022 = vsub.f32 %v1014, %v1020
  %v1023 = vmul.f32 %v1021, 1.442695
  %v1024 = vpow.pop %v1023
  %v1025 = vmul.f32 %v1022, 1.442695
  %v1026 = vpow.pop %v1025
  %v1027 = vsel %vm191, %v1024, 0.0
  %1028 = vadd.xlane.f32.xlu0 %v1027
  %v1029 = vpop.xlane.xlu0 %1028
  %v1030 = vsel %vm191, %v1026, 0.0
  %1031 = vadd.xlane.f32.xlu0 %v1030
  %v1032 = vpop.xlane.xlu0 %1031
  %v1033 = vrcp.pop %v1029
  %v1034 = vrcp.pop %v1032
  %v1035 = vmul.f32 %v1024, %v1033
  %v1036 = vmul.f32 %v1026, %v1034
  %1037 = vrot.lane.b32.xlu0 %v182, 48
  %v1038 = vpop.permute.xlu0 %1037
  %v1041 = vsel %vm191, %v1035, 0
  %1043 = vmatprep.subr.mxu0 0.0
  %1044 = vmatpush1.msra.mxu0 0.0
  %1045 = vmatprep.subr.mxu0 0.0
  %1046 = vmatpush1.msra.mxu0 0.0
  %1047 = vmatprep.subr.mxu0 0.0
  %1048 = vmatpush1.msra.mxu0 0.0
  %1049 = vmatprep.subr.mxu0 0.0
  %1050 = vmatpush1.msra.mxu0 0.0
  %1051 = vmatprep.subr.mxu0 0.0
  %1052 = vmatpush1.msra.mxu0 0.0
  %1053 = vmatprep.subr.mxu0 0.0
  %1054 = vmatpush1.msra.mxu0 0.0
  %1055 = vmatprep.subr.mxu0 0.0
  %1056 = vmatpush1.msra.mxu0 0.0
  %1057 = vmatprep.subr.mxu0 0.0
  %1058 = vmatpush1.msra.mxu0 0.0
  %1059 = vmatprep.subr.mxu0 0.0
  %1060 = vmatpush1.msra.mxu0 0.0
  %1061 = vmatprep.subr.mxu0 0.0
  %1062 = vmatpush1.msra.mxu0 0.0
  %1063 = vmatprep.subr.mxu0 0.0
  %1064 = vmatpush1.msra.mxu0 0.0
  %1065 = vmatprep.subr.mxu0 0.0
  %1066 = vmatpush1.msra.mxu0 0.0
  %1067 = vmatprep.subr.mxu0 0.0
  %1068 = vmatpush1.msra.mxu0 0.0
  %1069 = vmatprep.subr.mxu0 0.0
  %1070 = vmatpush1.msra.mxu0 0.0
  %1071 = vmatprep.subr.mxu0 0.0
  %1072 = vmatpush1.msra.mxu0 0.0
  %1073 = vmatprep.subr.mxu0 0.0
  %1074 = vmatpush1.msra.mxu0 %v1038
  %1075 = vmatprep.subr.mxu0 0.0
  %1076 = vmatpush2.msra.mxu0 0.0
  %1077 = vmatprep.subr.mxu0 0.0
  %1078 = vmatpush2.msra.mxu0 0.0
  %1079 = vmatprep.subr.mxu0 0.0
  %1080 = vmatpush2.msra.mxu0 0.0
  %1081 = vmatprep.subr.mxu0 0.0
  %1082 = vmatpush2.msra.mxu0 0.0
  %1083 = vmatprep.subr.mxu0 0.0
  %1084 = vmatpush2.msra.mxu0 0.0
  %1085 = vmatprep.subr.mxu0 0.0
  %1086 = vmatpush2.msra.mxu0 0.0
  %1087 = vmatprep.subr.mxu0 0.0
  %1088 = vmatpush2.msra.mxu0 0.0
  %1089 = vmatprep.subr.mxu0 0.0
  %1090 = vmatpush2.msra.mxu0 0.0
  %1091 = vmatprep.subr.mxu0 0.0
  %1092 = vmatpush2.msra.mxu0 0.0
  %1093 = vmatprep.subr.mxu0 0.0
  %1094 = vmatpush2.msra.mxu0 0.0
  %1095 = vmatprep.subr.mxu0 0.0
  %1096 = vmatpush2.msra.mxu0 0.0
  %1097 = vmatprep.subr.mxu0 0.0
  %1098 = vmatpush2.msra.mxu0 0.0
  %1099 = vmatprep.subr.mxu0 0.0
  %1100 = vmatpush2.msra.mxu0 0.0
  %1101 = vmatprep.subr.mxu0 0.0
  %1102 = vmatpush2.msra.mxu0 0.0
  %1103 = vmatprep.subr.mxu0 0.0
  %1104 = vmatpush2.msra.mxu0 0.0
  %1105 = vmatprep.subr.mxu0 0.0
  %1106 = vmatpush2.msra.mxu0 0.0
  %1107 = vmatprep.mubr.f32.mxu0 0.0
  %1108 = vmatmul.mubr.f32.gmra.mxu0 %v1041
  %v1109 = vpop.f32.mrf.mxu0
  %v1110 = vadd.f32 0.0, %v1109
  %v1111 = vpop.f32.mrf.mxu0
  %1112 = vdwg.mxu0
  %1113 = vrot.lane.b32.xlu0 %v185, 48
  %v1114 = vpop.permute.xlu0 %1113
  %v1117 = vsel %vm191, %v1036, 0
  %1119 = vmatprep.subr.mxu0 0.0
  %1120 = vmatpush1.msra.mxu0 0.0
  %1121 = vmatprep.subr.mxu0 0.0
  %1122 = vmatpush1.msra.mxu0 0.0
  %1123 = vmatprep.subr.mxu0 0.0
  %1124 = vmatpush1.msra.mxu0 0.0
  %1125 = vmatprep.subr.mxu0 0.0
  %1126 = vmatpush1.msra.mxu0 0.0
  %1127 = vmatprep.subr.mxu0 0.0
  %1128 = vmatpush1.msra.mxu0 0.0
  %1129 = vmatprep.subr.mxu0 0.0
  %1130 = vmatpush1.msra.mxu0 0.0
  %1131 = vmatprep.subr.mxu0 0.0
  %1132 = vmatpush1.msra.mxu0 0.0
  %1133 = vmatprep.subr.mxu0 0.0
  %1134 = vmatpush1.msra.mxu0 0.0
  %1135 = vmatprep.subr.mxu0 0.0
  %1136 = vmatpush1.msra.mxu0 0.0
  %1137 = vmatprep.subr.mxu0 0.0
  %1138 = vmatpush1.msra.mxu0 0.0
  %1139 = vmatprep.subr.mxu0 0.0
  %1140 = vmatpush1.msra.mxu0 0.0
  %1141 = vmatprep.subr.mxu0 0.0
  %1142 = vmatpush1.msra.mxu0 0.0
  %1143 = vmatprep.subr.mxu0 0.0
  %1144 = vmatpush1.msra.mxu0 0.0
  %1145 = vmatprep.subr.mxu0 0.0
  %1146 = vmatpush1.msra.mxu0 0.0
  %1147 = vmatprep.subr.mxu0 0.0
  %1148 = vmatpush1.msra.mxu0 0.0
  %1149 = vmatprep.subr.mxu0 0.0
  %1150 = vmatpush1.msra.mxu0 %v1114
  %1151 = vmatprep.subr.mxu0 0.0
  %1152 = vmatpush2.msra.mxu0 0.0
  %1153 = vmatprep.subr.mxu0 0.0
  %1154 = vmatpush2.msra.mxu0 0.0
  %1155 = vmatprep.subr.mxu0 0.0
  %1156 = vmatpush2.msra.mxu0 0.0
  %1157 = vmatprep.subr.mxu0 0.0
  %1158 = vmatpush2.msra.mxu0 0.0
  %1159 = vmatprep.subr.mxu0 0.0
  %1160 = vmatpush2.msra.mxu0 0.0
  %1161 = vmatprep.subr.mxu0 0.0
  %1162 = vmatpush2.msra.mxu0 0.0
  %1163 = vmatprep.subr.mxu0 0.0
  %1164 = vmatpush2.msra.mxu0 0.0
  %1165 = vmatprep.subr.mxu0 0.0
  %1166 = vmatpush2.msra.mxu0 0.0
  %1167 = vmatprep.subr.mxu0 0.0
  %1168 = vmatpush2.msra.mxu0 0.0
  %1169 = vmatprep.subr.mxu0 0.0
  %1170 = vmatpush2.msra.mxu0 0.0
  %1171 = vmatprep.subr.mxu0 0.0
  %1172 = vmatpush2.msra.mxu0 0.0
  %1173 = vmatprep.subr.mxu0 0.0
  %1174 = vmatpush2.msra.mxu0 0.0
  %1175 = vmatprep.subr.mxu0 0.0
  %1176 = vmatpush2.msra.mxu0 0.0
  %1177 = vmatprep.subr.mxu0 0.0
  %1178 = vmatpush2.msra.mxu0 0.0
  %1179 = vmatprep.subr.mxu0 0.0
  %1180 = vmatpush2.msra.mxu0 0.0
  %1181 = vmatprep.subr.mxu0 0.0
  %1182 = vmatpush2.msra.mxu0 0.0
  %1183 = vmatprep.mubr.f32.mxu0 0.0
  %1184 = vmatmul.mubr.f32.gmra.mxu0 %v1117
  %v1185 = vpop.f32.mrf.mxu0
  %v1186 = vadd.f32 0.0, %v1185
  %v1187 = vpop.f32.mrf.mxu0
  %1188 = vdwg.mxu0
  %1189 = vrot.lane.b32.xlu0 %v182, 104
  %v1190 = vpop.permute.xlu0 %1189
  %1191 = vrot.lane.b32.xlu0 %v182, 72
  %v1192 = vpop.permute.xlu0 %1191
  %v1193 = vsel %vm191, %v1190, 0
  %v1195 = vsel %vm191, %v1192, 0
  %1197 = vmatprep.subr.mxu0 0.0
  %1198 = vmatpush1.xpose.msra.mxu0 0.0
  %1199 = vmatprep.subr.mxu0 0.0
  %1200 = vmatpush1.xpose.msra.mxu0 0.0
  %1201 = vmatprep.subr.mxu0 0.0
  %1202 = vmatpush1.xpose.msra.mxu0 0.0
  %1203 = vmatprep.subr.mxu0 0.0
  %1204 = vmatpush1.xpose.msra.mxu0 0.0
  %1205 = vmatprep.subr.mxu0 0.0
  %1206 = vmatpush1.xpose.msra.mxu0 0.0
  %1207 = vmatprep.subr.mxu0 0.0
  %1208 = vmatpush1.xpose.msra.mxu0 0.0
  %1209 = vmatprep.subr.mxu0 0.0
  %1210 = vmatpush1.xpose.msra.mxu0 0.0
  %1211 = vmatprep.subr.mxu0 0.0
  %1212 = vmatpush1.xpose.msra.mxu0 0.0
  %1213 = vmatprep.subr.mxu0 0.0
  %1214 = vmatpush1.xpose.msra.mxu0 0.0
  %1215 = vmatprep.subr.mxu0 0.0
  %1216 = vmatpush1.xpose.msra.mxu0 0.0
  %1217 = vmatprep.subr.mxu0 0.0
  %1218 = vmatpush1.xpose.msra.mxu0 0.0
  %1219 = vmatprep.subr.mxu0 0.0
  %1220 = vmatpush1.xpose.msra.mxu0 0.0
  %1221 = vmatprep.subr.mxu0 0.0
  %1222 = vmatpush1.xpose.msra.mxu0 0.0
  %1223 = vmatprep.subr.mxu0 0.0
  %1224 = vmatpush1.xpose.msra.mxu0 0.0
  %1225 = vmatprep.subr.mxu0 0.0
  %1226 = vmatpush1.xpose.msra.mxu0 0.0
  %1227 = vmatprep.subr.mxu0 0.0
  %1228 = vmatpush1.xpose.msra.mxu0 %v1195
  %1229 = vmatprep.subr.mxu0 0.0
  %1230 = vmatpush2.xpose.msra.mxu0 0.0
  %1231 = vmatprep.subr.mxu0 0.0
  %1232 = vmatpush2.xpose.msra.mxu0 0.0
  %1233 = vmatprep.subr.mxu0 0.0
  %1234 = vmatpush2.xpose.msra.mxu0 0.0
  %1235 = vmatprep.subr.mxu0 0.0
  %1236 = vmatpush2.xpose.msra.mxu0 0.0
  %1237 = vmatprep.subr.mxu0 0.0
  %1238 = vmatpush2.xpose.msra.mxu0 0.0
  %1239 = vmatprep.subr.mxu0 0.0
  %1240 = vmatpush2.xpose.msra.mxu0 0.0
  %1241 = vmatprep.subr.mxu0 0.0
  %1242 = vmatpush2.xpose.msra.mxu0 0.0
  %1243 = vmatprep.subr.mxu0 0.0
  %1244 = vmatpush2.xpose.msra.mxu0 0.0
  %1245 = vmatprep.subr.mxu0 0.0
  %1246 = vmatpush2.xpose.msra.mxu0 0.0
  %1247 = vmatprep.subr.mxu0 0.0
  %1248 = vmatpush2.xpose.msra.mxu0 0.0
  %1249 = vmatprep.subr.mxu0 0.0
  %1250 = vmatpush2.xpose.msra.mxu0 0.0
  %1251 = vmatprep.subr.mxu0 0.0
  %1252 = vmatpush2.xpose.msra.mxu0 0.0
  %1253 = vmatprep.subr.mxu0 0.0
  %1254 = vmatpush2.xpose.msra.mxu0 0.0
  %1255 = vmatprep.subr.mxu0 0.0
  %1256 = vmatpush2.xpose.msra.mxu0 0.0
  %1257 = vmatprep.subr.mxu0 0.0
  %1258 = vmatpush2.xpose.msra.mxu0 0.0
  %1259 = vmatprep.subr.mxu0 0.0
  %1260 = vmatpush2.xpose.msra.mxu0 0.0
  %1261 = vmatprep.mubr.f32.mxu0 0.0
  %1262 = vmatmul.mubr.f32.gmra.mxu0 %v1193
  %v1263 = vpop.f32.mrf.mxu0
  %v1264 = vadd.f32 0.0, %v1263
  %v1265 = vpop.f32.mrf.mxu0
  %1266 = vdwg.mxu0
  %1267 = vrot.lane.b32.xlu0 %v185, 104
  %v1268 = vpop.permute.xlu0 %1267
  %1269 = vrot.lane.b32.xlu0 %v185, 72
  %v1270 = vpop.permute.xlu0 %1269
  %v1271 = vsel %vm191, %v1268, 0
  %v1273 = vsel %vm191, %v1270, 0
  %1275 = vmatprep.subr.mxu0 0.0
  %1276 = vmatpush1.xpose.msra.mxu0 0.0
  %1277 = vmatprep.subr.mxu0 0.0
  %1278 = vmatpush1.xpose.msra.mxu0 0.0
  %1279 = vmatprep.subr.mxu0 0.0
  %1280 = vmatpush1.xpose.msra.mxu0 0.0
  %1281 = vmatprep.subr.mxu0 0.0
  %1282 = vmatpush1.xpose.msra.mxu0 0.0
  %1283 = vmatprep.subr.mxu0 0.0
  %1284 = vmatpush1.xpose.msra.mxu0 0.0
  %1285 = vmatprep.subr.mxu0 0.0
  %1286 = vmatpush1.xpose.msra.mxu0 0.0
  %1287 = vmatprep.subr.mxu0 0.0
  %1288 = vmatpush1.xpose.msra.mxu0 0.0
  %1289 = vmatprep.subr.mxu0 0.0
  %1290 = vmatpush1.xpose.msra.mxu0 0.0
  %1291 = vmatprep.subr.mxu0 0.0
  %1292 = vmatpush1.xpose.msra.mxu0 0.0
  %1293 = vmatprep.subr.mxu0 0.0
  %1294 = vmatpush1.xpose.msra.mxu0 0.0
  %1295 = vmatprep.subr.mxu0 0.0
  %1296 = vmatpush1.xpose.msra.mxu0 0.0
  %1297 = vmatprep.subr.mxu0 0.0
  %1298 = vmatpush1.xpose.msra.mxu0 0.0
  %1299 = vmatprep.subr.mxu0 0.0
  %1300 = vmatpush1.xpose.msra.mxu0 0.0
  %1301 = vmatprep.subr.mxu0 0.0
  %1302 = vmatpush1.xpose.msra.mxu0 0.0
  %1303 = vmatprep.subr.mxu0 0.0
  %1304 = vmatpush1.xpose.msra.mxu0 0.0
  %1305 = vmatprep.subr.mxu0 0.0
  %1306 = vmatpush1.xpose.msra.mxu0 %v1273
  %1307 = vmatprep.subr.mxu0 0.0
  %1308 = vmatpush2.xpose.msra.mxu0 0.0
  %1309 = vmatprep.subr.mxu0 0.0
  %1310 = vmatpush2.xpose.msra.mxu0 0.0
  %1311 = vmatprep.subr.mxu0 0.0
  %1312 = vmatpush2.xpose.msra.mxu0 0.0
  %1313 = vmatprep.subr.mxu0 0.0
  %1314 = vmatpush2.xpose.msra.mxu0 0.0
  %1315 = vmatprep.subr.mxu0 0.0
  %1316 = vmatpush2.xpose.msra.mxu0 0.0
  %1317 = vmatprep.subr.mxu0 0.0
  %1318 = vmatpush2.xpose.msra.mxu0 0.0
  %1319 = vmatprep.subr.mxu0 0.0
  %1320 = vmatpush2.xpose.msra.mxu0 0.0
  %1321 = vmatprep.subr.mxu0 0.0
  %1322 = vmatpush2.xpose.msra.mxu0 0.0
  %1323 = vmatprep.subr.mxu0 0.0
  %1324 = vmatpush2.xpose.msra.mxu0 0.0
  %1325 = vmatprep.subr.mxu0 0.0
  %1326 = vmatpush2.xpose.msra.mxu0 0.0
  %1327 = vmatprep.subr.mxu0 0.0
  %1328 = vmatpush2.xpose.msra.mxu0 0.0
  %1329 = vmatprep.subr.mxu0 0.0
  %1330 = vmatpush2.xpose.msra.mxu0 0.0
  %1331 = vmatprep.subr.mxu0 0.0
  %1332 = vmatpush2.xpose.msra.mxu0 0.0
  %1333 = vmatprep.subr.mxu0 0.0
  %1334 = vmatpush2.xpose.msra.mxu0 0.0
  %1335 = vmatprep.subr.mxu0 0.0
  %1336 = vmatpush2.xpose.msra.mxu0 0.0
  %1337 = vmatprep.subr.mxu0 0.0
  %1338 = vmatpush2.xpose.msra.mxu0 0.0
  %1339 = vmatprep.mubr.f32.mxu0 0.0
  %1340 = vmatmul.mubr.f32.gmra.mxu0 %v1271
  %v1341 = vpop.f32.mrf.mxu0
  %v1342 = vadd.f32 0.0, %v1341
  %v1343 = vpop.f32.mrf.mxu0
  %1344 = vdwg.mxu0
  %v1345 = vmul.f32 %v1264, 0.35355338
  %v1346 = vmul.f32 %v1342, 0.35355338
  %v1347 = vadd.f32 %v1345, %v115
  %v1348 = vadd.f32 %v1346, %v119
  %v1349 = vsel %vm191, %v1347, -inf
  %1350 = vmax.xlane.f32.xlu0 %v1349
  %v1351 = vpop.xlane.xlu0 %1350
  %v1352 = vsel %vm191, %v1348, -inf
  %1353 = vmax.xlane.f32.xlu0 %v1352
  %v1354 = vpop.xlane.xlu0 %1353
  %v1355 = vsub.f32 %v1347, %v1351
  %v1356 = vsub.f32 %v1348, %v1354
  %v1357 = vmul.f32 %v1355, 1.442695
  %v1358 = vpow.pop %v1357
  %v1359 = vmul.f32 %v1356, 1.442695
  %v1360 = vpow.pop %v1359
  %v1361 = vsel %vm191, %v1358, 0.0
  %1362 = vadd.xlane.f32.xlu0 %v1361
  %v1363 = vpop.xlane.xlu0 %1362
  %v1364 = vsel %vm191, %v1360, 0.0
  %1365 = vadd.xlane.f32.xlu0 %v1364
  %v1366 = vpop.xlane.xlu0 %1365
  %v1367 = vrcp.pop %v1363
  %v1368 = vrcp.pop %v1366
  %v1369 = vmul.f32 %v1358, %v1367
  %v1370 = vmul.f32 %v1360, %v1368
  %1371 = vrot.lane.b32.xlu0 %v182, 40
  %v1372 = vpop.permute.xlu0 %1371
  %v1375 = vsel %vm191, %v1369, 0
  %1377 = vmatprep.subr.mxu0 0.0
  %1378 = vmatpush1.msra.mxu0 0.0
  %1379 = vmatprep.subr.mxu0 0.0
  %1380 = vmatpush1.msra.mxu0 0.0
  %1381 = vmatprep.subr.mxu0 0.0
  %1382 = vmatpush1.msra.mxu0 0.0
  %1383 = vmatprep.subr.mxu0 0.0
  %1384 = vmatpush1.msra.mxu0 0.0
  %1385 = vmatprep.subr.mxu0 0.0
  %1386 = vmatpush1.msra.mxu0 0.0
  %1387 = vmatprep.subr.mxu0 0.0
  %1388 = vmatpush1.msra.mxu0 0.0
  %1389 = vmatprep.subr.mxu0 0.0
  %1390 = vmatpush1.msra.mxu0 0.0
  %1391 = vmatprep.subr.mxu0 0.0
  %1392 = vmatpush1.msra.mxu0 0.0
  %1393 = vmatprep.subr.mxu0 0.0
  %1394 = vmatpush1.msra.mxu0 0.0
  %1395 = vmatprep.subr.mxu0 0.0
  %1396 = vmatpush1.msra.mxu0 0.0
  %1397 = vmatprep.subr.mxu0 0.0
  %1398 = vmatpush1.msra.mxu0 0.0
  %1399 = vmatprep.subr.mxu0 0.0
  %1400 = vmatpush1.msra.mxu0 0.0
  %1401 = vmatprep.subr.mxu0 0.0
  %1402 = vmatpush1.msra.mxu0 0.0
  %1403 = vmatprep.subr.mxu0 0.0
  %1404 = vmatpush1.msra.mxu0 0.0
  %1405 = vmatprep.subr.mxu0 0.0
  %1406 = vmatpush1.msra.mxu0 0.0
  %1407 = vmatprep.subr.mxu0 0.0
  %1408 = vmatpush1.msra.mxu0 %v1372
  %1409 = vmatprep.subr.mxu0 0.0
  %1410 = vmatpush2.msra.mxu0 0.0
  %1411 = vmatprep.subr.mxu0 0.0
  %1412 = vmatpush2.msra.mxu0 0.0
  %1413 = vmatprep.subr.mxu0 0.0
  %1414 = vmatpush2.msra.mxu0 0.0
  %1415 = vmatprep.subr.mxu0 0.0
  %1416 = vmatpush2.msra.mxu0 0.0
  %1417 = vmatprep.subr.mxu0 0.0
  %1418 = vmatpush2.msra.mxu0 0.0
  %1419 = vmatprep.subr.mxu0 0.0
  %1420 = vmatpush2.msra.mxu0 0.0
  %1421 = vmatprep.subr.mxu0 0.0
  %1422 = vmatpush2.msra.mxu0 0.0
  %1423 = vmatprep.subr.mxu0 0.0
  %1424 = vmatpush2.msra.mxu0 0.0
  %1425 = vmatprep.subr.mxu0 0.0
  %1426 = vmatpush2.msra.mxu0 0.0
  %1427 = vmatprep.subr.mxu0 0.0
  %1428 = vmatpush2.msra.mxu0 0.0
  %1429 = vmatprep.subr.mxu0 0.0
  %1430 = vmatpush2.msra.mxu0 0.0
  %1431 = vmatprep.subr.mxu0 0.0
  %1432 = vmatpush2.msra.mxu0 0.0
  %1433 = vmatprep.subr.mxu0 0.0
  %1434 = vmatpush2.msra.mxu0 0.0
  %1435 = vmatprep.subr.mxu0 0.0
  %1436 = vmatpush2.msra.mxu0 0.0
  %1437 = vmatprep.subr.mxu0 0.0
  %1438 = vmatpush2.msra.mxu0 0.0
  %1439 = vmatprep.subr.mxu0 0.0
  %1440 = vmatpush2.msra.mxu0 0.0
  %1441 = vmatprep.mubr.f32.mxu0 0.0
  %1442 = vmatmul.mubr.f32.gmra.mxu0 %v1375
  %v1443 = vpop.f32.mrf.mxu0
  %v1444 = vadd.f32 0.0, %v1443
  %v1445 = vpop.f32.mrf.mxu0
  %1446 = vdwg.mxu0
  %1447 = vrot.lane.b32.xlu0 %v185, 40
  %v1448 = vpop.permute.xlu0 %1447
  %v1451 = vsel %vm191, %v1370, 0
  %1453 = vmatprep.subr.mxu0 0.0
  %1454 = vmatpush1.msra.mxu0 0.0
  %1455 = vmatprep.subr.mxu0 0.0
  %1456 = vmatpush1.msra.mxu0 0.0
  %1457 = vmatprep.subr.mxu0 0.0
  %1458 = vmatpush1.msra.mxu0 0.0
  %1459 = vmatprep.subr.mxu0 0.0
  %1460 = vmatpush1.msra.mxu0 0.0
  %1461 = vmatprep.subr.mxu0 0.0
  %1462 = vmatpush1.msra.mxu0 0.0
  %1463 = vmatprep.subr.mxu0 0.0
  %1464 = vmatpush1.msra.mxu0 0.0
  %1465 = vmatprep.subr.mxu0 0.0
  %1466 = vmatpush1.msra.mxu0 0.0
  %1467 = vmatprep.subr.mxu0 0.0
  %1468 = vmatpush1.msra.mxu0 0.0
  %1469 = vmatprep.subr.mxu0 0.0
  %1470 = vmatpush1.msra.mxu0 0.0
  %1471 = vmatprep.subr.mxu0 0.0
  %1472 = vmatpush1.msra.mxu0 0.0
  %1473 = vmatprep.subr.mxu0 0.0
  %1474 = vmatpush1.msra.mxu0 0.0
  %1475 = vmatprep.subr.mxu0 0.0
  %1476 = vmatpush1.msra.mxu0 0.0
  %1477 = vmatprep.subr.mxu0 0.0
  %1478 = vmatpush1.msra.mxu0 0.0
  %1479 = vmatprep.subr.mxu0 0.0
  %1480 = vmatpush1.msra.mxu0 0.0
  %1481 = vmatprep.subr.mxu0 0.0
  %1482 = vmatpush1.msra.mxu0 0.0
  %1483 = vmatprep.subr.mxu0 0.0
  %1484 = vmatpush1.msra.mxu0 %v1448
  %1485 = vmatprep.subr.mxu0 0.0
  %1486 = vmatpush2.msra.mxu0 0.0
  %1487 = vmatprep.subr.mxu0 0.0
  %1488 = vmatpush2.msra.mxu0 0.0
  %1489 = vmatprep.subr.mxu0 0.0
  %1490 = vmatpush2.msra.mxu0 0.0
  %1491 = vmatprep.subr.mxu0 0.0
  %1492 = vmatpush2.msra.mxu0 0.0
  %1493 = vmatprep.subr.mxu0 0.0
  %1494 = vmatpush2.msra.mxu0 0.0
  %1495 = vmatprep.subr.mxu0 0.0
  %1496 = vmatpush2.msra.mxu0 0.0
  %1497 = vmatprep.subr.mxu0 0.0
  %1498 = vmatpush2.msra.mxu0 0.0
  %1499 = vmatprep.subr.mxu0 0.0
  %1500 = vmatpush2.msra.mxu0 0.0
  %1501 = vmatprep.subr.mxu0 0.0
  %1502 = vmatpush2.msra.mxu0 0.0
  %1503 = vmatprep.subr.mxu0 0.0
  %1504 = vmatpush2.msra.mxu0 0.0
  %1505 = vmatprep.subr.mxu0 0.0
  %1506 = vmatpush2.msra.mxu0 0.0
  %1507 = vmatprep.subr.mxu0 0.0
  %1508 = vmatpush2.msra.mxu0 0.0
  %1509 = vmatprep.subr.mxu0 0.0
  %1510 = vmatpush2.msra.mxu0 0.0
  %1511 = vmatprep.subr.mxu0 0.0
  %1512 = vmatpush2.msra.mxu0 0.0
  %1513 = vmatprep.subr.mxu0 0.0
  %1514 = vmatpush2.msra.mxu0 0.0
  %1515 = vmatprep.subr.mxu0 0.0
  %1516 = vmatpush2.msra.mxu0 0.0
  %1517 = vmatprep.mubr.f32.mxu0 0.0
  %1518 = vmatmul.mubr.f32.gmra.mxu0 %v1451
  %v1519 = vpop.f32.mrf.mxu0
  %v1520 = vadd.f32 0.0, %v1519
  %v1521 = vpop.f32.mrf.mxu0
  %1522 = vdwg.mxu0
  %1525 = vrot.lane.b32.xlu0 %v776, 8
  %v1526 = vpop.permute.xlu0 %1525
  %1527 = vrot.lane.b32.xlu0 %v852, 8
  %v1528 = vpop.permute.xlu0 %1527
  %1533 = vrot.lane.b32.xlu0 %v1110, 16
  %v1534 = vpop.permute.xlu0 %1533
  %1535 = vrot.lane.b32.xlu0 %v1186, 16
  %v1536 = vpop.permute.xlu0 %1535
  %1541 = vrot.lane.b32.xlu0 %v1444, 24
  %v1542 = vpop.permute.xlu0 %1541
  %1543 = vrot.lane.b32.xlu0 %v1520, 24
  %v1544 = vpop.permute.xlu0 %1543
  %v1547 = vsel %vm191, %v442, %v1526
  %v1548 = vsel %vm191, %v518, %v1528
  %vm1549 = vcmask 130048
  %v1550 = vsel %vm1549, %v1547, %v1534
  %v1551 = vsel %vm1549, %v1548, %v1536
  %vm1552 = vcmask 195584
  %v1553 = vsel %vm1552, %v1550, %v1542
  %v1554 = vsel %vm1552, %v1551, %v1544
  %v1555 = vpack.c.bf16 %v1554, %v1553
  %v1556 = vld [vmem:[%s4] sm:$0xf]
  %v1557 = vld [vmem:[%s4 + $0x4] sm:$0xf]
  %v1558 = vld [vmem:[%s4 + $0x8] sm:$0xf]
  %v1559 = vld [vmem:[%s4 + $0xc] sm:$0xf]
  %v1560 = vlaneseq
  %v1561 = vshrl.u32 %v1560, 7
  %v1562 = vsub.s32 1, %v1561
  %v1563 = vrot.slane %v122, %v1562
  %v1568 = vunpack.c.l.b16 %v1556
  %v1569 = vunpack.c.l.b16 %v1557
  %v1570 = vunpack.c.l.b16 %v1558
  %v1571 = vunpack.c.l.b16 %v1559
  %v1572 = vpack.c.b16 %v1569, %v1568
  %v1573 = vpack.c.b16 %v1571, %v1570
  %v1577 = vsel %vm46, %v1555, 0
  %1579 = vmatprep.subr.bf16.mxu0 0
  %1580 = vmatpush1.bf16.msra.mxu0 0
  %1581 = vmatprep.subr.bf16.mxu0 0
  %1582 = vmatpush1.bf16.msra.mxu0 0
  %1583 = vmatprep.subr.bf16.mxu0 0
  %1584 = vmatpush1.bf16.msra.mxu0 0
  %1585 = vmatprep.subr.bf16.mxu0 0
  %1586 = vmatpush1.bf16.msra.mxu0 0
  %1587 = vmatprep.subr.bf16.mxu0 0
  %1588 = vmatpush1.bf16.msra.mxu0 0
  %1589 = vmatprep.subr.bf16.mxu0 0
  %1590 = vmatpush1.bf16.msra.mxu0 0
  %1591 = vmatprep.subr.bf16.mxu0 0
  %1592 = vmatpush1.bf16.msra.mxu0 %v1573
  %1593 = vmatprep.subr.bf16.mxu0 0
  %1594 = vmatpush1.bf16.msra.mxu0 %v1572
  %1595 = vmatprep.subr.bf16.mxu0 0
  %1596 = vmatpush2.bf16.msra.mxu0 0
  %1597 = vmatprep.subr.bf16.mxu0 0
  %1598 = vmatpush2.bf16.msra.mxu0 0
  %1599 = vmatprep.subr.bf16.mxu0 0
  %1600 = vmatpush2.bf16.msra.mxu0 0
  %1601 = vmatprep.subr.bf16.mxu0 0
  %1602 = vmatpush2.bf16.msra.mxu0 0
  %1603 = vmatprep.subr.bf16.mxu0 0
  %1604 = vmatpush2.bf16.msra.mxu0 0
  %1605 = vmatprep.subr.bf16.mxu0 0
  %1606 = vmatpush2.bf16.msra.mxu0 0
  %1607 = vmatprep.subr.bf16.mxu0 0
  %1608 = vmatpush2.bf16.msra.mxu0 0
  %1609 = vmatprep.subr.bf16.mxu0 0
  %1610 = vmatpush2.bf16.msra.mxu0 0
  %1611 = vmatprep.mubr.bf16.mxu0 0
  %1612 = vmatmul.mubr.bf16.gmra.mxu0 %v1577
  %v1613 = vpop.f32.mrf.mxu0
  %v1614 = vadd.f32 %v1563, %v1613
  %v1615 = vpop.f32.mrf.mxu0
  %v1616 = vpop.f32.mrf.mxu0
  %v1617 = vadd.f32 %v1563, %v1616
  %v1618 = vpop.f32.mrf.mxu0
  %1619 = vdwg.mxu0
  %v1620 = vadd.f32 %v84, %v1614
  %v1621 = vadd.f32 %v85, %v1617
  %v1622 = vsel %vm46, %v1620, 0.0
  %1623 = vadd.xlane.f32.xlu0 %v1622
  %v1624 = vpop.xlane.xlu0 %1623
  %v1625 = vsel %vm46, %v1621, 0.0
  %1626 = vadd.xlane.f32.xlu0 %v1625
  %v1627 = vpop.xlane.xlu0 %1626
  %v1628 = vmul.f32 %v1624, %v53
  %v1629 = vmul.f32 %v1627, %v53
  %v1630 = vsub.f32 %v1620, %v1628
  %v1631 = vsub.f32 %v1621, %v1629
  %v1632 = vmul.f32 %v1630, %v1630
  %v1633 = vmul.f32 %v1631, %v1631
  %v1634 = vsel %vm46, %v1632, 0.0
  %1635 = vadd.xlane.f32.xlu0 %v1634
  %v1636 = vpop.xlane.xlu0 %1635
  %v1637 = vsel %vm46, %v1633, 0.0
  %1638 = vadd.xlane.f32.xlu0 %v1637
  %v1639 = vpop.xlane.xlu0 %1638
  %v1640 = vmul.f32 %v1636, %v53
  %v1641 = vmul.f32 %v1639, %v53
  %v1642 = vadd.f32 %v1640, 1e-12
  %v1643 = vadd.f32 %v1641, 1e-12
  %v1644 = vrsqrt.pop %v1642
  %v1645 = vrsqrt.pop %v1643
  %v1646 = vmul.f32 %v1630, %v1644
  %v1647 = vmul.f32 %v1631, %v1645
  %v1648 = vlaneseq
  %v1649 = vshrl.u32 %v1648, 7
  %v1650 = vsub.s32 2, %v1649
  %v1651 = vrot.slane %v122, %v1650
  %v1652 = vmul.f32 %v1646, %v1651
  %v1653 = vmul.f32 %v1647, %v1651
  %v1654 = vlaneseq
  %v1655 = vshrl.u32 %v1654, 7
  %v1656 = vsub.s32 3, %v1655
  %v1657 = vrot.slane %v122, %v1656
  %v1658 = vadd.f32 %v1652, %v1657
  %v1659 = vadd.f32 %v1653, %v1657
  %v1660 = vpack.c.bf16 %v1659, %v1658
  %v1661 = vld [vmem:[%s5] sm:$0xf]
  %v1662 = vld [vmem:[%s5 + $0x4] sm:$0xf]
  %v1663 = vld [vmem:[%s5 + $0x8] sm:$0xf]
  %v1664 = vld [vmem:[%s5 + $0xc] sm:$0xf]
  %v1665 = vlaneseq
  %v1666 = vshrl.u32 %v1665, 7
  %v1667 = vsub.s32 4, %v1666
  %v1668 = vrot.slane %v122, %v1667
  %v1673 = vunpack.c.l.b16 %v1661
  %v1674 = vunpack.c.l.b16 %v1662
  %v1675 = vunpack.c.l.b16 %v1663
  %v1676 = vunpack.c.l.b16 %v1664
  %v1677 = vpack.c.b16 %v1674, %v1673
  %v1678 = vpack.c.b16 %v1676, %v1675
  %v1682 = vsel %vm46, %v1660, 0
  %1684 = vmatprep.subr.bf16.mxu0 0
  %1685 = vmatpush1.bf16.msra.mxu0 0
  %1686 = vmatprep.subr.bf16.mxu0 0
  %1687 = vmatpush1.bf16.msra.mxu0 0
  %1688 = vmatprep.subr.bf16.mxu0 0
  %1689 = vmatpush1.bf16.msra.mxu0 0
  %1690 = vmatprep.subr.bf16.mxu0 0
  %1691 = vmatpush1.bf16.msra.mxu0 0
  %1692 = vmatprep.subr.bf16.mxu0 0
  %1693 = vmatpush1.bf16.msra.mxu0 0
  %1694 = vmatprep.subr.bf16.mxu0 0
  %1695 = vmatpush1.bf16.msra.mxu0 0
  %1696 = vmatprep.subr.bf16.mxu0 0
  %1697 = vmatpush1.bf16.msra.mxu0 %v1678
  %1698 = vmatprep.subr.bf16.mxu0 0
  %1699 = vmatpush1.bf16.msra.mxu0 %v1677
  %1700 = vmatprep.subr.bf16.mxu0 0
  %1701 = vmatpush2.bf16.msra.mxu0 0
  %1702 = vmatprep.subr.bf16.mxu0 0
  %1703 = vmatpush2.bf16.msra.mxu0 0
  %1704 = vmatprep.subr.bf16.mxu0 0
  %1705 = vmatpush2.bf16.msra.mxu0 0
  %1706 = vmatprep.subr.bf16.mxu0 0
  %1707 = vmatpush2.bf16.msra.mxu0 0
  %1708 = vmatprep.subr.bf16.mxu0 0
  %1709 = vmatpush2.bf16.msra.mxu0 0
  %1710 = vmatprep.subr.bf16.mxu0 0
  %1711 = vmatpush2.bf16.msra.mxu0 0
  %1712 = vmatprep.subr.bf16.mxu0 0
  %1713 = vmatpush2.bf16.msra.mxu0 0
  %1714 = vmatprep.subr.bf16.mxu0 0
  %1715 = vmatpush2.bf16.msra.mxu0 0
  %1716 = vmatprep.mubr.bf16.mxu0 0
  %1717 = vmatmul.mubr.bf16.gmra.mxu0 %v1682
  %v1718 = vpop.f32.mrf.mxu0
  %v1719 = vadd.f32 %v1668, %v1718
  %v1720 = vpop.f32.mrf.mxu0
  %v1721 = vpop.f32.mrf.mxu0
  %v1722 = vadd.f32 %v1668, %v1721
  %v1723 = vpop.f32.mrf.mxu0
  %1724 = vdwg.mxu0
  %v1725 = vmul.f32 %v1719, 0.5
  %v1726 = vmul.f32 %v1722, 0.5
  %v1727 = vmul.f32 %v1719, 0.70710677
  %v1728 = vmul.f32 %v1722, 0.70710677
  %vm1729 = vcmp.ge.f32.partialorder %v1727, 0.0
  %vm1730 = vcmp.ge.f32.partialorder %v1728, 0.0
  %v1731 = vsel %vm1729, 1.0, -1.0
  %v1732 = vsel %vm1730, 1.0, -1.0
  %v1733 = vand.u32 2147483647, %v1727
  %v1734 = vand.u32 2147483647, %v1728
  %v1735 = vmul.f32 %v1733, 0.3275911
  %v1736 = vmul.f32 %v1734, 0.3275911
  %v1737 = vadd.f32 %v1735, 1.0
  %v1738 = vadd.f32 %v1736, 1.0
  %v1739 = vrcp.pop %v1737
  %v1740 = vrcp.pop %v1738
  %v1741 = vmul.f32 %v1739, 1.0614054
  %v1742 = vmul.f32 %v1740, 1.0614054
  %v1743 = vadd.f32 %v1741, -1.4531521
  %v1744 = vadd.f32 %v1742, -1.4531521
  %v1745 = vmul.f32 %v1743, %v1739
  %v1746 = vmul.f32 %v1744, %v1740
  %v1747 = vadd.f32 %v1745, 1.4214138
  %v1748 = vadd.f32 %v1746, 1.4214138
  %v1749 = vmul.f32 %v1747, %v1739
  %v1750 = vmul.f32 %v1748, %v1740
  %v1751 = vadd.f32 %v1749, -0.28449672
  %v1752 = vadd.f32 %v1750, -0.28449672
  %v1753 = vmul.f32 %v1751, %v1739
  %v1754 = vmul.f32 %v1752, %v1740
  %v1755 = vadd.f32 %v1753, 0.2548296
  %v1756 = vadd.f32 %v1754, 0.2548296
  %v1757 = vmul.f32 %v1755, %v1739
  %v1758 = vmul.f32 %v1756, %v1740
  %v1759 = vsub.f32 0.0, %v1733
  %v1760 = vsub.f32 0.0, %v1734
  %v1761 = vmul.f32 %v1759, %v1733
  %v1762 = vmul.f32 %v1760, %v1734
  %v1763 = vmul.f32 %v1761, 1.442695
  %v1764 = vpow.pop %v1763
  %v1765 = vmul.f32 %v1762, 1.442695
  %v1766 = vpow.pop %v1765
  %v1767 = vmul.f32 %v1757, %v1764
  %v1768 = vmul.f32 %v1758, %v1766
  %v1769 = vsub.f32 1.0, %v1767
  %v1770 = vsub.f32 1.0, %v1768
  %v1771 = vmul.f32 %v1731, %v1769
  %v1772 = vmul.f32 %v1732, %v1770
  %v1773 = vadd.f32 %v1771, 1.0
  %v1774 = vadd.f32 %v1772, 1.0
  %v1775 = vmul.f32 %v1725, %v1773
  %v1776 = vmul.f32 %v1726, %v1774
  %v1777 = vpack.c.bf16 %v1776, %v1775
  %v1778 = vld [vmem:[%s6] sm:$0xf]
  %v1779 = vld [vmem:[%s6 + $0x4] sm:$0xf]
  %v1780 = vld [vmem:[%s6 + $0x8] sm:$0xf]
  %v1781 = vld [vmem:[%s6 + $0xc] sm:$0xf]
  %v1782 = vld [vmem:[%s6 + $0x10] sm:$0xf]
  %v1783 = vld [vmem:[%s6 + $0x14] sm:$0xf]
  %v1784 = vld [vmem:[%s6 + $0x18] sm:$0xf]
  %v1785 = vld [vmem:[%s6 + $0x1c] sm:$0xf]
  %v1786 = vlaneseq
  %v1787 = vshrl.u32 %v1786, 7
  %v1788 = vsub.s32 5, %v1787
  %v1789 = vrot.slane %v122, %v1788
  %v1798 = vunpack.c.l.b16 %v1778
  %v1799 = vunpack.c.l.b16 %v1779
  %v1800 = vunpack.c.l.b16 %v1780
  %v1801 = vunpack.c.l.b16 %v1781
  %v1802 = vunpack.c.l.b16 %v1782
  %v1803 = vunpack.c.l.b16 %v1783
  %v1804 = vunpack.c.l.b16 %v1784
  %v1805 = vunpack.c.l.b16 %v1785
  %v1806 = vpack.c.b16 %v1799, %v1798
  %v1807 = vpack.c.b16 %v1801, %v1800
  %v1808 = vpack.c.b16 %v1803, %v1802
  %v1809 = vpack.c.b16 %v1805, %v1804
  %vm1814 = vcmask 523264
  %v1816 = vsel %vm1814, %v1777, 0
  %1818 = vmatprep.subr.bf16.mxu0 0
  %1819 = vmatpush1.bf16.msra.mxu0 0
  %1820 = vmatprep.subr.bf16.mxu0 0
  %1821 = vmatpush1.bf16.msra.mxu0 0
  %1822 = vmatprep.subr.bf16.mxu0 0
  %1823 = vmatpush1.bf16.msra.mxu0 0
  %1824 = vmatprep.subr.bf16.mxu0 0
  %1825 = vmatpush1.bf16.msra.mxu0 0
  %1826 = vmatprep.subr.bf16.mxu0 0
  %1827 = vmatpush1.bf16.msra.mxu0 %v1809
  %1828 = vmatprep.subr.bf16.mxu0 0
  %1829 = vmatpush1.bf16.msra.mxu0 %v1808
  %1830 = vmatprep.subr.bf16.mxu0 0
  %1831 = vmatpush1.bf16.msra.mxu0 %v1807
  %1832 = vmatprep.subr.bf16.mxu0 0
  %1833 = vmatpush1.bf16.msra.mxu0 %v1806
  %1834 = vmatprep.subr.bf16.mxu0 0
  %1835 = vmatpush2.bf16.msra.mxu0 0
  %1836 = vmatprep.subr.bf16.mxu0 0
  %1837 = vmatpush2.bf16.msra.mxu0 0
  %1838 = vmatprep.subr.bf16.mxu0 0
  %1839 = vmatpush2.bf16.msra.mxu0 0
  %1840 = vmatprep.subr.bf16.mxu0 0
  %1841 = vmatpush2.bf16.msra.mxu0 0
  %1842 = vmatprep.subr.bf16.mxu0 0
  %1843 = vmatpush2.bf16.msra.mxu0 0
  %1844 = vmatprep.subr.bf16.mxu0 0
  %1845 = vmatpush2.bf16.msra.mxu0 0
  %1846 = vmatprep.subr.bf16.mxu0 0
  %1847 = vmatpush2.bf16.msra.mxu0 0
  %1848 = vmatprep.subr.bf16.mxu0 0
  %1849 = vmatpush2.bf16.msra.mxu0 0
  %1850 = vmatprep.mubr.bf16.mxu0 0
  %1851 = vmatmul.mubr.bf16.gmra.mxu0 %v1816
  %v1852 = vpop.f32.mrf.mxu0
  %v1853 = vadd.f32 %v1789, %v1852
  %v1854 = vpop.f32.mrf.mxu0
  %v1855 = vpop.f32.mrf.mxu0
  %v1856 = vadd.f32 %v1789, %v1855
  %v1857 = vpop.f32.mrf.mxu0
  %1858 = vdwg.mxu0
  %v1859 = vadd.f32 %v1658, %v1853
  %v1860 = vadd.f32 %v1659, %v1856
  %v1861 = vsel %vm46, %v1859, 0.0
  %1862 = vadd.xlane.f32.xlu0 %v1861
  %v1863 = vpop.xlane.xlu0 %1862
  %v1864 = vsel %vm46, %v1860, 0.0
  %1865 = vadd.xlane.f32.xlu0 %v1864
  %v1866 = vpop.xlane.xlu0 %1865
  %v1867 = vmul.f32 %v1863, %v53
  %v1868 = vmul.f32 %v1866, %v53
  %v1869 = vsub.f32 %v1859, %v1867
  %v1870 = vsub.f32 %v1860, %v1868
  %v1871 = vmul.f32 %v1869, %v1869
  %v1872 = vmul.f32 %v1870, %v1870
  %v1873 = vsel %vm46, %v1871, 0.0
  %1874 = vadd.xlane.f32.xlu0 %v1873
  %v1875 = vpop.xlane.xlu0 %1874
  %v1876 = vsel %vm46, %v1872, 0.0
  %1877 = vadd.xlane.f32.xlu0 %v1876
  %v1878 = vpop.xlane.xlu0 %1877
  %v1879 = vmul.f32 %v1875, %v53
  %v1880 = vmul.f32 %v1878, %v53
  %v1881 = vadd.f32 %v1879, 1e-12
  %v1882 = vadd.f32 %v1880, 1e-12
  %v1883 = vrsqrt.pop %v1881
  %v1884 = vrsqrt.pop %v1882
  %v1885 = vmul.f32 %v1869, %v1883
  %v1886 = vmul.f32 %v1870, %v1884
  %v1887 = vlaneseq
  %v1888 = vshrl.u32 %v1887, 7
  %v1889 = vsub.s32 6, %v1888
  %v1890 = vrot.slane %v122, %v1889
  %v1891 = vmul.f32 %v1885, %v1890
  %v1892 = vmul.f32 %v1886, %v1890
  %v1893 = vlaneseq
  %v1894 = vshrl.u32 %v1893, 7
  %v1895 = vsub.s32 7, %v1894
  %v1896 = vrot.slane %v122, %v1895
  %v1897 = vadd.f32 %v1891, %v1896
  %v1898 = vadd.f32 %v1892, %v1896
  %s1899 = scalar_lea.vmem %s7, 8
  %v1900 = vld [vmem:[%s1899] sm:$0xff]
  %v1901 = vpack.c.bf16 %v1898, %v1897
  %s1902 = scalar_lea.vmem %s3, 16
  %v1903 = vld [vmem:[%s1902] sm:$0xf]
  %v1904 = vld [vmem:[%s1902 + $0x4] sm:$0xf]
  %v1905 = vld [vmem:[%s1902 + $0x8] sm:$0xf]
  %v1906 = vld [vmem:[%s1902 + $0xc] sm:$0xf]
  %v1907 = vlaneseq
  %v1908 = vshrl.u32 %v1907, 7
  %v1909 = vsub.s32 0, %v1908
  %v1910 = vrot.slane %v1900, %v1909
  %v1915 = vunpack.c.l.b16 %v1903
  %v1916 = vunpack.c.l.b16 %v1904
  %v1917 = vunpack.c.l.b16 %v1905
  %v1918 = vunpack.c.l.b16 %v1906
  %v1919 = vpack.c.b16 %v1916, %v1915
  %v1920 = vpack.c.b16 %v1918, %v1917
  %v1924 = vsel %vm46, %v1901, 0
  %1926 = vmatprep.subr.bf16.mxu0 0
  %1927 = vmatpush1.bf16.msra.mxu0 0
  %1928 = vmatprep.subr.bf16.mxu0 0
  %1929 = vmatpush1.bf16.msra.mxu0 0
  %1930 = vmatprep.subr.bf16.mxu0 0
  %1931 = vmatpush1.bf16.msra.mxu0 0
  %1932 = vmatprep.subr.bf16.mxu0 0
  %1933 = vmatpush1.bf16.msra.mxu0 0
  %1934 = vmatprep.subr.bf16.mxu0 0
  %1935 = vmatpush1.bf16.msra.mxu0 0
  %1936 = vmatprep.subr.bf16.mxu0 0
  %1937 = vmatpush1.bf16.msra.mxu0 0
  %1938 = vmatprep.subr.bf16.mxu0 0
  %1939 = vmatpush1.bf16.msra.mxu0 %v1920
  %1940 = vmatprep.subr.bf16.mxu0 0
  %1941 = vmatpush1.bf16.msra.mxu0 %v1919
  %1942 = vmatprep.subr.bf16.mxu0 0
  %1943 = vmatpush2.bf16.msra.mxu0 0
  %1944 = vmatprep.subr.bf16.mxu0 0
  %1945 = vmatpush2.bf16.msra.mxu0 0
  %1946 = vmatprep.subr.bf16.mxu0 0
  %1947 = vmatpush2.bf16.msra.mxu0 0
  %1948 = vmatprep.subr.bf16.mxu0 0
  %1949 = vmatpush2.bf16.msra.mxu0 0
  %1950 = vmatprep.subr.bf16.mxu0 0
  %1951 = vmatpush2.bf16.msra.mxu0 0
  %1952 = vmatprep.subr.bf16.mxu0 0
  %1953 = vmatpush2.bf16.msra.mxu0 0
  %1954 = vmatprep.subr.bf16.mxu0 0
  %1955 = vmatpush2.bf16.msra.mxu0 0
  %1956 = vmatprep.subr.bf16.mxu0 0
  %1957 = vmatpush2.bf16.msra.mxu0 0
  %1958 = vmatprep.mubr.bf16.mxu0 0
  %1959 = vmatmul.mubr.bf16.gmra.mxu0 %v1924
  %v1960 = vpop.f32.mrf.mxu0
  %v1961 = vadd.f32 %v1910, %v1960
  %v1962 = vpop.f32.mrf.mxu0
  %v1963 = vpop.f32.mrf.mxu0
  %v1964 = vadd.f32 %v1910, %v1963
  %v1965 = vpop.f32.mrf.mxu0
  %1966 = vdwg.mxu0
  %1968 = vrot.lane.b32.xlu0 %v1961, 96
  %v1969 = vpop.permute.xlu0 %1968
  %v1970 = vsel %vm191, %v1961, 0
  %v1972 = vsel %vm191, %v1969, 0
  %1974 = vmatprep.subr.mxu0 0.0
  %1975 = vmatpush1.xpose.msra.mxu0 0.0
  %1976 = vmatprep.subr.mxu0 0.0
  %1977 = vmatpush1.xpose.msra.mxu0 0.0
  %1978 = vmatprep.subr.mxu0 0.0
  %1979 = vmatpush1.xpose.msra.mxu0 0.0
  %1980 = vmatprep.subr.mxu0 0.0
  %1981 = vmatpush1.xpose.msra.mxu0 0.0
  %1982 = vmatprep.subr.mxu0 0.0
  %1983 = vmatpush1.xpose.msra.mxu0 0.0
  %1984 = vmatprep.subr.mxu0 0.0
  %1985 = vmatpush1.xpose.msra.mxu0 0.0
  %1986 = vmatprep.subr.mxu0 0.0
  %1987 = vmatpush1.xpose.msra.mxu0 0.0
  %1988 = vmatprep.subr.mxu0 0.0
  %1989 = vmatpush1.xpose.msra.mxu0 0.0
  %1990 = vmatprep.subr.mxu0 0.0
  %1991 = vmatpush1.xpose.msra.mxu0 0.0
  %1992 = vmatprep.subr.mxu0 0.0
  %1993 = vmatpush1.xpose.msra.mxu0 0.0
  %1994 = vmatprep.subr.mxu0 0.0
  %1995 = vmatpush1.xpose.msra.mxu0 0.0
  %1996 = vmatprep.subr.mxu0 0.0
  %1997 = vmatpush1.xpose.msra.mxu0 0.0
  %1998 = vmatprep.subr.mxu0 0.0
  %1999 = vmatpush1.xpose.msra.mxu0 0.0
  %2000 = vmatprep.subr.mxu0 0.0
  %2001 = vmatpush1.xpose.msra.mxu0 0.0
  %2002 = vmatprep.subr.mxu0 0.0
  %2003 = vmatpush1.xpose.msra.mxu0 0.0
  %2004 = vmatprep.subr.mxu0 0.0
  %2005 = vmatpush1.xpose.msra.mxu0 %v1972
  %2006 = vmatprep.subr.mxu0 0.0
  %2007 = vmatpush2.xpose.msra.mxu0 0.0
  %2008 = vmatprep.subr.mxu0 0.0
  %2009 = vmatpush2.xpose.msra.mxu0 0.0
  %2010 = vmatprep.subr.mxu0 0.0
  %2011 = vmatpush2.xpose.msra.mxu0 0.0
  %2012 = vmatprep.subr.mxu0 0.0
  %2013 = vmatpush2.xpose.msra.mxu0 0.0
  %2014 = vmatprep.subr.mxu0 0.0
  %2015 = vmatpush2.xpose.msra.mxu0 0.0
  %2016 = vmatprep.subr.mxu0 0.0
  %2017 = vmatpush2.xpose.msra.mxu0 0.0
  %2018 = vmatprep.subr.mxu0 0.0
  %2019 = vmatpush2.xpose.msra.mxu0 0.0
  %2020 = vmatprep.subr.mxu0 0.0
  %2021 = vmatpush2.xpose.msra.mxu0 0.0
  %2022 = vmatprep.subr.mxu0 0.0
  %2023 = vmatpush2.xpose.msra.mxu0 0.0
  %2024 = vmatprep.subr.mxu0 0.0
  %2025 = vmatpush2.xpose.msra.mxu0 0.0
  %2026 = vmatprep.subr.mxu0 0.0
  %2027 = vmatpush2.xpose.msra.mxu0 0.0
  %2028 = vmatprep.subr.mxu0 0.0
  %2029 = vmatpush2.xpose.msra.mxu0 0.0
  %2030 = vmatprep.subr.mxu0 0.0
  %2031 = vmatpush2.xpose.msra.mxu0 0.0
  %2032 = vmatprep.subr.mxu0 0.0
  %2033 = vmatpush2.xpose.msra.mxu0 0.0
  %2034 = vmatprep.subr.mxu0 0.0
  %2035 = vmatpush2.xpose.msra.mxu0 0.0
  %2036 = vmatprep.subr.mxu0 0.0
  %2037 = vmatpush2.xpose.msra.mxu0 0.0
  %2038 = vmatprep.mubr.f32.mxu0 0.0
  %2039 = vmatmul.mubr.f32.gmra.mxu0 %v1970
  %v2040 = vpop.f32.mrf.mxu0
  %v2041 = vadd.f32 0.0, %v2040
  %v2042 = vpop.f32.mrf.mxu0
  %2043 = vdwg.mxu0
  %2045 = vrot.lane.b32.xlu0 %v1964, 96
  %v2046 = vpop.permute.xlu0 %2045
  %v2047 = vsel %vm191, %v1964, 0
  %v2049 = vsel %vm191, %v2046, 0
  %2051 = vmatprep.subr.mxu0 0.0
  %2052 = vmatpush1.xpose.msra.mxu0 0.0
  %2053 = vmatprep.subr.mxu0 0.0
  %2054 = vmatpush1.xpose.msra.mxu0 0.0
  %2055 = vmatprep.subr.mxu0 0.0
  %2056 = vmatpush1.xpose.msra.mxu0 0.0
  %2057 = vmatprep.subr.mxu0 0.0
  %2058 = vmatpush1.xpose.msra.mxu0 0.0
  %2059 = vmatprep.subr.mxu0 0.0
  %2060 = vmatpush1.xpose.msra.mxu0 0.0
  %2061 = vmatprep.subr.mxu0 0.0
  %2062 = vmatpush1.xpose.msra.mxu0 0.0
  %2063 = vmatprep.subr.mxu0 0.0
  %2064 = vmatpush1.xpose.msra.mxu0 0.0
  %2065 = vmatprep.subr.mxu0 0.0
  %2066 = vmatpush1.xpose.msra.mxu0 0.0
  %2067 = vmatprep.subr.mxu0 0.0
  %2068 = vmatpush1.xpose.msra.mxu0 0.0
  %2069 = vmatprep.subr.mxu0 0.0
  %2070 = vmatpush1.xpose.msra.mxu0 0.0
  %2071 = vmatprep.subr.mxu0 0.0
  %2072 = vmatpush1.xpose.msra.mxu0 0.0
  %2073 = vmatprep.subr.mxu0 0.0
  %2074 = vmatpush1.xpose.msra.mxu0 0.0
  %2075 = vmatprep.subr.mxu0 0.0
  %2076 = vmatpush1.xpose.msra.mxu0 0.0
  %2077 = vmatprep.subr.mxu0 0.0
  %2078 = vmatpush1.xpose.msra.mxu0 0.0
  %2079 = vmatprep.subr.mxu0 0.0
  %2080 = vmatpush1.xpose.msra.mxu0 0.0
  %2081 = vmatprep.subr.mxu0 0.0
  %2082 = vmatpush1.xpose.msra.mxu0 %v2049
  %2083 = vmatprep.subr.mxu0 0.0
  %2084 = vmatpush2.xpose.msra.mxu0 0.0
  %2085 = vmatprep.subr.mxu0 0.0
  %2086 = vmatpush2.xpose.msra.mxu0 0.0
  %2087 = vmatprep.subr.mxu0 0.0
  %2088 = vmatpush2.xpose.msra.mxu0 0.0
  %2089 = vmatprep.subr.mxu0 0.0
  %2090 = vmatpush2.xpose.msra.mxu0 0.0
  %2091 = vmatprep.subr.mxu0 0.0
  %2092 = vmatpush2.xpose.msra.mxu0 0.0
  %2093 = vmatprep.subr.mxu0 0.0
  %2094 = vmatpush2.xpose.msra.mxu0 0.0
  %2095 = vmatprep.subr.mxu0 0.0
  %2096 = vmatpush2.xpose.msra.mxu0 0.0
  %2097 = vmatprep.subr.mxu0 0.0
  %2098 = vmatpush2.xpose.msra.mxu0 0.0
  %2099 = vmatprep.subr.mxu0 0.0
  %2100 = vmatpush2.xpose.msra.mxu0 0.0
  %2101 = vmatprep.subr.mxu0 0.0
  %2102 = vmatpush2.xpose.msra.mxu0 0.0
  %2103 = vmatprep.subr.mxu0 0.0
  %2104 = vmatpush2.xpose.msra.mxu0 0.0
  %2105 = vmatprep.subr.mxu0 0.0
  %2106 = vmatpush2.xpose.msra.mxu0 0.0
  %2107 = vmatprep.subr.mxu0 0.0
  %2108 = vmatpush2.xpose.msra.mxu0 0.0
  %2109 = vmatprep.subr.mxu0 0.0
  %2110 = vmatpush2.xpose.msra.mxu0 0.0
  %2111 = vmatprep.subr.mxu0 0.0
  %2112 = vmatpush2.xpose.msra.mxu0 0.0
  %2113 = vmatprep.subr.mxu0 0.0
  %2114 = vmatpush2.xpose.msra.mxu0 0.0
  %2115 = vmatprep.mubr.f32.mxu0 0.0
  %2116 = vmatmul.mubr.f32.gmra.mxu0 %v2047
  %v2117 = vpop.f32.mrf.mxu0
  %v2118 = vadd.f32 0.0, %v2117
  %v2119 = vpop.f32.mrf.mxu0
  %2120 = vdwg.mxu0
  %v2121 = vmul.f32 %v2041, 0.35355338
  %v2122 = vmul.f32 %v2118, 0.35355338
  %v2123 = vadd.f32 %v2121, %v115
  %v2124 = vadd.f32 %v2122, %v119
  %v2125 = vsel %vm191, %v2123, -inf
  %2126 = vmax.xlane.f32.xlu0 %v2125
  %v2127 = vpop.xlane.xlu0 %2126
  %v2128 = vsel %vm191, %v2124, -inf
  %2129 = vmax.xlane.f32.xlu0 %v2128
  %v2130 = vpop.xlane.xlu0 %2129
  %v2131 = vsub.f32 %v2123, %v2127
  %v2132 = vsub.f32 %v2124, %v2130
  %v2133 = vmul.f32 %v2131, 1.442695
  %v2134 = vpow.pop %v2133
  %v2135 = vmul.f32 %v2132, 1.442695
  %v2136 = vpow.pop %v2135
  %v2137 = vsel %vm191, %v2134, 0.0
  %2138 = vadd.xlane.f32.xlu0 %v2137
  %v2139 = vpop.xlane.xlu0 %2138
  %v2140 = vsel %vm191, %v2136, 0.0
  %2141 = vadd.xlane.f32.xlu0 %v2140
  %v2142 = vpop.xlane.xlu0 %2141
  %v2143 = vrcp.pop %v2139
  %v2144 = vrcp.pop %v2142
  %v2145 = vmul.f32 %v2134, %v2143
  %v2146 = vmul.f32 %v2136, %v2144
  %2147 = vrot.lane.b32.xlu0 %v1961, 64
  %v2148 = vpop.permute.xlu0 %2147
  %v2151 = vsel %vm191, %v2145, 0
  %2153 = vmatprep.subr.mxu0 0.0
  %2154 = vmatpush1.msra.mxu0 0.0
  %2155 = vmatprep.subr.mxu0 0.0
  %2156 = vmatpush1.msra.mxu0 0.0
  %2157 = vmatprep.subr.mxu0 0.0
  %2158 = vmatpush1.msra.mxu0 0.0
  %2159 = vmatprep.subr.mxu0 0.0
  %2160 = vmatpush1.msra.mxu0 0.0
  %2161 = vmatprep.subr.mxu0 0.0
  %2162 = vmatpush1.msra.mxu0 0.0
  %2163 = vmatprep.subr.mxu0 0.0
  %2164 = vmatpush1.msra.mxu0 0.0
  %2165 = vmatprep.subr.mxu0 0.0
  %2166 = vmatpush1.msra.mxu0 0.0
  %2167 = vmatprep.subr.mxu0 0.0
  %2168 = vmatpush1.msra.mxu0 0.0
  %2169 = vmatprep.subr.mxu0 0.0
  %2170 = vmatpush1.msra.mxu0 0.0
  %2171 = vmatprep.subr.mxu0 0.0
  %2172 = vmatpush1.msra.mxu0 0.0
  %2173 = vmatprep.subr.mxu0 0.0
  %2174 = vmatpush1.msra.mxu0 0.0
  %2175 = vmatprep.subr.mxu0 0.0
  %2176 = vmatpush1.msra.mxu0 0.0
  %2177 = vmatprep.subr.mxu0 0.0
  %2178 = vmatpush1.msra.mxu0 0.0
  %2179 = vmatprep.subr.mxu0 0.0
  %2180 = vmatpush1.msra.mxu0 0.0
  %2181 = vmatprep.subr.mxu0 0.0
  %2182 = vmatpush1.msra.mxu0 0.0
  %2183 = vmatprep.subr.mxu0 0.0
  %2184 = vmatpush1.msra.mxu0 %v2148
  %2185 = vmatprep.subr.mxu0 0.0
  %2186 = vmatpush2.msra.mxu0 0.0
  %2187 = vmatprep.subr.mxu0 0.0
  %2188 = vmatpush2.msra.mxu0 0.0
  %2189 = vmatprep.subr.mxu0 0.0
  %2190 = vmatpush2.msra.mxu0 0.0
  %2191 = vmatprep.subr.mxu0 0.0
  %2192 = vmatpush2.msra.mxu0 0.0
  %2193 = vmatprep.subr.mxu0 0.0
  %2194 = vmatpush2.msra.mxu0 0.0
  %2195 = vmatprep.subr.mxu0 0.0
  %2196 = vmatpush2.msra.mxu0 0.0
  %2197 = vmatprep.subr.mxu0 0.0
  %2198 = vmatpush2.msra.mxu0 0.0
  %2199 = vmatprep.subr.mxu0 0.0
  %2200 = vmatpush2.msra.mxu0 0.0
  %2201 = vmatprep.subr.mxu0 0.0
  %2202 = vmatpush2.msra.mxu0 0.0
  %2203 = vmatprep.subr.mxu0 0.0
  %2204 = vmatpush2.msra.mxu0 0.0
  %2205 = vmatprep.subr.mxu0 0.0
  %2206 = vmatpush2.msra.mxu0 0.0
  %2207 = vmatprep.subr.mxu0 0.0
  %2208 = vmatpush2.msra.mxu0 0.0
  %2209 = vmatprep.subr.mxu0 0.0
  %2210 = vmatpush2.msra.mxu0 0.0
  %2211 = vmatprep.subr.mxu0 0.0
  %2212 = vmatpush2.msra.mxu0 0.0
  %2213 = vmatprep.subr.mxu0 0.0
  %2214 = vmatpush2.msra.mxu0 0.0
  %2215 = vmatprep.subr.mxu0 0.0
  %2216 = vmatpush2.msra.mxu0 0.0
  %2217 = vmatprep.mubr.f32.mxu0 0.0
  %2218 = vmatmul.mubr.f32.gmra.mxu0 %v2151
  %v2219 = vpop.f32.mrf.mxu0
  %v2220 = vadd.f32 0.0, %v2219
  %v2221 = vpop.f32.mrf.mxu0
  %2222 = vdwg.mxu0
  %2223 = vrot.lane.b32.xlu0 %v1964, 64
  %v2224 = vpop.permute.xlu0 %2223
  %v2227 = vsel %vm191, %v2146, 0
  %2229 = vmatprep.subr.mxu0 0.0
  %2230 = vmatpush1.msra.mxu0 0.0
  %2231 = vmatprep.subr.mxu0 0.0
  %2232 = vmatpush1.msra.mxu0 0.0
  %2233 = vmatprep.subr.mxu0 0.0
  %2234 = vmatpush1.msra.mxu0 0.0
  %2235 = vmatprep.subr.mxu0 0.0
  %2236 = vmatpush1.msra.mxu0 0.0
  %2237 = vmatprep.subr.mxu0 0.0
  %2238 = vmatpush1.msra.mxu0 0.0
  %2239 = vmatprep.subr.mxu0 0.0
  %2240 = vmatpush1.msra.mxu0 0.0
  %2241 = vmatprep.subr.mxu0 0.0
  %2242 = vmatpush1.msra.mxu0 0.0
  %2243 = vmatprep.subr.mxu0 0.0
  %2244 = vmatpush1.msra.mxu0 0.0
  %2245 = vmatprep.subr.mxu0 0.0
  %2246 = vmatpush1.msra.mxu0 0.0
  %2247 = vmatprep.subr.mxu0 0.0
  %2248 = vmatpush1.msra.mxu0 0.0
  %2249 = vmatprep.subr.mxu0 0.0
  %2250 = vmatpush1.msra.mxu0 0.0
  %2251 = vmatprep.subr.mxu0 0.0
  %2252 = vmatpush1.msra.mxu0 0.0
  %2253 = vmatprep.subr.mxu0 0.0
  %2254 = vmatpush1.msra.mxu0 0.0
  %2255 = vmatprep.subr.mxu0 0.0
  %2256 = vmatpush1.msra.mxu0 0.0
  %2257 = vmatprep.subr.mxu0 0.0
  %2258 = vmatpush1.msra.mxu0 0.0
  %2259 = vmatprep.subr.mxu0 0.0
  %2260 = vmatpush1.msra.mxu0 %v2224
  %2261 = vmatprep.subr.mxu0 0.0
  %2262 = vmatpush2.msra.mxu0 0.0
  %2263 = vmatprep.subr.mxu0 0.0
  %2264 = vmatpush2.msra.mxu0 0.0
  %2265 = vmatprep.subr.mxu0 0.0
  %2266 = vmatpush2.msra.mxu0 0.0
  %2267 = vmatprep.subr.mxu0 0.0
  %2268 = vmatpush2.msra.mxu0 0.0
  %2269 = vmatprep.subr.mxu0 0.0
  %2270 = vmatpush2.msra.mxu0 0.0
  %2271 = vmatprep.subr.mxu0 0.0
  %2272 = vmatpush2.msra.mxu0 0.0
  %2273 = vmatprep.subr.mxu0 0.0
  %2274 = vmatpush2.msra.mxu0 0.0
  %2275 = vmatprep.subr.mxu0 0.0
  %2276 = vmatpush2.msra.mxu0 0.0
  %2277 = vmatprep.subr.mxu0 0.0
  %2278 = vmatpush2.msra.mxu0 0.0
  %2279 = vmatprep.subr.mxu0 0.0
  %2280 = vmatpush2.msra.mxu0 0.0
  %2281 = vmatprep.subr.mxu0 0.0
  %2282 = vmatpush2.msra.mxu0 0.0
  %2283 = vmatprep.subr.mxu0 0.0
  %2284 = vmatpush2.msra.mxu0 0.0
  %2285 = vmatprep.subr.mxu0 0.0
  %2286 = vmatpush2.msra.mxu0 0.0
  %2287 = vmatprep.subr.mxu0 0.0
  %2288 = vmatpush2.msra.mxu0 0.0
  %2289 = vmatprep.subr.mxu0 0.0
  %2290 = vmatpush2.msra.mxu0 0.0
  %2291 = vmatprep.subr.mxu0 0.0
  %2292 = vmatpush2.msra.mxu0 0.0
  %2293 = vmatprep.mubr.f32.mxu0 0.0
  %2294 = vmatmul.mubr.f32.gmra.mxu0 %v2227
  %v2295 = vpop.f32.mrf.mxu0
  %v2296 = vadd.f32 0.0, %v2295
  %v2297 = vpop.f32.mrf.mxu0
  %2298 = vdwg.mxu0
  %2299 = vrot.lane.b32.xlu0 %v1961, 120
  %v2300 = vpop.permute.xlu0 %2299
  %2301 = vrot.lane.b32.xlu0 %v1961, 88
  %v2302 = vpop.permute.xlu0 %2301
  %v2303 = vsel %vm191, %v2300, 0
  %v2305 = vsel %vm191, %v2302, 0
  %2307 = vmatprep.subr.mxu0 0.0
  %2308 = vmatpush1.xpose.msra.mxu0 0.0
  %2309 = vmatprep.subr.mxu0 0.0
  %2310 = vmatpush1.xpose.msra.mxu0 0.0
  %2311 = vmatprep.subr.mxu0 0.0
  %2312 = vmatpush1.xpose.msra.mxu0 0.0
  %2313 = vmatprep.subr.mxu0 0.0
  %2314 = vmatpush1.xpose.msra.mxu0 0.0
  %2315 = vmatprep.subr.mxu0 0.0
  %2316 = vmatpush1.xpose.msra.mxu0 0.0
  %2317 = vmatprep.subr.mxu0 0.0
  %2318 = vmatpush1.xpose.msra.mxu0 0.0
  %2319 = vmatprep.subr.mxu0 0.0
  %2320 = vmatpush1.xpose.msra.mxu0 0.0
  %2321 = vmatprep.subr.mxu0 0.0
  %2322 = vmatpush1.xpose.msra.mxu0 0.0
  %2323 = vmatprep.subr.mxu0 0.0
  %2324 = vmatpush1.xpose.msra.mxu0 0.0
  %2325 = vmatprep.subr.mxu0 0.0
  %2326 = vmatpush1.xpose.msra.mxu0 0.0
  %2327 = vmatprep.subr.mxu0 0.0
  %2328 = vmatpush1.xpose.msra.mxu0 0.0
  %2329 = vmatprep.subr.mxu0 0.0
  %2330 = vmatpush1.xpose.msra.mxu0 0.0
  %2331 = vmatprep.subr.mxu0 0.0
  %2332 = vmatpush1.xpose.msra.mxu0 0.0
  %2333 = vmatprep.subr.mxu0 0.0
  %2334 = vmatpush1.xpose.msra.mxu0 0.0
  %2335 = vmatprep.subr.mxu0 0.0
  %2336 = vmatpush1.xpose.msra.mxu0 0.0
  %2337 = vmatprep.subr.mxu0 0.0
  %2338 = vmatpush1.xpose.msra.mxu0 %v2305
  %2339 = vmatprep.subr.mxu0 0.0
  %2340 = vmatpush2.xpose.msra.mxu0 0.0
  %2341 = vmatprep.subr.mxu0 0.0
  %2342 = vmatpush2.xpose.msra.mxu0 0.0
  %2343 = vmatprep.subr.mxu0 0.0
  %2344 = vmatpush2.xpose.msra.mxu0 0.0
  %2345 = vmatprep.subr.mxu0 0.0
  %2346 = vmatpush2.xpose.msra.mxu0 0.0
  %2347 = vmatprep.subr.mxu0 0.0
  %2348 = vmatpush2.xpose.msra.mxu0 0.0
  %2349 = vmatprep.subr.mxu0 0.0
  %2350 = vmatpush2.xpose.msra.mxu0 0.0
  %2351 = vmatprep.subr.mxu0 0.0
  %2352 = vmatpush2.xpose.msra.mxu0 0.0
  %2353 = vmatprep.subr.mxu0 0.0
  %2354 = vmatpush2.xpose.msra.mxu0 0.0
  %2355 = vmatprep.subr.mxu0 0.0
  %2356 = vmatpush2.xpose.msra.mxu0 0.0
  %2357 = vmatprep.subr.mxu0 0.0
  %2358 = vmatpush2.xpose.msra.mxu0 0.0
  %2359 = vmatprep.subr.mxu0 0.0
  %2360 = vmatpush2.xpose.msra.mxu0 0.0
  %2361 = vmatprep.subr.mxu0 0.0
  %2362 = vmatpush2.xpose.msra.mxu0 0.0
  %2363 = vmatprep.subr.mxu0 0.0
  %2364 = vmatpush2.xpose.msra.mxu0 0.0
  %2365 = vmatprep.subr.mxu0 0.0
  %2366 = vmatpush2.xpose.msra.mxu0 0.0
  %2367 = vmatprep.subr.mxu0 0.0
  %2368 = vmatpush2.xpose.msra.mxu0 0.0
  %2369 = vmatprep.subr.mxu0 0.0
  %2370 = vmatpush2.xpose.msra.mxu0 0.0
  %2371 = vmatprep.mubr.f32.mxu0 0.0
  %2372 = vmatmul.mubr.f32.gmra.mxu0 %v2303
  %v2373 = vpop.f32.mrf.mxu0
  %v2374 = vadd.f32 0.0, %v2373
  %v2375 = vpop.f32.mrf.mxu0
  %2376 = vdwg.mxu0
  %2377 = vrot.lane.b32.xlu0 %v1964, 120
  %v2378 = vpop.permute.xlu0 %2377
  %2379 = vrot.lane.b32.xlu0 %v1964, 88
  %v2380 = vpop.permute.xlu0 %2379
  %v2381 = vsel %vm191, %v2378, 0
  %v2383 = vsel %vm191, %v2380, 0
  %2385 = vmatprep.subr.mxu0 0.0
  %2386 = vmatpush1.xpose.msra.mxu0 0.0
  %2387 = vmatprep.subr.mxu0 0.0
  %2388 = vmatpush1.xpose.msra.mxu0 0.0
  %2389 = vmatprep.subr.mxu0 0.0
  %2390 = vmatpush1.xpose.msra.mxu0 0.0
  %2391 = vmatprep.subr.mxu0 0.0
  %2392 = vmatpush1.xpose.msra.mxu0 0.0
  %2393 = vmatprep.subr.mxu0 0.0
  %2394 = vmatpush1.xpose.msra.mxu0 0.0
  %2395 = vmatprep.subr.mxu0 0.0
  %2396 = vmatpush1.xpose.msra.mxu0 0.0
  %2397 = vmatprep.subr.mxu0 0.0
  %2398 = vmatpush1.xpose.msra.mxu0 0.0
  %2399 = vmatprep.subr.mxu0 0.0
  %2400 = vmatpush1.xpose.msra.mxu0 0.0
  %2401 = vmatprep.subr.mxu0 0.0
  %2402 = vmatpush1.xpose.msra.mxu0 0.0
  %2403 = vmatprep.subr.mxu0 0.0
  %2404 = vmatpush1.xpose.msra.mxu0 0.0
  %2405 = vmatprep.subr.mxu0 0.0
  %2406 = vmatpush1.xpose.msra.mxu0 0.0
  %2407 = vmatprep.subr.mxu0 0.0
  %2408 = vmatpush1.xpose.msra.mxu0 0.0
  %2409 = vmatprep.subr.mxu0 0.0
  %2410 = vmatpush1.xpose.msra.mxu0 0.0
  %2411 = vmatprep.subr.mxu0 0.0
  %2412 = vmatpush1.xpose.msra.mxu0 0.0
  %2413 = vmatprep.subr.mxu0 0.0
  %2414 = vmatpush1.xpose.msra.mxu0 0.0
  %2415 = vmatprep.subr.mxu0 0.0
  %2416 = vmatpush1.xpose.msra.mxu0 %v2383
  %2417 = vmatprep.subr.mxu0 0.0
  %2418 = vmatpush2.xpose.msra.mxu0 0.0
  %2419 = vmatprep.subr.mxu0 0.0
  %2420 = vmatpush2.xpose.msra.mxu0 0.0
  %2421 = vmatprep.subr.mxu0 0.0
  %2422 = vmatpush2.xpose.msra.mxu0 0.0
  %2423 = vmatprep.subr.mxu0 0.0
  %2424 = vmatpush2.xpose.msra.mxu0 0.0
  %2425 = vmatprep.subr.mxu0 0.0
  %2426 = vmatpush2.xpose.msra.mxu0 0.0
  %2427 = vmatprep.subr.mxu0 0.0
  %2428 = vmatpush2.xpose.msra.mxu0 0.0
  %2429 = vmatprep.subr.mxu0 0.0
  %2430 = vmatpush2.xpose.msra.mxu0 0.0
  %2431 = vmatprep.subr.mxu0 0.0
  %2432 = vmatpush2.xpose.msra.mxu0 0.0
  %2433 = vmatprep.subr.mxu0 0.0
  %2434 = vmatpush2.xpose.msra.mxu0 0.0
  %2435 = vmatprep.subr.mxu0 0.0
  %2436 = vmatpush2.xpose.msra.mxu0 0.0
  %2437 = vmatprep.subr.mxu0 0.0
  %2438 = vmatpush2.xpose.msra.mxu0 0.0
  %2439 = vmatprep.subr.mxu0 0.0
  %2440 = vmatpush2.xpose.msra.mxu0 0.0
  %2441 = vmatprep.subr.mxu0 0.0
  %2442 = vmatpush2.xpose.msra.mxu0 0.0
  %2443 = vmatprep.subr.mxu0 0.0
  %2444 = vmatpush2.xpose.msra.mxu0 0.0
  %2445 = vmatprep.subr.mxu0 0.0
  %2446 = vmatpush2.xpose.msra.mxu0 0.0
  %2447 = vmatprep.subr.mxu0 0.0
  %2448 = vmatpush2.xpose.msra.mxu0 0.0
  %2449 = vmatprep.mubr.f32.mxu0 0.0
  %2450 = vmatmul.mubr.f32.gmra.mxu0 %v2381
  %v2451 = vpop.f32.mrf.mxu0
  %v2452 = vadd.f32 0.0, %v2451
  %v2453 = vpop.f32.mrf.mxu0
  %2454 = vdwg.mxu0
  %v2455 = vmul.f32 %v2374, 0.35355338
  %v2456 = vmul.f32 %v2452, 0.35355338
  %v2457 = vadd.f32 %v2455, %v115
  %v2458 = vadd.f32 %v2456, %v119
  %v2459 = vsel %vm191, %v2457, -inf
  %2460 = vmax.xlane.f32.xlu0 %v2459
  %v2461 = vpop.xlane.xlu0 %2460
  %v2462 = vsel %vm191, %v2458, -inf
  %2463 = vmax.xlane.f32.xlu0 %v2462
  %v2464 = vpop.xlane.xlu0 %2463
  %v2465 = vsub.f32 %v2457, %v2461
  %v2466 = vsub.f32 %v2458, %v2464
  %v2467 = vmul.f32 %v2465, 1.442695
  %v2468 = vpow.pop %v2467
  %v2469 = vmul.f32 %v2466, 1.442695
  %v2470 = vpow.pop %v2469
  %v2471 = vsel %vm191, %v2468, 0.0
  %2472 = vadd.xlane.f32.xlu0 %v2471
  %v2473 = vpop.xlane.xlu0 %2472
  %v2474 = vsel %vm191, %v2470, 0.0
  %2475 = vadd.xlane.f32.xlu0 %v2474
  %v2476 = vpop.xlane.xlu0 %2475
  %v2477 = vrcp.pop %v2473
  %v2478 = vrcp.pop %v2476
  %v2479 = vmul.f32 %v2468, %v2477
  %v2480 = vmul.f32 %v2470, %v2478
  %2481 = vrot.lane.b32.xlu0 %v1961, 56
  %v2482 = vpop.permute.xlu0 %2481
  %v2485 = vsel %vm191, %v2479, 0
  %2487 = vmatprep.subr.mxu0 0.0
  %2488 = vmatpush1.msra.mxu0 0.0
  %2489 = vmatprep.subr.mxu0 0.0
  %2490 = vmatpush1.msra.mxu0 0.0
  %2491 = vmatprep.subr.mxu0 0.0
  %2492 = vmatpush1.msra.mxu0 0.0
  %2493 = vmatprep.subr.mxu0 0.0
  %2494 = vmatpush1.msra.mxu0 0.0
  %2495 = vmatprep.subr.mxu0 0.0
  %2496 = vmatpush1.msra.mxu0 0.0
  %2497 = vmatprep.subr.mxu0 0.0
  %2498 = vmatpush1.msra.mxu0 0.0
  %2499 = vmatprep.subr.mxu0 0.0
  %2500 = vmatpush1.msra.mxu0 0.0
  %2501 = vmatprep.subr.mxu0 0.0
  %2502 = vmatpush1.msra.mxu0 0.0
  %2503 = vmatprep.subr.mxu0 0.0
  %2504 = vmatpush1.msra.mxu0 0.0
  %2505 = vmatprep.subr.mxu0 0.0
  %2506 = vmatpush1.msra.mxu0 0.0
  %2507 = vmatprep.subr.mxu0 0.0
  %2508 = vmatpush1.msra.mxu0 0.0
  %2509 = vmatprep.subr.mxu0 0.0
  %2510 = vmatpush1.msra.mxu0 0.0
  %2511 = vmatprep.subr.mxu0 0.0
  %2512 = vmatpush1.msra.mxu0 0.0
  %2513 = vmatprep.subr.mxu0 0.0
  %2514 = vmatpush1.msra.mxu0 0.0
  %2515 = vmatprep.subr.mxu0 0.0
  %2516 = vmatpush1.msra.mxu0 0.0
  %2517 = vmatprep.subr.mxu0 0.0
  %2518 = vmatpush1.msra.mxu0 %v2482
  %2519 = vmatprep.subr.mxu0 0.0
  %2520 = vmatpush2.msra.mxu0 0.0
  %2521 = vmatprep.subr.mxu0 0.0
  %2522 = vmatpush2.msra.mxu0 0.0
  %2523 = vmatprep.subr.mxu0 0.0
  %2524 = vmatpush2.msra.mxu0 0.0
  %2525 = vmatprep.subr.mxu0 0.0
  %2526 = vmatpush2.msra.mxu0 0.0
  %2527 = vmatprep.subr.mxu0 0.0
  %2528 = vmatpush2.msra.mxu0 0.0
  %2529 = vmatprep.subr.mxu0 0.0
  %2530 = vmatpush2.msra.mxu0 0.0
  %2531 = vmatprep.subr.mxu0 0.0
  %2532 = vmatpush2.msra.mxu0 0.0
  %2533 = vmatprep.subr.mxu0 0.0
  %2534 = vmatpush2.msra.mxu0 0.0
  %2535 = vmatprep.subr.mxu0 0.0
  %2536 = vmatpush2.msra.mxu0 0.0
  %2537 = vmatprep.subr.mxu0 0.0
  %2538 = vmatpush2.msra.mxu0 0.0
  %2539 = vmatprep.subr.mxu0 0.0
  %2540 = vmatpush2.msra.mxu0 0.0
  %2541 = vmatprep.subr.mxu0 0.0
  %2542 = vmatpush2.msra.mxu0 0.0
  %2543 = vmatprep.subr.mxu0 0.0
  %2544 = vmatpush2.msra.mxu0 0.0
  %2545 = vmatprep.subr.mxu0 0.0
  %2546 = vmatpush2.msra.mxu0 0.0
  %2547 = vmatprep.subr.mxu0 0.0
  %2548 = vmatpush2.msra.mxu0 0.0
  %2549 = vmatprep.subr.mxu0 0.0
  %2550 = vmatpush2.msra.mxu0 0.0
  %2551 = vmatprep.mubr.f32.mxu0 0.0
  %2552 = vmatmul.mubr.f32.gmra.mxu0 %v2485
  %v2553 = vpop.f32.mrf.mxu0
  %v2554 = vadd.f32 0.0, %v2553
  %v2555 = vpop.f32.mrf.mxu0
  %2556 = vdwg.mxu0
  %2557 = vrot.lane.b32.xlu0 %v1964, 56
  %v2558 = vpop.permute.xlu0 %2557
  %v2561 = vsel %vm191, %v2480, 0
  %2563 = vmatprep.subr.mxu0 0.0
  %2564 = vmatpush1.msra.mxu0 0.0
  %2565 = vmatprep.subr.mxu0 0.0
  %2566 = vmatpush1.msra.mxu0 0.0
  %2567 = vmatprep.subr.mxu0 0.0
  %2568 = vmatpush1.msra.mxu0 0.0
  %2569 = vmatprep.subr.mxu0 0.0
  %2570 = vmatpush1.msra.mxu0 0.0
  %2571 = vmatprep.subr.mxu0 0.0
  %2572 = vmatpush1.msra.mxu0 0.0
  %2573 = vmatprep.subr.mxu0 0.0
  %2574 = vmatpush1.msra.mxu0 0.0
  %2575 = vmatprep.subr.mxu0 0.0
  %2576 = vmatpush1.msra.mxu0 0.0
  %2577 = vmatprep.subr.mxu0 0.0
  %2578 = vmatpush1.msra.mxu0 0.0
  %2579 = vmatprep.subr.mxu0 0.0
  %2580 = vmatpush1.msra.mxu0 0.0
  %2581 = vmatprep.subr.mxu0 0.0
  %2582 = vmatpush1.msra.mxu0 0.0
  %2583 = vmatprep.subr.mxu0 0.0
  %2584 = vmatpush1.msra.mxu0 0.0
  %2585 = vmatprep.subr.mxu0 0.0
  %2586 = vmatpush1.msra.mxu0 0.0
  %2587 = vmatprep.subr.mxu0 0.0
  %2588 = vmatpush1.msra.mxu0 0.0
  %2589 = vmatprep.subr.mxu0 0.0
  %2590 = vmatpush1.msra.mxu0 0.0
  %2591 = vmatprep.subr.mxu0 0.0
  %2592 = vmatpush1.msra.mxu0 0.0
  %2593 = vmatprep.subr.mxu0 0.0
  %2594 = vmatpush1.msra.mxu0 %v2558
  %2595 = vmatprep.subr.mxu0 0.0
  %2596 = vmatpush2.msra.mxu0 0.0
  %2597 = vmatprep.subr.mxu0 0.0
  %2598 = vmatpush2.msra.mxu0 0.0
  %2599 = vmatprep.subr.mxu0 0.0
  %2600 = vmatpush2.msra.mxu0 0.0
  %2601 = vmatprep.subr.mxu0 0.0
  %2602 = vmatpush2.msra.mxu0 0.0
  %2603 = vmatprep.subr.mxu0 0.0
  %2604 = vmatpush2.msra.mxu0 0.0
  %2605 = vmatprep.subr.mxu0 0.0
  %2606 = vmatpush2.msra.mxu0 0.0
  %2607 = vmatprep.subr.mxu0 0.0
  %2608 = vmatpush2.msra.mxu0 0.0
  %2609 = vmatprep.subr.mxu0 0.0
  %2610 = vmatpush2.msra.mxu0 0.0
  %2611 = vmatprep.subr.mxu0 0.0
  %2612 = vmatpush2.msra.mxu0 0.0
  %2613 = vmatprep.subr.mxu0 0.0
  %2614 = vmatpush2.msra.mxu0 0.0
  %2615 = vmatprep.subr.mxu0 0.0
  %2616 = vmatpush2.msra.mxu0 0.0
  %2617 = vmatprep.subr.mxu0 0.0
  %2618 = vmatpush2.msra.mxu0 0.0
  %2619 = vmatprep.subr.mxu0 0.0
  %2620 = vmatpush2.msra.mxu0 0.0
  %2621 = vmatprep.subr.mxu0 0.0
  %2622 = vmatpush2.msra.mxu0 0.0
  %2623 = vmatprep.subr.mxu0 0.0
  %2624 = vmatpush2.msra.mxu0 0.0
  %2625 = vmatprep.subr.mxu0 0.0
  %2626 = vmatpush2.msra.mxu0 0.0
  %2627 = vmatprep.mubr.f32.mxu0 0.0
  %2628 = vmatmul.mubr.f32.gmra.mxu0 %v2561
  %v2629 = vpop.f32.mrf.mxu0
  %v2630 = vadd.f32 0.0, %v2629
  %v2631 = vpop.f32.mrf.mxu0
  %2632 = vdwg.mxu0
  %2633 = vrot.lane.b32.xlu0 %v1961, 112
  %v2634 = vpop.permute.xlu0 %2633
  %2635 = vrot.lane.b32.xlu0 %v1961, 80
  %v2636 = vpop.permute.xlu0 %2635
  %v2637 = vsel %vm191, %v2634, 0
  %v2639 = vsel %vm191, %v2636, 0
  %2641 = vmatprep.subr.mxu0 0.0
  %2642 = vmatpush1.xpose.msra.mxu0 0.0
  %2643 = vmatprep.subr.mxu0 0.0
  %2644 = vmatpush1.xpose.msra.mxu0 0.0
  %2645 = vmatprep.subr.mxu0 0.0
  %2646 = vmatpush1.xpose.msra.mxu0 0.0
  %2647 = vmatprep.subr.mxu0 0.0
  %2648 = vmatpush1.xpose.msra.mxu0 0.0
  %2649 = vmatprep.subr.mxu0 0.0
  %2650 = vmatpush1.xpose.msra.mxu0 0.0
  %2651 = vmatprep.subr.mxu0 0.0
  %2652 = vmatpush1.xpose.msra.mxu0 0.0
  %2653 = vmatprep.subr.mxu0 0.0
  %2654 = vmatpush1.xpose.msra.mxu0 0.0
  %2655 = vmatprep.subr.mxu0 0.0
  %2656 = vmatpush1.xpose.msra.mxu0 0.0
  %2657 = vmatprep.subr.mxu0 0.0
  %2658 = vmatpush1.xpose.msra.mxu0 0.0
  %2659 = vmatprep.subr.mxu0 0.0
  %2660 = vmatpush1.xpose.msra.mxu0 0.0
  %2661 = vmatprep.subr.mxu0 0.0
  %2662 = vmatpush1.xpose.msra.mxu0 0.0
  %2663 = vmatprep.subr.mxu0 0.0
  %2664 = vmatpush1.xpose.msra.mxu0 0.0
  %2665 = vmatprep.subr.mxu0 0.0
  %2666 = vmatpush1.xpose.msra.mxu0 0.0
  %2667 = vmatprep.subr.mxu0 0.0
  %2668 = vmatpush1.xpose.msra.mxu0 0.0
  %2669 = vmatprep.subr.mxu0 0.0
  %2670 = vmatpush1.xpose.msra.mxu0 0.0
  %2671 = vmatprep.subr.mxu0 0.0
  %2672 = vmatpush1.xpose.msra.mxu0 %v2639
  %2673 = vmatprep.subr.mxu0 0.0
  %2674 = vmatpush2.xpose.msra.mxu0 0.0
  %2675 = vmatprep.subr.mxu0 0.0
  %2676 = vmatpush2.xpose.msra.mxu0 0.0
  %2677 = vmatprep.subr.mxu0 0.0
  %2678 = vmatpush2.xpose.msra.mxu0 0.0
  %2679 = vmatprep.subr.mxu0 0.0
  %2680 = vmatpush2.xpose.msra.mxu0 0.0
  %2681 = vmatprep.subr.mxu0 0.0
  %2682 = vmatpush2.xpose.msra.mxu0 0.0
  %2683 = vmatprep.subr.mxu0 0.0
  %2684 = vmatpush2.xpose.msra.mxu0 0.0
  %2685 = vmatprep.subr.mxu0 0.0
  %2686 = vmatpush2.xpose.msra.mxu0 0.0
  %2687 = vmatprep.subr.mxu0 0.0
  %2688 = vmatpush2.xpose.msra.mxu0 0.0
  %2689 = vmatprep.subr.mxu0 0.0
  %2690 = vmatpush2.xpose.msra.mxu0 0.0
  %2691 = vmatprep.subr.mxu0 0.0
  %2692 = vmatpush2.xpose.msra.mxu0 0.0
  %2693 = vmatprep.subr.mxu0 0.0
  %2694 = vmatpush2.xpose.msra.mxu0 0.0
  %2695 = vmatprep.subr.mxu0 0.0
  %2696 = vmatpush2.xpose.msra.mxu0 0.0
  %2697 = vmatprep.subr.mxu0 0.0
  %2698 = vmatpush2.xpose.msra.mxu0 0.0
  %2699 = vmatprep.subr.mxu0 0.0
  %2700 = vmatpush2.xpose.msra.mxu0 0.0
  %2701 = vmatprep.subr.mxu0 0.0
  %2702 = vmatpush2.xpose.msra.mxu0 0.0
  %2703 = vmatprep.subr.mxu0 0.0
  %2704 = vmatpush2.xpose.msra.mxu0 0.0
  %2705 = vmatprep.mubr.f32.mxu0 0.0
  %2706 = vmatmul.mubr.f32.gmra.mxu0 %v2637
  %v2707 = vpop.f32.mrf.mxu0
  %v2708 = vadd.f32 0.0, %v2707
  %v2709 = vpop.f32.mrf.mxu0
  %2710 = vdwg.mxu0
  %2711 = vrot.lane.b32.xlu0 %v1964, 112
  %v2712 = vpop.permute.xlu0 %2711
  %2713 = vrot.lane.b32.xlu0 %v1964, 80
  %v2714 = vpop.permute.xlu0 %2713
  %v2715 = vsel %vm191, %v2712, 0
  %v2717 = vsel %vm191, %v2714, 0
  %2719 = vmatprep.subr.mxu0 0.0
  %2720 = vmatpush1.xpose.msra.mxu0 0.0
  %2721 = vmatprep.subr.mxu0 0.0
  %2722 = vmatpush1.xpose.msra.mxu0 0.0
  %2723 = vmatprep.subr.mxu0 0.0
  %2724 = vmatpush1.xpose.msra.mxu0 0.0
  %2725 = vmatprep.subr.mxu0 0.0
  %2726 = vmatpush1.xpose.msra.mxu0 0.0
  %2727 = vmatprep.subr.mxu0 0.0
  %2728 = vmatpush1.xpose.msra.mxu0 0.0
  %2729 = vmatprep.subr.mxu0 0.0
  %2730 = vmatpush1.xpose.msra.mxu0 0.0
  %2731 = vmatprep.subr.mxu0 0.0
  %2732 = vmatpush1.xpose.msra.mxu0 0.0
  %2733 = vmatprep.subr.mxu0 0.0
  %2734 = vmatpush1.xpose.msra.mxu0 0.0
  %2735 = vmatprep.subr.mxu0 0.0
  %2736 = vmatpush1.xpose.msra.mxu0 0.0
  %2737 = vmatprep.subr.mxu0 0.0
  %2738 = vmatpush1.xpose.msra.mxu0 0.0
  %2739 = vmatprep.subr.mxu0 0.0
  %2740 = vmatpush1.xpose.msra.mxu0 0.0
  %2741 = vmatprep.subr.mxu0 0.0
  %2742 = vmatpush1.xpose.msra.mxu0 0.0
  %2743 = vmatprep.subr.mxu0 0.0
  %2744 = vmatpush1.xpose.msra.mxu0 0.0
  %2745 = vmatprep.subr.mxu0 0.0
  %2746 = vmatpush1.xpose.msra.mxu0 0.0
  %2747 = vmatprep.subr.mxu0 0.0
  %2748 = vmatpush1.xpose.msra.mxu0 0.0
  %2749 = vmatprep.subr.mxu0 0.0
  %2750 = vmatpush1.xpose.msra.mxu0 %v2717
  %2751 = vmatprep.subr.mxu0 0.0
  %2752 = vmatpush2.xpose.msra.mxu0 0.0
  %2753 = vmatprep.subr.mxu0 0.0
  %2754 = vmatpush2.xpose.msra.mxu0 0.0
  %2755 = vmatprep.subr.mxu0 0.0
  %2756 = vmatpush2.xpose.msra.mxu0 0.0
  %2757 = vmatprep.subr.mxu0 0.0
  %2758 = vmatpush2.xpose.msra.mxu0 0.0
  %2759 = vmatprep.subr.mxu0 0.0
  %2760 = vmatpush2.xpose.msra.mxu0 0.0
  %2761 = vmatprep.subr.mxu0 0.0
  %2762 = vmatpush2.xpose.msra.mxu0 0.0
  %2763 = vmatprep.subr.mxu0 0.0
  %2764 = vmatpush2.xpose.msra.mxu0 0.0
  %2765 = vmatprep.subr.mxu0 0.0
  %2766 = vmatpush2.xpose.msra.mxu0 0.0
  %2767 = vmatprep.subr.mxu0 0.0
  %2768 = vmatpush2.xpose.msra.mxu0 0.0
  %2769 = vmatprep.subr.mxu0 0.0
  %2770 = vmatpush2.xpose.msra.mxu0 0.0
  %2771 = vmatprep.subr.mxu0 0.0
  %2772 = vmatpush2.xpose.msra.mxu0 0.0
  %2773 = vmatprep.subr.mxu0 0.0
  %2774 = vmatpush2.xpose.msra.mxu0 0.0
  %2775 = vmatprep.subr.mxu0 0.0
  %2776 = vmatpush2.xpose.msra.mxu0 0.0
  %2777 = vmatprep.subr.mxu0 0.0
  %2778 = vmatpush2.xpose.msra.mxu0 0.0
  %2779 = vmatprep.subr.mxu0 0.0
  %2780 = vmatpush2.xpose.msra.mxu0 0.0
  %2781 = vmatprep.subr.mxu0 0.0
  %2782 = vmatpush2.xpose.msra.mxu0 0.0
  %2783 = vmatprep.mubr.f32.mxu0 0.0
  %2784 = vmatmul.mubr.f32.gmra.mxu0 %v2715
  %v2785 = vpop.f32.mrf.mxu0
  %v2786 = vadd.f32 0.0, %v2785
  %v2787 = vpop.f32.mrf.mxu0
  %2788 = vdwg.mxu0
  %v2789 = vmul.f32 %v2708, 0.35355338
  %v2790 = vmul.f32 %v2786, 0.35355338
  %v2791 = vadd.f32 %v2789, %v115
  %v2792 = vadd.f32 %v2790, %v119
  %v2793 = vsel %vm191, %v2791, -inf
  %2794 = vmax.xlane.f32.xlu0 %v2793
  %v2795 = vpop.xlane.xlu0 %2794
  %v2796 = vsel %vm191, %v2792, -inf
  %2797 = vmax.xlane.f32.xlu0 %v2796
  %v2798 = vpop.xlane.xlu0 %2797
  %v2799 = vsub.f32 %v2791, %v2795
  %v2800 = vsub.f32 %v2792, %v2798
  %v2801 = vmul.f32 %v2799, 1.442695
  %v2802 = vpow.pop %v2801
  %v2803 = vmul.f32 %v2800, 1.442695
  %v2804 = vpow.pop %v2803
  %v2805 = vsel %vm191, %v2802, 0.0
  %2806 = vadd.xlane.f32.xlu0 %v2805
  %v2807 = vpop.xlane.xlu0 %2806
  %v2808 = vsel %vm191, %v2804, 0.0
  %2809 = vadd.xlane.f32.xlu0 %v2808
  %v2810 = vpop.xlane.xlu0 %2809
  %v2811 = vrcp.pop %v2807
  %v2812 = vrcp.pop %v2810
  %v2813 = vmul.f32 %v2802, %v2811
  %v2814 = vmul.f32 %v2804, %v2812
  %2815 = vrot.lane.b32.xlu0 %v1961, 48
  %v2816 = vpop.permute.xlu0 %2815
  %v2819 = vsel %vm191, %v2813, 0
  %2821 = vmatprep.subr.mxu0 0.0
  %2822 = vmatpush1.msra.mxu0 0.0
  %2823 = vmatprep.subr.mxu0 0.0
  %2824 = vmatpush1.msra.mxu0 0.0
  %2825 = vmatprep.subr.mxu0 0.0
  %2826 = vmatpush1.msra.mxu0 0.0
  %2827 = vmatprep.subr.mxu0 0.0
  %2828 = vmatpush1.msra.mxu0 0.0
  %2829 = vmatprep.subr.mxu0 0.0
  %2830 = vmatpush1.msra.mxu0 0.0
  %2831 = vmatprep.subr.mxu0 0.0
  %2832 = vmatpush1.msra.mxu0 0.0
  %2833 = vmatprep.subr.mxu0 0.0
  %2834 = vmatpush1.msra.mxu0 0.0
  %2835 = vmatprep.subr.mxu0 0.0
  %2836 = vmatpush1.msra.mxu0 0.0
  %2837 = vmatprep.subr.mxu0 0.0
  %2838 = vmatpush1.msra.mxu0 0.0
  %2839 = vmatprep.subr.mxu0 0.0
  %2840 = vmatpush1.msra.mxu0 0.0
  %2841 = vmatprep.subr.mxu0 0.0
  %2842 = vmatpush1.msra.mxu0 0.0
  %2843 = vmatprep.subr.mxu0 0.0
  %2844 = vmatpush1.msra.mxu0 0.0
  %2845 = vmatprep.subr.mxu0 0.0
  %2846 = vmatpush1.msra.mxu0 0.0
  %2847 = vmatprep.subr.mxu0 0.0
  %2848 = vmatpush1.msra.mxu0 0.0
  %2849 = vmatprep.subr.mxu0 0.0
  %2850 = vmatpush1.msra.mxu0 0.0
  %2851 = vmatprep.subr.mxu0 0.0
  %2852 = vmatpush1.msra.mxu0 %v2816
  %2853 = vmatprep.subr.mxu0 0.0
  %2854 = vmatpush2.msra.mxu0 0.0
  %2855 = vmatprep.subr.mxu0 0.0
  %2856 = vmatpush2.msra.mxu0 0.0
  %2857 = vmatprep.subr.mxu0 0.0
  %2858 = vmatpush2.msra.mxu0 0.0
  %2859 = vmatprep.subr.mxu0 0.0
  %2860 = vmatpush2.msra.mxu0 0.0
  %2861 = vmatprep.subr.mxu0 0.0
  %2862 = vmatpush2.msra.mxu0 0.0
  %2863 = vmatprep.subr.mxu0 0.0
  %2864 = vmatpush2.msra.mxu0 0.0
  %2865 = vmatprep.subr.mxu0 0.0
  %2866 = vmatpush2.msra.mxu0 0.0
  %2867 = vmatprep.subr.mxu0 0.0
  %2868 = vmatpush2.msra.mxu0 0.0
  %2869 = vmatprep.subr.mxu0 0.0
  %2870 = vmatpush2.msra.mxu0 0.0
  %2871 = vmatprep.subr.mxu0 0.0
  %2872 = vmatpush2.msra.mxu0 0.0
  %2873 = vmatprep.subr.mxu0 0.0
  %2874 = vmatpush2.msra.mxu0 0.0
  %2875 = vmatprep.subr.mxu0 0.0
  %2876 = vmatpush2.msra.mxu0 0.0
  %2877 = vmatprep.subr.mxu0 0.0
  %2878 = vmatpush2.msra.mxu0 0.0
  %2879 = vmatprep.subr.mxu0 0.0
  %2880 = vmatpush2.msra.mxu0 0.0
  %2881 = vmatprep.subr.mxu0 0.0
  %2882 = vmatpush2.msra.mxu0 0.0
  %2883 = vmatprep.subr.mxu0 0.0
  %2884 = vmatpush2.msra.mxu0 0.0
  %2885 = vmatprep.mubr.f32.mxu0 0.0
  %2886 = vmatmul.mubr.f32.gmra.mxu0 %v2819
  %v2887 = vpop.f32.mrf.mxu0
  %v2888 = vadd.f32 0.0, %v2887
  %v2889 = vpop.f32.mrf.mxu0
  %2890 = vdwg.mxu0
  %2891 = vrot.lane.b32.xlu0 %v1964, 48
  %v2892 = vpop.permute.xlu0 %2891
  %v2895 = vsel %vm191, %v2814, 0
  %2897 = vmatprep.subr.mxu0 0.0
  %2898 = vmatpush1.msra.mxu0 0.0
  %2899 = vmatprep.subr.mxu0 0.0
  %2900 = vmatpush1.msra.mxu0 0.0
  %2901 = vmatprep.subr.mxu0 0.0
  %2902 = vmatpush1.msra.mxu0 0.0
  %2903 = vmatprep.subr.mxu0 0.0
  %2904 = vmatpush1.msra.mxu0 0.0
  %2905 = vmatprep.subr.mxu0 0.0
  %2906 = vmatpush1.msra.mxu0 0.0
  %2907 = vmatprep.subr.mxu0 0.0
  %2908 = vmatpush1.msra.mxu0 0.0
  %2909 = vmatprep.subr.mxu0 0.0
  %2910 = vmatpush1.msra.mxu0 0.0
  %2911 = vmatprep.subr.mxu0 0.0
  %2912 = vmatpush1.msra.mxu0 0.0
  %2913 = vmatprep.subr.mxu0 0.0
  %2914 = vmatpush1.msra.mxu0 0.0
  %2915 = vmatprep.subr.mxu0 0.0
  %2916 = vmatpush1.msra.mxu0 0.0
  %2917 = vmatprep.subr.mxu0 0.0
  %2918 = vmatpush1.msra.mxu0 0.0
  %2919 = vmatprep.subr.mxu0 0.0
  %2920 = vmatpush1.msra.mxu0 0.0
  %2921 = vmatprep.subr.mxu0 0.0
  %2922 = vmatpush1.msra.mxu0 0.0
  %2923 = vmatprep.subr.mxu0 0.0
  %2924 = vmatpush1.msra.mxu0 0.0
  %2925 = vmatprep.subr.mxu0 0.0
  %2926 = vmatpush1.msra.mxu0 0.0
  %2927 = vmatprep.subr.mxu0 0.0
  %2928 = vmatpush1.msra.mxu0 %v2892
  %2929 = vmatprep.subr.mxu0 0.0
  %2930 = vmatpush2.msra.mxu0 0.0
  %2931 = vmatprep.subr.mxu0 0.0
  %2932 = vmatpush2.msra.mxu0 0.0
  %2933 = vmatprep.subr.mxu0 0.0
  %2934 = vmatpush2.msra.mxu0 0.0
  %2935 = vmatprep.subr.mxu0 0.0
  %2936 = vmatpush2.msra.mxu0 0.0
  %2937 = vmatprep.subr.mxu0 0.0
  %2938 = vmatpush2.msra.mxu0 0.0
  %2939 = vmatprep.subr.mxu0 0.0
  %2940 = vmatpush2.msra.mxu0 0.0
  %2941 = vmatprep.subr.mxu0 0.0
  %2942 = vmatpush2.msra.mxu0 0.0
  %2943 = vmatprep.subr.mxu0 0.0
  %2944 = vmatpush2.msra.mxu0 0.0
  %2945 = vmatprep.subr.mxu0 0.0
  %2946 = vmatpush2.msra.mxu0 0.0
  %2947 = vmatprep.subr.mxu0 0.0
  %2948 = vmatpush2.msra.mxu0 0.0
  %2949 = vmatprep.subr.mxu0 0.0
  %2950 = vmatpush2.msra.mxu0 0.0
  %2951 = vmatprep.subr.mxu0 0.0
  %2952 = vmatpush2.msra.mxu0 0.0
  %2953 = vmatprep.subr.mxu0 0.0
  %2954 = vmatpush2.msra.mxu0 0.0
  %2955 = vmatprep.subr.mxu0 0.0
  %2956 = vmatpush2.msra.mxu0 0.0
  %2957 = vmatprep.subr.mxu0 0.0
  %2958 = vmatpush2.msra.mxu0 0.0
  %2959 = vmatprep.subr.mxu0 0.0
  %2960 = vmatpush2.msra.mxu0 0.0
  %2961 = vmatprep.mubr.f32.mxu0 0.0
  %2962 = vmatmul.mubr.f32.gmra.mxu0 %v2895
  %v2963 = vpop.f32.mrf.mxu0
  %v2964 = vadd.f32 0.0, %v2963
  %v2965 = vpop.f32.mrf.mxu0
  %2966 = vdwg.mxu0
  %2967 = vrot.lane.b32.xlu0 %v1961, 104
  %v2968 = vpop.permute.xlu0 %2967
  %2969 = vrot.lane.b32.xlu0 %v1961, 72
  %v2970 = vpop.permute.xlu0 %2969
  %v2971 = vsel %vm191, %v2968, 0
  %v2973 = vsel %vm191, %v2970, 0
  %2975 = vmatprep.subr.mxu0 0.0
  %2976 = vmatpush1.xpose.msra.mxu0 0.0
  %2977 = vmatprep.subr.mxu0 0.0
  %2978 = vmatpush1.xpose.msra.mxu0 0.0
  %2979 = vmatprep.subr.mxu0 0.0
  %2980 = vmatpush1.xpose.msra.mxu0 0.0
  %2981 = vmatprep.subr.mxu0 0.0
  %2982 = vmatpush1.xpose.msra.mxu0 0.0
  %2983 = vmatprep.subr.mxu0 0.0
  %2984 = vmatpush1.xpose.msra.mxu0 0.0
  %2985 = vmatprep.subr.mxu0 0.0
  %2986 = vmatpush1.xpose.msra.mxu0 0.0
  %2987 = vmatprep.subr.mxu0 0.0
  %2988 = vmatpush1.xpose.msra.mxu0 0.0
  %2989 = vmatprep.subr.mxu0 0.0
  %2990 = vmatpush1.xpose.msra.mxu0 0.0
  %2991 = vmatprep.subr.mxu0 0.0
  %2992 = vmatpush1.xpose.msra.mxu0 0.0
  %2993 = vmatprep.subr.mxu0 0.0
  %2994 = vmatpush1.xpose.msra.mxu0 0.0
  %2995 = vmatprep.subr.mxu0 0.0
  %2996 = vmatpush1.xpose.msra.mxu0 0.0
  %2997 = vmatprep.subr.mxu0 0.0
  %2998 = vmatpush1.xpose.msra.mxu0 0.0
  %2999 = vmatprep.subr.mxu0 0.0
  %3000 = vmatpush1.xpose.msra.mxu0 0.0
  %3001 = vmatprep.subr.mxu0 0.0
  %3002 = vmatpush1.xpose.msra.mxu0 0.0
  %3003 = vmatprep.subr.mxu0 0.0
  %3004 = vmatpush1.xpose.msra.mxu0 0.0
  %3005 = vmatprep.subr.mxu0 0.0
  %3006 = vmatpush1.xpose.msra.mxu0 %v2973
  %3007 = vmatprep.subr.mxu0 0.0
  %3008 = vmatpush2.xpose.msra.mxu0 0.0
  %3009 = vmatprep.subr.mxu0 0.0
  %3010 = vmatpush2.xpose.msra.mxu0 0.0
  %3011 = vmatprep.subr.mxu0 0.0
  %3012 = vmatpush2.xpose.msra.mxu0 0.0
  %3013 = vmatprep.subr.mxu0 0.0
  %3014 = vmatpush2.xpose.msra.mxu0 0.0
  %3015 = vmatprep.subr.mxu0 0.0
  %3016 = vmatpush2.xpose.msra.mxu0 0.0
  %3017 = vmatprep.subr.mxu0 0.0
  %3018 = vmatpush2.xpose.msra.mxu0 0.0
  %3019 = vmatprep.subr.mxu0 0.0
  %3020 = vmatpush2.xpose.msra.mxu0 0.0
  %3021 = vmatprep.subr.mxu0 0.0
  %3022 = vmatpush2.xpose.msra.mxu0 0.0
  %3023 = vmatprep.subr.mxu0 0.0
  %3024 = vmatpush2.xpose.msra.mxu0 0.0
  %3025 = vmatprep.subr.mxu0 0.0
  %3026 = vmatpush2.xpose.msra.mxu0 0.0
  %3027 = vmatprep.subr.mxu0 0.0
  %3028 = vmatpush2.xpose.msra.mxu0 0.0
  %3029 = vmatprep.subr.mxu0 0.0
  %3030 = vmatpush2.xpose.msra.mxu0 0.0
  %3031 = vmatprep.subr.mxu0 0.0
  %3032 = vmatpush2.xpose.msra.mxu0 0.0
  %3033 = vmatprep.subr.mxu0 0.0
  %3034 = vmatpush2.xpose.msra.mxu0 0.0
  %3035 = vmatprep.subr.mxu0 0.0
  %3036 = vmatpush2.xpose.msra.mxu0 0.0
  %3037 = vmatprep.subr.mxu0 0.0
  %3038 = vmatpush2.xpose.msra.mxu0 0.0
  %3039 = vmatprep.mubr.f32.mxu0 0.0
  %3040 = vmatmul.mubr.f32.gmra.mxu0 %v2971
  %v3041 = vpop.f32.mrf.mxu0
  %v3042 = vadd.f32 0.0, %v3041
  %v3043 = vpop.f32.mrf.mxu0
  %3044 = vdwg.mxu0
  %3045 = vrot.lane.b32.xlu0 %v1964, 104
  %v3046 = vpop.permute.xlu0 %3045
  %3047 = vrot.lane.b32.xlu0 %v1964, 72
  %v3048 = vpop.permute.xlu0 %3047
  %v3049 = vsel %vm191, %v3046, 0
  %v3051 = vsel %vm191, %v3048, 0
  %3053 = vmatprep.subr.mxu0 0.0
  %3054 = vmatpush1.xpose.msra.mxu0 0.0
  %3055 = vmatprep.subr.mxu0 0.0
  %3056 = vmatpush1.xpose.msra.mxu0 0.0
  %3057 = vmatprep.subr.mxu0 0.0
  %3058 = vmatpush1.xpose.msra.mxu0 0.0
  %3059 = vmatprep.subr.mxu0 0.0
  %3060 = vmatpush1.xpose.msra.mxu0 0.0
  %3061 = vmatprep.subr.mxu0 0.0
  %3062 = vmatpush1.xpose.msra.mxu0 0.0
  %3063 = vmatprep.subr.mxu0 0.0
  %3064 = vmatpush1.xpose.msra.mxu0 0.0
  %3065 = vmatprep.subr.mxu0 0.0
  %3066 = vmatpush1.xpose.msra.mxu0 0.0
  %3067 = vmatprep.subr.mxu0 0.0
  %3068 = vmatpush1.xpose.msra.mxu0 0.0
  %3069 = vmatprep.subr.mxu0 0.0
  %3070 = vmatpush1.xpose.msra.mxu0 0.0
  %3071 = vmatprep.subr.mxu0 0.0
  %3072 = vmatpush1.xpose.msra.mxu0 0.0
  %3073 = vmatprep.subr.mxu0 0.0
  %3074 = vmatpush1.xpose.msra.mxu0 0.0
  %3075 = vmatprep.subr.mxu0 0.0
  %3076 = vmatpush1.xpose.msra.mxu0 0.0
  %3077 = vmatprep.subr.mxu0 0.0
  %3078 = vmatpush1.xpose.msra.mxu0 0.0
  %3079 = vmatprep.subr.mxu0 0.0
  %3080 = vmatpush1.xpose.msra.mxu0 0.0
  %3081 = vmatprep.subr.mxu0 0.0
  %3082 = vmatpush1.xpose.msra.mxu0 0.0
  %3083 = vmatprep.subr.mxu0 0.0
  %3084 = vmatpush1.xpose.msra.mxu0 %v3051
  %3085 = vmatprep.subr.mxu0 0.0
  %3086 = vmatpush2.xpose.msra.mxu0 0.0
  %3087 = vmatprep.subr.mxu0 0.0
  %3088 = vmatpush2.xpose.msra.mxu0 0.0
  %3089 = vmatprep.subr.mxu0 0.0
  %3090 = vmatpush2.xpose.msra.mxu0 0.0
  %3091 = vmatprep.subr.mxu0 0.0
  %3092 = vmatpush2.xpose.msra.mxu0 0.0
  %3093 = vmatprep.subr.mxu0 0.0
  %3094 = vmatpush2.xpose.msra.mxu0 0.0
  %3095 = vmatprep.subr.mxu0 0.0
  %3096 = vmatpush2.xpose.msra.mxu0 0.0
  %3097 = vmatprep.subr.mxu0 0.0
  %3098 = vmatpush2.xpose.msra.mxu0 0.0
  %3099 = vmatprep.subr.mxu0 0.0
  %3100 = vmatpush2.xpose.msra.mxu0 0.0
  %3101 = vmatprep.subr.mxu0 0.0
  %3102 = vmatpush2.xpose.msra.mxu0 0.0
  %3103 = vmatprep.subr.mxu0 0.0
  %3104 = vmatpush2.xpose.msra.mxu0 0.0
  %3105 = vmatprep.subr.mxu0 0.0
  %3106 = vmatpush2.xpose.msra.mxu0 0.0
  %3107 = vmatprep.subr.mxu0 0.0
  %3108 = vmatpush2.xpose.msra.mxu0 0.0
  %3109 = vmatprep.subr.mxu0 0.0
  %3110 = vmatpush2.xpose.msra.mxu0 0.0
  %3111 = vmatprep.subr.mxu0 0.0
  %3112 = vmatpush2.xpose.msra.mxu0 0.0
  %3113 = vmatprep.subr.mxu0 0.0
  %3114 = vmatpush2.xpose.msra.mxu0 0.0
  %3115 = vmatprep.subr.mxu0 0.0
  %3116 = vmatpush2.xpose.msra.mxu0 0.0
  %3117 = vmatprep.mubr.f32.mxu0 0.0
  %3118 = vmatmul.mubr.f32.gmra.mxu0 %v3049
  %v3119 = vpop.f32.mrf.mxu0
  %v3120 = vadd.f32 0.0, %v3119
  %v3121 = vpop.f32.mrf.mxu0
  %3122 = vdwg.mxu0
  %v3123 = vmul.f32 %v3042, 0.35355338
  %v3124 = vmul.f32 %v3120, 0.35355338
  %v3125 = vadd.f32 %v3123, %v115
  %v3126 = vadd.f32 %v3124, %v119
  %v3127 = vsel %vm191, %v3125, -inf
  %3128 = vmax.xlane.f32.xlu0 %v3127
  %v3129 = vpop.xlane.xlu0 %3128
  %v3130 = vsel %vm191, %v3126, -inf
  %3131 = vmax.xlane.f32.xlu0 %v3130
  %v3132 = vpop.xlane.xlu0 %3131
  %v3133 = vsub.f32 %v3125, %v3129
  %v3134 = vsub.f32 %v3126, %v3132
  %v3135 = vmul.f32 %v3133, 1.442695
  %v3136 = vpow.pop %v3135
  %v3137 = vmul.f32 %v3134, 1.442695
  %v3138 = vpow.pop %v3137
  %v3139 = vsel %vm191, %v3136, 0.0
  %3140 = vadd.xlane.f32.xlu0 %v3139
  %v3141 = vpop.xlane.xlu0 %3140
  %v3142 = vsel %vm191, %v3138, 0.0
  %3143 = vadd.xlane.f32.xlu0 %v3142
  %v3144 = vpop.xlane.xlu0 %3143
  %v3145 = vrcp.pop %v3141
  %v3146 = vrcp.pop %v3144
  %v3147 = vmul.f32 %v3136, %v3145
  %v3148 = vmul.f32 %v3138, %v3146
  %3149 = vrot.lane.b32.xlu0 %v1961, 40
  %v3150 = vpop.permute.xlu0 %3149
  %v3153 = vsel %vm191, %v3147, 0
  %3155 = vmatprep.subr.mxu0 0.0
  %3156 = vmatpush1.msra.mxu0 0.0
  %3157 = vmatprep.subr.mxu0 0.0
  %3158 = vmatpush1.msra.mxu0 0.0
  %3159 = vmatprep.subr.mxu0 0.0
  %3160 = vmatpush1.msra.mxu0 0.0
  %3161 = vmatprep.subr.mxu0 0.0
  %3162 = vmatpush1.msra.mxu0 0.0
  %3163 = vmatprep.subr.mxu0 0.0
  %3164 = vmatpush1.msra.mxu0 0.0
  %3165 = vmatprep.subr.mxu0 0.0
  %3166 = vmatpush1.msra.mxu0 0.0
  %3167 = vmatprep.subr.mxu0 0.0
  %3168 = vmatpush1.msra.mxu0 0.0
  %3169 = vmatprep.subr.mxu0 0.0
  %3170 = vmatpush1.msra.mxu0 0.0
  %3171 = vmatprep.subr.mxu0 0.0
  %3172 = vmatpush1.msra.mxu0 0.0
  %3173 = vmatprep.subr.mxu0 0.0
  %3174 = vmatpush1.msra.mxu0 0.0
  %3175 = vmatprep.subr.mxu0 0.0
  %3176 = vmatpush1.msra.mxu0 0.0
  %3177 = vmatprep.subr.mxu0 0.0
  %3178 = vmatpush1.msra.mxu0 0.0
  %3179 = vmatprep.subr.mxu0 0.0
  %3180 = vmatpush1.msra.mxu0 0.0
  %3181 = vmatprep.subr.mxu0 0.0
  %3182 = vmatpush1.msra.mxu0 0.0
  %3183 = vmatprep.subr.mxu0 0.0
  %3184 = vmatpush1.msra.mxu0 0.0
  %3185 = vmatprep.subr.mxu0 0.0
  %3186 = vmatpush1.msra.mxu0 %v3150
  %3187 = vmatprep.subr.mxu0 0.0
  %3188 = vmatpush2.msra.mxu0 0.0
  %3189 = vmatprep.subr.mxu0 0.0
  %3190 = vmatpush2.msra.mxu0 0.0
  %3191 = vmatprep.subr.mxu0 0.0
  %3192 = vmatpush2.msra.mxu0 0.0
  %3193 = vmatprep.subr.mxu0 0.0
  %3194 = vmatpush2.msra.mxu0 0.0
  %3195 = vmatprep.subr.mxu0 0.0
  %3196 = vmatpush2.msra.mxu0 0.0
  %3197 = vmatprep.subr.mxu0 0.0
  %3198 = vmatpush2.msra.mxu0 0.0
  %3199 = vmatprep.subr.mxu0 0.0
  %3200 = vmatpush2.msra.mxu0 0.0
  %3201 = vmatprep.subr.mxu0 0.0
  %3202 = vmatpush2.msra.mxu0 0.0
  %3203 = vmatprep.subr.mxu0 0.0
  %3204 = vmatpush2.msra.mxu0 0.0
  %3205 = vmatprep.subr.mxu0 0.0
  %3206 = vmatpush2.msra.mxu0 0.0
  %3207 = vmatprep.subr.mxu0 0.0
  %3208 = vmatpush2.msra.mxu0 0.0
  %3209 = vmatprep.subr.mxu0 0.0
  %3210 = vmatpush2.msra.mxu0 0.0
  %3211 = vmatprep.subr.mxu0 0.0
  %3212 = vmatpush2.msra.mxu0 0.0
  %3213 = vmatprep.subr.mxu0 0.0
  %3214 = vmatpush2.msra.mxu0 0.0
  %3215 = vmatprep.subr.mxu0 0.0
  %3216 = vmatpush2.msra.mxu0 0.0
  %3217 = vmatprep.subr.mxu0 0.0
  %3218 = vmatpush2.msra.mxu0 0.0
  %3219 = vmatprep.mubr.f32.mxu0 0.0
  %3220 = vmatmul.mubr.f32.gmra.mxu0 %v3153
  %v3221 = vpop.f32.mrf.mxu0
  %v3222 = vadd.f32 0.0, %v3221
  %v3223 = vpop.f32.mrf.mxu0
  %3224 = vdwg.mxu0
  %3225 = vrot.lane.b32.xlu0 %v1964, 40
  %v3226 = vpop.permute.xlu0 %3225
  %v3229 = vsel %vm191, %v3148, 0
  %3231 = vmatprep.subr.mxu0 0.0
  %3232 = vmatpush1.msra.mxu0 0.0
  %3233 = vmatprep.subr.mxu0 0.0
  %3234 = vmatpush1.msra.mxu0 0.0
  %3235 = vmatprep.subr.mxu0 0.0
  %3236 = vmatpush1.msra.mxu0 0.0
  %3237 = vmatprep.subr.mxu0 0.0
  %3238 = vmatpush1.msra.mxu0 0.0
  %3239 = vmatprep.subr.mxu0 0.0
  %3240 = vmatpush1.msra.mxu0 0.0
  %3241 = vmatprep.subr.mxu0 0.0
  %3242 = vmatpush1.msra.mxu0 0.0
  %3243 = vmatprep.subr.mxu0 0.0
  %3244 = vmatpush1.msra.mxu0 0.0
  %3245 = vmatprep.subr.mxu0 0.0
  %3246 = vmatpush1.msra.mxu0 0.0
  %3247 = vmatprep.subr.mxu0 0.0
  %3248 = vmatpush1.msra.mxu0 0.0
  %3249 = vmatprep.subr.mxu0 0.0
  %3250 = vmatpush1.msra.mxu0 0.0
  %3251 = vmatprep.subr.mxu0 0.0
  %3252 = vmatpush1.msra.mxu0 0.0
  %3253 = vmatprep.subr.mxu0 0.0
  %3254 = vmatpush1.msra.mxu0 0.0
  %3255 = vmatprep.subr.mxu0 0.0
  %3256 = vmatpush1.msra.mxu0 0.0
  %3257 = vmatprep.subr.mxu0 0.0
  %3258 = vmatpush1.msra.mxu0 0.0
  %3259 = vmatprep.subr.mxu0 0.0
  %3260 = vmatpush1.msra.mxu0 0.0
  %3261 = vmatprep.subr.mxu0 0.0
  %3262 = vmatpush1.msra.mxu0 %v3226
  %3263 = vmatprep.subr.mxu0 0.0
  %3264 = vmatpush2.msra.mxu0 0.0
  %3265 = vmatprep.subr.mxu0 0.0
  %3266 = vmatpush2.msra.mxu0 0.0
  %3267 = vmatprep.subr.mxu0 0.0
  %3268 = vmatpush2.msra.mxu0 0.0
  %3269 = vmatprep.subr.mxu0 0.0
  %3270 = vmatpush2.msra.mxu0 0.0
  %3271 = vmatprep.subr.mxu0 0.0
  %3272 = vmatpush2.msra.mxu0 0.0
  %3273 = vmatprep.subr.mxu0 0.0
  %3274 = vmatpush2.msra.mxu0 0.0
  %3275 = vmatprep.subr.mxu0 0.0
  %3276 = vmatpush2.msra.mxu0 0.0
  %3277 = vmatprep.subr.mxu0 0.0
  %3278 = vmatpush2.msra.mxu0 0.0
  %3279 = vmatprep.subr.mxu0 0.0
  %3280 = vmatpush2.msra.mxu0 0.0
  %3281 = vmatprep.subr.mxu0 0.0
  %3282 = vmatpush2.msra.mxu0 0.0
  %3283 = vmatprep.subr.mxu0 0.0
  %3284 = vmatpush2.msra.mxu0 0.0
  %3285 = vmatprep.subr.mxu0 0.0
  %3286 = vmatpush2.msra.mxu0 0.0
  %3287 = vmatprep.subr.mxu0 0.0
  %3288 = vmatpush2.msra.mxu0 0.0
  %3289 = vmatprep.subr.mxu0 0.0
  %3290 = vmatpush2.msra.mxu0 0.0
  %3291 = vmatprep.subr.mxu0 0.0
  %3292 = vmatpush2.msra.mxu0 0.0
  %3293 = vmatprep.subr.mxu0 0.0
  %3294 = vmatpush2.msra.mxu0 0.0
  %3295 = vmatprep.mubr.f32.mxu0 0.0
  %3296 = vmatmul.mubr.f32.gmra.mxu0 %v3229
  %v3297 = vpop.f32.mrf.mxu0
  %v3298 = vadd.f32 0.0, %v3297
  %v3299 = vpop.f32.mrf.mxu0
  %3300 = vdwg.mxu0
  %3303 = vrot.lane.b32.xlu0 %v2554, 8
  %v3304 = vpop.permute.xlu0 %3303
  %3305 = vrot.lane.b32.xlu0 %v2630, 8
  %v3306 = vpop.permute.xlu0 %3305
  %3311 = vrot.lane.b32.xlu0 %v2888, 16
  %v3312 = vpop.permute.xlu0 %3311
  %3313 = vrot.lane.b32.xlu0 %v2964, 16
  %v3314 = vpop.permute.xlu0 %3313
  %3319 = vrot.lane.b32.xlu0 %v3222, 24
  %v3320 = vpop.permute.xlu0 %3319
  %3321 = vrot.lane.b32.xlu0 %v3298, 24
  %v3322 = vpop.permute.xlu0 %3321
  %v3325 = vsel %vm191, %v2220, %v3304
  %v3326 = vsel %vm191, %v2296, %v3306
  %v3327 = vsel %vm1549, %v3325, %v3312
  %v3328 = vsel %vm1549, %v3326, %v3314
  %v3329 = vsel %vm1552, %v3327, %v3320
  %v3330 = vsel %vm1552, %v3328, %v3322
  %v3331 = vpack.c.bf16 %v3330, %v3329
  %s3332 = scalar_lea.vmem %s4, 16
  %v3333 = vld [vmem:[%s3332] sm:$0xf]
  %v3334 = vld [vmem:[%s3332 + $0x4] sm:$0xf]
  %v3335 = vld [vmem:[%s3332 + $0x8] sm:$0xf]
  %v3336 = vld [vmem:[%s3332 + $0xc] sm:$0xf]
  %v3337 = vlaneseq
  %v3338 = vshrl.u32 %v3337, 7
  %v3339 = vsub.s32 1, %v3338
  %v3340 = vrot.slane %v1900, %v3339
  %v3345 = vunpack.c.l.b16 %v3333
  %v3346 = vunpack.c.l.b16 %v3334
  %v3347 = vunpack.c.l.b16 %v3335
  %v3348 = vunpack.c.l.b16 %v3336
  %v3349 = vpack.c.b16 %v3346, %v3345
  %v3350 = vpack.c.b16 %v3348, %v3347
  %v3354 = vsel %vm46, %v3331, 0
  %3356 = vmatprep.subr.bf16.mxu0 0
  %3357 = vmatpush1.bf16.msra.mxu0 0
  %3358 = vmatprep.subr.bf16.mxu0 0
  %3359 = vmatpush1.bf16.msra.mxu0 0
  %3360 = vmatprep.subr.bf16.mxu0 0
  %3361 = vmatpush1.bf16.msra.mxu0 0
  %3362 = vmatprep.subr.bf16.mxu0 0
  %3363 = vmatpush1.bf16.msra.mxu0 0
  %3364 = vmatprep.subr.bf16.mxu0 0
  %3365 = vmatpush1.bf16.msra.mxu0 0
  %3366 = vmatprep.subr.bf16.mxu0 0
  %3367 = vmatpush1.bf16.msra.mxu0 0
  %3368 = vmatprep.subr.bf16.mxu0 0
  %3369 = vmatpush1.bf16.msra.mxu0 %v3350
  %3370 = vmatprep.subr.bf16.mxu0 0
  %3371 = vmatpush1.bf16.msra.mxu0 %v3349
  %3372 = vmatprep.subr.bf16.mxu0 0
  %3373 = vmatpush2.bf16.msra.mxu0 0
  %3374 = vmatprep.subr.bf16.mxu0 0
  %3375 = vmatpush2.bf16.msra.mxu0 0
  %3376 = vmatprep.subr.bf16.mxu0 0
  %3377 = vmatpush2.bf16.msra.mxu0 0
  %3378 = vmatprep.subr.bf16.mxu0 0
  %3379 = vmatpush2.bf16.msra.mxu0 0
  %3380 = vmatprep.subr.bf16.mxu0 0
  %3381 = vmatpush2.bf16.msra.mxu0 0
  %3382 = vmatprep.subr.bf16.mxu0 0
  %3383 = vmatpush2.bf16.msra.mxu0 0
  %3384 = vmatprep.subr.bf16.mxu0 0
  %3385 = vmatpush2.bf16.msra.mxu0 0
  %3386 = vmatprep.subr.bf16.mxu0 0
  %3387 = vmatpush2.bf16.msra.mxu0 0
  %3388 = vmatprep.mubr.bf16.mxu0 0
  %3389 = vmatmul.mubr.bf16.gmra.mxu0 %v3354
  %v3390 = vpop.f32.mrf.mxu0
  %v3391 = vadd.f32 %v3340, %v3390
  %v3392 = vpop.f32.mrf.mxu0
  %v3393 = vpop.f32.mrf.mxu0
  %v3394 = vadd.f32 %v3340, %v3393
  %v3395 = vpop.f32.mrf.mxu0
  %3396 = vdwg.mxu0
  %v3397 = vadd.f32 %v1897, %v3391
  %v3398 = vadd.f32 %v1898, %v3394
  %v3399 = vsel %vm46, %v3397, 0.0
  %3400 = vadd.xlane.f32.xlu0 %v3399
  %v3401 = vpop.xlane.xlu0 %3400
  %v3402 = vsel %vm46, %v3398, 0.0
  %3403 = vadd.xlane.f32.xlu0 %v3402
  %v3404 = vpop.xlane.xlu0 %3403
  %v3405 = vmul.f32 %v3401, %v53
  %v3406 = vmul.f32 %v3404, %v53
  %v3407 = vsub.f32 %v3397, %v3405
  %v3408 = vsub.f32 %v3398, %v3406
  %v3409 = vmul.f32 %v3407, %v3407
  %v3410 = vmul.f32 %v3408, %v3408
  %v3411 = vsel %vm46, %v3409, 0.0
  %3412 = vadd.xlane.f32.xlu0 %v3411
  %v3413 = vpop.xlane.xlu0 %3412
  %v3414 = vsel %vm46, %v3410, 0.0
  %3415 = vadd.xlane.f32.xlu0 %v3414
  %v3416 = vpop.xlane.xlu0 %3415
  %v3417 = vmul.f32 %v3413, %v53
  %v3418 = vmul.f32 %v3416, %v53
  %v3419 = vadd.f32 %v3417, 1e-12
  %v3420 = vadd.f32 %v3418, 1e-12
  %v3421 = vrsqrt.pop %v3419
  %v3422 = vrsqrt.pop %v3420
  %v3423 = vmul.f32 %v3407, %v3421
  %v3424 = vmul.f32 %v3408, %v3422
  %v3425 = vlaneseq
  %v3426 = vshrl.u32 %v3425, 7
  %v3427 = vsub.s32 2, %v3426
  %v3428 = vrot.slane %v1900, %v3427
  %v3429 = vmul.f32 %v3423, %v3428
  %v3430 = vmul.f32 %v3424, %v3428
  %v3431 = vlaneseq
  %v3432 = vshrl.u32 %v3431, 7
  %v3433 = vsub.s32 3, %v3432
  %v3434 = vrot.slane %v1900, %v3433
  %v3435 = vadd.f32 %v3429, %v3434
  %v3436 = vadd.f32 %v3430, %v3434
  %v3437 = vpack.c.bf16 %v3436, %v3435
  %s3438 = scalar_lea.vmem %s5, 16
  %v3439 = vld [vmem:[%s3438] sm:$0xf]
  %v3440 = vld [vmem:[%s3438 + $0x4] sm:$0xf]
  %v3441 = vld [vmem:[%s3438 + $0x8] sm:$0xf]
  %v3442 = vld [vmem:[%s3438 + $0xc] sm:$0xf]
  %v3443 = vlaneseq
  %v3444 = vshrl.u32 %v3443, 7
  %v3445 = vsub.s32 4, %v3444
  %v3446 = vrot.slane %v1900, %v3445
  %v3451 = vunpack.c.l.b16 %v3439
  %v3452 = vunpack.c.l.b16 %v3440
  %v3453 = vunpack.c.l.b16 %v3441
  %v3454 = vunpack.c.l.b16 %v3442
  %v3455 = vpack.c.b16 %v3452, %v3451
  %v3456 = vpack.c.b16 %v3454, %v3453
  %v3460 = vsel %vm46, %v3437, 0
  %3462 = vmatprep.subr.bf16.mxu0 0
  %3463 = vmatpush1.bf16.msra.mxu0 0
  %3464 = vmatprep.subr.bf16.mxu0 0
  %3465 = vmatpush1.bf16.msra.mxu0 0
  %3466 = vmatprep.subr.bf16.mxu0 0
  %3467 = vmatpush1.bf16.msra.mxu0 0
  %3468 = vmatprep.subr.bf16.mxu0 0
  %3469 = vmatpush1.bf16.msra.mxu0 0
  %3470 = vmatprep.subr.bf16.mxu0 0
  %3471 = vmatpush1.bf16.msra.mxu0 0
  %3472 = vmatprep.subr.bf16.mxu0 0
  %3473 = vmatpush1.bf16.msra.mxu0 0
  %3474 = vmatprep.subr.bf16.mxu0 0
  %3475 = vmatpush1.bf16.msra.mxu0 %v3456
  %3476 = vmatprep.subr.bf16.mxu0 0
  %3477 = vmatpush1.bf16.msra.mxu0 %v3455
  %3478 = vmatprep.subr.bf16.mxu0 0
  %3479 = vmatpush2.bf16.msra.mxu0 0
  %3480 = vmatprep.subr.bf16.mxu0 0
  %3481 = vmatpush2.bf16.msra.mxu0 0
  %3482 = vmatprep.subr.bf16.mxu0 0
  %3483 = vmatpush2.bf16.msra.mxu0 0
  %3484 = vmatprep.subr.bf16.mxu0 0
  %3485 = vmatpush2.bf16.msra.mxu0 0
  %3486 = vmatprep.subr.bf16.mxu0 0
  %3487 = vmatpush2.bf16.msra.mxu0 0
  %3488 = vmatprep.subr.bf16.mxu0 0
  %3489 = vmatpush2.bf16.msra.mxu0 0
  %3490 = vmatprep.subr.bf16.mxu0 0
  %3491 = vmatpush2.bf16.msra.mxu0 0
  %3492 = vmatprep.subr.bf16.mxu0 0
  %3493 = vmatpush2.bf16.msra.mxu0 0
  %3494 = vmatprep.mubr.bf16.mxu0 0
  %3495 = vmatmul.mubr.bf16.gmra.mxu0 %v3460
  %v3496 = vpop.f32.mrf.mxu0
  %v3497 = vadd.f32 %v3446, %v3496
  %v3498 = vpop.f32.mrf.mxu0
  %v3499 = vpop.f32.mrf.mxu0
  %v3500 = vadd.f32 %v3446, %v3499
  %v3501 = vpop.f32.mrf.mxu0
  %3502 = vdwg.mxu0
  %v3503 = vmul.f32 %v3497, 0.5
  %v3504 = vmul.f32 %v3500, 0.5
  %v3505 = vmul.f32 %v3497, 0.70710677
  %v3506 = vmul.f32 %v3500, 0.70710677
  %vm3507 = vcmp.ge.f32.partialorder %v3505, 0.0
  %vm3508 = vcmp.ge.f32.partialorder %v3506, 0.0
  %v3509 = vsel %vm3507, 1.0, -1.0
  %v3510 = vsel %vm3508, 1.0, -1.0
  %v3511 = vand.u32 2147483647, %v3505
  %v3512 = vand.u32 2147483647, %v3506
  %v3513 = vmul.f32 %v3511, 0.3275911
  %v3514 = vmul.f32 %v3512, 0.3275911
  %v3515 = vadd.f32 %v3513, 1.0
  %v3516 = vadd.f32 %v3514, 1.0
  %v3517 = vrcp.pop %v3515
  %v3518 = vrcp.pop %v3516
  %v3519 = vmul.f32 %v3517, 1.0614054
  %v3520 = vmul.f32 %v3518, 1.0614054
  %v3521 = vadd.f32 %v3519, -1.4531521
  %v3522 = vadd.f32 %v3520, -1.4531521
  %v3523 = vmul.f32 %v3521, %v3517
  %v3524 = vmul.f32 %v3522, %v3518
  %v3525 = vadd.f32 %v3523, 1.4214138
  %v3526 = vadd.f32 %v3524, 1.4214138
  %v3527 = vmul.f32 %v3525, %v3517
  %v3528 = vmul.f32 %v3526, %v3518
  %v3529 = vadd.f32 %v3527, -0.28449672
  %v3530 = vadd.f32 %v3528, -0.28449672
  %v3531 = vmul.f32 %v3529, %v3517
  %v3532 = vmul.f32 %v3530, %v3518
  %v3533 = vadd.f32 %v3531, 0.2548296
  %v3534 = vadd.f32 %v3532, 0.2548296
  %v3535 = vmul.f32 %v3533, %v3517
  %v3536 = vmul.f32 %v3534, %v3518
  %v3537 = vsub.f32 0.0, %v3511
  %v3538 = vsub.f32 0.0, %v3512
  %v3539 = vmul.f32 %v3537, %v3511
  %v3540 = vmul.f32 %v3538, %v3512
  %v3541 = vmul.f32 %v3539, 1.442695
  %v3542 = vpow.pop %v3541
  %v3543 = vmul.f32 %v3540, 1.442695
  %v3544 = vpow.pop %v3543
  %v3545 = vmul.f32 %v3535, %v3542
  %v3546 = vmul.f32 %v3536, %v3544
  %v3547 = vsub.f32 1.0, %v3545
  %v3548 = vsub.f32 1.0, %v3546
  %v3549 = vmul.f32 %v3509, %v3547
  %v3550 = vmul.f32 %v3510, %v3548
  %v3551 = vadd.f32 %v3549, 1.0
  %v3552 = vadd.f32 %v3550, 1.0
  %v3553 = vmul.f32 %v3503, %v3551
  %v3554 = vmul.f32 %v3504, %v3552
  %v3555 = vpack.c.bf16 %v3554, %v3553
  %s3556 = scalar_lea.vmem %s6, 32
  %v3557 = vld [vmem:[%s3556] sm:$0xf]
  %v3558 = vld [vmem:[%s3556 + $0x4] sm:$0xf]
  %v3559 = vld [vmem:[%s3556 + $0x8] sm:$0xf]
  %v3560 = vld [vmem:[%s3556 + $0xc] sm:$0xf]
  %v3561 = vld [vmem:[%s3556 + $0x10] sm:$0xf]
  %v3562 = vld [vmem:[%s3556 + $0x14] sm:$0xf]
  %v3563 = vld [vmem:[%s3556 + $0x18] sm:$0xf]
  %v3564 = vld [vmem:[%s3556 + $0x1c] sm:$0xf]
  %v3565 = vlaneseq
  %v3566 = vshrl.u32 %v3565, 7
  %v3567 = vsub.s32 5, %v3566
  %v3568 = vrot.slane %v1900, %v3567
  %v3577 = vunpack.c.l.b16 %v3557
  %v3578 = vunpack.c.l.b16 %v3558
  %v3579 = vunpack.c.l.b16 %v3559
  %v3580 = vunpack.c.l.b16 %v3560
  %v3581 = vunpack.c.l.b16 %v3561
  %v3582 = vunpack.c.l.b16 %v3562
  %v3583 = vunpack.c.l.b16 %v3563
  %v3584 = vunpack.c.l.b16 %v3564
  %v3585 = vpack.c.b16 %v3578, %v3577
  %v3586 = vpack.c.b16 %v3580, %v3579
  %v3587 = vpack.c.b16 %v3582, %v3581
  %v3588 = vpack.c.b16 %v3584, %v3583
  %v3594 = vsel %vm1814, %v3555, 0
  %3596 = vmatprep.subr.bf16.mxu0 0
  %3597 = vmatpush1.bf16.msra.mxu0 0
  %3598 = vmatprep.subr.bf16.mxu0 0
  %3599 = vmatpush1.bf16.msra.mxu0 0
  %3600 = vmatprep.subr.bf16.mxu0 0
  %3601 = vmatpush1.bf16.msra.mxu0 0
  %3602 = vmatprep.subr.bf16.mxu0 0
  %3603 = vmatpush1.bf16.msra.mxu0 0
  %3604 = vmatprep.subr.bf16.mxu0 0
  %3605 = vmatpush1.bf16.msra.mxu0 %v3588
  %3606 = vmatprep.subr.bf16.mxu0 0
  %3607 = vmatpush1.bf16.msra.mxu0 %v3587
  %3608 = vmatprep.subr.bf16.mxu0 0
  %3609 = vmatpush1.bf16.msra.mxu0 %v3586
  %3610 = vmatprep.subr.bf16.mxu0 0
  %3611 = vmatpush1.bf16.msra.mxu0 %v3585
  %3612 = vmatprep.subr.bf16.mxu0 0
  %3613 = vmatpush2.bf16.msra.mxu0 0
  %3614 = vmatprep.subr.bf16.mxu0 0
  %3615 = vmatpush2.bf16.msra.mxu0 0
  %3616 = vmatprep.subr.bf16.mxu0 0
  %3617 = vmatpush2.bf16.msra.mxu0 0
  %3618 = vmatprep.subr.bf16.mxu0 0
  %3619 = vmatpush2.bf16.msra.mxu0 0
  %3620 = vmatprep.subr.bf16.mxu0 0
  %3621 = vmatpush2.bf16.msra.mxu0 0
  %3622 = vmatprep.subr.bf16.mxu0 0
  %3623 = vmatpush2.bf16.msra.mxu0 0
  %3624 = vmatprep.subr.bf16.mxu0 0
  %3625 = vmatpush2.bf16.msra.mxu0 0
  %3626 = vmatprep.subr.bf16.mxu0 0
  %3627 = vmatpush2.bf16.msra.mxu0 0
  %3628 = vmatprep.mubr.bf16.mxu0 0
  %3629 = vmatmul.mubr.bf16.gmra.mxu0 %v3594
  %v3630 = vpop.f32.mrf.mxu0
  %v3631 = vadd.f32 %v3568, %v3630
  %v3632 = vpop.f32.mrf.mxu0
  %v3633 = vpop.f32.mrf.mxu0
  %v3634 = vadd.f32 %v3568, %v3633
  %v3635 = vpop.f32.mrf.mxu0
  %3636 = vdwg.mxu0
  %v3637 = vadd.f32 %v3435, %v3631
  %v3638 = vadd.f32 %v3436, %v3634
  %v3639 = vsel %vm46, %v3637, 0.0
  %3640 = vadd.xlane.f32.xlu0 %v3639
  %v3641 = vpop.xlane.xlu0 %3640
  %v3642 = vsel %vm46, %v3638, 0.0
  %3643 = vadd.xlane.f32.xlu0 %v3642
  %v3644 = vpop.xlane.xlu0 %3643
  %v3645 = vmul.f32 %v3641, %v53
  %v3646 = vmul.f32 %v3644, %v53
  %v3647 = vsub.f32 %v3637, %v3645
  %v3648 = vsub.f32 %v3638, %v3646
  %v3649 = vmul.f32 %v3647, %v3647
  %v3650 = vmul.f32 %v3648, %v3648
  %v3651 = vsel %vm46, %v3649, 0.0
  %3652 = vadd.xlane.f32.xlu0 %v3651
  %v3653 = vpop.xlane.xlu0 %3652
  %v3654 = vsel %vm46, %v3650, 0.0
  %3655 = vadd.xlane.f32.xlu0 %v3654
  %v3656 = vpop.xlane.xlu0 %3655
  %v3657 = vmul.f32 %v3653, %v53
  %v3658 = vmul.f32 %v3656, %v53
  %v3659 = vadd.f32 %v3657, 1e-12
  %v3660 = vadd.f32 %v3658, 1e-12
  %v3661 = vrsqrt.pop %v3659
  %v3662 = vrsqrt.pop %v3660
  %v3663 = vmul.f32 %v3647, %v3661
  %v3664 = vmul.f32 %v3648, %v3662
  %v3665 = vlaneseq
  %v3666 = vshrl.u32 %v3665, 7
  %v3667 = vsub.s32 6, %v3666
  %v3668 = vrot.slane %v1900, %v3667
  %v3669 = vmul.f32 %v3663, %v3668
  %v3670 = vmul.f32 %v3664, %v3668
  %v3671 = vlaneseq
  %v3672 = vshrl.u32 %v3671, 7
  %v3673 = vsub.s32 7, %v3672
  %v3674 = vrot.slane %v1900, %v3673
  %v3675 = vadd.f32 %v3669, %v3674
  %v3676 = vadd.f32 %v3670, %v3674
  %s3677 = scalar_lea.vmem %s7, 16
  %v3678 = vld [vmem:[%s3677] sm:$0xff]
  %v3679 = vpack.c.bf16 %v3676, %v3675
  %s3680 = scalar_lea.vmem %s3, 32
  %v3681 = vld [vmem:[%s3680] sm:$0xf]
  %v3682 = vld [vmem:[%s3680 + $0x4] sm:$0xf]
  %v3683 = vld [vmem:[%s3680 + $0x8] sm:$0xf]
  %v3684 = vld [vmem:[%s3680 + $0xc] sm:$0xf]
  %v3685 = vlaneseq
  %v3686 = vshrl.u32 %v3685, 7
  %v3687 = vsub.s32 0, %v3686
  %v3688 = vrot.slane %v3678, %v3687
  %v3693 = vunpack.c.l.b16 %v3681
  %v3694 = vunpack.c.l.b16 %v3682
  %v3695 = vunpack.c.l.b16 %v3683
  %v3696 = vunpack.c.l.b16 %v3684
  %v3697 = vpack.c.b16 %v3694, %v3693
  %v3698 = vpack.c.b16 %v3696, %v3695
  %v3702 = vsel %vm46, %v3679, 0
  %3704 = vmatprep.subr.bf16.mxu0 0
  %3705 = vmatpush1.bf16.msra.mxu0 0
  %3706 = vmatprep.subr.bf16.mxu0 0
  %3707 = vmatpush1.bf16.msra.mxu0 0
  %3708 = vmatprep.subr.bf16.mxu0 0
  %3709 = vmatpush1.bf16.msra.mxu0 0
  %3710 = vmatprep.subr.bf16.mxu0 0
  %3711 = vmatpush1.bf16.msra.mxu0 0
  %3712 = vmatprep.subr.bf16.mxu0 0
  %3713 = vmatpush1.bf16.msra.mxu0 0
  %3714 = vmatprep.subr.bf16.mxu0 0
  %3715 = vmatpush1.bf16.msra.mxu0 0
  %3716 = vmatprep.subr.bf16.mxu0 0
  %3717 = vmatpush1.bf16.msra.mxu0 %v3698
  %3718 = vmatprep.subr.bf16.mxu0 0
  %3719 = vmatpush1.bf16.msra.mxu0 %v3697
  %3720 = vmatprep.subr.bf16.mxu0 0
  %3721 = vmatpush2.bf16.msra.mxu0 0
  %3722 = vmatprep.subr.bf16.mxu0 0
  %3723 = vmatpush2.bf16.msra.mxu0 0
  %3724 = vmatprep.subr.bf16.mxu0 0
  %3725 = vmatpush2.bf16.msra.mxu0 0
  %3726 = vmatprep.subr.bf16.mxu0 0
  %3727 = vmatpush2.bf16.msra.mxu0 0
  %3728 = vmatprep.subr.bf16.mxu0 0
  %3729 = vmatpush2.bf16.msra.mxu0 0
  %3730 = vmatprep.subr.bf16.mxu0 0
  %3731 = vmatpush2.bf16.msra.mxu0 0
  %3732 = vmatprep.subr.bf16.mxu0 0
  %3733 = vmatpush2.bf16.msra.mxu0 0
  %3734 = vmatprep.subr.bf16.mxu0 0
  %3735 = vmatpush2.bf16.msra.mxu0 0
  %3736 = vmatprep.mubr.bf16.mxu0 0
  %3737 = vmatmul.mubr.bf16.gmra.mxu0 %v3702
  %v3738 = vpop.f32.mrf.mxu0
  %v3739 = vadd.f32 %v3688, %v3738
  %v3740 = vpop.f32.mrf.mxu0
  %v3741 = vpop.f32.mrf.mxu0
  %v3742 = vadd.f32 %v3688, %v3741
  %v3743 = vpop.f32.mrf.mxu0
  %3744 = vdwg.mxu0
  %3746 = vrot.lane.b32.xlu0 %v3739, 96
  %v3747 = vpop.permute.xlu0 %3746
  %v3748 = vsel %vm191, %v3739, 0
  %v3750 = vsel %vm191, %v3747, 0
  %3752 = vmatprep.subr.mxu0 0.0
  %3753 = vmatpush1.xpose.msra.mxu0 0.0
  %3754 = vmatprep.subr.mxu0 0.0
  %3755 = vmatpush1.xpose.msra.mxu0 0.0
  %3756 = vmatprep.subr.mxu0 0.0
  %3757 = vmatpush1.xpose.msra.mxu0 0.0
  %3758 = vmatprep.subr.mxu0 0.0
  %3759 = vmatpush1.xpose.msra.mxu0 0.0
  %3760 = vmatprep.subr.mxu0 0.0
  %3761 = vmatpush1.xpose.msra.mxu0 0.0
  %3762 = vmatprep.subr.mxu0 0.0
  %3763 = vmatpush1.xpose.msra.mxu0 0.0
  %3764 = vmatprep.subr.mxu0 0.0
  %3765 = vmatpush1.xpose.msra.mxu0 0.0
  %3766 = vmatprep.subr.mxu0 0.0
  %3767 = vmatpush1.xpose.msra.mxu0 0.0
  %3768 = vmatprep.subr.mxu0 0.0
  %3769 = vmatpush1.xpose.msra.mxu0 0.0
  %3770 = vmatprep.subr.mxu0 0.0
  %3771 = vmatpush1.xpose.msra.mxu0 0.0
  %3772 = vmatprep.subr.mxu0 0.0
  %3773 = vmatpush1.xpose.msra.mxu0 0.0
  %3774 = vmatprep.subr.mxu0 0.0
  %3775 = vmatpush1.xpose.msra.mxu0 0.0
  %3776 = vmatprep.subr.mxu0 0.0
  %3777 = vmatpush1.xpose.msra.mxu0 0.0
  %3778 = vmatprep.subr.mxu0 0.0
  %3779 = vmatpush1.xpose.msra.mxu0 0.0
  %3780 = vmatprep.subr.mxu0 0.0
  %3781 = vmatpush1.xpose.msra.mxu0 0.0
  %3782 = vmatprep.subr.mxu0 0.0
  %3783 = vmatpush1.xpose.msra.mxu0 %v3750
  %3784 = vmatprep.subr.mxu0 0.0
  %3785 = vmatpush2.xpose.msra.mxu0 0.0
  %3786 = vmatprep.subr.mxu0 0.0
  %3787 = vmatpush2.xpose.msra.mxu0 0.0
  %3788 = vmatprep.subr.mxu0 0.0
  %3789 = vmatpush2.xpose.msra.mxu0 0.0
  %3790 = vmatprep.subr.mxu0 0.0
  %3791 = vmatpush2.xpose.msra.mxu0 0.0
  %3792 = vmatprep.subr.mxu0 0.0
  %3793 = vmatpush2.xpose.msra.mxu0 0.0
  %3794 = vmatprep.subr.mxu0 0.0
  %3795 = vmatpush2.xpose.msra.mxu0 0.0
  %3796 = vmatprep.subr.mxu0 0.0
  %3797 = vmatpush2.xpose.msra.mxu0 0.0
  %3798 = vmatprep.subr.mxu0 0.0
  %3799 = vmatpush2.xpose.msra.mxu0 0.0
  %3800 = vmatprep.subr.mxu0 0.0
  %3801 = vmatpush2.xpose.msra.mxu0 0.0
  %3802 = vmatprep.subr.mxu0 0.0
  %3803 = vmatpush2.xpose.msra.mxu0 0.0
  %3804 = vmatprep.subr.mxu0 0.0
  %3805 = vmatpush2.xpose.msra.mxu0 0.0
  %3806 = vmatprep.subr.mxu0 0.0
  %3807 = vmatpush2.xpose.msra.mxu0 0.0
  %3808 = vmatprep.subr.mxu0 0.0
  %3809 = vmatpush2.xpose.msra.mxu0 0.0
  %3810 = vmatprep.subr.mxu0 0.0
  %3811 = vmatpush2.xpose.msra.mxu0 0.0
  %3812 = vmatprep.subr.mxu0 0.0
  %3813 = vmatpush2.xpose.msra.mxu0 0.0
  %3814 = vmatprep.subr.mxu0 0.0
  %3815 = vmatpush2.xpose.msra.mxu0 0.0
  %3816 = vmatprep.mubr.f32.mxu0 0.0
  %3817 = vmatmul.mubr.f32.gmra.mxu0 %v3748
  %v3818 = vpop.f32.mrf.mxu0
  %v3819 = vadd.f32 0.0, %v3818
  %v3820 = vpop.f32.mrf.mxu0
  %3821 = vdwg.mxu0
  %3823 = vrot.lane.b32.xlu0 %v3742, 96
  %v3824 = vpop.permute.xlu0 %3823
  %v3825 = vsel %vm191, %v3742, 0
  %v3827 = vsel %vm191, %v3824, 0
  %3829 = vmatprep.subr.mxu0 0.0
  %3830 = vmatpush1.xpose.msra.mxu0 0.0
  %3831 = vmatprep.subr.mxu0 0.0
  %3832 = vmatpush1.xpose.msra.mxu0 0.0
  %3833 = vmatprep.subr.mxu0 0.0
  %3834 = vmatpush1.xpose.msra.mxu0 0.0
  %3835 = vmatprep.subr.mxu0 0.0
  %3836 = vmatpush1.xpose.msra.mxu0 0.0
  %3837 = vmatprep.subr.mxu0 0.0
  %3838 = vmatpush1.xpose.msra.mxu0 0.0
  %3839 = vmatprep.subr.mxu0 0.0
  %3840 = vmatpush1.xpose.msra.mxu0 0.0
  %3841 = vmatprep.subr.mxu0 0.0
  %3842 = vmatpush1.xpose.msra.mxu0 0.0
  %3843 = vmatprep.subr.mxu0 0.0
  %3844 = vmatpush1.xpose.msra.mxu0 0.0
  %3845 = vmatprep.subr.mxu0 0.0
  %3846 = vmatpush1.xpose.msra.mxu0 0.0
  %3847 = vmatprep.subr.mxu0 0.0
  %3848 = vmatpush1.xpose.msra.mxu0 0.0
  %3849 = vmatprep.subr.mxu0 0.0
  %3850 = vmatpush1.xpose.msra.mxu0 0.0
  %3851 = vmatprep.subr.mxu0 0.0
  %3852 = vmatpush1.xpose.msra.mxu0 0.0
  %3853 = vmatprep.subr.mxu0 0.0
  %3854 = vmatpush1.xpose.msra.mxu0 0.0
  %3855 = vmatprep.subr.mxu0 0.0
  %3856 = vmatpush1.xpose.msra.mxu0 0.0
  %3857 = vmatprep.subr.mxu0 0.0
  %3858 = vmatpush1.xpose.msra.mxu0 0.0
  %3859 = vmatprep.subr.mxu0 0.0
  %3860 = vmatpush1.xpose.msra.mxu0 %v3827
  %3861 = vmatprep.subr.mxu0 0.0
  %3862 = vmatpush2.xpose.msra.mxu0 0.0
  %3863 = vmatprep.subr.mxu0 0.0
  %3864 = vmatpush2.xpose.msra.mxu0 0.0
  %3865 = vmatprep.subr.mxu0 0.0
  %3866 = vmatpush2.xpose.msra.mxu0 0.0
  %3867 = vmatprep.subr.mxu0 0.0
  %3868 = vmatpush2.xpose.msra.mxu0 0.0
  %3869 = vmatprep.subr.mxu0 0.0
  %3870 = vmatpush2.xpose.msra.mxu0 0.0
  %3871 = vmatprep.subr.mxu0 0.0
  %3872 = vmatpush2.xpose.msra.mxu0 0.0
  %3873 = vmatprep.subr.mxu0 0.0
  %3874 = vmatpush2.xpose.msra.mxu0 0.0
  %3875 = vmatprep.subr.mxu0 0.0
  %3876 = vmatpush2.xpose.msra.mxu0 0.0
  %3877 = vmatprep.subr.mxu0 0.0
  %3878 = vmatpush2.xpose.msra.mxu0 0.0
  %3879 = vmatprep.subr.mxu0 0.0
  %3880 = vmatpush2.xpose.msra.mxu0 0.0
  %3881 = vmatprep.subr.mxu0 0.0
  %3882 = vmatpush2.xpose.msra.mxu0 0.0
  %3883 = vmatprep.subr.mxu0 0.0
  %3884 = vmatpush2.xpose.msra.mxu0 0.0
  %3885 = vmatprep.subr.mxu0 0.0
  %3886 = vmatpush2.xpose.msra.mxu0 0.0
  %3887 = vmatprep.subr.mxu0 0.0
  %3888 = vmatpush2.xpose.msra.mxu0 0.0
  %3889 = vmatprep.subr.mxu0 0.0
  %3890 = vmatpush2.xpose.msra.mxu0 0.0
  %3891 = vmatprep.subr.mxu0 0.0
  %3892 = vmatpush2.xpose.msra.mxu0 0.0
  %3893 = vmatprep.mubr.f32.mxu0 0.0
  %3894 = vmatmul.mubr.f32.gmra.mxu0 %v3825
  %v3895 = vpop.f32.mrf.mxu0
  %v3896 = vadd.f32 0.0, %v3895
  %v3897 = vpop.f32.mrf.mxu0
  %3898 = vdwg.mxu0
  %v3899 = vmul.f32 %v3819, 0.35355338
  %v3900 = vmul.f32 %v3896, 0.35355338
  %v3901 = vadd.f32 %v3899, %v115
  %v3902 = vadd.f32 %v3900, %v119
  %v3903 = vsel %vm191, %v3901, -inf
  %3904 = vmax.xlane.f32.xlu0 %v3903
  %v3905 = vpop.xlane.xlu0 %3904
  %v3906 = vsel %vm191, %v3902, -inf
  %3907 = vmax.xlane.f32.xlu0 %v3906
  %v3908 = vpop.xlane.xlu0 %3907
  %v3909 = vsub.f32 %v3901, %v3905
  %v3910 = vsub.f32 %v3902, %v3908
  %v3911 = vmul.f32 %v3909, 1.442695
  %v3912 = vpow.pop %v3911
  %v3913 = vmul.f32 %v3910, 1.442695
  %v3914 = vpow.pop %v3913
  %v3915 = vsel %vm191, %v3912, 0.0
  %3916 = vadd.xlane.f32.xlu0 %v3915
  %v3917 = vpop.xlane.xlu0 %3916
  %v3918 = vsel %vm191, %v3914, 0.0
  %3919 = vadd.xlane.f32.xlu0 %v3918
  %v3920 = vpop.xlane.xlu0 %3919
  %v3921 = vrcp.pop %v3917
  %v3922 = vrcp.pop %v3920
  %v3923 = vmul.f32 %v3912, %v3921
  %v3924 = vmul.f32 %v3914, %v3922
  %3925 = vrot.lane.b32.xlu0 %v3739, 64
  %v3926 = vpop.permute.xlu0 %3925
  %v3929 = vsel %vm191, %v3923, 0
  %3931 = vmatprep.subr.mxu0 0.0
  %3932 = vmatpush1.msra.mxu0 0.0
  %3933 = vmatprep.subr.mxu0 0.0
  %3934 = vmatpush1.msra.mxu0 0.0
  %3935 = vmatprep.subr.mxu0 0.0
  %3936 = vmatpush1.msra.mxu0 0.0
  %3937 = vmatprep.subr.mxu0 0.0
  %3938 = vmatpush1.msra.mxu0 0.0
  %3939 = vmatprep.subr.mxu0 0.0
  %3940 = vmatpush1.msra.mxu0 0.0
  %3941 = vmatprep.subr.mxu0 0.0
  %3942 = vmatpush1.msra.mxu0 0.0
  %3943 = vmatprep.subr.mxu0 0.0
  %3944 = vmatpush1.msra.mxu0 0.0
  %3945 = vmatprep.subr.mxu0 0.0
  %3946 = vmatpush1.msra.mxu0 0.0
  %3947 = vmatprep.subr.mxu0 0.0
  %3948 = vmatpush1.msra.mxu0 0.0
  %3949 = vmatprep.subr.mxu0 0.0
  %3950 = vmatpush1.msra.mxu0 0.0
  %3951 = vmatprep.subr.mxu0 0.0
  %3952 = vmatpush1.msra.mxu0 0.0
  %3953 = vmatprep.subr.mxu0 0.0
  %3954 = vmatpush1.msra.mxu0 0.0
  %3955 = vmatprep.subr.mxu0 0.0
  %3956 = vmatpush1.msra.mxu0 0.0
  %3957 = vmatprep.subr.mxu0 0.0
  %3958 = vmatpush1.msra.mxu0 0.0
  %3959 = vmatprep.subr.mxu0 0.0
  %3960 = vmatpush1.msra.mxu0 0.0
  %3961 = vmatprep.subr.mxu0 0.0
  %3962 = vmatpush1.msra.mxu0 %v3926
  %3963 = vmatprep.subr.mxu0 0.0
  %3964 = vmatpush2.msra.mxu0 0.0
  %3965 = vmatprep.subr.mxu0 0.0
  %3966 = vmatpush2.msra.mxu0 0.0
  %3967 = vmatprep.subr.mxu0 0.0
  %3968 = vmatpush2.msra.mxu0 0.0
  %3969 = vmatprep.subr.mxu0 0.0
  %3970 = vmatpush2.msra.mxu0 0.0
  %3971 = vmatprep.subr.mxu0 0.0
  %3972 = vmatpush2.msra.mxu0 0.0
  %3973 = vmatprep.subr.mxu0 0.0
  %3974 = vmatpush2.msra.mxu0 0.0
  %3975 = vmatprep.subr.mxu0 0.0
  %3976 = vmatpush2.msra.mxu0 0.0
  %3977 = vmatprep.subr.mxu0 0.0
  %3978 = vmatpush2.msra.mxu0 0.0
  %3979 = vmatprep.subr.mxu0 0.0
  %3980 = vmatpush2.msra.mxu0 0.0
  %3981 = vmatprep.subr.mxu0 0.0
  %3982 = vmatpush2.msra.mxu0 0.0
  %3983 = vmatprep.subr.mxu0 0.0
  %3984 = vmatpush2.msra.mxu0 0.0
  %3985 = vmatprep.subr.mxu0 0.0
  %3986 = vmatpush2.msra.mxu0 0.0
  %3987 = vmatprep.subr.mxu0 0.0
  %3988 = vmatpush2.msra.mxu0 0.0
  %3989 = vmatprep.subr.mxu0 0.0
  %3990 = vmatpush2.msra.mxu0 0.0
  %3991 = vmatprep.subr.mxu0 0.0
  %3992 = vmatpush2.msra.mxu0 0.0
  %3993 = vmatprep.subr.mxu0 0.0
  %3994 = vmatpush2.msra.mxu0 0.0
  %3995 = vmatprep.mubr.f32.mxu0 0.0
  %3996 = vmatmul.mubr.f32.gmra.mxu0 %v3929
  %v3997 = vpop.f32.mrf.mxu0
  %v3998 = vadd.f32 0.0, %v3997
  %v3999 = vpop.f32.mrf.mxu0
  %4000 = vdwg.mxu0
  %4001 = vrot.lane.b32.xlu0 %v3742, 64
  %v4002 = vpop.permute.xlu0 %4001
  %v4005 = vsel %vm191, %v3924, 0
  %4007 = vmatprep.subr.mxu0 0.0
  %4008 = vmatpush1.msra.mxu0 0.0
  %4009 = vmatprep.subr.mxu0 0.0
  %4010 = vmatpush1.msra.mxu0 0.0
  %4011 = vmatprep.subr.mxu0 0.0
  %4012 = vmatpush1.msra.mxu0 0.0
  %4013 = vmatprep.subr.mxu0 0.0
  %4014 = vmatpush1.msra.mxu0 0.0
  %4015 = vmatprep.subr.mxu0 0.0
  %4016 = vmatpush1.msra.mxu0 0.0
  %4017 = vmatprep.subr.mxu0 0.0
  %4018 = vmatpush1.msra.mxu0 0.0
  %4019 = vmatprep.subr.mxu0 0.0
  %4020 = vmatpush1.msra.mxu0 0.0
  %4021 = vmatprep.subr.mxu0 0.0
  %4022 = vmatpush1.msra.mxu0 0.0
  %4023 = vmatprep.subr.mxu0 0.0
  %4024 = vmatpush1.msra.mxu0 0.0
  %4025 = vmatprep.subr.mxu0 0.0
  %4026 = vmatpush1.msra.mxu0 0.0
  %4027 = vmatprep.subr.mxu0 0.0
  %4028 = vmatpush1.msra.mxu0 0.0
  %4029 = vmatprep.subr.mxu0 0.0
  %4030 = vmatpush1.msra.mxu0 0.0
  %4031 = vmatprep.subr.mxu0 0.0
  %4032 = vmatpush1.msra.mxu0 0.0
  %4033 = vmatprep.subr.mxu0 0.0
  %4034 = vmatpush1.msra.mxu0 0.0
  %4035 = vmatprep.subr.mxu0 0.0
  %4036 = vmatpush1.msra.mxu0 0.0
  %4037 = vmatprep.subr.mxu0 0.0
  %4038 = vmatpush1.msra.mxu0 %v4002
  %4039 = vmatprep.subr.mxu0 0.0
  %4040 = vmatpush2.msra.mxu0 0.0
  %4041 = vmatprep.subr.mxu0 0.0
  %4042 = vmatpush2.msra.mxu0 0.0
  %4043 = vmatprep.subr.mxu0 0.0
  %4044 = vmatpush2.msra.mxu0 0.0
  %4045 = vmatprep.subr.mxu0 0.0
  %4046 = vmatpush2.msra.mxu0 0.0
  %4047 = vmatprep.subr.mxu0 0.0
  %4048 = vmatpush2.msra.mxu0 0.0
  %4049 = vmatprep.subr.mxu0 0.0
  %4050 = vmatpush2.msra.mxu0 0.0
  %4051 = vmatprep.subr.mxu0 0.0
  %4052 = vmatpush2.msra.mxu0 0.0
  %4053 = vmatprep.subr.mxu0 0.0
  %4054 = vmatpush2.msra.mxu0 0.0
  %4055 = vmatprep.subr.mxu0 0.0
  %4056 = vmatpush2.msra.mxu0 0.0
  %4057 = vmatprep.subr.mxu0 0.0
  %4058 = vmatpush2.msra.mxu0 0.0
  %4059 = vmatprep.subr.mxu0 0.0
  %4060 = vmatpush2.msra.mxu0 0.0
  %4061 = vmatprep.subr.mxu0 0.0
  %4062 = vmatpush2.msra.mxu0 0.0
  %4063 = vmatprep.subr.mxu0 0.0
  %4064 = vmatpush2.msra.mxu0 0.0
  %4065 = vmatprep.subr.mxu0 0.0
  %4066 = vmatpush2.msra.mxu0 0.0
  %4067 = vmatprep.subr.mxu0 0.0
  %4068 = vmatpush2.msra.mxu0 0.0
  %4069 = vmatprep.subr.mxu0 0.0
  %4070 = vmatpush2.msra.mxu0 0.0
  %4071 = vmatprep.mubr.f32.mxu0 0.0
  %4072 = vmatmul.mubr.f32.gmra.mxu0 %v4005
  %v4073 = vpop.f32.mrf.mxu0
  %v4074 = vadd.f32 0.0, %v4073
  %v4075 = vpop.f32.mrf.mxu0
  %4076 = vdwg.mxu0
  %4077 = vrot.lane.b32.xlu0 %v3739, 120
  %v4078 = vpop.permute.xlu0 %4077
  %4079 = vrot.lane.b32.xlu0 %v3739, 88
  %v4080 = vpop.permute.xlu0 %4079
  %v4081 = vsel %vm191, %v4078, 0
  %v4083 = vsel %vm191, %v4080, 0
  %4085 = vmatprep.subr.mxu0 0.0
  %4086 = vmatpush1.xpose.msra.mxu0 0.0
  %4087 = vmatprep.subr.mxu0 0.0
  %4088 = vmatpush1.xpose.msra.mxu0 0.0
  %4089 = vmatprep.subr.mxu0 0.0
  %4090 = vmatpush1.xpose.msra.mxu0 0.0
  %4091 = vmatprep.subr.mxu0 0.0
  %4092 = vmatpush1.xpose.msra.mxu0 0.0
  %4093 = vmatprep.subr.mxu0 0.0
  %4094 = vmatpush1.xpose.msra.mxu0 0.0
  %4095 = vmatprep.subr.mxu0 0.0
  %4096 = vmatpush1.xpose.msra.mxu0 0.0
  %4097 = vmatprep.subr.mxu0 0.0
  %4098 = vmatpush1.xpose.msra.mxu0 0.0
  %4099 = vmatprep.subr.mxu0 0.0
  %4100 = vmatpush1.xpose.msra.mxu0 0.0
  %4101 = vmatprep.subr.mxu0 0.0
  %4102 = vmatpush1.xpose.msra.mxu0 0.0
  %4103 = vmatprep.subr.mxu0 0.0
  %4104 = vmatpush1.xpose.msra.mxu0 0.0
  %4105 = vmatprep.subr.mxu0 0.0
  %4106 = vmatpush1.xpose.msra.mxu0 0.0
  %4107 = vmatprep.subr.mxu0 0.0
  %4108 = vmatpush1.xpose.msra.mxu0 0.0
  %4109 = vmatprep.subr.mxu0 0.0
  %4110 = vmatpush1.xpose.msra.mxu0 0.0
  %4111 = vmatprep.subr.mxu0 0.0
  %4112 = vmatpush1.xpose.msra.mxu0 0.0
  %4113 = vmatprep.subr.mxu0 0.0
  %4114 = vmatpush1.xpose.msra.mxu0 0.0
  %4115 = vmatprep.subr.mxu0 0.0
  %4116 = vmatpush1.xpose.msra.mxu0 %v4083
  %4117 = vmatprep.subr.mxu0 0.0
  %4118 = vmatpush2.xpose.msra.mxu0 0.0
  %4119 = vmatprep.subr.mxu0 0.0
  %4120 = vmatpush2.xpose.msra.mxu0 0.0
  %4121 = vmatprep.subr.mxu0 0.0
  %4122 = vmatpush2.xpose.msra.mxu0 0.0
  %4123 = vmatprep.subr.mxu0 0.0
  %4124 = vmatpush2.xpose.msra.mxu0 0.0
  %4125 = vmatprep.subr.mxu0 0.0
  %4126 = vmatpush2.xpose.msra.mxu0 0.0
  %4127 = vmatprep.subr.mxu0 0.0
  %4128 = vmatpush2.xpose.msra.mxu0 0.0
  %4129 = vmatprep.subr.mxu0 0.0
  %4130 = vmatpush2.xpose.msra.mxu0 0.0
  %4131 = vmatprep.subr.mxu0 0.0
  %4132 = vmatpush2.xpose.msra.mxu0 0.0
  %4133 = vmatprep.subr.mxu0 0.0
  %4134 = vmatpush2.xpose.msra.mxu0 0.0
  %4135 = vmatprep.subr.mxu0 0.0
  %4136 = vmatpush2.xpose.msra.mxu0 0.0
  %4137 = vmatprep.subr.mxu0 0.0
  %4138 = vmatpush2.xpose.msra.mxu0 0.0
  %4139 = vmatprep.subr.mxu0 0.0
  %4140 = vmatpush2.xpose.msra.mxu0 0.0
  %4141 = vmatprep.subr.mxu0 0.0
  %4142 = vmatpush2.xpose.msra.mxu0 0.0
  %4143 = vmatprep.subr.mxu0 0.0
  %4144 = vmatpush2.xpose.msra.mxu0 0.0
  %4145 = vmatprep.subr.mxu0 0.0
  %4146 = vmatpush2.xpose.msra.mxu0 0.0
  %4147 = vmatprep.subr.mxu0 0.0
  %4148 = vmatpush2.xpose.msra.mxu0 0.0
  %4149 = vmatprep.mubr.f32.mxu0 0.0
  %4150 = vmatmul.mubr.f32.gmra.mxu0 %v4081
  %v4151 = vpop.f32.mrf.mxu0
  %v4152 = vadd.f32 0.0, %v4151
  %v4153 = vpop.f32.mrf.mxu0
  %4154 = vdwg.mxu0
  %4155 = vrot.lane.b32.xlu0 %v3742, 120
  %v4156 = vpop.permute.xlu0 %4155
  %4157 = vrot.lane.b32.xlu0 %v3742, 88
  %v4158 = vpop.permute.xlu0 %4157
  %v4159 = vsel %vm191, %v4156, 0
  %v4161 = vsel %vm191, %v4158, 0
  %4163 = vmatprep.subr.mxu0 0.0
  %4164 = vmatpush1.xpose.msra.mxu0 0.0
  %4165 = vmatprep.subr.mxu0 0.0
  %4166 = vmatpush1.xpose.msra.mxu0 0.0
  %4167 = vmatprep.subr.mxu0 0.0
  %4168 = vmatpush1.xpose.msra.mxu0 0.0
  %4169 = vmatprep.subr.mxu0 0.0
  %4170 = vmatpush1.xpose.msra.mxu0 0.0
  %4171 = vmatprep.subr.mxu0 0.0
  %4172 = vmatpush1.xpose.msra.mxu0 0.0
  %4173 = vmatprep.subr.mxu0 0.0
  %4174 = vmatpush1.xpose.msra.mxu0 0.0
  %4175 = vmatprep.subr.mxu0 0.0
  %4176 = vmatpush1.xpose.msra.mxu0 0.0
  %4177 = vmatprep.subr.mxu0 0.0
  %4178 = vmatpush1.xpose.msra.mxu0 0.0
  %4179 = vmatprep.subr.mxu0 0.0
  %4180 = vmatpush1.xpose.msra.mxu0 0.0
  %4181 = vmatprep.subr.mxu0 0.0
  %4182 = vmatpush1.xpose.msra.mxu0 0.0
  %4183 = vmatprep.subr.mxu0 0.0
  %4184 = vmatpush1.xpose.msra.mxu0 0.0
  %4185 = vmatprep.subr.mxu0 0.0
  %4186 = vmatpush1.xpose.msra.mxu0 0.0
  %4187 = vmatprep.subr.mxu0 0.0
  %4188 = vmatpush1.xpose.msra.mxu0 0.0
  %4189 = vmatprep.subr.mxu0 0.0
  %4190 = vmatpush1.xpose.msra.mxu0 0.0
  %4191 = vmatprep.subr.mxu0 0.0
  %4192 = vmatpush1.xpose.msra.mxu0 0.0
  %4193 = vmatprep.subr.mxu0 0.0
  %4194 = vmatpush1.xpose.msra.mxu0 %v4161
  %4195 = vmatprep.subr.mxu0 0.0
  %4196 = vmatpush2.xpose.msra.mxu0 0.0
  %4197 = vmatprep.subr.mxu0 0.0
  %4198 = vmatpush2.xpose.msra.mxu0 0.0
  %4199 = vmatprep.subr.mxu0 0.0
  %4200 = vmatpush2.xpose.msra.mxu0 0.0
  %4201 = vmatprep.subr.mxu0 0.0
  %4202 = vmatpush2.xpose.msra.mxu0 0.0
  %4203 = vmatprep.subr.mxu0 0.0
  %4204 = vmatpush2.xpose.msra.mxu0 0.0
  %4205 = vmatprep.subr.mxu0 0.0
  %4206 = vmatpush2.xpose.msra.mxu0 0.0
  %4207 = vmatprep.subr.mxu0 0.0
  %4208 = vmatpush2.xpose.msra.mxu0 0.0
  %4209 = vmatprep.subr.mxu0 0.0
  %4210 = vmatpush2.xpose.msra.mxu0 0.0
  %4211 = vmatprep.subr.mxu0 0.0
  %4212 = vmatpush2.xpose.msra.mxu0 0.0
  %4213 = vmatprep.subr.mxu0 0.0
  %4214 = vmatpush2.xpose.msra.mxu0 0.0
  %4215 = vmatprep.subr.mxu0 0.0
  %4216 = vmatpush2.xpose.msra.mxu0 0.0
  %4217 = vmatprep.subr.mxu0 0.0
  %4218 = vmatpush2.xpose.msra.mxu0 0.0
  %4219 = vmatprep.subr.mxu0 0.0
  %4220 = vmatpush2.xpose.msra.mxu0 0.0
  %4221 = vmatprep.subr.mxu0 0.0
  %4222 = vmatpush2.xpose.msra.mxu0 0.0
  %4223 = vmatprep.subr.mxu0 0.0
  %4224 = vmatpush2.xpose.msra.mxu0 0.0
  %4225 = vmatprep.subr.mxu0 0.0
  %4226 = vmatpush2.xpose.msra.mxu0 0.0
  %4227 = vmatprep.mubr.f32.mxu0 0.0
  %4228 = vmatmul.mubr.f32.gmra.mxu0 %v4159
  %v4229 = vpop.f32.mrf.mxu0
  %v4230 = vadd.f32 0.0, %v4229
  %v4231 = vpop.f32.mrf.mxu0
  %4232 = vdwg.mxu0
  %v4233 = vmul.f32 %v4152, 0.35355338
  %v4234 = vmul.f32 %v4230, 0.35355338
  %v4235 = vadd.f32 %v4233, %v115
  %v4236 = vadd.f32 %v4234, %v119
  %v4237 = vsel %vm191, %v4235, -inf
  %4238 = vmax.xlane.f32.xlu0 %v4237
  %v4239 = vpop.xlane.xlu0 %4238
  %v4240 = vsel %vm191, %v4236, -inf
  %4241 = vmax.xlane.f32.xlu0 %v4240
  %v4242 = vpop.xlane.xlu0 %4241
  %v4243 = vsub.f32 %v4235, %v4239
  %v4244 = vsub.f32 %v4236, %v4242
  %v4245 = vmul.f32 %v4243, 1.442695
  %v4246 = vpow.pop %v4245
  %v4247 = vmul.f32 %v4244, 1.442695
  %v4248 = vpow.pop %v4247
  %v4249 = vsel %vm191, %v4246, 0.0
  %4250 = vadd.xlane.f32.xlu0 %v4249
  %v4251 = vpop.xlane.xlu0 %4250
  %v4252 = vsel %vm191, %v4248, 0.0
  %4253 = vadd.xlane.f32.xlu0 %v4252
  %v4254 = vpop.xlane.xlu0 %4253
  %v4255 = vrcp.pop %v4251
  %v4256 = vrcp.pop %v4254
  %v4257 = vmul.f32 %v4246, %v4255
  %v4258 = vmul.f32 %v4248, %v4256
  %4259 = vrot.lane.b32.xlu0 %v3739, 56
  %v4260 = vpop.permute.xlu0 %4259
  %v4263 = vsel %vm191, %v4257, 0
  %4265 = vmatprep.subr.mxu0 0.0
  %4266 = vmatpush1.msra.mxu0 0.0
  %4267 = vmatprep.subr.mxu0 0.0
  %4268 = vmatpush1.msra.mxu0 0.0
  %4269 = vmatprep.subr.mxu0 0.0
  %4270 = vmatpush1.msra.mxu0 0.0
  %4271 = vmatprep.subr.mxu0 0.0
  %4272 = vmatpush1.msra.mxu0 0.0
  %4273 = vmatprep.subr.mxu0 0.0
  %4274 = vmatpush1.msra.mxu0 0.0
  %4275 = vmatprep.subr.mxu0 0.0
  %4276 = vmatpush1.msra.mxu0 0.0
  %4277 = vmatprep.subr.mxu0 0.0
  %4278 = vmatpush1.msra.mxu0 0.0
  %4279 = vmatprep.subr.mxu0 0.0
  %4280 = vmatpush1.msra.mxu0 0.0
  %4281 = vmatprep.subr.mxu0 0.0
  %4282 = vmatpush1.msra.mxu0 0.0
  %4283 = vmatprep.subr.mxu0 0.0
  %4284 = vmatpush1.msra.mxu0 0.0
  %4285 = vmatprep.subr.mxu0 0.0
  %4286 = vmatpush1.msra.mxu0 0.0
  %4287 = vmatprep.subr.mxu0 0.0
  %4288 = vmatpush1.msra.mxu0 0.0
  %4289 = vmatprep.subr.mxu0 0.0
  %4290 = vmatpush1.msra.mxu0 0.0
  %4291 = vmatprep.subr.mxu0 0.0
  %4292 = vmatpush1.msra.mxu0 0.0
  %4293 = vmatprep.subr.mxu0 0.0
  %4294 = vmatpush1.msra.mxu0 0.0
  %4295 = vmatprep.subr.mxu0 0.0
  %4296 = vmatpush1.msra.mxu0 %v4260
  %4297 = vmatprep.subr.mxu0 0.0
  %4298 = vmatpush2.msra.mxu0 0.0
  %4299 = vmatprep.subr.mxu0 0.0
  %4300 = vmatpush2.msra.mxu0 0.0
  %4301 = vmatprep.subr.mxu0 0.0
  %4302 = vmatpush2.msra.mxu0 0.0
  %4303 = vmatprep.subr.mxu0 0.0
  %4304 = vmatpush2.msra.mxu0 0.0
  %4305 = vmatprep.subr.mxu0 0.0
  %4306 = vmatpush2.msra.mxu0 0.0
  %4307 = vmatprep.subr.mxu0 0.0
  %4308 = vmatpush2.msra.mxu0 0.0
  %4309 = vmatprep.subr.mxu0 0.0
  %4310 = vmatpush2.msra.mxu0 0.0
  %4311 = vmatprep.subr.mxu0 0.0
  %4312 = vmatpush2.msra.mxu0 0.0
  %4313 = vmatprep.subr.mxu0 0.0
  %4314 = vmatpush2.msra.mxu0 0.0
  %4315 = vmatprep.subr.mxu0 0.0
  %4316 = vmatpush2.msra.mxu0 0.0
  %4317 = vmatprep.subr.mxu0 0.0
  %4318 = vmatpush2.msra.mxu0 0.0
  %4319 = vmatprep.subr.mxu0 0.0
  %4320 = vmatpush2.msra.mxu0 0.0
  %4321 = vmatprep.subr.mxu0 0.0
  %4322 = vmatpush2.msra.mxu0 0.0
  %4323 = vmatprep.subr.mxu0 0.0
  %4324 = vmatpush2.msra.mxu0 0.0
  %4325 = vmatprep.subr.mxu0 0.0
  %4326 = vmatpush2.msra.mxu0 0.0
  %4327 = vmatprep.subr.mxu0 0.0
  %4328 = vmatpush2.msra.mxu0 0.0
  %4329 = vmatprep.mubr.f32.mxu0 0.0
  %4330 = vmatmul.mubr.f32.gmra.mxu0 %v4263
  %v4331 = vpop.f32.mrf.mxu0
  %v4332 = vadd.f32 0.0, %v4331
  %v4333 = vpop.f32.mrf.mxu0
  %4334 = vdwg.mxu0
  %4335 = vrot.lane.b32.xlu0 %v3742, 56
  %v4336 = vpop.permute.xlu0 %4335
  %v4339 = vsel %vm191, %v4258, 0
  %4341 = vmatprep.subr.mxu0 0.0
  %4342 = vmatpush1.msra.mxu0 0.0
  %4343 = vmatprep.subr.mxu0 0.0
  %4344 = vmatpush1.msra.mxu0 0.0
  %4345 = vmatprep.subr.mxu0 0.0
  %4346 = vmatpush1.msra.mxu0 0.0
  %4347 = vmatprep.subr.mxu0 0.0
  %4348 = vmatpush1.msra.mxu0 0.0
  %4349 = vmatprep.subr.mxu0 0.0
  %4350 = vmatpush1.msra.mxu0 0.0
  %4351 = vmatprep.subr.mxu0 0.0
  %4352 = vmatpush1.msra.mxu0 0.0
  %4353 = vmatprep.subr.mxu0 0.0
  %4354 = vmatpush1.msra.mxu0 0.0
  %4355 = vmatprep.subr.mxu0 0.0
  %4356 = vmatpush1.msra.mxu0 0.0
  %4357 = vmatprep.subr.mxu0 0.0
  %4358 = vmatpush1.msra.mxu0 0.0
  %4359 = vmatprep.subr.mxu0 0.0
  %4360 = vmatpush1.msra.mxu0 0.0
  %4361 = vmatprep.subr.mxu0 0.0
  %4362 = vmatpush1.msra.mxu0 0.0
  %4363 = vmatprep.subr.mxu0 0.0
  %4364 = vmatpush1.msra.mxu0 0.0
  %4365 = vmatprep.subr.mxu0 0.0
  %4366 = vmatpush1.msra.mxu0 0.0
  %4367 = vmatprep.subr.mxu0 0.0
  %4368 = vmatpush1.msra.mxu0 0.0
  %4369 = vmatprep.subr.mxu0 0.0
  %4370 = vmatpush1.msra.mxu0 0.0
  %4371 = vmatprep.subr.mxu0 0.0
  %4372 = vmatpush1.msra.mxu0 %v4336
  %4373 = vmatprep.subr.mxu0 0.0
  %4374 = vmatpush2.msra.mxu0 0.0
  %4375 = vmatprep.subr.mxu0 0.0
  %4376 = vmatpush2.msra.mxu0 0.0
  %4377 = vmatprep.subr.mxu0 0.0
  %4378 = vmatpush2.msra.mxu0 0.0
  %4379 = vmatprep.subr.mxu0 0.0
  %4380 = vmatpush2.msra.mxu0 0.0
  %4381 = vmatprep.subr.mxu0 0.0
  %4382 = vmatpush2.msra.mxu0 0.0
  %4383 = vmatprep.subr.mxu0 0.0
  %4384 = vmatpush2.msra.mxu0 0.0
  %4385 = vmatprep.subr.mxu0 0.0
  %4386 = vmatpush2.msra.mxu0 0.0
  %4387 = vmatprep.subr.mxu0 0.0
  %4388 = vmatpush2.msra.mxu0 0.0
  %4389 = vmatprep.subr.mxu0 0.0
  %4390 = vmatpush2.msra.mxu0 0.0
  %4391 = vmatprep.subr.mxu0 0.0
  %4392 = vmatpush2.msra.mxu0 0.0
  %4393 = vmatprep.subr.mxu0 0.0
  %4394 = vmatpush2.msra.mxu0 0.0
  %4395 = vmatprep.subr.mxu0 0.0
  %4396 = vmatpush2.msra.mxu0 0.0
  %4397 = vmatprep.subr.mxu0 0.0
  %4398 = vmatpush2.msra.mxu0 0.0
  %4399 = vmatprep.subr.mxu0 0.0
  %4400 = vmatpush2.msra.mxu0 0.0
  %4401 = vmatprep.subr.mxu0 0.0
  %4402 = vmatpush2.msra.mxu0 0.0
  %4403 = vmatprep.subr.mxu0 0.0
  %4404 = vmatpush2.msra.mxu0 0.0
  %4405 = vmatprep.mubr.f32.mxu0 0.0
  %4406 = vmatmul.mubr.f32.gmra.mxu0 %v4339
  %v4407 = vpop.f32.mrf.mxu0
  %v4408 = vadd.f32 0.0, %v4407
  %v4409 = vpop.f32.mrf.mxu0
  %4410 = vdwg.mxu0
  %4411 = vrot.lane.b32.xlu0 %v3739, 112
  %v4412 = vpop.permute.xlu0 %4411
  %4413 = vrot.lane.b32.xlu0 %v3739, 80
  %v4414 = vpop.permute.xlu0 %4413
  %v4415 = vsel %vm191, %v4412, 0
  %v4417 = vsel %vm191, %v4414, 0
  %4419 = vmatprep.subr.mxu0 0.0
  %4420 = vmatpush1.xpose.msra.mxu0 0.0
  %4421 = vmatprep.subr.mxu0 0.0
  %4422 = vmatpush1.xpose.msra.mxu0 0.0
  %4423 = vmatprep.subr.mxu0 0.0
  %4424 = vmatpush1.xpose.msra.mxu0 0.0
  %4425 = vmatprep.subr.mxu0 0.0
  %4426 = vmatpush1.xpose.msra.mxu0 0.0
  %4427 = vmatprep.subr.mxu0 0.0
  %4428 = vmatpush1.xpose.msra.mxu0 0.0
  %4429 = vmatprep.subr.mxu0 0.0
  %4430 = vmatpush1.xpose.msra.mxu0 0.0
  %4431 = vmatprep.subr.mxu0 0.0
  %4432 = vmatpush1.xpose.msra.mxu0 0.0
  %4433 = vmatprep.subr.mxu0 0.0
  %4434 = vmatpush1.xpose.msra.mxu0 0.0
  %4435 = vmatprep.subr.mxu0 0.0
  %4436 = vmatpush1.xpose.msra.mxu0 0.0
  %4437 = vmatprep.subr.mxu0 0.0
  %4438 = vmatpush1.xpose.msra.mxu0 0.0
  %4439 = vmatprep.subr.mxu0 0.0
  %4440 = vmatpush1.xpose.msra.mxu0 0.0
  %4441 = vmatprep.subr.mxu0 0.0
  %4442 = vmatpush1.xpose.msra.mxu0 0.0
  %4443 = vmatprep.subr.mxu0 0.0
  %4444 = vmatpush1.xpose.msra.mxu0 0.0
  %4445 = vmatprep.subr.mxu0 0.0
  %4446 = vmatpush1.xpose.msra.mxu0 0.0
  %4447 = vmatprep.subr.mxu0 0.0
  %4448 = vmatpush1.xpose.msra.mxu0 0.0
  %4449 = vmatprep.subr.mxu0 0.0
  %4450 = vmatpush1.xpose.msra.mxu0 %v4417
  %4451 = vmatprep.subr.mxu0 0.0
  %4452 = vmatpush2.xpose.msra.mxu0 0.0
  %4453 = vmatprep.subr.mxu0 0.0
  %4454 = vmatpush2.xpose.msra.mxu0 0.0
  %4455 = vmatprep.subr.mxu0 0.0
  %4456 = vmatpush2.xpose.msra.mxu0 0.0
  %4457 = vmatprep.subr.mxu0 0.0
  %4458 = vmatpush2.xpose.msra.mxu0 0.0
  %4459 = vmatprep.subr.mxu0 0.0
  %4460 = vmatpush2.xpose.msra.mxu0 0.0
  %4461 = vmatprep.subr.mxu0 0.0
  %4462 = vmatpush2.xpose.msra.mxu0 0.0
  %4463 = vmatprep.subr.mxu0 0.0
  %4464 = vmatpush2.xpose.msra.mxu0 0.0
  %4465 = vmatprep.subr.mxu0 0.0
  %4466 = vmatpush2.xpose.msra.mxu0 0.0
  %4467 = vmatprep.subr.mxu0 0.0
  %4468 = vmatpush2.xpose.msra.mxu0 0.0
  %4469 = vmatprep.subr.mxu0 0.0
  %4470 = vmatpush2.xpose.msra.mxu0 0.0
  %4471 = vmatprep.subr.mxu0 0.0
  %4472 = vmatpush2.xpose.msra.mxu0 0.0
  %4473 = vmatprep.subr.mxu0 0.0
  %4474 = vmatpush2.xpose.msra.mxu0 0.0
  %4475 = vmatprep.subr.mxu0 0.0
  %4476 = vmatpush2.xpose.msra.mxu0 0.0
  %4477 = vmatprep.subr.mxu0 0.0
  %4478 = vmatpush2.xpose.msra.mxu0 0.0
  %4479 = vmatprep.subr.mxu0 0.0
  %4480 = vmatpush2.xpose.msra.mxu0 0.0
  %4481 = vmatprep.subr.mxu0 0.0
  %4482 = vmatpush2.xpose.msra.mxu0 0.0
  %4483 = vmatprep.mubr.f32.mxu0 0.0
  %4484 = vmatmul.mubr.f32.gmra.mxu0 %v4415
  %v4485 = vpop.f32.mrf.mxu0
  %v4486 = vadd.f32 0.0, %v4485
  %v4487 = vpop.f32.mrf.mxu0
  %4488 = vdwg.mxu0
  %4489 = vrot.lane.b32.xlu0 %v3742, 112
  %v4490 = vpop.permute.xlu0 %4489
  %4491 = vrot.lane.b32.xlu0 %v3742, 80
  %v4492 = vpop.permute.xlu0 %4491
  %v4493 = vsel %vm191, %v4490, 0
  %v4495 = vsel %vm191, %v4492, 0
  %4497 = vmatprep.subr.mxu0 0.0
  %4498 = vmatpush1.xpose.msra.mxu0 0.0
  %4499 = vmatprep.subr.mxu0 0.0
  %4500 = vmatpush1.xpose.msra.mxu0 0.0
  %4501 = vmatprep.subr.mxu0 0.0
  %4502 = vmatpush1.xpose.msra.mxu0 0.0
  %4503 = vmatprep.subr.mxu0 0.0
  %4504 = vmatpush1.xpose.msra.mxu0 0.0
  %4505 = vmatprep.subr.mxu0 0.0
  %4506 = vmatpush1.xpose.msra.mxu0 0.0
  %4507 = vmatprep.subr.mxu0 0.0
  %4508 = vmatpush1.xpose.msra.mxu0 0.0
  %4509 = vmatprep.subr.mxu0 0.0
  %4510 = vmatpush1.xpose.msra.mxu0 0.0
  %4511 = vmatprep.subr.mxu0 0.0
  %4512 = vmatpush1.xpose.msra.mxu0 0.0
  %4513 = vmatprep.subr.mxu0 0.0
  %4514 = vmatpush1.xpose.msra.mxu0 0.0
  %4515 = vmatprep.subr.mxu0 0.0
  %4516 = vmatpush1.xpose.msra.mxu0 0.0
  %4517 = vmatprep.subr.mxu0 0.0
  %4518 = vmatpush1.xpose.msra.mxu0 0.0
  %4519 = vmatprep.subr.mxu0 0.0
  %4520 = vmatpush1.xpose.msra.mxu0 0.0
  %4521 = vmatprep.subr.mxu0 0.0
  %4522 = vmatpush1.xpose.msra.mxu0 0.0
  %4523 = vmatprep.subr.mxu0 0.0
  %4524 = vmatpush1.xpose.msra.mxu0 0.0
  %4525 = vmatprep.subr.mxu0 0.0
  %4526 = vmatpush1.xpose.msra.mxu0 0.0
  %4527 = vmatprep.subr.mxu0 0.0
  %4528 = vmatpush1.xpose.msra.mxu0 %v4495
  %4529 = vmatprep.subr.mxu0 0.0
  %4530 = vmatpush2.xpose.msra.mxu0 0.0
  %4531 = vmatprep.subr.mxu0 0.0
  %4532 = vmatpush2.xpose.msra.mxu0 0.0
  %4533 = vmatprep.subr.mxu0 0.0
  %4534 = vmatpush2.xpose.msra.mxu0 0.0
  %4535 = vmatprep.subr.mxu0 0.0
  %4536 = vmatpush2.xpose.msra.mxu0 0.0
  %4537 = vmatprep.subr.mxu0 0.0
  %4538 = vmatpush2.xpose.msra.mxu0 0.0
  %4539 = vmatprep.subr.mxu0 0.0
  %4540 = vmatpush2.xpose.msra.mxu0 0.0
  %4541 = vmatprep.subr.mxu0 0.0
  %4542 = vmatpush2.xpose.msra.mxu0 0.0
  %4543 = vmatprep.subr.mxu0 0.0
  %4544 = vmatpush2.xpose.msra.mxu0 0.0
  %4545 = vmatprep.subr.mxu0 0.0
  %4546 = vmatpush2.xpose.msra.mxu0 0.0
  %4547 = vmatprep.subr.mxu0 0.0
  %4548 = vmatpush2.xpose.msra.mxu0 0.0
  %4549 = vmatprep.subr.mxu0 0.0
  %4550 = vmatpush2.xpose.msra.mxu0 0.0
  %4551 = vmatprep.subr.mxu0 0.0
  %4552 = vmatpush2.xpose.msra.mxu0 0.0
  %4553 = vmatprep.subr.mxu0 0.0
  %4554 = vmatpush2.xpose.msra.mxu0 0.0
  %4555 = vmatprep.subr.mxu0 0.0
  %4556 = vmatpush2.xpose.msra.mxu0 0.0
  %4557 = vmatprep.subr.mxu0 0.0
  %4558 = vmatpush2.xpose.msra.mxu0 0.0
  %4559 = vmatprep.subr.mxu0 0.0
  %4560 = vmatpush2.xpose.msra.mxu0 0.0
  %4561 = vmatprep.mubr.f32.mxu0 0.0
  %4562 = vmatmul.mubr.f32.gmra.mxu0 %v4493
  %v4563 = vpop.f32.mrf.mxu0
  %v4564 = vadd.f32 0.0, %v4563
  %v4565 = vpop.f32.mrf.mxu0
  %4566 = vdwg.mxu0
  %v4567 = vmul.f32 %v4486, 0.35355338
  %v4568 = vmul.f32 %v4564, 0.35355338
  %v4569 = vadd.f32 %v4567, %v115
  %v4570 = vadd.f32 %v4568, %v119
  %v4571 = vsel %vm191, %v4569, -inf
  %4572 = vmax.xlane.f32.xlu0 %v4571
  %v4573 = vpop.xlane.xlu0 %4572
  %v4574 = vsel %vm191, %v4570, -inf
  %4575 = vmax.xlane.f32.xlu0 %v4574
  %v4576 = vpop.xlane.xlu0 %4575
  %v4577 = vsub.f32 %v4569, %v4573
  %v4578 = vsub.f32 %v4570, %v4576
  %v4579 = vmul.f32 %v4577, 1.442695
  %v4580 = vpow.pop %v4579
  %v4581 = vmul.f32 %v4578, 1.442695
  %v4582 = vpow.pop %v4581
  %v4583 = vsel %vm191, %v4580, 0.0
  %4584 = vadd.xlane.f32.xlu0 %v4583
  %v4585 = vpop.xlane.xlu0 %4584
  %v4586 = vsel %vm191, %v4582, 0.0
  %4587 = vadd.xlane.f32.xlu0 %v4586
  %v4588 = vpop.xlane.xlu0 %4587
  %v4589 = vrcp.pop %v4585
  %v4590 = vrcp.pop %v4588
  %v4591 = vmul.f32 %v4580, %v4589
  %v4592 = vmul.f32 %v4582, %v4590
  %4593 = vrot.lane.b32.xlu0 %v3739, 48
  %v4594 = vpop.permute.xlu0 %4593
  %v4597 = vsel %vm191, %v4591, 0
  %4599 = vmatprep.subr.mxu0 0.0
  %4600 = vmatpush1.msra.mxu0 0.0
  %4601 = vmatprep.subr.mxu0 0.0
  %4602 = vmatpush1.msra.mxu0 0.0
  %4603 = vmatprep.subr.mxu0 0.0
  %4604 = vmatpush1.msra.mxu0 0.0
  %4605 = vmatprep.subr.mxu0 0.0
  %4606 = vmatpush1.msra.mxu0 0.0
  %4607 = vmatprep.subr.mxu0 0.0
  %4608 = vmatpush1.msra.mxu0 0.0
  %4609 = vmatprep.subr.mxu0 0.0
  %4610 = vmatpush1.msra.mxu0 0.0
  %4611 = vmatprep.subr.mxu0 0.0
  %4612 = vmatpush1.msra.mxu0 0.0
  %4613 = vmatprep.subr.mxu0 0.0
  %4614 = vmatpush1.msra.mxu0 0.0
  %4615 = vmatprep.subr.mxu0 0.0
  %4616 = vmatpush1.msra.mxu0 0.0
  %4617 = vmatprep.subr.mxu0 0.0
  %4618 = vmatpush1.msra.mxu0 0.0
  %4619 = vmatprep.subr.mxu0 0.0
  %4620 = vmatpush1.msra.mxu0 0.0
  %4621 = vmatprep.subr.mxu0 0.0
  %4622 = vmatpush1.msra.mxu0 0.0
  %4623 = vmatprep.subr.mxu0 0.0
  %4624 = vmatpush1.msra.mxu0 0.0
  %4625 = vmatprep.subr.mxu0 0.0
  %4626 = vmatpush1.msra.mxu0 0.0
  %4627 = vmatprep.subr.mxu0 0.0
  %4628 = vmatpush1.msra.mxu0 0.0
  %4629 = vmatprep.subr.mxu0 0.0
  %4630 = vmatpush1.msra.mxu0 %v4594
  %4631 = vmatprep.subr.mxu0 0.0
  %4632 = vmatpush2.msra.mxu0 0.0
  %4633 = vmatprep.subr.mxu0 0.0
  %4634 = vmatpush2.msra.mxu0 0.0
  %4635 = vmatprep.subr.mxu0 0.0
  %4636 = vmatpush2.msra.mxu0 0.0
  %4637 = vmatprep.subr.mxu0 0.0
  %4638 = vmatpush2.msra.mxu0 0.0
  %4639 = vmatprep.subr.mxu0 0.0
  %4640 = vmatpush2.msra.mxu0 0.0
  %4641 = vmatprep.subr.mxu0 0.0
  %4642 = vmatpush2.msra.mxu0 0.0
  %4643 = vmatprep.subr.mxu0 0.0
  %4644 = vmatpush2.msra.mxu0 0.0
  %4645 = vmatprep.subr.mxu0 0.0
  %4646 = vmatpush2.msra.mxu0 0.0
  %4647 = vmatprep.subr.mxu0 0.0
  %4648 = vmatpush2.msra.mxu0 0.0
  %4649 = vmatprep.subr.mxu0 0.0
  %4650 = vmatpush2.msra.mxu0 0.0
  %4651 = vmatprep.subr.mxu0 0.0
  %4652 = vmatpush2.msra.mxu0 0.0
  %4653 = vmatprep.subr.mxu0 0.0
  %4654 = vmatpush2.msra.mxu0 0.0
  %4655 = vmatprep.subr.mxu0 0.0
  %4656 = vmatpush2.msra.mxu0 0.0
  %4657 = vmatprep.subr.mxu0 0.0
  %4658 = vmatpush2.msra.mxu0 0.0
  %4659 = vmatprep.subr.mxu0 0.0
  %4660 = vmatpush2.msra.mxu0 0.0
  %4661 = vmatprep.subr.mxu0 0.0
  %4662 = vmatpush2.msra.mxu0 0.0
  %4663 = vmatprep.mubr.f32.mxu0 0.0
  %4664 = vmatmul.mubr.f32.gmra.mxu0 %v4597
  %v4665 = vpop.f32.mrf.mxu0
  %v4666 = vadd.f32 0.0, %v4665
  %v4667 = vpop.f32.mrf.mxu0
  %4668 = vdwg.mxu0
  %4669 = vrot.lane.b32.xlu0 %v3742, 48
  %v4670 = vpop.permute.xlu0 %4669
  %v4673 = vsel %vm191, %v4592, 0
  %4675 = vmatprep.subr.mxu0 0.0
  %4676 = vmatpush1.msra.mxu0 0.0
  %4677 = vmatprep.subr.mxu0 0.0
  %4678 = vmatpush1.msra.mxu0 0.0
  %4679 = vmatprep.subr.mxu0 0.0
  %4680 = vmatpush1.msra.mxu0 0.0
  %4681 = vmatprep.subr.mxu0 0.0
  %4682 = vmatpush1.msra.mxu0 0.0
  %4683 = vmatprep.subr.mxu0 0.0
  %4684 = vmatpush1.msra.mxu0 0.0
  %4685 = vmatprep.subr.mxu0 0.0
  %4686 = vmatpush1.msra.mxu0 0.0
  %4687 = vmatprep.subr.mxu0 0.0
  %4688 = vmatpush1.msra.mxu0 0.0
  %4689 = vmatprep.subr.mxu0 0.0
  %4690 = vmatpush1.msra.mxu0 0.0
  %4691 = vmatprep.subr.mxu0 0.0
  %4692 = vmatpush1.msra.mxu0 0.0
  %4693 = vmatprep.subr.mxu0 0.0
  %4694 = vmatpush1.msra.mxu0 0.0
  %4695 = vmatprep.subr.mxu0 0.0
  %4696 = vmatpush1.msra.mxu0 0.0
  %4697 = vmatprep.subr.mxu0 0.0
  %4698 = vmatpush1.msra.mxu0 0.0
  %4699 = vmatprep.subr.mxu0 0.0
  %4700 = vmatpush1.msra.mxu0 0.0
  %4701 = vmatprep.subr.mxu0 0.0
  %4702 = vmatpush1.msra.mxu0 0.0
  %4703 = vmatprep.subr.mxu0 0.0
  %4704 = vmatpush1.msra.mxu0 0.0
  %4705 = vmatprep.subr.mxu0 0.0
  %4706 = vmatpush1.msra.mxu0 %v4670
  %4707 = vmatprep.subr.mxu0 0.0
  %4708 = vmatpush2.msra.mxu0 0.0
  %4709 = vmatprep.subr.mxu0 0.0
  %4710 = vmatpush2.msra.mxu0 0.0
  %4711 = vmatprep.subr.mxu0 0.0
  %4712 = vmatpush2.msra.mxu0 0.0
  %4713 = vmatprep.subr.mxu0 0.0
  %4714 = vmatpush2.msra.mxu0 0.0
  %4715 = vmatprep.subr.mxu0 0.0
  %4716 = vmatpush2.msra.mxu0 0.0
  %4717 = vmatprep.subr.mxu0 0.0
  %4718 = vmatpush2.msra.mxu0 0.0
  %4719 = vmatprep.subr.mxu0 0.0
  %4720 = vmatpush2.msra.mxu0 0.0
  %4721 = vmatprep.subr.mxu0 0.0
  %4722 = vmatpush2.msra.mxu0 0.0
  %4723 = vmatprep.subr.mxu0 0.0
  %4724 = vmatpush2.msra.mxu0 0.0
  %4725 = vmatprep.subr.mxu0 0.0
  %4726 = vmatpush2.msra.mxu0 0.0
  %4727 = vmatprep.subr.mxu0 0.0
  %4728 = vmatpush2.msra.mxu0 0.0
  %4729 = vmatprep.subr.mxu0 0.0
  %4730 = vmatpush2.msra.mxu0 0.0
  %4731 = vmatprep.subr.mxu0 0.0
  %4732 = vmatpush2.msra.mxu0 0.0
  %4733 = vmatprep.subr.mxu0 0.0
  %4734 = vmatpush2.msra.mxu0 0.0
  %4735 = vmatprep.subr.mxu0 0.0
  %4736 = vmatpush2.msra.mxu0 0.0
  %4737 = vmatprep.subr.mxu0 0.0
  %4738 = vmatpush2.msra.mxu0 0.0
  %4739 = vmatprep.mubr.f32.mxu0 0.0
  %4740 = vmatmul.mubr.f32.gmra.mxu0 %v4673
  %v4741 = vpop.f32.mrf.mxu0
  %v4742 = vadd.f32 0.0, %v4741
  %v4743 = vpop.f32.mrf.mxu0
  %4744 = vdwg.mxu0
  %4745 = vrot.lane.b32.xlu0 %v3739, 104
  %v4746 = vpop.permute.xlu0 %4745
  %4747 = vrot.lane.b32.xlu0 %v3739, 72
  %v4748 = vpop.permute.xlu0 %4747
  %v4749 = vsel %vm191, %v4746, 0
  %v4751 = vsel %vm191, %v4748, 0
  %4753 = vmatprep.subr.mxu0 0.0
  %4754 = vmatpush1.xpose.msra.mxu0 0.0
  %4755 = vmatprep.subr.mxu0 0.0
  %4756 = vmatpush1.xpose.msra.mxu0 0.0
  %4757 = vmatprep.subr.mxu0 0.0
  %4758 = vmatpush1.xpose.msra.mxu0 0.0
  %4759 = vmatprep.subr.mxu0 0.0
  %4760 = vmatpush1.xpose.msra.mxu0 0.0
  %4761 = vmatprep.subr.mxu0 0.0
  %4762 = vmatpush1.xpose.msra.mxu0 0.0
  %4763 = vmatprep.subr.mxu0 0.0
  %4764 = vmatpush1.xpose.msra.mxu0 0.0
  %4765 = vmatprep.subr.mxu0 0.0
  %4766 = vmatpush1.xpose.msra.mxu0 0.0
  %4767 = vmatprep.subr.mxu0 0.0
  %4768 = vmatpush1.xpose.msra.mxu0 0.0
  %4769 = vmatprep.subr.mxu0 0.0
  %4770 = vmatpush1.xpose.msra.mxu0 0.0
  %4771 = vmatprep.subr.mxu0 0.0
  %4772 = vmatpush1.xpose.msra.mxu0 0.0
  %4773 = vmatprep.subr.mxu0 0.0
  %4774 = vmatpush1.xpose.msra.mxu0 0.0
  %4775 = vmatprep.subr.mxu0 0.0
  %4776 = vmatpush1.xpose.msra.mxu0 0.0
  %4777 = vmatprep.subr.mxu0 0.0
  %4778 = vmatpush1.xpose.msra.mxu0 0.0
  %4779 = vmatprep.subr.mxu0 0.0
  %4780 = vmatpush1.xpose.msra.mxu0 0.0
  %4781 = vmatprep.subr.mxu0 0.0
  %4782 = vmatpush1.xpose.msra.mxu0 0.0
  %4783 = vmatprep.subr.mxu0 0.0
  %4784 = vmatpush1.xpose.msra.mxu0 %v4751
  %4785 = vmatprep.subr.mxu0 0.0
  %4786 = vmatpush2.xpose.msra.mxu0 0.0
  %4787 = vmatprep.subr.mxu0 0.0
  %4788 = vmatpush2.xpose.msra.mxu0 0.0
  %4789 = vmatprep.subr.mxu0 0.0
  %4790 = vmatpush2.xpose.msra.mxu0 0.0
  %4791 = vmatprep.subr.mxu0 0.0
  %4792 = vmatpush2.xpose.msra.mxu0 0.0
  %4793 = vmatprep.subr.mxu0 0.0
  %4794 = vmatpush2.xpose.msra.mxu0 0.0
  %4795 = vmatprep.subr.mxu0 0.0
  %4796 = vmatpush2.xpose.msra.mxu0 0.0
  %4797 = vmatprep.subr.mxu0 0.0
  %4798 = vmatpush2.xpose.msra.mxu0 0.0
  %4799 = vmatprep.subr.mxu0 0.0
  %4800 = vmatpush2.xpose.msra.mxu0 0.0
  %4801 = vmatprep.subr.mxu0 0.0
  %4802 = vmatpush2.xpose.msra.mxu0 0.0
  %4803 = vmatprep.subr.mxu0 0.0
  %4804 = vmatpush2.xpose.msra.mxu0 0.0
  %4805 = vmatprep.subr.mxu0 0.0
  %4806 = vmatpush2.xpose.msra.mxu0 0.0
  %4807 = vmatprep.subr.mxu0 0.0
  %4808 = vmatpush2.xpose.msra.mxu0 0.0
  %4809 = vmatprep.subr.mxu0 0.0
  %4810 = vmatpush2.xpose.msra.mxu0 0.0
  %4811 = vmatprep.subr.mxu0 0.0
  %4812 = vmatpush2.xpose.msra.mxu0 0.0
  %4813 = vmatprep.subr.mxu0 0.0
  %4814 = vmatpush2.xpose.msra.mxu0 0.0
  %4815 = vmatprep.subr.mxu0 0.0
  %4816 = vmatpush2.xpose.msra.mxu0 0.0
  %4817 = vmatprep.mubr.f32.mxu0 0.0
  %4818 = vmatmul.mubr.f32.gmra.mxu0 %v4749
  %v4819 = vpop.f32.mrf.mxu0
  %v4820 = vadd.f32 0.0, %v4819
  %v4821 = vpop.f32.mrf.mxu0
  %4822 = vdwg.mxu0
  %4823 = vrot.lane.b32.xlu0 %v3742, 104
  %v4824 = vpop.permute.xlu0 %4823
  %4825 = vrot.lane.b32.xlu0 %v3742, 72
  %v4826 = vpop.permute.xlu0 %4825
  %v4827 = vsel %vm191, %v4824, 0
  %v4829 = vsel %vm191, %v4826, 0
  %4831 = vmatprep.subr.mxu0 0.0
  %4832 = vmatpush1.xpose.msra.mxu0 0.0
  %4833 = vmatprep.subr.mxu0 0.0
  %4834 = vmatpush1.xpose.msra.mxu0 0.0
  %4835 = vmatprep.subr.mxu0 0.0
  %4836 = vmatpush1.xpose.msra.mxu0 0.0
  %4837 = vmatprep.subr.mxu0 0.0
  %4838 = vmatpush1.xpose.msra.mxu0 0.0
  %4839 = vmatprep.subr.mxu0 0.0
  %4840 = vmatpush1.xpose.msra.mxu0 0.0
  %4841 = vmatprep.subr.mxu0 0.0
  %4842 = vmatpush1.xpose.msra.mxu0 0.0
  %4843 = vmatprep.subr.mxu0 0.0
  %4844 = vmatpush1.xpose.msra.mxu0 0.0
  %4845 = vmatprep.subr.mxu0 0.0
  %4846 = vmatpush1.xpose.msra.mxu0 0.0
  %4847 = vmatprep.subr.mxu0 0.0
  %4848 = vmatpush1.xpose.msra.mxu0 0.0
  %4849 = vmatprep.subr.mxu0 0.0
  %4850 = vmatpush1.xpose.msra.mxu0 0.0
  %4851 = vmatprep.subr.mxu0 0.0
  %4852 = vmatpush1.xpose.msra.mxu0 0.0
  %4853 = vmatprep.subr.mxu0 0.0
  %4854 = vmatpush1.xpose.msra.mxu0 0.0
  %4855 = vmatprep.subr.mxu0 0.0
  %4856 = vmatpush1.xpose.msra.mxu0 0.0
  %4857 = vmatprep.subr.mxu0 0.0
  %4858 = vmatpush1.xpose.msra.mxu0 0.0
  %4859 = vmatprep.subr.mxu0 0.0
  %4860 = vmatpush1.xpose.msra.mxu0 0.0
  %4861 = vmatprep.subr.mxu0 0.0
  %4862 = vmatpush1.xpose.msra.mxu0 %v4829
  %4863 = vmatprep.subr.mxu0 0.0
  %4864 = vmatpush2.xpose.msra.mxu0 0.0
  %4865 = vmatprep.subr.mxu0 0.0
  %4866 = vmatpush2.xpose.msra.mxu0 0.0
  %4867 = vmatprep.subr.mxu0 0.0
  %4868 = vmatpush2.xpose.msra.mxu0 0.0
  %4869 = vmatprep.subr.mxu0 0.0
  %4870 = vmatpush2.xpose.msra.mxu0 0.0
  %4871 = vmatprep.subr.mxu0 0.0
  %4872 = vmatpush2.xpose.msra.mxu0 0.0
  %4873 = vmatprep.subr.mxu0 0.0
  %4874 = vmatpush2.xpose.msra.mxu0 0.0
  %4875 = vmatprep.subr.mxu0 0.0
  %4876 = vmatpush2.xpose.msra.mxu0 0.0
  %4877 = vmatprep.subr.mxu0 0.0
  %4878 = vmatpush2.xpose.msra.mxu0 0.0
  %4879 = vmatprep.subr.mxu0 0.0
  %4880 = vmatpush2.xpose.msra.mxu0 0.0
  %4881 = vmatprep.subr.mxu0 0.0
  %4882 = vmatpush2.xpose.msra.mxu0 0.0
  %4883 = vmatprep.subr.mxu0 0.0
  %4884 = vmatpush2.xpose.msra.mxu0 0.0
  %4885 = vmatprep.subr.mxu0 0.0
  %4886 = vmatpush2.xpose.msra.mxu0 0.0
  %4887 = vmatprep.subr.mxu0 0.0
  %4888 = vmatpush2.xpose.msra.mxu0 0.0
  %4889 = vmatprep.subr.mxu0 0.0
  %4890 = vmatpush2.xpose.msra.mxu0 0.0
  %4891 = vmatprep.subr.mxu0 0.0
  %4892 = vmatpush2.xpose.msra.mxu0 0.0
  %4893 = vmatprep.subr.mxu0 0.0
  %4894 = vmatpush2.xpose.msra.mxu0 0.0
  %4895 = vmatprep.mubr.f32.mxu0 0.0
  %4896 = vmatmul.mubr.f32.gmra.mxu0 %v4827
  %v4897 = vpop.f32.mrf.mxu0
  %v4898 = vadd.f32 0.0, %v4897
  %v4899 = vpop.f32.mrf.mxu0
  %4900 = vdwg.mxu0
  %v4901 = vmul.f32 %v4820, 0.35355338
  %v4902 = vmul.f32 %v4898, 0.35355338
  %v4903 = vadd.f32 %v4901, %v115
  %v4904 = vadd.f32 %v4902, %v119
  %v4905 = vsel %vm191, %v4903, -inf
  %4906 = vmax.xlane.f32.xlu0 %v4905
  %v4907 = vpop.xlane.xlu0 %4906
  %v4908 = vsel %vm191, %v4904, -inf
  %4909 = vmax.xlane.f32.xlu0 %v4908
  %v4910 = vpop.xlane.xlu0 %4909
  %v4911 = vsub.f32 %v4903, %v4907
  %v4912 = vsub.f32 %v4904, %v4910
  %v4913 = vmul.f32 %v4911, 1.442695
  %v4914 = vpow.pop %v4913
  %v4915 = vmul.f32 %v4912, 1.442695
  %v4916 = vpow.pop %v4915
  %v4917 = vsel %vm191, %v4914, 0.0
  %4918 = vadd.xlane.f32.xlu0 %v4917
  %v4919 = vpop.xlane.xlu0 %4918
  %v4920 = vsel %vm191, %v4916, 0.0
  %4921 = vadd.xlane.f32.xlu0 %v4920
  %v4922 = vpop.xlane.xlu0 %4921
  %v4923 = vrcp.pop %v4919
  %v4924 = vrcp.pop %v4922
  %v4925 = vmul.f32 %v4914, %v4923
  %v4926 = vmul.f32 %v4916, %v4924
  %4927 = vrot.lane.b32.xlu0 %v3739, 40
  %v4928 = vpop.permute.xlu0 %4927
  %v4931 = vsel %vm191, %v4925, 0
  %4933 = vmatprep.subr.mxu0 0.0
  %4934 = vmatpush1.msra.mxu0 0.0
  %4935 = vmatprep.subr.mxu0 0.0
  %4936 = vmatpush1.msra.mxu0 0.0
  %4937 = vmatprep.subr.mxu0 0.0
  %4938 = vmatpush1.msra.mxu0 0.0
  %4939 = vmatprep.subr.mxu0 0.0
  %4940 = vmatpush1.msra.mxu0 0.0
  %4941 = vmatprep.subr.mxu0 0.0
  %4942 = vmatpush1.msra.mxu0 0.0
  %4943 = vmatprep.subr.mxu0 0.0
  %4944 = vmatpush1.msra.mxu0 0.0
  %4945 = vmatprep.subr.mxu0 0.0
  %4946 = vmatpush1.msra.mxu0 0.0
  %4947 = vmatprep.subr.mxu0 0.0
  %4948 = vmatpush1.msra.mxu0 0.0
  %4949 = vmatprep.subr.mxu0 0.0
  %4950 = vmatpush1.msra.mxu0 0.0
  %4951 = vmatprep.subr.mxu0 0.0
  %4952 = vmatpush1.msra.mxu0 0.0
  %4953 = vmatprep.subr.mxu0 0.0
  %4954 = vmatpush1.msra.mxu0 0.0
  %4955 = vmatprep.subr.mxu0 0.0
  %4956 = vmatpush1.msra.mxu0 0.0
  %4957 = vmatprep.subr.mxu0 0.0
  %4958 = vmatpush1.msra.mxu0 0.0
  %4959 = vmatprep.subr.mxu0 0.0
  %4960 = vmatpush1.msra.mxu0 0.0
  %4961 = vmatprep.subr.mxu0 0.0
  %4962 = vmatpush1.msra.mxu0 0.0
  %4963 = vmatprep.subr.mxu0 0.0
  %4964 = vmatpush1.msra.mxu0 %v4928
  %4965 = vmatprep.subr.mxu0 0.0
  %4966 = vmatpush2.msra.mxu0 0.0
  %4967 = vmatprep.subr.mxu0 0.0
  %4968 = vmatpush2.msra.mxu0 0.0
  %4969 = vmatprep.subr.mxu0 0.0
  %4970 = vmatpush2.msra.mxu0 0.0
  %4971 = vmatprep.subr.mxu0 0.0
  %4972 = vmatpush2.msra.mxu0 0.0
  %4973 = vmatprep.subr.mxu0 0.0
  %4974 = vmatpush2.msra.mxu0 0.0
  %4975 = vmatprep.subr.mxu0 0.0
  %4976 = vmatpush2.msra.mxu0 0.0
  %4977 = vmatprep.subr.mxu0 0.0
  %4978 = vmatpush2.msra.mxu0 0.0
  %4979 = vmatprep.subr.mxu0 0.0
  %4980 = vmatpush2.msra.mxu0 0.0
  %4981 = vmatprep.subr.mxu0 0.0
  %4982 = vmatpush2.msra.mxu0 0.0
  %4983 = vmatprep.subr.mxu0 0.0
  %4984 = vmatpush2.msra.mxu0 0.0
  %4985 = vmatprep.subr.mxu0 0.0
  %4986 = vmatpush2.msra.mxu0 0.0
  %4987 = vmatprep.subr.mxu0 0.0
  %4988 = vmatpush2.msra.mxu0 0.0
  %4989 = vmatprep.subr.mxu0 0.0
  %4990 = vmatpush2.msra.mxu0 0.0
  %4991 = vmatprep.subr.mxu0 0.0
  %4992 = vmatpush2.msra.mxu0 0.0
  %4993 = vmatprep.subr.mxu0 0.0
  %4994 = vmatpush2.msra.mxu0 0.0
  %4995 = vmatprep.subr.mxu0 0.0
  %4996 = vmatpush2.msra.mxu0 0.0
  %4997 = vmatprep.mubr.f32.mxu0 0.0
  %4998 = vmatmul.mubr.f32.gmra.mxu0 %v4931
  %v4999 = vpop.f32.mrf.mxu0
  %v5000 = vadd.f32 0.0, %v4999
  %v5001 = vpop.f32.mrf.mxu0
  %5002 = vdwg.mxu0
  %5003 = vrot.lane.b32.xlu0 %v3742, 40
  %v5004 = vpop.permute.xlu0 %5003
  %v5007 = vsel %vm191, %v4926, 0
  %5009 = vmatprep.subr.mxu0 0.0
  %5010 = vmatpush1.msra.mxu0 0.0
  %5011 = vmatprep.subr.mxu0 0.0
  %5012 = vmatpush1.msra.mxu0 0.0
  %5013 = vmatprep.subr.mxu0 0.0
  %5014 = vmatpush1.msra.mxu0 0.0
  %5015 = vmatprep.subr.mxu0 0.0
  %5016 = vmatpush1.msra.mxu0 0.0
  %5017 = vmatprep.subr.mxu0 0.0
  %5018 = vmatpush1.msra.mxu0 0.0
  %5019 = vmatprep.subr.mxu0 0.0
  %5020 = vmatpush1.msra.mxu0 0.0
  %5021 = vmatprep.subr.mxu0 0.0
  %5022 = vmatpush1.msra.mxu0 0.0
  %5023 = vmatprep.subr.mxu0 0.0
  %5024 = vmatpush1.msra.mxu0 0.0
  %5025 = vmatprep.subr.mxu0 0.0
  %5026 = vmatpush1.msra.mxu0 0.0
  %5027 = vmatprep.subr.mxu0 0.0
  %5028 = vmatpush1.msra.mxu0 0.0
  %5029 = vmatprep.subr.mxu0 0.0
  %5030 = vmatpush1.msra.mxu0 0.0
  %5031 = vmatprep.subr.mxu0 0.0
  %5032 = vmatpush1.msra.mxu0 0.0
  %5033 = vmatprep.subr.mxu0 0.0
  %5034 = vmatpush1.msra.mxu0 0.0
  %5035 = vmatprep.subr.mxu0 0.0
  %5036 = vmatpush1.msra.mxu0 0.0
  %5037 = vmatprep.subr.mxu0 0.0
  %5038 = vmatpush1.msra.mxu0 0.0
  %5039 = vmatprep.subr.mxu0 0.0
  %5040 = vmatpush1.msra.mxu0 %v5004
  %5041 = vmatprep.subr.mxu0 0.0
  %5042 = vmatpush2.msra.mxu0 0.0
  %5043 = vmatprep.subr.mxu0 0.0
  %5044 = vmatpush2.msra.mxu0 0.0
  %5045 = vmatprep.subr.mxu0 0.0
  %5046 = vmatpush2.msra.mxu0 0.0
  %5047 = vmatprep.subr.mxu0 0.0
  %5048 = vmatpush2.msra.mxu0 0.0
  %5049 = vmatprep.subr.mxu0 0.0
  %5050 = vmatpush2.msra.mxu0 0.0
  %5051 = vmatprep.subr.mxu0 0.0
  %5052 = vmatpush2.msra.mxu0 0.0
  %5053 = vmatprep.subr.mxu0 0.0
  %5054 = vmatpush2.msra.mxu0 0.0
  %5055 = vmatprep.subr.mxu0 0.0
  %5056 = vmatpush2.msra.mxu0 0.0
  %5057 = vmatprep.subr.mxu0 0.0
  %5058 = vmatpush2.msra.mxu0 0.0
  %5059 = vmatprep.subr.mxu0 0.0
  %5060 = vmatpush2.msra.mxu0 0.0
  %5061 = vmatprep.subr.mxu0 0.0
  %5062 = vmatpush2.msra.mxu0 0.0
  %5063 = vmatprep.subr.mxu0 0.0
  %5064 = vmatpush2.msra.mxu0 0.0
  %5065 = vmatprep.subr.mxu0 0.0
  %5066 = vmatpush2.msra.mxu0 0.0
  %5067 = vmatprep.subr.mxu0 0.0
  %5068 = vmatpush2.msra.mxu0 0.0
  %5069 = vmatprep.subr.mxu0 0.0
  %5070 = vmatpush2.msra.mxu0 0.0
  %5071 = vmatprep.subr.mxu0 0.0
  %5072 = vmatpush2.msra.mxu0 0.0
  %5073 = vmatprep.mubr.f32.mxu0 0.0
  %5074 = vmatmul.mubr.f32.gmra.mxu0 %v5007
  %v5075 = vpop.f32.mrf.mxu0
  %v5076 = vadd.f32 0.0, %v5075
  %v5077 = vpop.f32.mrf.mxu0
  %5078 = vdwg.mxu0
  %5081 = vrot.lane.b32.xlu0 %v4332, 8
  %v5082 = vpop.permute.xlu0 %5081
  %5083 = vrot.lane.b32.xlu0 %v4408, 8
  %v5084 = vpop.permute.xlu0 %5083
  %5089 = vrot.lane.b32.xlu0 %v4666, 16
  %v5090 = vpop.permute.xlu0 %5089
  %5091 = vrot.lane.b32.xlu0 %v4742, 16
  %v5092 = vpop.permute.xlu0 %5091
  %5097 = vrot.lane.b32.xlu0 %v5000, 24
  %v5098 = vpop.permute.xlu0 %5097
  %5099 = vrot.lane.b32.xlu0 %v5076, 24
  %v5100 = vpop.permute.xlu0 %5099
  %v5103 = vsel %vm191, %v3998, %v5082
  %v5104 = vsel %vm191, %v4074, %v5084
  %v5105 = vsel %vm1549, %v5103, %v5090
  %v5106 = vsel %vm1549, %v5104, %v5092
  %v5107 = vsel %vm1552, %v5105, %v5098
  %v5108 = vsel %vm1552, %v5106, %v5100
  %v5109 = vpack.c.bf16 %v5108, %v5107
  %s5110 = scalar_lea.vmem %s4, 32
  %v5111 = vld [vmem:[%s5110] sm:$0xf]
  %v5112 = vld [vmem:[%s5110 + $0x4] sm:$0xf]
  %v5113 = vld [vmem:[%s5110 + $0x8] sm:$0xf]
  %v5114 = vld [vmem:[%s5110 + $0xc] sm:$0xf]
  %v5115 = vlaneseq
  %v5116 = vshrl.u32 %v5115, 7
  %v5117 = vsub.s32 1, %v5116
  %v5118 = vrot.slane %v3678, %v5117
  %v5123 = vunpack.c.l.b16 %v5111
  %v5124 = vunpack.c.l.b16 %v5112
  %v5125 = vunpack.c.l.b16 %v5113
  %v5126 = vunpack.c.l.b16 %v5114
  %v5127 = vpack.c.b16 %v5124, %v5123
  %v5128 = vpack.c.b16 %v5126, %v5125
  %v5132 = vsel %vm46, %v5109, 0
  %5134 = vmatprep.subr.bf16.mxu0 0
  %5135 = vmatpush1.bf16.msra.mxu0 0
  %5136 = vmatprep.subr.bf16.mxu0 0
  %5137 = vmatpush1.bf16.msra.mxu0 0
  %5138 = vmatprep.subr.bf16.mxu0 0
  %5139 = vmatpush1.bf16.msra.mxu0 0
  %5140 = vmatprep.subr.bf16.mxu0 0
  %5141 = vmatpush1.bf16.msra.mxu0 0
  %5142 = vmatprep.subr.bf16.mxu0 0
  %5143 = vmatpush1.bf16.msra.mxu0 0
  %5144 = vmatprep.subr.bf16.mxu0 0
  %5145 = vmatpush1.bf16.msra.mxu0 0
  %5146 = vmatprep.subr.bf16.mxu0 0
  %5147 = vmatpush1.bf16.msra.mxu0 %v5128
  %5148 = vmatprep.subr.bf16.mxu0 0
  %5149 = vmatpush1.bf16.msra.mxu0 %v5127
  %5150 = vmatprep.subr.bf16.mxu0 0
  %5151 = vmatpush2.bf16.msra.mxu0 0
  %5152 = vmatprep.subr.bf16.mxu0 0
  %5153 = vmatpush2.bf16.msra.mxu0 0
  %5154 = vmatprep.subr.bf16.mxu0 0
  %5155 = vmatpush2.bf16.msra.mxu0 0
  %5156 = vmatprep.subr.bf16.mxu0 0
  %5157 = vmatpush2.bf16.msra.mxu0 0
  %5158 = vmatprep.subr.bf16.mxu0 0
  %5159 = vmatpush2.bf16.msra.mxu0 0
  %5160 = vmatprep.subr.bf16.mxu0 0
  %5161 = vmatpush2.bf16.msra.mxu0 0
  %5162 = vmatprep.subr.bf16.mxu0 0
  %5163 = vmatpush2.bf16.msra.mxu0 0
  %5164 = vmatprep.subr.bf16.mxu0 0
  %5165 = vmatpush2.bf16.msra.mxu0 0
  %5166 = vmatprep.mubr.bf16.mxu0 0
  %5167 = vmatmul.mubr.bf16.gmra.mxu0 %v5132
  %v5168 = vpop.f32.mrf.mxu0
  %v5169 = vadd.f32 %v5118, %v5168
  %v5170 = vpop.f32.mrf.mxu0
  %v5171 = vpop.f32.mrf.mxu0
  %v5172 = vadd.f32 %v5118, %v5171
  %v5173 = vpop.f32.mrf.mxu0
  %5174 = vdwg.mxu0
  %v5175 = vadd.f32 %v3675, %v5169
  %v5176 = vadd.f32 %v3676, %v5172
  %v5177 = vsel %vm46, %v5175, 0.0
  %5178 = vadd.xlane.f32.xlu0 %v5177
  %v5179 = vpop.xlane.xlu0 %5178
  %v5180 = vsel %vm46, %v5176, 0.0
  %5181 = vadd.xlane.f32.xlu0 %v5180
  %v5182 = vpop.xlane.xlu0 %5181
  %v5183 = vmul.f32 %v5179, %v53
  %v5184 = vmul.f32 %v5182, %v53
  %v5185 = vsub.f32 %v5175, %v5183
  %v5186 = vsub.f32 %v5176, %v5184
  %v5187 = vmul.f32 %v5185, %v5185
  %v5188 = vmul.f32 %v5186, %v5186
  %v5189 = vsel %vm46, %v5187, 0.0
  %5190 = vadd.xlane.f32.xlu0 %v5189
  %v5191 = vpop.xlane.xlu0 %5190
  %v5192 = vsel %vm46, %v5188, 0.0
  %5193 = vadd.xlane.f32.xlu0 %v5192
  %v5194 = vpop.xlane.xlu0 %5193
  %v5195 = vmul.f32 %v5191, %v53
  %v5196 = vmul.f32 %v5194, %v53
  %v5197 = vadd.f32 %v5195, 1e-12
  %v5198 = vadd.f32 %v5196, 1e-12
  %v5199 = vrsqrt.pop %v5197
  %v5200 = vrsqrt.pop %v5198
  %v5201 = vmul.f32 %v5185, %v5199
  %v5202 = vmul.f32 %v5186, %v5200
  %v5203 = vlaneseq
  %v5204 = vshrl.u32 %v5203, 7
  %v5205 = vsub.s32 2, %v5204
  %v5206 = vrot.slane %v3678, %v5205
  %v5207 = vmul.f32 %v5201, %v5206
  %v5208 = vmul.f32 %v5202, %v5206
  %v5209 = vlaneseq
  %v5210 = vshrl.u32 %v5209, 7
  %v5211 = vsub.s32 3, %v5210
  %v5212 = vrot.slane %v3678, %v5211
  %v5213 = vadd.f32 %v5207, %v5212
  %v5214 = vadd.f32 %v5208, %v5212
  %v5215 = vpack.c.bf16 %v5214, %v5213
  %s5216 = scalar_lea.vmem %s5, 32
  %v5217 = vld [vmem:[%s5216] sm:$0xf]
  %v5218 = vld [vmem:[%s5216 + $0x4] sm:$0xf]
  %v5219 = vld [vmem:[%s5216 + $0x8] sm:$0xf]
  %v5220 = vld [vmem:[%s5216 + $0xc] sm:$0xf]
  %v5221 = vlaneseq
  %v5222 = vshrl.u32 %v5221, 7
  %v5223 = vsub.s32 4, %v5222
  %v5224 = vrot.slane %v3678, %v5223
  %v5229 = vunpack.c.l.b16 %v5217
  %v5230 = vunpack.c.l.b16 %v5218
  %v5231 = vunpack.c.l.b16 %v5219
  %v5232 = vunpack.c.l.b16 %v5220
  %v5233 = vpack.c.b16 %v5230, %v5229
  %v5234 = vpack.c.b16 %v5232, %v5231
  %v5238 = vsel %vm46, %v5215, 0
  %5240 = vmatprep.subr.bf16.mxu0 0
  %5241 = vmatpush1.bf16.msra.mxu0 0
  %5242 = vmatprep.subr.bf16.mxu0 0
  %5243 = vmatpush1.bf16.msra.mxu0 0
  %5244 = vmatprep.subr.bf16.mxu0 0
  %5245 = vmatpush1.bf16.msra.mxu0 0
  %5246 = vmatprep.subr.bf16.mxu0 0
  %5247 = vmatpush1.bf16.msra.mxu0 0
  %5248 = vmatprep.subr.bf16.mxu0 0
  %5249 = vmatpush1.bf16.msra.mxu0 0
  %5250 = vmatprep.subr.bf16.mxu0 0
  %5251 = vmatpush1.bf16.msra.mxu0 0
  %5252 = vmatprep.subr.bf16.mxu0 0
  %5253 = vmatpush1.bf16.msra.mxu0 %v5234
  %5254 = vmatprep.subr.bf16.mxu0 0
  %5255 = vmatpush1.bf16.msra.mxu0 %v5233
  %5256 = vmatprep.subr.bf16.mxu0 0
  %5257 = vmatpush2.bf16.msra.mxu0 0
  %5258 = vmatprep.subr.bf16.mxu0 0
  %5259 = vmatpush2.bf16.msra.mxu0 0
  %5260 = vmatprep.subr.bf16.mxu0 0
  %5261 = vmatpush2.bf16.msra.mxu0 0
  %5262 = vmatprep.subr.bf16.mxu0 0
  %5263 = vmatpush2.bf16.msra.mxu0 0
  %5264 = vmatprep.subr.bf16.mxu0 0
  %5265 = vmatpush2.bf16.msra.mxu0 0
  %5266 = vmatprep.subr.bf16.mxu0 0
  %5267 = vmatpush2.bf16.msra.mxu0 0
  %5268 = vmatprep.subr.bf16.mxu0 0
  %5269 = vmatpush2.bf16.msra.mxu0 0
  %5270 = vmatprep.subr.bf16.mxu0 0
  %5271 = vmatpush2.bf16.msra.mxu0 0
  %5272 = vmatprep.mubr.bf16.mxu0 0
  %5273 = vmatmul.mubr.bf16.gmra.mxu0 %v5238
  %v5274 = vpop.f32.mrf.mxu0
  %v5275 = vadd.f32 %v5224, %v5274
  %v5276 = vpop.f32.mrf.mxu0
  %v5277 = vpop.f32.mrf.mxu0
  %v5278 = vadd.f32 %v5224, %v5277
  %v5279 = vpop.f32.mrf.mxu0
  %5280 = vdwg.mxu0
  %v5281 = vmul.f32 %v5275, 0.5
  %v5282 = vmul.f32 %v5278, 0.5
  %v5283 = vmul.f32 %v5275, 0.70710677
  %v5284 = vmul.f32 %v5278, 0.70710677
  %vm5285 = vcmp.ge.f32.partialorder %v5283, 0.0
  %vm5286 = vcmp.ge.f32.partialorder %v5284, 0.0
  %v5287 = vsel %vm5285, 1.0, -1.0
  %v5288 = vsel %vm5286, 1.0, -1.0
  %v5289 = vand.u32 2147483647, %v5283
  %v5290 = vand.u32 2147483647, %v5284
  %v5291 = vmul.f32 %v5289, 0.3275911
  %v5292 = vmul.f32 %v5290, 0.3275911
  %v5293 = vadd.f32 %v5291, 1.0
  %v5294 = vadd.f32 %v5292, 1.0
  %v5295 = vrcp.pop %v5293
  %v5296 = vrcp.pop %v5294
  %v5297 = vmul.f32 %v5295, 1.0614054
  %v5298 = vmul.f32 %v5296, 1.0614054
  %v5299 = vadd.f32 %v5297, -1.4531521
  %v5300 = vadd.f32 %v5298, -1.4531521
  %v5301 = vmul.f32 %v5299, %v5295
  %v5302 = vmul.f32 %v5300, %v5296
  %v5303 = vadd.f32 %v5301, 1.4214138
  %v5304 = vadd.f32 %v5302, 1.4214138
  %v5305 = vmul.f32 %v5303, %v5295
  %v5306 = vmul.f32 %v5304, %v5296
  %v5307 = vadd.f32 %v5305, -0.28449672
  %v5308 = vadd.f32 %v5306, -0.28449672
  %v5309 = vmul.f32 %v5307, %v5295
  %v5310 = vmul.f32 %v5308, %v5296
  %v5311 = vadd.f32 %v5309, 0.2548296
  %v5312 = vadd.f32 %v5310, 0.2548296
  %v5313 = vmul.f32 %v5311, %v5295
  %v5314 = vmul.f32 %v5312, %v5296
  %v5315 = vsub.f32 0.0, %v5289
  %v5316 = vsub.f32 0.0, %v5290
  %v5317 = vmul.f32 %v5315, %v5289
  %v5318 = vmul.f32 %v5316, %v5290
  %v5319 = vmul.f32 %v5317, 1.442695
  %v5320 = vpow.pop %v5319
  %v5321 = vmul.f32 %v5318, 1.442695
  %v5322 = vpow.pop %v5321
  %v5323 = vmul.f32 %v5313, %v5320
  %v5324 = vmul.f32 %v5314, %v5322
  %v5325 = vsub.f32 1.0, %v5323
  %v5326 = vsub.f32 1.0, %v5324
  %v5327 = vmul.f32 %v5287, %v5325
  %v5328 = vmul.f32 %v5288, %v5326
  %v5329 = vadd.f32 %v5327, 1.0
  %v5330 = vadd.f32 %v5328, 1.0
  %v5331 = vmul.f32 %v5281, %v5329
  %v5332 = vmul.f32 %v5282, %v5330
  %v5333 = vpack.c.bf16 %v5332, %v5331
  %s5334 = scalar_lea.vmem %s6, 64
  %v5335 = vld [vmem:[%s5334] sm:$0xf]
  %v5336 = vld [vmem:[%s5334 + $0x4] sm:$0xf]
  %v5337 = vld [vmem:[%s5334 + $0x8] sm:$0xf]
  %v5338 = vld [vmem:[%s5334 + $0xc] sm:$0xf]
  %v5339 = vld [vmem:[%s5334 + $0x10] sm:$0xf]
  %v5340 = vld [vmem:[%s5334 + $0x14] sm:$0xf]
  %v5341 = vld [vmem:[%s5334 + $0x18] sm:$0xf]
  %v5342 = vld [vmem:[%s5334 + $0x1c] sm:$0xf]
  %v5343 = vlaneseq
  %v5344 = vshrl.u32 %v5343, 7
  %v5345 = vsub.s32 5, %v5344
  %v5346 = vrot.slane %v3678, %v5345
  %v5355 = vunpack.c.l.b16 %v5335
  %v5356 = vunpack.c.l.b16 %v5336
  %v5357 = vunpack.c.l.b16 %v5337
  %v5358 = vunpack.c.l.b16 %v5338
  %v5359 = vunpack.c.l.b16 %v5339
  %v5360 = vunpack.c.l.b16 %v5340
  %v5361 = vunpack.c.l.b16 %v5341
  %v5362 = vunpack.c.l.b16 %v5342
  %v5363 = vpack.c.b16 %v5356, %v5355
  %v5364 = vpack.c.b16 %v5358, %v5357
  %v5365 = vpack.c.b16 %v5360, %v5359
  %v5366 = vpack.c.b16 %v5362, %v5361
  %v5372 = vsel %vm1814, %v5333, 0
  %5374 = vmatprep.subr.bf16.mxu0 0
  %5375 = vmatpush1.bf16.msra.mxu0 0
  %5376 = vmatprep.subr.bf16.mxu0 0
  %5377 = vmatpush1.bf16.msra.mxu0 0
  %5378 = vmatprep.subr.bf16.mxu0 0
  %5379 = vmatpush1.bf16.msra.mxu0 0
  %5380 = vmatprep.subr.bf16.mxu0 0
  %5381 = vmatpush1.bf16.msra.mxu0 0
  %5382 = vmatprep.subr.bf16.mxu0 0
  %5383 = vmatpush1.bf16.msra.mxu0 %v5366
  %5384 = vmatprep.subr.bf16.mxu0 0
  %5385 = vmatpush1.bf16.msra.mxu0 %v5365
  %5386 = vmatprep.subr.bf16.mxu0 0
  %5387 = vmatpush1.bf16.msra.mxu0 %v5364
  %5388 = vmatprep.subr.bf16.mxu0 0
  %5389 = vmatpush1.bf16.msra.mxu0 %v5363
  %5390 = vmatprep.subr.bf16.mxu0 0
  %5391 = vmatpush2.bf16.msra.mxu0 0
  %5392 = vmatprep.subr.bf16.mxu0 0
  %5393 = vmatpush2.bf16.msra.mxu0 0
  %5394 = vmatprep.subr.bf16.mxu0 0
  %5395 = vmatpush2.bf16.msra.mxu0 0
  %5396 = vmatprep.subr.bf16.mxu0 0
  %5397 = vmatpush2.bf16.msra.mxu0 0
  %5398 = vmatprep.subr.bf16.mxu0 0
  %5399 = vmatpush2.bf16.msra.mxu0 0
  %5400 = vmatprep.subr.bf16.mxu0 0
  %5401 = vmatpush2.bf16.msra.mxu0 0
  %5402 = vmatprep.subr.bf16.mxu0 0
  %5403 = vmatpush2.bf16.msra.mxu0 0
  %5404 = vmatprep.subr.bf16.mxu0 0
  %5405 = vmatpush2.bf16.msra.mxu0 0
  %5406 = vmatprep.mubr.bf16.mxu0 0
  %5407 = vmatmul.mubr.bf16.gmra.mxu0 %v5372
  %v5408 = vpop.f32.mrf.mxu0
  %v5409 = vadd.f32 %v5346, %v5408
  %v5410 = vpop.f32.mrf.mxu0
  %v5411 = vpop.f32.mrf.mxu0
  %v5412 = vadd.f32 %v5346, %v5411
  %v5413 = vpop.f32.mrf.mxu0
  %5414 = vdwg.mxu0
  %v5415 = vadd.f32 %v5213, %v5409
  %v5416 = vadd.f32 %v5214, %v5412
  %v5417 = vsel %vm46, %v5415, 0.0
  %5418 = vadd.xlane.f32.xlu0 %v5417
  %v5419 = vpop.xlane.xlu0 %5418
  %v5420 = vsel %vm46, %v5416, 0.0
  %5421 = vadd.xlane.f32.xlu0 %v5420
  %v5422 = vpop.xlane.xlu0 %5421
  %v5423 = vmul.f32 %v5419, %v53
  %v5424 = vmul.f32 %v5422, %v53
  %v5425 = vsub.f32 %v5415, %v5423
  %v5426 = vsub.f32 %v5416, %v5424
  %v5427 = vmul.f32 %v5425, %v5425
  %v5428 = vmul.f32 %v5426, %v5426
  %v5429 = vsel %vm46, %v5427, 0.0
  %5430 = vadd.xlane.f32.xlu0 %v5429
  %v5431 = vpop.xlane.xlu0 %5430
  %v5432 = vsel %vm46, %v5428, 0.0
  %5433 = vadd.xlane.f32.xlu0 %v5432
  %v5434 = vpop.xlane.xlu0 %5433
  %v5435 = vmul.f32 %v5431, %v53
  %v5436 = vmul.f32 %v5434, %v53
  %v5437 = vadd.f32 %v5435, 1e-12
  %v5438 = vadd.f32 %v5436, 1e-12
  %v5439 = vrsqrt.pop %v5437
  %v5440 = vrsqrt.pop %v5438
  %v5441 = vmul.f32 %v5425, %v5439
  %v5442 = vmul.f32 %v5426, %v5440
  %v5443 = vlaneseq
  %v5444 = vshrl.u32 %v5443, 7
  %v5445 = vsub.s32 6, %v5444
  %v5446 = vrot.slane %v3678, %v5445
  %v5447 = vmul.f32 %v5441, %v5446
  %v5448 = vmul.f32 %v5442, %v5446
  %v5449 = vlaneseq
  %v5450 = vshrl.u32 %v5449, 7
  %v5451 = vsub.s32 7, %v5450
  %v5452 = vrot.slane %v3678, %v5451
  %v5453 = vadd.f32 %v5447, %v5452
  %v5454 = vadd.f32 %v5448, %v5452
  %v5455 = vpack.c.bf16 %v5453, %v5453
  %v5456 = vpack.c.bf16 %v5454, %v5454
  %v5457 = vld [vmem:[%s8] sm:$0xf]
  %v5458 = vld [vmem:[%s8 + $0x4] sm:$0xf]
  %v5459 = vld [vmem:[%s8 + $0x8] sm:$0xf]
  %v5460 = vld [vmem:[%s8 + $0xc] sm:$0xf]
  %v5461 = vld [vmem:[%s9] sm:$0x1]
  %v5463 = vlaneseq
  %v5464 = vshrl.u32 %v5463, 7
  %v5465 = vsub.s32 0, %v5464
  %v5466 = vrot.slane %v5461, %v5465
  %v5470 = vunpack.c.l.b16 %v5455
  %v5471 = vunpack.c.l.b16 %v5456
  %v5472 = vrot.slane %v5471, 7
  %vm5473 = vcmask 1041409
  %v5474 = vsel %vm5473, %v5472, %v5470
  %v5475 = vpack.c.b16 %v5474, %v5474
  %v5480 = vunpack.c.l.b16 %v5457
  %v5481 = vunpack.c.l.b16 %v5458
  %v5482 = vunpack.c.l.b16 %v5459
  %v5483 = vunpack.c.l.b16 %v5460
  %v5484 = vpack.c.b16 %v5481, %v5480
  %v5485 = vpack.c.b16 %v5483, %v5482
  %v5489 = vsel %vm46, %v5475, 0
  %5491 = vmatprep.subr.bf16.mxu0 0
  %5492 = vmatpush1.bf16.msra.mxu0 0
  %5493 = vmatprep.subr.bf16.mxu0 0
  %5494 = vmatpush1.bf16.msra.mxu0 0
  %5495 = vmatprep.subr.bf16.mxu0 0
  %5496 = vmatpush1.bf16.msra.mxu0 0
  %5497 = vmatprep.subr.bf16.mxu0 0
  %5498 = vmatpush1.bf16.msra.mxu0 0
  %5499 = vmatprep.subr.bf16.mxu0 0
  %5500 = vmatpush1.bf16.msra.mxu0 0
  %5501 = vmatprep.subr.bf16.mxu0 0
  %5502 = vmatpush1.bf16.msra.mxu0 0
  %5503 = vmatprep.subr.bf16.mxu0 0
  %5504 = vmatpush1.bf16.msra.mxu0 %v5485
  %5505 = vmatprep.subr.bf16.mxu0 0
  %5506 = vmatpush1.bf16.msra.mxu0 %v5484
  %5507 = vmatprep.subr.bf16.mxu0 0
  %5508 = vmatpush2.bf16.msra.mxu0 0
  %5509 = vmatprep.subr.bf16.mxu0 0
  %5510 = vmatpush2.bf16.msra.mxu0 0
  %5511 = vmatprep.subr.bf16.mxu0 0
  %5512 = vmatpush2.bf16.msra.mxu0 0
  %5513 = vmatprep.subr.bf16.mxu0 0
  %5514 = vmatpush2.bf16.msra.mxu0 0
  %5515 = vmatprep.subr.bf16.mxu0 0
  %5516 = vmatpush2.bf16.msra.mxu0 0
  %5517 = vmatprep.subr.bf16.mxu0 0
  %5518 = vmatpush2.bf16.msra.mxu0 0
  %5519 = vmatprep.subr.bf16.mxu0 0
  %5520 = vmatpush2.bf16.msra.mxu0 0
  %5521 = vmatprep.subr.bf16.mxu0 0
  %5522 = vmatpush2.bf16.msra.mxu0 0
  %5523 = vmatprep.mubr.bf16.mxu0 0
  %5524 = vmatmul.mubr.bf16.gmra.mxu0 %v5489
  %v5525 = vpop.f32.mrf.mxu0
  %v5526 = vadd.f32 %v5466, %v5525
  %v5527 = vpop.f32.mrf.mxu0
  %v5528 = vpop.f32.mrf.mxu0
  %v5529 = vpop.f32.mrf.mxu0
  %5530 = vdwg.mxu0
  %v5531 = vtanh.pop %v5526
  %v5532 = vpack.c.bf16 %v5531, %v5531
  %v5533 = vld [vmem:[%s10] sm:$0xf]
  %v5534 = vld [vmem:[%s10 + $0x4] sm:$0xf]
  %v5535 = vld [vmem:[%s10 + $0x8] sm:$0xf]
  %v5536 = vld [vmem:[%s10 + $0xc] sm:$0xf]
  %v5537 = vld [vmem:[%s11] sm:$0x1]
  %v5539 = vlaneseq
  %v5540 = vshrl.u32 %v5539, 7
  %v5541 = vsub.s32 0, %v5540
  %v5542 = vrot.slane %v5537, %v5541
  %v5548 = vunpack.c.l.b16 %v5533
  %v5549 = vunpack.c.l.b16 %v5534
  %v5550 = vunpack.c.l.b16 %v5535
  %v5551 = vunpack.c.l.b16 %v5536
  %v5552 = vpack.c.b16 %v5549, %v5548
  %v5553 = vpack.c.b16 %v5551, %v5550
  %v5557 = vsel %vm46, %v5532, 0
  %5559 = vmatprep.subr.bf16.mxu0 0
  %5560 = vmatpush1.bf16.msra.mxu0 0
  %5561 = vmatprep.subr.bf16.mxu0 0
  %5562 = vmatpush1.bf16.msra.mxu0 0
  %5563 = vmatprep.subr.bf16.mxu0 0
  %5564 = vmatpush1.bf16.msra.mxu0 0
  %5565 = vmatprep.subr.bf16.mxu0 0
  %5566 = vmatpush1.bf16.msra.mxu0 0
  %5567 = vmatprep.subr.bf16.mxu0 0
  %5568 = vmatpush1.bf16.msra.mxu0 0
  %5569 = vmatprep.subr.bf16.mxu0 0
  %5570 = vmatpush1.bf16.msra.mxu0 0
  %5571 = vmatprep.subr.bf16.mxu0 0
  %5572 = vmatpush1.bf16.msra.mxu0 %v5553
  %5573 = vmatprep.subr.bf16.mxu0 0
  %5574 = vmatpush1.bf16.msra.mxu0 %v5552
  %5575 = vmatprep.subr.bf16.mxu0 0
  %5576 = vmatpush2.bf16.msra.mxu0 0
  %5577 = vmatprep.subr.bf16.mxu0 0
  %5578 = vmatpush2.bf16.msra.mxu0 0
  %5579 = vmatprep.subr.bf16.mxu0 0
  %5580 = vmatpush2.bf16.msra.mxu0 0
  %5581 = vmatprep.subr.bf16.mxu0 0
  %5582 = vmatpush2.bf16.msra.mxu0 0
  %5583 = vmatprep.subr.bf16.mxu0 0
  %5584 = vmatpush2.bf16.msra.mxu0 0
  %5585 = vmatprep.subr.bf16.mxu0 0
  %5586 = vmatpush2.bf16.msra.mxu0 0
  %5587 = vmatprep.subr.bf16.mxu0 0
  %5588 = vmatpush2.bf16.msra.mxu0 0
  %5589 = vmatprep.subr.bf16.mxu0 0
  %5590 = vmatpush2.bf16.msra.mxu0 0
  %5591 = vmatprep.mubr.bf16.mxu0 0
  %5592 = vmatmul.mubr.bf16.gmra.mxu0 %v5557
  %v5593 = vpop.f32.mrf.mxu0
  %v5594 = vadd.f32 %v5542, %v5593
  %v5595 = vpop.f32.mrf.mxu0
  %v5596 = vpop.f32.mrf.mxu0
  %v5597 = vpop.f32.mrf.mxu0
  %5598 = vdwg.mxu0
  %5599 = vst [vmem:[%s12] sm:$0x3] %v5594
  // Predicated region
  $region50: #{forward.1} parent=0 // pred_check
    _
  $region51: #{forward.1} parent=0 // pred_check_branch
    %5601 = sbr.rel (0) target = $region53
  $region52: #{forward.1} parent=0 // pred_region
    _
  $region53: #{forward.1} parent=0 // pred_fallthru
    _
  // Predicated region
  $region54: #{forward.1} parent=0 // pred_check
    _
  $region55: #{forward.1} parent=0 // pred_check_branch
    %5603 = sbr.rel (0) target = $region57
  $region56: #{forward.1} parent=0 // pred_region
    _
  $region57: #{forward.1} parent=0 // pred_fallthru
    _

</llo_original>
